<compile_context>
chip_gen: v7x
topology: tpu7x:2x2x1
jax: 0.10.0
libtpu: 0.0.40
codegen_flags: <defaults>
</compile_context>

<pallas_src>
import functools

import jax
import jax.numpy as jnp
from jax.experimental import pallas as pl
from jax.experimental.pallas import tpu as pltpu


def _silu(x):
    return x * jax.nn.sigmoid(x)


def _group_norm(x3, proj, gamma, beta, eps=1e-5):
    """GroupNorm over (Nb, P, C) with per-sample stats and centered (two-pass) variance.

    `proj` is a (C, C) group-averaging matrix: proj[c, c'] = 1 / (P * C_per_group)
    if c, c' belong to the same group else 0, so `row_sums @ proj` broadcasts the
    per-(sample, group) mean back to channels.
    """
    s1 = jnp.sum(x3, axis=1)                                           # (Nb, C)
    mean_c = jnp.dot(s1, proj, preferred_element_type=jnp.float32)     # (Nb, C)
    xc = x3 - mean_c[:, None, :]
    s2 = jnp.sum(xc * xc, axis=1)                                      # (Nb, C)
    var_c = jnp.dot(s2, proj, preferred_element_type=jnp.float32)      # (Nb, C)
    inv = jax.lax.rsqrt(var_c + eps)
    return xc * inv[:, None, :] * gamma + beta


def _zero_halo(hpad, Nb, H, W, C):
    # Only the 1-element border ever needs to be zero; the interior is fully
    # overwritten every grid step, so never memset the whole buffer.
    hpad[:, 0:1, :, :] = jnp.zeros((Nb, 1, W + 2, C), hpad.dtype)
    hpad[:, H + 1:H + 2, :, :] = jnp.zeros((Nb, 1, W + 2, C), hpad.dtype)
    hpad[:, :, 0:1, :] = jnp.zeros((Nb, H + 2, 1, C), hpad.dtype)
    hpad[:, :, W + 1:W + 2, :] = jnp.zeros((Nb, H + 2, 1, C), hpad.dtype)


def _im2col(hpad, col, Nb, H, W, C, mdt):
    # col[:, t*C:(t+1)*C] = 3x3 tap t of the halo-padded activation, row-flattened.
    P = H * W
    for ky in range(3):
        for kx in range(3):
            t = ky * 3 + kx
            patch = hpad[:, ky:ky + H, kx:kx + W, :]                    # (Nb, H, W, C)
            col[:, t * C:(t + 1) * C] = patch.reshape(Nb * P, C).astype(mdt)


def _resblock_kernel(H, W, Cin, Cout, Nb, mdt,
                     x_ref, embo_ref,
                     proj1_ref, gn1_w_ref, gn1_b_ref, w1_ref, b1_ref,
                     proj2_ref, gn2_w_ref, gn2_b_ref, w2_ref, b2_ref,
                     out_ref,
                     hpad1, hpad2, col1, col2):
    P = H * W
    x3 = x_ref[...].reshape(Nb, P, Cin)                                 # f32

    # ---- in_layers: GroupNorm32 -> SiLU -> Conv3x3 (single im2col matmul) ----
    h1 = _silu(_group_norm(x3, proj1_ref[...], gn1_w_ref[...], gn1_b_ref[...]))
    _zero_halo(hpad1, Nb, H, W, Cin)
    hpad1[:, 1:H + 1, 1:W + 1, :] = h1.reshape(Nb, H, W, Cin)
    _im2col(hpad1, col1, Nb, H, W, Cin, mdt)
    h = jnp.dot(col1[...], w1_ref[...], preferred_element_type=jnp.float32)
    h = h + b1_ref[...]                                                 # (Nb*P, Cout)

    # ---- emb_layers (precomputed in the wrapper): add per-sample row ----
    h = h.reshape(Nb, P, Cout) + embo_ref[...]                          # (Nb,1,Cout) bcast

    # ---- out_layers: GroupNorm32 -> SiLU -> (Dropout = id in eval) -> Conv3x3,
    #      with the 1x1 skip conv fused via K-concatenation ----
    h2 = _silu(_group_norm(h, proj2_ref[...], gn2_w_ref[...], gn2_b_ref[...]))
    _zero_halo(hpad2, Nb, H, W, Cout)
    hpad2[:, 1:H + 1, 1:W + 1, :] = h2.reshape(Nb, H, W, Cout)
    _im2col(hpad2, col2, Nb, H, W, Cout, mdt)
    col2[:, 9 * Cout:9 * Cout + Cin] = x3.reshape(Nb * P, Cin).astype(mdt)

    out = jnp.dot(col2[...], w2_ref[...], preferred_element_type=jnp.float32)
    out_ref[...] = (out + b2_ref[...]).reshape(Nb, P, Cout)


def resblock_forward(x_nchw, emb, params, *, num_groups=32,
                     matmul_dtype=jnp.bfloat16, block_rows=256):
    """ResBlock forward.  x_nchw: (N, Cin, H, W) f32, emb: (N, Cemb) -> (N, Cout, H, W)."""
    N, Cin, H, W = x_nchw.shape
    Cout = params["conv1_w"].shape[0]
    P = H * W
    mdt = matmul_dtype

    # Samples per grid step: largest divisor of N with nb*P >= ~block_rows (MXU fill).
    nb = 1
    for d in range(min(N, max(1, -(-block_rows // P))), 0, -1):
        if N % d == 0:
            nb = d
            break

    # ---------------- layout / parameter prep (plain XLA, outside the kernel) ----
    x = jnp.transpose(x_nchw, (0, 2, 3, 1)).astype(jnp.float32)         # NHWC

    # emb_layers hoisted: SiLU + Linear for all N samples as one batched XLA matmul.
    e = emb.astype(jnp.float32)
    emb_out = (_silu(e) @ params["emb_w"].T.astype(jnp.float32)
               + params["emb_b"].astype(jnp.float32))[:, None, :]       # (N, 1, Cout)

    def conv3x3_slab(w_oihw):   # (O, I, 3, 3) -> (9*I, O), tap-major rows
        o, i, kh, kw = w_oihw.shape
        return jnp.transpose(w_oihw, (2, 3, 1, 0)).reshape(kh * kw * i, o)

    w1 = conv3x3_slab(params["conv1_w"]).astype(mdt)                    # (9*Cin, Cout)
    w2 = jnp.concatenate(
        [conv3x3_slab(params["conv2_w"]),
         params["skip_w"][:, :, 0, 0].T], axis=0).astype(mdt)           # (9*Cout+Cin, Cout)
    b1 = params["conv1_b"].astype(jnp.float32)[None, :]
    b2 = (params["conv2_b"] + params["skip_b"]).astype(jnp.float32)[None, :]

    def group_proj(C):          # (C, C) per-group averaging projector (stats in f32)
        g = jnp.arange(C) // (C // num_groups)
        m = (g[:, None] == g[None, :]).astype(jnp.float32)
        return m / jnp.float32(P * (C // num_groups))

    proj1, proj2 = group_proj(Cin), group_proj(Cout)
    gn1_w = params["gn1_w"].astype(jnp.float32)[None, :]
    gn1_b = params["gn1_b"].astype(jnp.float32)[None, :]
    gn2_w = params["gn2_w"].astype(jnp.float32)[None, :]
    gn2_b = params["gn2_b"].astype(jnp.float32)[None, :]

    kernel = functools.partial(_resblock_kernel, H, W, Cin, Cout, nb, mdt)

    def const_spec(a):
        r = a.ndim
        return pl.BlockSpec(a.shape, lambda n, _r=r: (0,) * _r)

    grid_spec = pltpu.PrefetchScalarGridSpec(
        num_scalar_prefetch=0,
        grid=(N // nb,),
        in_specs=[
            pl.BlockSpec((nb, H, W, Cin), lambda n: (n, 0, 0, 0)),      # x
            pl.BlockSpec((nb, 1, Cout), lambda n: (n, 0, 0)),           # emb_out
            const_spec(proj1), const_spec(gn1_w), const_spec(gn1_b),
            const_spec(w1), const_spec(b1),
            const_spec(proj2), const_spec(gn2_w), const_spec(gn2_b),
            const_spec(w2), const_spec(b2),
        ],
        out_specs=pl.BlockSpec((nb, P, Cout), lambda n: (n, 0, 0)),
        scratch_shapes=[
            pltpu.VMEM((nb, H + 2, W + 2, Cin), jnp.float32),           # conv1 halo
            pltpu.VMEM((nb, H + 2, W + 2, Cout), jnp.float32),          # conv2 halo
            pltpu.VMEM((nb * P, 9 * Cin), mdt),                         # conv1 im2col
            pltpu.VMEM((nb * P, 9 * Cout + Cin), mdt),                  # conv2+skip im2col
        ],
    )

    out = pl.pallas_call(
        kernel,
        grid_spec=grid_spec,
        out_shape=jax.ShapeDtypeStruct((N, P, Cout), jnp.float32),
        compiler_params=pltpu.CompilerParams(
            # batch blocks are independent -> megacore-parallel on v7x, harmless elsewhere
            dimension_semantics=("parallel",),
            # explicit scoped-VMEM budget with headroom (v7x has only 64 MiB physical)
            vmem_limit_bytes=48 * 1024 * 1024,
        ),
    )(x, emb_out, proj1, gn1_w, gn1_b, w1, b1, proj2, gn2_w, gn2_b, w2, b2)

    return jnp.transpose(out.reshape(N, H, W, Cout), (0, 3, 1, 2))      # back to NCHW


# ---------------- pure-JAX reference (NCHW, mirrors the PyTorch module) -----------
def _ref_forward(x, emb, p, G=32, eps=1e-5):
    def gn(t, gamma, beta):
        n, c, h, w = t.shape
        tg = t.reshape(n, G, -1)
        m = tg.mean(-1, keepdims=True)
        v = ((tg - m) ** 2).mean(-1, keepdims=True)
        tn = ((tg - m) * jax.lax.rsqrt(v + eps)).reshape(n, c, h, w)
        return tn * gamma[None, :, None, None] + beta[None, :, None, None]

    def conv(t, w, b, pad):
        y = jax.lax.conv_general_dilated(
            t, w, (1, 1), [(pad, pad), (pad, pad)],
            dimension_numbers=("NCHW", "OIHW", "NCHW"))
        return y + b[None, :, None, None]

    h = conv(_silu(gn(x, p["gn1_w"], p["gn1_b"])), p["conv1_w"], p["conv1_b"], 1)
    e = _silu(emb) @ p["emb_w"].T + p["emb_b"]
    h = h + e[:, :, None, None]
    h = conv(_silu(gn(h, p["gn2_w"], p["gn2_b"])), p["conv2_w"], p["conv2_b"], 1)
    skip = conv(x, p["skip_w"], p["skip_b"], 0)
    return skip + h


if __name__ == "__main__":
    # Small but MXU-friendly shapes: lane-aligned channel counts (Cout = 128 keeps
    # the output stores lane-dense), 8x8 spatial, 8 samples -> 2 grid steps of 4.
    N, Cin, Cout, Cemb, H, W = 8, 64, 128, 64, 8, 8

    key = jax.random.PRNGKey(0)
    ks = jax.random.split(key, 14)

    # NOTE: the original module zero-initializes the second conv (zero_module);
    # small random weights are used instead so the full compute path is exercised.
    params = dict(
        gn1_w=1.0 + 0.1 * jax.random.normal(ks[0], (Cin,), jnp.float32),
        gn1_b=0.1 * jax.random.normal(ks[1], (Cin,), jnp.float32),
        conv1_w=0.10 * jax.random.normal(ks[2], (Cout, Cin, 3, 3), jnp.float32),
        conv1_b=0.10 * jax.random.normal(ks[3], (Cout,), jnp.float32),
        emb_w=0.10 * jax.random.normal(ks[4], (Cout, Cemb), jnp.float32),
        emb_b=0.10 * jax.random.normal(ks[5], (Cout,), jnp.float32),
        gn2_w=1.0 + 0.1 * jax.random.normal(ks[6], (Cout,), jnp.float32),
        gn2_b=0.1 * jax.random.normal(ks[7], (Cout,), jnp.float32),
        conv2_w=0.05 * jax.random.normal(ks[8], (Cout, Cout, 3, 3), jnp.float32),
        conv2_b=0.05 * jax.random.normal(ks[9], (Cout,), jnp.float32),
        skip_w=0.10 * jax.random.normal(ks[10], (Cout, Cin, 1, 1), jnp.float32),
        skip_b=0.10 * jax.random.normal(ks[11], (Cout,), jnp.float32),
    )

    x = jax.random.normal(ks[12], (N, Cin, H, W), jnp.float32)          # PyTorch NCHW input
    emb = jax.random.normal(ks[13], (N, Cemb), jnp.float32)

    ref = _ref_forward(x, emb, params)
    jax.block_until_ready(ref)

    # f32 MXU operands: strict correctness check against the XLA reference.
    out_f32 = resblock_forward(x, emb, params, matmul_dtype=jnp.float32)
    jax.block_until_ready(out_f32)
    assert out_f32.shape == (N, Cout, H, W)
    err_abs32 = float(jnp.max(jnp.abs(out_f32 - ref)))
    err_rel32 = float(jnp.sqrt(jnp.mean((out_f32 - ref) ** 2) / jnp.mean(ref ** 2)))
    assert err_abs32 < 1e-2 and err_rel32 < 1e-3, \
        f"f32 kernel mismatch: max abs err = {err_abs32}, rel rms = {err_rel32}"

    # bf16 MXU operands (recommended fast path on v6e/v7x): looser tolerance.
    out_bf16 = resblock_forward(x, emb, params, matmul_dtype=jnp.bfloat16)
    jax.block_until_ready(out_bf16)
    err_abs = float(jnp.max(jnp.abs(out_bf16 - ref)))
    err_rel = float(jnp.sqrt(jnp.mean((out_bf16 - ref) ** 2) / jnp.mean(ref ** 2)))
    assert err_abs < 0.2 and err_rel < 2e-2, \
        f"bf16 kernel mismatch: max abs err = {err_abs}, rel rms = {err_rel}"

    print("KERNEL_OK")
</pallas_src>

<mosaic_0001>
module attributes {stable_mosaic.version = 11 : i64} {
  func.func @_resblock_kernel(%arg0: i32, %arg1: memref<4x8x8x64xf32, #tpu.memory_space<vmem>>, %arg2: memref<4x1x128xf32, #tpu.memory_space<vmem>>, %arg3: memref<64x64xf32, #tpu.memory_space<vmem>>, %arg4: memref<1x64xf32, #tpu.memory_space<vmem>>, %arg5: memref<1x64xf32, #tpu.memory_space<vmem>>, %arg6: memref<576x128xf32, #tpu.memory_space<vmem>>, %arg7: memref<1x128xf32, #tpu.memory_space<vmem>>, %arg8: memref<128x128xf32, #tpu.memory_space<vmem>>, %arg9: memref<1x128xf32, #tpu.memory_space<vmem>>, %arg10: memref<1x128xf32, #tpu.memory_space<vmem>>, %arg11: memref<1216x128xf32, #tpu.memory_space<vmem>>, %arg12: memref<1x128xf32, #tpu.memory_space<vmem>>, %arg13: memref<4x64x128xf32, #tpu.memory_space<vmem>>, %arg14: memref<4x10x10x64xf32, #tpu.memory_space<vmem>>, %arg15: memref<4x10x10x128xf32, #tpu.memory_space<vmem>>, %arg16: memref<256x576xf32, #tpu.memory_space<vmem>>, %arg17: memref<256x1216xf32, #tpu.memory_space<vmem>>) attributes {dimension_semantics = [#tpu.dimension_semantics<parallel>], iteration_bounds = array<i64: 2>, scalar_prefetch = 0 : i64, scratch_operands = 4 : i64, tpu.core_type = #tpu.core_type<tc>, window_params = [{transform_indices = @transform_0, window_bounds = array<i64: 4, 8, 8, 64>}, {transform_indices = @transform_1, window_bounds = array<i64: 4, 1, 128>}, {pipeline_mode = #tpu.pipeline_mode<synchronous>, transform_indices = @transform_2, window_bounds = array<i64: 64, 64>}, {pipeline_mode = #tpu.pipeline_mode<synchronous>, transform_indices = @transform_3, window_bounds = array<i64: 1, 64>}, {pipeline_mode = #tpu.pipeline_mode<synchronous>, transform_indices = @transform_4, window_bounds = array<i64: 1, 64>}, {pipeline_mode = #tpu.pipeline_mode<synchronous>, transform_indices = @transform_5, window_bounds = array<i64: 576, 128>}, {pipeline_mode = #tpu.pipeline_mode<synchronous>, transform_indices = @transform_6, window_bounds = array<i64: 1, 128>}, {pipeline_mode = #tpu.pipeline_mode<synchronous>, transform_indices = @transform_7, window_bounds = array<i64: 128, 128>}, {pipeline_mode = #tpu.pipeline_mode<synchronous>, transform_indices = @transform_8, window_bounds = array<i64: 1, 128>}, {pipeline_mode = #tpu.pipeline_mode<synchronous>, transform_indices = @transform_9, window_bounds = array<i64: 1, 128>}, {pipeline_mode = #tpu.pipeline_mode<synchronous>, transform_indices = @transform_10, window_bounds = array<i64: 1216, 128>}, {pipeline_mode = #tpu.pipeline_mode<synchronous>, transform_indices = @transform_11, window_bounds = array<i64: 1, 128>}, {transform_indices = @transform_12, window_bounds = array<i64: 4, 64, 128>}]} {
    %c0 = arith.constant 0 : index
    %c0_0 = arith.constant 0 : index
    %c0_1 = arith.constant 0 : index
    %c0_2 = arith.constant 0 : index
    %0 = vector.load %arg1[%c0, %c0_0, %c0_1, %c0_2] : memref<4x8x8x64xf32, #tpu.memory_space<vmem>>, vector<4x8x8x64xf32>
    %1 = vector.shape_cast %0 : vector<4x8x8x64xf32> to vector<4x64x64xf32>
    %c0_3 = arith.constant 0 : index
    %c0_4 = arith.constant 0 : index
    %2 = vector.load %arg3[%c0_3, %c0_4] : memref<64x64xf32, #tpu.memory_space<vmem>>, vector<64x64xf32>
    %c0_5 = arith.constant 0 : index
    %c0_6 = arith.constant 0 : index
    %3 = vector.load %arg4[%c0_5, %c0_6] : memref<1x64xf32, #tpu.memory_space<vmem>>, vector<1x64xf32>
    %c0_7 = arith.constant 0 : index
    %c0_8 = arith.constant 0 : index
    %4 = vector.load %arg5[%c0_7, %c0_8] : memref<1x64xf32, #tpu.memory_space<vmem>>, vector<1x64xf32>
    %cst = arith.constant dense<0.000000e+00> : vector<4x64xf32>
    %5 = vector.multi_reduction <add>, %1, %cst [1] : vector<4x64x64xf32> to vector<4x64xf32>
    %cst_9 = arith.constant dense<0.000000e+00> : vector<4x64xf32>
    %6 = tpu.matmul %5, %2, %cst_9 {dimension_numbers = #tpu.dot_dimension_numbers<[1], [0], [0], [1], [0, 0, 1, 1], [], []>} : vector<4x64xf32>, vector<64x64xf32>, vector<4x64xf32> -> vector<4x64xf32>
    %7 = vector.shape_cast %6 : vector<4x64xf32> to vector<4x1x64xf32>
    %8 = vector.broadcast %7 : vector<4x1x64xf32> to vector<4x64x64xf32>
    %9 = arith.subf %1, %8 : vector<4x64x64xf32>
    %10 = arith.mulf %9, %9 : vector<4x64x64xf32>
    %cst_10 = arith.constant dense<0.000000e+00> : vector<4x64xf32>
    %11 = vector.multi_reduction <add>, %10, %cst_10 [1] : vector<4x64x64xf32> to vector<4x64xf32>
    %cst_11 = arith.constant dense<0.000000e+00> : vector<4x64xf32>
    %12 = tpu.matmul %11, %2, %cst_11 {dimension_numbers = #tpu.dot_dimension_numbers<[1], [0], [0], [1], [0, 0, 1, 1], [], []>} : vector<4x64xf32>, vector<64x64xf32>, vector<4x64xf32> -> vector<4x64xf32>
    %cst_12 = arith.constant 9.99999974E-6 : f32
    %13 = vector.broadcast %cst_12 : f32 to vector<4x64xf32>
    %14 = arith.addf %12, %13 : vector<4x64xf32>
    %15 = math.rsqrt %14 : vector<4x64xf32>
    %16 = vector.shape_cast %15 : vector<4x64xf32> to vector<4x1x64xf32>
    %17 = vector.broadcast %16 : vector<4x1x64xf32> to vector<4x64x64xf32>
    %18 = arith.mulf %9, %17 : vector<4x64x64xf32>
    %19 = vector.shape_cast %3 : vector<1x64xf32> to vector<1x1x64xf32>
    %20 = vector.broadcast %19 : vector<1x1x64xf32> to vector<4x64x64xf32>
    %21 = arith.mulf %18, %20 : vector<4x64x64xf32>
    %22 = vector.shape_cast %4 : vector<1x64xf32> to vector<1x1x64xf32>
    %23 = vector.broadcast %22 : vector<1x1x64xf32> to vector<4x64x64xf32>
    %24 = arith.addf %21, %23 : vector<4x64x64xf32>
    %25 = arith.negf %24 : vector<4x64x64xf32>
    %26 = math.exp %25 : vector<4x64x64xf32>
    %cst_13 = arith.constant 1.000000e+00 : f32
    %27 = vector.broadcast %cst_13 : f32 to vector<4x64x64xf32>
    %28 = arith.addf %27, %26 : vector<4x64x64xf32>
    %29 = arith.divf %27, %28 : vector<4x64x64xf32>
    %30 = arith.mulf %24, %29 : vector<4x64x64xf32>
    %cst_14 = arith.constant 0.000000e+00 : f32
    %31 = vector.broadcast %cst_14 : f32 to vector<4x1x10x64xf32>
    %c0_15 = arith.constant 0 : index
    %c0_16 = arith.constant 0 : index
    %c0_17 = arith.constant 0 : index
    %c0_18 = arith.constant 0 : index
    %32 = vector.load %arg14[%c0_15, %c0_16, %c0_17, %c0_18] : memref<4x10x10x64xf32, #tpu.memory_space<vmem>>, vector<4x1x10x64xf32>
    tpu.vector_store %arg14[%c0_15, %c0_16, %c0_17, %c0_18], %31 {strides = array<i32>} : memref<4x10x10x64xf32, #tpu.memory_space<vmem>>, vector<4x1x10x64xf32>,
    %cst_19 = arith.constant 0.000000e+00 : f32
    %33 = vector.broadcast %cst_19 : f32 to vector<4x1x10x64xf32>
    %c0_20 = arith.constant 0 : index
    %c9 = arith.constant 9 : index
    %c0_21 = arith.constant 0 : index
    %c0_22 = arith.constant 0 : index
    %34 = vector.load %arg14[%c0_20, %c9, %c0_21, %c0_22] : memref<4x10x10x64xf32, #tpu.memory_space<vmem>>, vector<4x1x10x64xf32>
    tpu.vector_store %arg14[%c0_20, %c9, %c0_21, %c0_22], %33 {strides = array<i32>} : memref<4x10x10x64xf32, #tpu.memory_space<vmem>>, vector<4x1x10x64xf32>,
    %cst_23 = arith.constant 0.000000e+00 : f32
    %35 = vector.broadcast %cst_23 : f32 to vector<4x10x1x64xf32>
    %c0_24 = arith.constant 0 : index
    %c0_25 = arith.constant 0 : index
    %c0_26 = arith.constant 0 : index
    %c0_27 = arith.constant 0 : index
    %36 = vector.load %arg14[%c0_24, %c0_25, %c0_26, %c0_27] : memref<4x10x10x64xf32, #tpu.memory_space<vmem>>, vector<4x10x1x64xf32>
    tpu.vector_store %arg14[%c0_24, %c0_25, %c0_26, %c0_27], %35 {strides = array<i32>} : memref<4x10x10x64xf32, #tpu.memory_space<vmem>>, vector<4x10x1x64xf32>,
    %cst_28 = arith.constant 0.000000e+00 : f32
    %37 = vector.broadcast %cst_28 : f32 to vector<4x10x1x64xf32>
    %c0_29 = arith.constant 0 : index
    %c0_30 = arith.constant 0 : index
    %c9_31 = arith.constant 9 : index
    %c0_32 = arith.constant 0 : index
    %38 = vector.load %arg14[%c0_29, %c0_30, %c9_31, %c0_32] : memref<4x10x10x64xf32, #tpu.memory_space<vmem>>, vector<4x10x1x64xf32>
    tpu.vector_store %arg14[%c0_29, %c0_30, %c9_31, %c0_32], %37 {strides = array<i32>} : memref<4x10x10x64xf32, #tpu.memory_space<vmem>>, vector<4x10x1x64xf32>,
    %39 = vector.shape_cast %30 : vector<4x64x64xf32> to vector<4x8x8x64xf32>
    %c0_33 = arith.constant 0 : index
    %c1 = arith.constant 1 : index
    %c1_34 = arith.constant 1 : index
    %c0_35 = arith.constant 0 : index
    %40 = vector.load %arg14[%c0_33, %c1, %c1_34, %c0_35] : memref<4x10x10x64xf32, #tpu.memory_space<vmem>>, vector<4x8x8x64xf32>
    tpu.vector_store %arg14[%c0_33, %c1, %c1_34, %c0_35], %39 {strides = array<i32>} : memref<4x10x10x64xf32, #tpu.memory_space<vmem>>, vector<4x8x8x64xf32>,
    %c0_36 = arith.constant 0 : index
    %c0_37 = arith.constant 0 : index
    %c0_38 = arith.constant 0 : index
    %c0_39 = arith.constant 0 : index
    %41 = vector.load %arg14[%c0_36, %c0_37, %c0_38, %c0_39] : memref<4x10x10x64xf32, #tpu.memory_space<vmem>>, vector<4x8x8x64xf32>
    %42 = vector.shape_cast %41 : vector<4x8x8x64xf32> to vector<256x64xf32>
    %c0_40 = arith.constant 0 : index
    %c0_41 = arith.constant 0 : index
    %43 = vector.load %arg16[%c0_40, %c0_41] : memref<256x576xf32, #tpu.memory_space<vmem>>, vector<256x64xf32>
    tpu.vector_store %arg16[%c0_40, %c0_41], %42 {strides = array<i32>} : memref<256x576xf32, #tpu.memory_space<vmem>>, vector<256x64xf32>,
    %c0_42 = arith.constant 0 : index
    %c0_43 = arith.constant 0 : index
    %c1_44 = arith.constant 1 : index
    %c0_45 = arith.constant 0 : index
    %44 = vector.load %arg14[%c0_42, %c0_43, %c1_44, %c0_45] : memref<4x10x10x64xf32, #tpu.memory_space<vmem>>, vector<4x8x8x64xf32>
    %45 = vector.shape_cast %44 : vector<4x8x8x64xf32> to vector<256x64xf32>
    %c0_46 = arith.constant 0 : index
    %c64 = arith.constant 64 : index
    %46 = vector.load %arg16[%c0_46, %c64] : memref<256x576xf32, #tpu.memory_space<vmem>>, vector<256x64xf32>
    tpu.vector_store %arg16[%c0_46, %c64], %45 {strides = array<i32>} : memref<256x576xf32, #tpu.memory_space<vmem>>, vector<256x64xf32>,
    %c0_47 = arith.constant 0 : index
    %c0_48 = arith.constant 0 : index
    %c2 = arith.constant 2 : index
    %c0_49 = arith.constant 0 : index
    %47 = vector.load %arg14[%c0_47, %c0_48, %c2, %c0_49] : memref<4x10x10x64xf32, #tpu.memory_space<vmem>>, vector<4x8x8x64xf32>
    %48 = vector.shape_cast %47 : vector<4x8x8x64xf32> to vector<256x64xf32>
    %c0_50 = arith.constant 0 : index
    %c128 = arith.constant 128 : index
    %49 = vector.load %arg16[%c0_50, %c128] : memref<256x576xf32, #tpu.memory_space<vmem>>, vector<256x64xf32>
    tpu.vector_store %arg16[%c0_50, %c128], %48 {strides = array<i32>} : memref<256x576xf32, #tpu.memory_space<vmem>>, vector<256x64xf32>,
    %c0_51 = arith.constant 0 : index
    %c1_52 = arith.constant 1 : index
    %c0_53 = arith.constant 0 : index
    %c0_54 = arith.constant 0 : index
    %50 = vector.load %arg14[%c0_51, %c1_52, %c0_53, %c0_54] : memref<4x10x10x64xf32, #tpu.memory_space<vmem>>, vector<4x8x8x64xf32>
    %51 = vector.shape_cast %50 : vector<4x8x8x64xf32> to vector<256x64xf32>
    %c0_55 = arith.constant 0 : index
    %c192 = arith.constant 192 : index
    %52 = vector.load %arg16[%c0_55, %c192] : memref<256x576xf32, #tpu.memory_space<vmem>>, vector<256x64xf32>
    tpu.vector_store %arg16[%c0_55, %c192], %51 {strides = array<i32>} : memref<256x576xf32, #tpu.memory_space<vmem>>, vector<256x64xf32>,
    %c0_56 = arith.constant 0 : index
    %c1_57 = arith.constant 1 : index
    %c1_58 = arith.constant 1 : index
    %c0_59 = arith.constant 0 : index
    %53 = vector.load %arg14[%c0_56, %c1_57, %c1_58, %c0_59] : memref<4x10x10x64xf32, #tpu.memory_space<vmem>>, vector<4x8x8x64xf32>
    %54 = vector.shape_cast %53 : vector<4x8x8x64xf32> to vector<256x64xf32>
    %c0_60 = arith.constant 0 : index
    %c256 = arith.constant 256 : index
    %55 = vector.load %arg16[%c0_60, %c256] : memref<256x576xf32, #tpu.memory_space<vmem>>, vector<256x64xf32>
    tpu.vector_store %arg16[%c0_60, %c256], %54 {strides = array<i32>} : memref<256x576xf32, #tpu.memory_space<vmem>>, vector<256x64xf32>,
    %c0_61 = arith.constant 0 : index
    %c1_62 = arith.constant 1 : index
    %c2_63 = arith.constant 2 : index
    %c0_64 = arith.constant 0 : index
    %56 = vector.load %arg14[%c0_61, %c1_62, %c2_63, %c0_64] : memref<4x10x10x64xf32, #tpu.memory_space<vmem>>, vector<4x8x8x64xf32>
    %57 = vector.shape_cast %56 : vector<4x8x8x64xf32> to vector<256x64xf32>
    %c0_65 = arith.constant 0 : index
    %c320 = arith.constant 320 : index
    %58 = vector.load %arg16[%c0_65, %c320] : memref<256x576xf32, #tpu.memory_space<vmem>>, vector<256x64xf32>
    tpu.vector_store %arg16[%c0_65, %c320], %57 {strides = array<i32>} : memref<256x576xf32, #tpu.memory_space<vmem>>, vector<256x64xf32>,
    %c0_66 = arith.constant 0 : index
    %c2_67 = arith.constant 2 : index
    %c0_68 = arith.constant 0 : index
    %c0_69 = arith.constant 0 : index
    %59 = vector.load %arg14[%c0_66, %c2_67, %c0_68, %c0_69] : memref<4x10x10x64xf32, #tpu.memory_space<vmem>>, vector<4x8x8x64xf32>
    %60 = vector.shape_cast %59 : vector<4x8x8x64xf32> to vector<256x64xf32>
    %c0_70 = arith.constant 0 : index
    %c384 = arith.constant 384 : index
    %61 = vector.load %arg16[%c0_70, %c384] : memref<256x576xf32, #tpu.memory_space<vmem>>, vector<256x64xf32>
    tpu.vector_store %arg16[%c0_70, %c384], %60 {strides = array<i32>} : memref<256x576xf32, #tpu.memory_space<vmem>>, vector<256x64xf32>,
    %c0_71 = arith.constant 0 : index
    %c2_72 = arith.constant 2 : index
    %c1_73 = arith.constant 1 : index
    %c0_74 = arith.constant 0 : index
    %62 = vector.load %arg14[%c0_71, %c2_72, %c1_73, %c0_74] : memref<4x10x10x64xf32, #tpu.memory_space<vmem>>, vector<4x8x8x64xf32>
    %63 = vector.shape_cast %62 : vector<4x8x8x64xf32> to vector<256x64xf32>
    %c0_75 = arith.constant 0 : index
    %c448 = arith.constant 448 : index
    %64 = vector.load %arg16[%c0_75, %c448] : memref<256x576xf32, #tpu.memory_space<vmem>>, vector<256x64xf32>
    tpu.vector_store %arg16[%c0_75, %c448], %63 {strides = array<i32>} : memref<256x576xf32, #tpu.memory_space<vmem>>, vector<256x64xf32>,
    %c0_76 = arith.constant 0 : index
    %c2_77 = arith.constant 2 : index
    %c2_78 = arith.constant 2 : index
    %c0_79 = arith.constant 0 : index
    %65 = vector.load %arg14[%c0_76, %c2_77, %c2_78, %c0_79] : memref<4x10x10x64xf32, #tpu.memory_space<vmem>>, vector<4x8x8x64xf32>
    %66 = vector.shape_cast %65 : vector<4x8x8x64xf32> to vector<256x64xf32>
    %c0_80 = arith.constant 0 : index
    %c512 = arith.constant 512 : index
    %67 = vector.load %arg16[%c0_80, %c512] : memref<256x576xf32, #tpu.memory_space<vmem>>, vector<256x64xf32>
    tpu.vector_store %arg16[%c0_80, %c512], %66 {strides = array<i32>} : memref<256x576xf32, #tpu.memory_space<vmem>>, vector<256x64xf32>,
    %c0_81 = arith.constant 0 : index
    %c0_82 = arith.constant 0 : index
    %68 = vector.load %arg16[%c0_81, %c0_82] : memref<256x576xf32, #tpu.memory_space<vmem>>, vector<256x576xf32>
    %c0_83 = arith.constant 0 : index
    %c0_84 = arith.constant 0 : index
    %69 = vector.load %arg6[%c0_83, %c0_84] : memref<576x128xf32, #tpu.memory_space<vmem>>, vector<576x128xf32>
    %cst_85 = arith.constant dense<0.000000e+00> : vector<256x128xf32>
    %70 = tpu.matmul %68, %69, %cst_85 {dimension_numbers = #tpu.dot_dimension_numbers<[1], [0], [0], [1], [0, 0, 1, 1], [], []>} : vector<256x576xf32>, vector<576x128xf32>, vector<256x128xf32> -> vector<256x128xf32>
    %c0_86 = arith.constant 0 : index
    %c0_87 = arith.constant 0 : index
    %71 = vector.load %arg7[%c0_86, %c0_87] : memref<1x128xf32, #tpu.memory_space<vmem>>, vector<1x128xf32>
    %72 = vector.broadcast %71 : vector<1x128xf32> to vector<256x128xf32>
    %73 = arith.addf %70, %72 : vector<256x128xf32>
    %74 = vector.shape_cast %73 : vector<256x128xf32> to vector<4x64x128xf32>
    %c0_88 = arith.constant 0 : index
    %c0_89 = arith.constant 0 : index
    %c0_90 = arith.constant 0 : index
    %75 = vector.load %arg2[%c0_88, %c0_89, %c0_90] : memref<4x1x128xf32, #tpu.memory_space<vmem>>, vector<4x1x128xf32>
    %76 = vector.broadcast %75 : vector<4x1x128xf32> to vector<4x64x128xf32>
    %77 = arith.addf %74, %76 : vector<4x64x128xf32>
    %c0_91 = arith.constant 0 : index
    %c0_92 = arith.constant 0 : index
    %78 = vector.load %arg8[%c0_91, %c0_92] : memref<128x128xf32, #tpu.memory_space<vmem>>, vector<128x128xf32>
    %c0_93 = arith.constant 0 : index
    %c0_94 = arith.constant 0 : index
    %79 = vector.load %arg9[%c0_93, %c0_94] : memref<1x128xf32, #tpu.memory_space<vmem>>, vector<1x128xf32>
    %c0_95 = arith.constant 0 : index
    %c0_96 = arith.constant 0 : index
    %80 = vector.load %arg10[%c0_95, %c0_96] : memref<1x128xf32, #tpu.memory_space<vmem>>, vector<1x128xf32>
    %cst_97 = arith.constant dense<0.000000e+00> : vector<4x128xf32>
    %81 = vector.multi_reduction <add>, %77, %cst_97 [1] : vector<4x64x128xf32> to vector<4x128xf32>
    %cst_98 = arith.constant dense<0.000000e+00> : vector<4x128xf32>
    %82 = tpu.matmul %81, %78, %cst_98 {dimension_numbers = #tpu.dot_dimension_numbers<[1], [0], [0], [1], [0, 0, 1, 1], [], []>} : vector<4x128xf32>, vector<128x128xf32>, vector<4x128xf32> -> vector<4x128xf32>
    %83 = vector.shape_cast %82 : vector<4x128xf32> to vector<4x1x128xf32>
    %84 = vector.broadcast %83 : vector<4x1x128xf32> to vector<4x64x128xf32>
    %85 = arith.subf %77, %84 : vector<4x64x128xf32>
    %86 = arith.mulf %85, %85 : vector<4x64x128xf32>
    %cst_99 = arith.constant dense<0.000000e+00> : vector<4x128xf32>
    %87 = vector.multi_reduction <add>, %86, %cst_99 [1] : vector<4x64x128xf32> to vector<4x128xf32>
    %cst_100 = arith.constant dense<0.000000e+00> : vector<4x128xf32>
    %88 = tpu.matmul %87, %78, %cst_100 {dimension_numbers = #tpu.dot_dimension_numbers<[1], [0], [0], [1], [0, 0, 1, 1], [], []>} : vector<4x128xf32>, vector<128x128xf32>, vector<4x128xf32> -> vector<4x128xf32>
    %cst_101 = arith.constant 9.99999974E-6 : f32
    %89 = vector.broadcast %cst_101 : f32 to vector<4x128xf32>
    %90 = arith.addf %88, %89 : vector<4x128xf32>
    %91 = math.rsqrt %90 : vector<4x128xf32>
    %92 = vector.shape_cast %91 : vector<4x128xf32> to vector<4x1x128xf32>
    %93 = vector.broadcast %92 : vector<4x1x128xf32> to vector<4x64x128xf32>
    %94 = arith.mulf %85, %93 : vector<4x64x128xf32>
    %95 = vector.shape_cast %79 : vector<1x128xf32> to vector<1x1x128xf32>
    %96 = vector.broadcast %95 : vector<1x1x128xf32> to vector<4x64x128xf32>
    %97 = arith.mulf %94, %96 : vector<4x64x128xf32>
    %98 = vector.shape_cast %80 : vector<1x128xf32> to vector<1x1x128xf32>
    %99 = vector.broadcast %98 : vector<1x1x128xf32> to vector<4x64x128xf32>
    %100 = arith.addf %97, %99 : vector<4x64x128xf32>
    %101 = arith.negf %100 : vector<4x64x128xf32>
    %102 = math.exp %101 : vector<4x64x128xf32>
    %cst_102 = arith.constant 1.000000e+00 : f32
    %103 = vector.broadcast %cst_102 : f32 to vector<4x64x128xf32>
    %104 = arith.addf %103, %102 : vector<4x64x128xf32>
    %105 = arith.divf %103, %104 : vector<4x64x128xf32>
    %106 = arith.mulf %100, %105 : vector<4x64x128xf32>
    %cst_103 = arith.constant 0.000000e+00 : f32
    %107 = vector.broadcast %cst_103 : f32 to vector<4x1x10x128xf32>
    %c0_104 = arith.constant 0 : index
    %c0_105 = arith.constant 0 : index
    %c0_106 = arith.constant 0 : index
    %c0_107 = arith.constant 0 : index
    %108 = vector.load %arg15[%c0_104, %c0_105, %c0_106, %c0_107] : memref<4x10x10x128xf32, #tpu.memory_space<vmem>>, vector<4x1x10x128xf32>
    tpu.vector_store %arg15[%c0_104, %c0_105, %c0_106, %c0_107], %107 {strides = array<i32>} : memref<4x10x10x128xf32, #tpu.memory_space<vmem>>, vector<4x1x10x128xf32>,
    %cst_108 = arith.constant 0.000000e+00 : f32
    %109 = vector.broadcast %cst_108 : f32 to vector<4x1x10x128xf32>
    %c0_109 = arith.constant 0 : index
    %c9_110 = arith.constant 9 : index
    %c0_111 = arith.constant 0 : index
    %c0_112 = arith.constant 0 : index
    %110 = vector.load %arg15[%c0_109, %c9_110, %c0_111, %c0_112] : memref<4x10x10x128xf32, #tpu.memory_space<vmem>>, vector<4x1x10x128xf32>
    tpu.vector_store %arg15[%c0_109, %c9_110, %c0_111, %c0_112], %109 {strides = array<i32>} : memref<4x10x10x128xf32, #tpu.memory_space<vmem>>, vector<4x1x10x128xf32>,
    %cst_113 = arith.constant 0.000000e+00 : f32
    %111 = vector.broadcast %cst_113 : f32 to vector<4x10x1x128xf32>
    %c0_114 = arith.constant 0 : index
    %c0_115 = arith.constant 0 : index
    %c0_116 = arith.constant 0 : index
    %c0_117 = arith.constant 0 : index
    %112 = vector.load %arg15[%c0_114, %c0_115, %c0_116, %c0_117] : memref<4x10x10x128xf32, #tpu.memory_space<vmem>>, vector<4x10x1x128xf32>
    tpu.vector_store %arg15[%c0_114, %c0_115, %c0_116, %c0_117], %111 {strides = array<i32>} : memref<4x10x10x128xf32, #tpu.memory_space<vmem>>, vector<4x10x1x128xf32>,
    %cst_118 = arith.constant 0.000000e+00 : f32
    %113 = vector.broadcast %cst_118 : f32 to vector<4x10x1x128xf32>
    %c0_119 = arith.constant 0 : index
    %c0_120 = arith.constant 0 : index
    %c9_121 = arith.constant 9 : index
    %c0_122 = arith.constant 0 : index
    %114 = vector.load %arg15[%c0_119, %c0_120, %c9_121, %c0_122] : memref<4x10x10x128xf32, #tpu.memory_space<vmem>>, vector<4x10x1x128xf32>
    tpu.vector_store %arg15[%c0_119, %c0_120, %c9_121, %c0_122], %113 {strides = array<i32>} : memref<4x10x10x128xf32, #tpu.memory_space<vmem>>, vector<4x10x1x128xf32>,
    %115 = vector.shape_cast %106 : vector<4x64x128xf32> to vector<4x8x8x128xf32>
    %c0_123 = arith.constant 0 : index
    %c1_124 = arith.constant 1 : index
    %c1_125 = arith.constant 1 : index
    %c0_126 = arith.constant 0 : index
    %116 = vector.load %arg15[%c0_123, %c1_124, %c1_125, %c0_126] : memref<4x10x10x128xf32, #tpu.memory_space<vmem>>, vector<4x8x8x128xf32>
    tpu.vector_store %arg15[%c0_123, %c1_124, %c1_125, %c0_126], %115 {strides = array<i32>} : memref<4x10x10x128xf32, #tpu.memory_space<vmem>>, vector<4x8x8x128xf32>,
    %c0_127 = arith.constant 0 : index
    %c0_128 = arith.constant 0 : index
    %c0_129 = arith.constant 0 : index
    %c0_130 = arith.constant 0 : index
    %117 = vector.load %arg15[%c0_127, %c0_128, %c0_129, %c0_130] : memref<4x10x10x128xf32, #tpu.memory_space<vmem>>, vector<4x8x8x128xf32>
    %118 = vector.shape_cast %117 : vector<4x8x8x128xf32> to vector<256x128xf32>
    %c0_131 = arith.constant 0 : index
    %c0_132 = arith.constant 0 : index
    %119 = vector.load %arg17[%c0_131, %c0_132] : memref<256x1216xf32, #tpu.memory_space<vmem>>, vector<256x128xf32>
    tpu.vector_store %arg17[%c0_131, %c0_132], %118 {strides = array<i32>} : memref<256x1216xf32, #tpu.memory_space<vmem>>, vector<256x128xf32>,
    %c0_133 = arith.constant 0 : index
    %c0_134 = arith.constant 0 : index
    %c1_135 = arith.constant 1 : index
    %c0_136 = arith.constant 0 : index
    %120 = vector.load %arg15[%c0_133, %c0_134, %c1_135, %c0_136] : memref<4x10x10x128xf32, #tpu.memory_space<vmem>>, vector<4x8x8x128xf32>
    %121 = vector.shape_cast %120 : vector<4x8x8x128xf32> to vector<256x128xf32>
    %c0_137 = arith.constant 0 : index
    %c128_138 = arith.constant 128 : index
    %122 = vector.load %arg17[%c0_137, %c128_138] : memref<256x1216xf32, #tpu.memory_space<vmem>>, vector<256x128xf32>
    tpu.vector_store %arg17[%c0_137, %c128_138], %121 {strides = array<i32>} : memref<256x1216xf32, #tpu.memory_space<vmem>>, vector<256x128xf32>,
    %c0_139 = arith.constant 0 : index
    %c0_140 = arith.constant 0 : index
    %c2_141 = arith.constant 2 : index
    %c0_142 = arith.constant 0 : index
    %123 = vector.load %arg15[%c0_139, %c0_140, %c2_141, %c0_142] : memref<4x10x10x128xf32, #tpu.memory_space<vmem>>, vector<4x8x8x128xf32>
    %124 = vector.shape_cast %123 : vector<4x8x8x128xf32> to vector<256x128xf32>
    %c0_143 = arith.constant 0 : index
    %c256_144 = arith.constant 256 : index
    %125 = vector.load %arg17[%c0_143, %c256_144] : memref<256x1216xf32, #tpu.memory_space<vmem>>, vector<256x128xf32>
    tpu.vector_store %arg17[%c0_143, %c256_144], %124 {strides = array<i32>} : memref<256x1216xf32, #tpu.memory_space<vmem>>, vector<256x128xf32>,
    %c0_145 = arith.constant 0 : index
    %c1_146 = arith.constant 1 : index
    %c0_147 = arith.constant 0 : index
    %c0_148 = arith.constant 0 : index
    %126 = vector.load %arg15[%c0_145, %c1_146, %c0_147, %c0_148] : memref<4x10x10x128xf32, #tpu.memory_space<vmem>>, vector<4x8x8x128xf32>
    %127 = vector.shape_cast %126 : vector<4x8x8x128xf32> to vector<256x128xf32>
    %c0_149 = arith.constant 0 : index
    %c384_150 = arith.constant 384 : index
    %128 = vector.load %arg17[%c0_149, %c384_150] : memref<256x1216xf32, #tpu.memory_space<vmem>>, vector<256x128xf32>
    tpu.vector_store %arg17[%c0_149, %c384_150], %127 {strides = array<i32>} : memref<256x1216xf32, #tpu.memory_space<vmem>>, vector<256x128xf32>,
    %c0_151 = arith.constant 0 : index
    %c1_152 = arith.constant 1 : index
    %c1_153 = arith.constant 1 : index
    %c0_154 = arith.constant 0 : index
    %129 = vector.load %arg15[%c0_151, %c1_152, %c1_153, %c0_154] : memref<4x10x10x128xf32, #tpu.memory_space<vmem>>, vector<4x8x8x128xf32>
    %130 = vector.shape_cast %129 : vector<4x8x8x128xf32> to vector<256x128xf32>
    %c0_155 = arith.constant 0 : index
    %c512_156 = arith.constant 512 : index
    %131 = vector.load %arg17[%c0_155, %c512_156] : memref<256x1216xf32, #tpu.memory_space<vmem>>, vector<256x128xf32>
    tpu.vector_store %arg17[%c0_155, %c512_156], %130 {strides = array<i32>} : memref<256x1216xf32, #tpu.memory_space<vmem>>, vector<256x128xf32>,
    %c0_157 = arith.constant 0 : index
    %c1_158 = arith.constant 1 : index
    %c2_159 = arith.constant 2 : index
    %c0_160 = arith.constant 0 : index
    %132 = vector.load %arg15[%c0_157, %c1_158, %c2_159, %c0_160] : memref<4x10x10x128xf32, #tpu.memory_space<vmem>>, vector<4x8x8x128xf32>
    %133 = vector.shape_cast %132 : vector<4x8x8x128xf32> to vector<256x128xf32>
    %c0_161 = arith.constant 0 : index
    %c640 = arith.constant 640 : index
    %134 = vector.load %arg17[%c0_161, %c640] : memref<256x1216xf32, #tpu.memory_space<vmem>>, vector<256x128xf32>
    tpu.vector_store %arg17[%c0_161, %c640], %133 {strides = array<i32>} : memref<256x1216xf32, #tpu.memory_space<vmem>>, vector<256x128xf32>,
    %c0_162 = arith.constant 0 : index
    %c2_163 = arith.constant 2 : index
    %c0_164 = arith.constant 0 : index
    %c0_165 = arith.constant 0 : index
    %135 = vector.load %arg15[%c0_162, %c2_163, %c0_164, %c0_165] : memref<4x10x10x128xf32, #tpu.memory_space<vmem>>, vector<4x8x8x128xf32>
    %136 = vector.shape_cast %135 : vector<4x8x8x128xf32> to vector<256x128xf32>
    %c0_166 = arith.constant 0 : index
    %c768 = arith.constant 768 : index
    %137 = vector.load %arg17[%c0_166, %c768] : memref<256x1216xf32, #tpu.memory_space<vmem>>, vector<256x128xf32>
    tpu.vector_store %arg17[%c0_166, %c768], %136 {strides = array<i32>} : memref<256x1216xf32, #tpu.memory_space<vmem>>, vector<256x128xf32>,
    %c0_167 = arith.constant 0 : index
    %c2_168 = arith.constant 2 : index
    %c1_169 = arith.constant 1 : index
    %c0_170 = arith.constant 0 : index
    %138 = vector.load %arg15[%c0_167, %c2_168, %c1_169, %c0_170] : memref<4x10x10x128xf32, #tpu.memory_space<vmem>>, vector<4x8x8x128xf32>
    %139 = vector.shape_cast %138 : vector<4x8x8x128xf32> to vector<256x128xf32>
    %c0_171 = arith.constant 0 : index
    %c896 = arith.constant 896 : index
    %140 = vector.load %arg17[%c0_171, %c896] : memref<256x1216xf32, #tpu.memory_space<vmem>>, vector<256x128xf32>
    tpu.vector_store %arg17[%c0_171, %c896], %139 {strides = array<i32>} : memref<256x1216xf32, #tpu.memory_space<vmem>>, vector<256x128xf32>,
    %c0_172 = arith.constant 0 : index
    %c2_173 = arith.constant 2 : index
    %c2_174 = arith.constant 2 : index
    %c0_175 = arith.constant 0 : index
    %141 = vector.load %arg15[%c0_172, %c2_173, %c2_174, %c0_175] : memref<4x10x10x128xf32, #tpu.memory_space<vmem>>, vector<4x8x8x128xf32>
    %142 = vector.shape_cast %141 : vector<4x8x8x128xf32> to vector<256x128xf32>
    %c0_176 = arith.constant 0 : index
    %c1024 = arith.constant 1024 : index
    %143 = vector.load %arg17[%c0_176, %c1024] : memref<256x1216xf32, #tpu.memory_space<vmem>>, vector<256x128xf32>
    tpu.vector_store %arg17[%c0_176, %c1024], %142 {strides = array<i32>} : memref<256x1216xf32, #tpu.memory_space<vmem>>, vector<256x128xf32>,
    %144 = vector.shape_cast %1 : vector<4x64x64xf32> to vector<256x64xf32>
    %c0_177 = arith.constant 0 : index
    %c1152 = arith.constant 1152 : index
    %145 = vector.load %arg17[%c0_177, %c1152] : memref<256x1216xf32, #tpu.memory_space<vmem>>, vector<256x64xf32>
    tpu.vector_store %arg17[%c0_177, %c1152], %144 {strides = array<i32>} : memref<256x1216xf32, #tpu.memory_space<vmem>>, vector<256x64xf32>,
    %c0_178 = arith.constant 0 : index
    %c0_179 = arith.constant 0 : index
    %146 = vector.load %arg17[%c0_178, %c0_179] : memref<256x1216xf32, #tpu.memory_space<vmem>>, vector<256x1216xf32>
    %c0_180 = arith.constant 0 : index
    %c0_181 = arith.constant 0 : index
    %147 = vector.load %arg11[%c0_180, %c0_181] : memref<1216x128xf32, #tpu.memory_space<vmem>>, vector<1216x128xf32>
    %cst_182 = arith.constant dense<0.000000e+00> : vector<256x128xf32>
    %148 = tpu.matmul %146, %147, %cst_182 {dimension_numbers = #tpu.dot_dimension_numbers<[1], [0], [0], [1], [0, 0, 1, 1], [], []>} : vector<256x1216xf32>, vector<1216x128xf32>, vector<256x128xf32> -> vector<256x128xf32>
    %c0_183 = arith.constant 0 : index
    %c0_184 = arith.constant 0 : index
    %149 = vector.load %arg12[%c0_183, %c0_184] : memref<1x128xf32, #tpu.memory_space<vmem>>, vector<1x128xf32>
    %150 = vector.broadcast %149 : vector<1x128xf32> to vector<256x128xf32>
    %151 = arith.addf %148, %150 : vector<256x128xf32>
    %152 = vector.shape_cast %151 : vector<256x128xf32> to vector<4x64x128xf32>
    %c0_185 = arith.constant 0 : index
    %c0_186 = arith.constant 0 : index
    %c0_187 = arith.constant 0 : index
    %153 = vector.load %arg13[%c0_185, %c0_186, %c0_187] : memref<4x64x128xf32, #tpu.memory_space<vmem>>, vector<4x64x128xf32>
    tpu.vector_store %arg13[%c0_185, %c0_186, %c0_187], %152 {strides = array<i32>} : memref<4x64x128xf32, #tpu.memory_space<vmem>>, vector<4x64x128xf32>,
    return
  }
  func.func @transform_0(%arg0: i32) -> (i32, i32, i32, i32) {
    %c0_i32 = arith.constant 0 : i32
    %c0_i32_0 = arith.constant 0 : i32
    %c0_i32_1 = arith.constant 0 : i32
    %c0_i32_2 = arith.constant 0 : i32
    return %arg0, %c0_i32, %c0_i32_0, %c0_i32_1 : i32, i32, i32, i32
  }
  func.func @transform_1(%arg0: i32) -> (i32, i32, i32) {
    %c0_i32 = arith.constant 0 : i32
    %c0_i32_0 = arith.constant 0 : i32
    %c0_i32_1 = arith.constant 0 : i32
    return %arg0, %c0_i32, %c0_i32_0 : i32, i32, i32
  }
  func.func @transform_2(%arg0: i32) -> (i32, i32) {
    %c0_i32 = arith.constant 0 : i32
    %c0_i32_0 = arith.constant 0 : i32
    %c0_i32_1 = arith.constant 0 : i32
    return %c0_i32, %c0_i32_0 : i32, i32
  }
  func.func @transform_3(%arg0: i32) -> (i32, i32) {
    %c0_i32 = arith.constant 0 : i32
    %c0_i32_0 = arith.constant 0 : i32
    %c0_i32_1 = arith.constant 0 : i32
    return %c0_i32, %c0_i32_0 : i32, i32
  }
  func.func @transform_4(%arg0: i32) -> (i32, i32) {
    %c0_i32 = arith.constant 0 : i32
    %c0_i32_0 = arith.constant 0 : i32
    %c0_i32_1 = arith.constant 0 : i32
    return %c0_i32, %c0_i32_0 : i32, i32
  }
  func.func @transform_5(%arg0: i32) -> (i32, i32) {
    %c0_i32 = arith.constant 0 : i32
    %c0_i32_0 = arith.constant 0 : i32
    %c0_i32_1 = arith.constant 0 : i32
    return %c0_i32, %c0_i32_0 : i32, i32
  }
  func.func @transform_6(%arg0: i32) -> (i32, i32) {
    %c0_i32 = arith.constant 0 : i32
    %c0_i32_0 = arith.constant 0 : i32
    %c0_i32_1 = arith.constant 0 : i32
    return %c0_i32, %c0_i32_0 : i32, i32
  }
  func.func @transform_7(%arg0: i32) -> (i32, i32) {
    %c0_i32 = arith.constant 0 : i32
    %c0_i32_0 = arith.constant 0 : i32
    %c0_i32_1 = arith.constant 0 : i32
    return %c0_i32, %c0_i32_0 : i32, i32
  }
  func.func @transform_8(%arg0: i32) -> (i32, i32) {
    %c0_i32 = arith.constant 0 : i32
    %c0_i32_0 = arith.constant 0 : i32
    %c0_i32_1 = arith.constant 0 : i32
    return %c0_i32, %c0_i32_0 : i32, i32
  }
  func.func @transform_9(%arg0: i32) -> (i32, i32) {
    %c0_i32 = arith.constant 0 : i32
    %c0_i32_0 = arith.constant 0 : i32
    %c0_i32_1 = arith.constant 0 : i32
    return %c0_i32, %c0_i32_0 : i32, i32
  }
  func.func @transform_10(%arg0: i32) -> (i32, i32) {
    %c0_i32 = arith.constant 0 : i32
    %c0_i32_0 = arith.constant 0 : i32
    %c0_i32_1 = arith.constant 0 : i32
    return %c0_i32, %c0_i32_0 : i32, i32
  }
  func.func @transform_11(%arg0: i32) -> (i32, i32) {
    %c0_i32 = arith.constant 0 : i32
    %c0_i32_0 = arith.constant 0 : i32
    %c0_i32_1 = arith.constant 0 : i32
    return %c0_i32, %c0_i32_0 : i32, i32
  }
  func.func @transform_12(%arg0: i32) -> (i32, i32, i32) {
    %c0_i32 = arith.constant 0 : i32
    %c0_i32_0 = arith.constant 0 : i32
    %c0_i32_1 = arith.constant 0 : i32
    return %arg0, %c0_i32, %c0_i32_0 : i32, i32, i32
  }
}

</mosaic_0001>

<llo_original>
// kernel: tpu_custom_call.1
$region0: #{tpu_custom_call.1}
  #allocation0 [shape = 'u32[]', space=smem, size = 0x4, offset = 0x4, fixed_abs, tag = 'smem constant byte address 0x4 - core index']
  #allocation1 [shape = 'u32[144,128]{1,0:T(1,128)}', space=vmem, size = 0x12000, scoped, tag = 'internal scratch']
  #allocation2 [shape = 'f32[4,10,10,64]{3,2,1,0:T(8,128)}', space=vmem, size = 0x50000, scoped, tag = 'scratch operand']
  #allocation3 [shape = 'f32[4,10,10,128]{3,2,1,0:T(8,128)}', space=vmem, size = 0x50000, scoped, tag = 'scratch operand']
  #allocation4 [shape = 'f32[256,576]{1,0:T(8,128)}', space=vmem, size = 0xa0000, scoped, tag = 'scratch operand']
  #allocation5 [shape = 'f32[256,1216]{1,0:T(8,128)}', space=vmem, size = 0x140000, scoped, tag = 'scratch operand']
  %s0 = inlined_call_operand.hbm [shape: f32[8,8,8,64], index: 0, kind: input, shape index: {}]
  %s1 = inlined_call_operand.hbm [shape: f32[8,1,128], index: 1, kind: input, shape index: {}]
  %s2 = inlined_call_operand.hbm [shape: f32[64,64], index: 2, kind: input, shape index: {}]
  %s3 = inlined_call_operand.vmem [shape: f32[1,64], index: 3, kind: input, shape index: {}]
  %s4 = inlined_call_operand.vmem [shape: f32[1,64], index: 4, kind: input, shape index: {}]
  %s5 = inlined_call_operand.hbm [shape: f32[576,128], index: 5, kind: input, shape index: {}]
  %s6 = inlined_call_operand.vmem [shape: f32[1,128], index: 6, kind: input, shape index: {}]
  %s7 = inlined_call_operand.hbm [shape: f32[128,128], index: 7, kind: input, shape index: {}]
  %s8 = inlined_call_operand.vmem [shape: f32[1,128], index: 8, kind: input, shape index: {}]
  %s9 = inlined_call_operand.vmem [shape: f32[1,128], index: 9, kind: input, shape index: {}]
  %s10 = inlined_call_operand.hbm [shape: f32[1216,128], index: 10, kind: input, shape index: {}]
  %s11 = inlined_call_operand.vmem [shape: f32[1,128], index: 11, kind: input, shape index: {}]
  %s12 = inlined_call_operand.hbm [shape: f32[8,64,128], index: 12, kind: output, shape index: {}]
  %s13 = sld [smem:[#allocation0]]
  $region105: #{tpu_custom_call.1} parent=0
    _
  %s15 = ssub.s32 1, %s13
  %s16 = scalar_select 0, %s15, %s13
  $region1: #{tpu_custom_call.1} parent=0
    #allocation6 [shape = 'u8[262144]{0}', space=vmem, size = 0x40000, scoped, tag = 'input window, operand 0']
    #allocation7 [shape = 's32[2]{0}', space=sflag, size = 0x8, scoped, tag = 'scoped memory for tpu_custom_call.1']
    #allocation8 [shape = 's32[2]{0}', space=sflag, size = 0x8, scoped, tag = 'scoped memory for tpu_custom_call.1']
    #allocation9 [shape = 'u8[4096]{0}', space=vmem, size = 0x1000, scoped, tag = 'input window, operand 1']
    #allocation10 [shape = 's32[2]{0}', space=sflag, size = 0x8, scoped, tag = 'scoped memory for tpu_custom_call.1']
    #allocation11 [shape = 'u8[32768]{0}', space=vmem, size = 0x8000, scoped, tag = 'input window, operand 2, single buffered']
    #allocation12 [shape = 'u8[294912]{0}', space=vmem, size = 0x48000, scoped, tag = 'input window, operand 5, single buffered']
    #allocation13 [shape = 's32[1]{0}', space=sflag, size = 0x4, scoped, tag = 'scoped memory for tpu_custom_call.1']
    #allocation14 [shape = 'u8[65536]{0}', space=vmem, size = 0x10000, scoped, tag = 'input window, operand 7, single buffered']
    #allocation15 [shape = 'u8[622592]{0}', space=vmem, size = 0x98000, scoped, tag = 'input window, operand 10, single buffered']
    #allocation16 [shape = 's32[1]{0}', space=sflag, size = 0x4, scoped, tag = 'scoped memory for tpu_custom_call.1']
    #allocation17 [shape = 'u8[262144]{0}', space=vmem, size = 0x40000, scoped, tag = 'output window, operand 0']
    %17 = vsyncpa [#allocation7], 0
    %s18 = scalar_lea.sflag [#allocation7], 1
    %19 = vsyncpa %s18, 0
    %20 = vsyncpa [#allocation10], 0
    %s21 = scalar_lea.sflag [#allocation10], 1
    %22 = vsyncpa %s21, 0
    %23 = vsyncpa [#allocation13], 0
    %24 = vsyncpa [#allocation16], 0
    %25 = vsyncpa [#allocation8], 0
    %s26 = scalar_lea.sflag [#allocation8], 1
    %27 = vsyncpa %s26, 0
    loop: start=0, step=1, limit=4
    $region2: #{tpu_custom_call.1} parent=1 // loop_pre_header
      _
    $region3: #{tpu_custom_call.1} parent=1 // loop_header
      %s29 = sphi 0, %s33
      %p30 = scmp.ge.s32.totalorder %s29, 4
      %s39 = sphi 0, %s41
      %s42 = sphi 0, %s39
      %s43 = sphi 0, %s42
      %s59 = sphi 0, %s43
      %s65 = sphi 0, %s67
      %s68 = sphi 0, %s65
      %s69 = sphi 0, %s68
      %s85 = sphi 0, %s69
      %s89 = sphi 0, %s89
      %s91 = sphi 0, %s89
      %s92 = sphi 0, %s91
      %s106 = sphi 0, %s92
      %s110 = sphi 0, %s110
      %s112 = sphi 0, %s110
      %s113 = sphi 0, %s112
      %s127 = sphi 0, %s113
      %s131 = sphi 0, %s131
      %s133 = sphi 0, %s131
      %s134 = sphi 0, %s133
      %s148 = sphi 0, %s134
      %s152 = sphi 0, %s152
      %s154 = sphi 0, %s152
      %s155 = sphi 0, %s154
      %s169 = sphi 0, %s155
      %s173 = sphi 0, %s173
      %s175 = sphi 0, %s173
      %s176 = sphi 0, %s175
      %s190 = sphi 0, %s176
      %s194 = sphi 0, %s194
      %s196 = sphi 0, %s194
      %s197 = sphi 0, %s196
      %s211 = sphi 0, %s197
      %s215 = sphi 0, %s215
      %s217 = sphi 0, %s215
      %s218 = sphi 0, %s217
      %s232 = sphi 0, %s218
      %s236 = sphi 0, %s236
      %s238 = sphi 0, %s236
      %s239 = sphi 0, %s238
      %s253 = sphi 0, %s239
      %s257 = sphi 0, %s257
      %s259 = sphi 0, %s257
      %s260 = sphi 0, %s259
      %s274 = sphi 0, %s260
      %s278 = sphi 0, %s278
      %s280 = sphi 0, %s278
      %s281 = sphi 0, %s280
      %s295 = sphi 0, %s281
      %s301 = sphi 0, %s303
      %s304 = sphi 0, %s301
      %s305 = sphi 0, %s304
      %s321 = sphi 0, %s305
    $region4: #{tpu_custom_call.1} parent=1 // loop_header_branch
      %32 = sbr.rel (%p30) target = $region8
    $region5: #{tpu_custom_call.1} parent=1 // loop_body
      %s34 = ssub.s32 %s29, 1
      %s35 = ssub.s32 %s29, 2
      %s36 = sadd.s32 %s29, 1
      %s37 = ssub.s32 %s29, %s36
      %p38 = scmp.eq.s32.totalorder %s37, 0
      %s40 = sadd.s32 %s39, 1
      %s41 = scalar_select %p38, %s39, %s40
      %p44 = pneg %p38
      %p45 = scmp.eq.s32.totalorder %s29, 1
      %p46 = por %p44, %p45
      %p47 = scmp.ne.s32.totalorder %s39, %s42
      %p48 = scmp.eq.s32.totalorder %s29, 0
      %p49 = por %p47, %p48
      %p50 = scmp.ne.s32.totalorder %s39, %s42
      %p51 = scmp.eq.s32.totalorder %s34, 1
      %p52 = por %p50, %p51
      %p53 = scmp.ne.s32.totalorder %s42, %s43
      %p54 = scmp.eq.s32.totalorder %s34, 0
      %p55 = por %p53, %p54
      %p56 = scmp.ne.s32.totalorder %s42, %s43
      %p57 = scmp.eq.s32.totalorder %s35, 1
      %p58 = por %p56, %p57
      %p60 = scmp.ne.s32.totalorder %s43, %s59
      %p61 = scmp.eq.s32.totalorder %s35, 0
      %p62 = por %p60, %p61
      %s63 = ssub.s32 %s29, %s36
      %p64 = scmp.eq.s32.totalorder %s63, 0
      %s66 = sadd.s32 %s65, 1
      %s67 = scalar_select %p64, %s65, %s66
      %p70 = pneg %p64
      %p71 = scmp.eq.s32.totalorder %s29, 1
      %p72 = por %p70, %p71
      %p73 = scmp.ne.s32.totalorder %s65, %s68
      %p74 = scmp.eq.s32.totalorder %s29, 0
      %p75 = por %p73, %p74
      %p76 = scmp.ne.s32.totalorder %s65, %s68
      %p77 = scmp.eq.s32.totalorder %s34, 1
      %p78 = por %p76, %p77
      %p79 = scmp.ne.s32.totalorder %s68, %s69
      %p80 = scmp.eq.s32.totalorder %s34, 0
      %p81 = por %p79, %p80
      %p82 = scmp.ne.s32.totalorder %s68, %s69
      %p83 = scmp.eq.s32.totalorder %s35, 1
      %p84 = por %p82, %p83
      %p86 = scmp.ne.s32.totalorder %s69, %s85
      %p87 = scmp.eq.s32.totalorder %s35, 0
      %p88 = por %p86, %p87
      %s90 = sadd.s32 %s89, 1
      %p93 = scmp.eq.s32.totalorder %s29, 1
      %p94 = scmp.ne.s32.totalorder %s89, %s91
      %p95 = scmp.eq.s32.totalorder %s29, 0
      %p96 = por %p94, %p95
      %p97 = scmp.ne.s32.totalorder %s89, %s91
      %p98 = scmp.eq.s32.totalorder %s34, 1
      %p99 = por %p97, %p98
      %p100 = scmp.ne.s32.totalorder %s91, %s92
      %p101 = scmp.eq.s32.totalorder %s34, 0
      %p102 = por %p100, %p101
      %p103 = scmp.ne.s32.totalorder %s91, %s92
      %p104 = scmp.eq.s32.totalorder %s35, 1
      %p105 = por %p103, %p104
      %p107 = scmp.ne.s32.totalorder %s92, %s106
      %p108 = scmp.eq.s32.totalorder %s35, 0
      %p109 = por %p107, %p108
      %s111 = sadd.s32 %s110, 1
      %p114 = scmp.eq.s32.totalorder %s29, 1
      %p115 = scmp.ne.s32.totalorder %s110, %s112
      %p116 = scmp.eq.s32.totalorder %s29, 0
      %p117 = por %p115, %p116
      %p118 = scmp.ne.s32.totalorder %s110, %s112
      %p119 = scmp.eq.s32.totalorder %s34, 1
      %p120 = por %p118, %p119
      %p121 = scmp.ne.s32.totalorder %s112, %s113
      %p122 = scmp.eq.s32.totalorder %s34, 0
      %p123 = por %p121, %p122
      %p124 = scmp.ne.s32.totalorder %s112, %s113
      %p125 = scmp.eq.s32.totalorder %s35, 1
      %p126 = por %p124, %p125
      %p128 = scmp.ne.s32.totalorder %s113, %s127
      %p129 = scmp.eq.s32.totalorder %s35, 0
      %p130 = por %p128, %p129
      %s132 = sadd.s32 %s131, 1
      %p135 = scmp.eq.s32.totalorder %s29, 1
      %p136 = scmp.ne.s32.totalorder %s131, %s133
      %p137 = scmp.eq.s32.totalorder %s29, 0
      %p138 = por %p136, %p137
      %p139 = scmp.ne.s32.totalorder %s131, %s133
      %p140 = scmp.eq.s32.totalorder %s34, 1
      %p141 = por %p139, %p140
      %p142 = scmp.ne.s32.totalorder %s133, %s134
      %p143 = scmp.eq.s32.totalorder %s34, 0
      %p144 = por %p142, %p143
      %p145 = scmp.ne.s32.totalorder %s133, %s134
      %p146 = scmp.eq.s32.totalorder %s35, 1
      %p147 = por %p145, %p146
      %p149 = scmp.ne.s32.totalorder %s134, %s148
      %p150 = scmp.eq.s32.totalorder %s35, 0
      %p151 = por %p149, %p150
      %s153 = sadd.s32 %s152, 1
      %p156 = scmp.eq.s32.totalorder %s29, 1
      %p157 = scmp.ne.s32.totalorder %s152, %s154
      %p158 = scmp.eq.s32.totalorder %s29, 0
      %p159 = por %p157, %p158
      %p160 = scmp.ne.s32.totalorder %s152, %s154
      %p161 = scmp.eq.s32.totalorder %s34, 1
      %p162 = por %p160, %p161
      %p163 = scmp.ne.s32.totalorder %s154, %s155
      %p164 = scmp.eq.s32.totalorder %s34, 0
      %p165 = por %p163, %p164
      %p166 = scmp.ne.s32.totalorder %s154, %s155
      %p167 = scmp.eq.s32.totalorder %s35, 1
      %p168 = por %p166, %p167
      %p170 = scmp.ne.s32.totalorder %s155, %s169
      %p171 = scmp.eq.s32.totalorder %s35, 0
      %p172 = por %p170, %p171
      %s174 = sadd.s32 %s173, 1
      %p177 = scmp.eq.s32.totalorder %s29, 1
      %p178 = scmp.ne.s32.totalorder %s173, %s175
      %p179 = scmp.eq.s32.totalorder %s29, 0
      %p180 = por %p178, %p179
      %p181 = scmp.ne.s32.totalorder %s173, %s175
      %p182 = scmp.eq.s32.totalorder %s34, 1
      %p183 = por %p181, %p182
      %p184 = scmp.ne.s32.totalorder %s175, %s176
      %p185 = scmp.eq.s32.totalorder %s34, 0
      %p186 = por %p184, %p185
      %p187 = scmp.ne.s32.totalorder %s175, %s176
      %p188 = scmp.eq.s32.totalorder %s35, 1
      %p189 = por %p187, %p188
      %p191 = scmp.ne.s32.totalorder %s176, %s190
      %p192 = scmp.eq.s32.totalorder %s35, 0
      %p193 = por %p191, %p192
      %s195 = sadd.s32 %s194, 1
      %p198 = scmp.eq.s32.totalorder %s29, 1
      %p199 = scmp.ne.s32.totalorder %s194, %s196
      %p200 = scmp.eq.s32.totalorder %s29, 0
      %p201 = por %p199, %p200
      %p202 = scmp.ne.s32.totalorder %s194, %s196
      %p203 = scmp.eq.s32.totalorder %s34, 1
      %p204 = por %p202, %p203
      %p205 = scmp.ne.s32.totalorder %s196, %s197
      %p206 = scmp.eq.s32.totalorder %s34, 0
      %p207 = por %p205, %p206
      %p208 = scmp.ne.s32.totalorder %s196, %s197
      %p209 = scmp.eq.s32.totalorder %s35, 1
      %p210 = por %p208, %p209
      %p212 = scmp.ne.s32.totalorder %s197, %s211
      %p213 = scmp.eq.s32.totalorder %s35, 0
      %p214 = por %p212, %p213
      %s216 = sadd.s32 %s215, 1
      %p219 = scmp.eq.s32.totalorder %s29, 1
      %p220 = scmp.ne.s32.totalorder %s215, %s217
      %p221 = scmp.eq.s32.totalorder %s29, 0
      %p222 = por %p220, %p221
      %p223 = scmp.ne.s32.totalorder %s215, %s217
      %p224 = scmp.eq.s32.totalorder %s34, 1
      %p225 = por %p223, %p224
      %p226 = scmp.ne.s32.totalorder %s217, %s218
      %p227 = scmp.eq.s32.totalorder %s34, 0
      %p228 = por %p226, %p227
      %p229 = scmp.ne.s32.totalorder %s217, %s218
      %p230 = scmp.eq.s32.totalorder %s35, 1
      %p231 = por %p229, %p230
      %p233 = scmp.ne.s32.totalorder %s218, %s232
      %p234 = scmp.eq.s32.totalorder %s35, 0
      %p235 = por %p233, %p234
      %s237 = sadd.s32 %s236, 1
      %p240 = scmp.eq.s32.totalorder %s29, 1
      %p241 = scmp.ne.s32.totalorder %s236, %s238
      %p242 = scmp.eq.s32.totalorder %s29, 0
      %p243 = por %p241, %p242
      %p244 = scmp.ne.s32.totalorder %s236, %s238
      %p245 = scmp.eq.s32.totalorder %s34, 1
      %p246 = por %p244, %p245
      %p247 = scmp.ne.s32.totalorder %s238, %s239
      %p248 = scmp.eq.s32.totalorder %s34, 0
      %p249 = por %p247, %p248
      %p250 = scmp.ne.s32.totalorder %s238, %s239
      %p251 = scmp.eq.s32.totalorder %s35, 1
      %p252 = por %p250, %p251
      %p254 = scmp.ne.s32.totalorder %s239, %s253
      %p255 = scmp.eq.s32.totalorder %s35, 0
      %p256 = por %p254, %p255
      %s258 = sadd.s32 %s257, 1
      %p261 = scmp.eq.s32.totalorder %s29, 1
      %p262 = scmp.ne.s32.totalorder %s257, %s259
      %p263 = scmp.eq.s32.totalorder %s29, 0
      %p264 = por %p262, %p263
      %p265 = scmp.ne.s32.totalorder %s257, %s259
      %p266 = scmp.eq.s32.totalorder %s34, 1
      %p267 = por %p265, %p266
      %p268 = scmp.ne.s32.totalorder %s259, %s260
      %p269 = scmp.eq.s32.totalorder %s34, 0
      %p270 = por %p268, %p269
      %p271 = scmp.ne.s32.totalorder %s259, %s260
      %p272 = scmp.eq.s32.totalorder %s35, 1
      %p273 = por %p271, %p272
      %p275 = scmp.ne.s32.totalorder %s260, %s274
      %p276 = scmp.eq.s32.totalorder %s35, 0
      %p277 = por %p275, %p276
      %s279 = sadd.s32 %s278, 1
      %p282 = scmp.eq.s32.totalorder %s29, 1
      %p283 = scmp.ne.s32.totalorder %s278, %s280
      %p284 = scmp.eq.s32.totalorder %s29, 0
      %p285 = por %p283, %p284
      %p286 = scmp.ne.s32.totalorder %s278, %s280
      %p287 = scmp.eq.s32.totalorder %s34, 1
      %p288 = por %p286, %p287
      %p289 = scmp.ne.s32.totalorder %s280, %s281
      %p290 = scmp.eq.s32.totalorder %s34, 0
      %p291 = por %p289, %p290
      %p292 = scmp.ne.s32.totalorder %s280, %s281
      %p293 = scmp.eq.s32.totalorder %s35, 1
      %p294 = por %p292, %p293
      %p296 = scmp.ne.s32.totalorder %s281, %s295
      %p297 = scmp.eq.s32.totalorder %s35, 0
      %p298 = por %p296, %p297
      %s299 = ssub.s32 %s29, %s36
      %p300 = scmp.eq.s32.totalorder %s299, 0
      %s302 = sadd.s32 %s301, 1
      %s303 = scalar_select %p300, %s301, %s302
      %p306 = pneg %p300
      %p307 = scmp.eq.s32.totalorder %s29, 1
      %p308 = por %p306, %p307
      %p309 = scmp.ne.s32.totalorder %s301, %s304
      %p310 = scmp.eq.s32.totalorder %s29, 0
      %p311 = por %p309, %p310
      %p312 = scmp.ne.s32.totalorder %s301, %s304
      %p313 = scmp.eq.s32.totalorder %s34, 1
      %p314 = por %p312, %p313
      %p315 = scmp.ne.s32.totalorder %s304, %s305
      %p316 = scmp.eq.s32.totalorder %s34, 0
      %p317 = por %p315, %p316
      %p318 = scmp.ne.s32.totalorder %s304, %s305
      %p319 = scmp.eq.s32.totalorder %s35, 1
      %p320 = por %p318, %p319
      %p322 = scmp.ne.s32.totalorder %s305, %s321
      %p323 = scmp.eq.s32.totalorder %s35, 0
      %p324 = por %p322, %p323
      %p325 = scmp.le.s32.totalorder 1, %s29
      %p326 = scmp.lt.s32.totalorder %s29, 3
      %p327 = pnand %p325, %p326
      %p328 = pneg %p327
      // Predicated region
      $region9: #{tpu_custom_call.1} parent=5 // pred_check
        _
      $region10: #{tpu_custom_call.1} parent=5 // pred_check_branch
        %330 = sbr.rel (%p327) target = $region12
      $region11: #{tpu_custom_call.1} parent=5 // pred_region
        %s331 = ssub.s32 %s29, 1
        // Predicated region
        $region13: #{tpu_custom_call.1} parent=11 // pred_check
          %p332 = pneg %p102
        $region14: #{tpu_custom_call.1} parent=11 // pred_check_branch
          %334 = sbr.rel (%p332) target = $region16
        $region15: #{tpu_custom_call.1} parent=11 // pred_region
          %s336 = ssub.s32 1024, 1024
          %337 = vsyncadd [#allocation10], %s336
          %s338 = sshll.u32 [#allocation11], 4
          %s339 = int_to_ptr.vmem [resolvable:$true] %s338
          %344 = dma.hbm_to_vmem [thread:$0]  %s2, 1024, %s339, [#allocation10], 128, 128, 8
        $region16: #{tpu_custom_call.1} parent=11 // pred_fallthru
          _
        // Predicated region
        $region17: #{tpu_custom_call.1} parent=11 // pred_check
          %p345 = pneg %p123
        $region18: #{tpu_custom_call.1} parent=11 // pred_check_branch
          %347 = sbr.rel (%p345) target = $region20
        $region19: #{tpu_custom_call.1} parent=11 // pred_region
          _
        $region20: #{tpu_custom_call.1} parent=11 // pred_fallthru
          _
        // Predicated region
        $region21: #{tpu_custom_call.1} parent=11 // pred_check
          %p348 = pneg %p144
        $region22: #{tpu_custom_call.1} parent=11 // pred_check_branch
          %350 = sbr.rel (%p348) target = $region24
        $region23: #{tpu_custom_call.1} parent=11 // pred_region
          _
        $region24: #{tpu_custom_call.1} parent=11 // pred_fallthru
          _
        // Predicated region
        $region25: #{tpu_custom_call.1} parent=11 // pred_check
          %p351 = pneg %p165
        $region26: #{tpu_custom_call.1} parent=11 // pred_check_branch
          %353 = sbr.rel (%p351) target = $region28
        $region27: #{tpu_custom_call.1} parent=11 // pred_region
          %s355 = ssub.s32 9216, 9216
          %356 = vsyncadd [#allocation13], %s355
          %s357 = sshll.u32 [#allocation12], 4
          %s358 = int_to_ptr.vmem [resolvable:$true] %s357
          %363 = dma.hbm_to_vmem [thread:$0]  %s5, 9216, %s358, [#allocation13], 128, 128, 8
        $region28: #{tpu_custom_call.1} parent=11 // pred_fallthru
          _
        // Predicated region
        $region29: #{tpu_custom_call.1} parent=11 // pred_check
          %p364 = pneg %p186
        $region30: #{tpu_custom_call.1} parent=11 // pred_check_branch
          %366 = sbr.rel (%p364) target = $region32
        $region31: #{tpu_custom_call.1} parent=11 // pred_region
          _
        $region32: #{tpu_custom_call.1} parent=11 // pred_fallthru
          _
        // Predicated region
        $region33: #{tpu_custom_call.1} parent=11 // pred_check
          %p367 = pneg %p207
        $region34: #{tpu_custom_call.1} parent=11 // pred_check_branch
          %369 = sbr.rel (%p367) target = $region36
        $region35: #{tpu_custom_call.1} parent=11 // pred_region
          %s371 = ssub.s32 2048, 2048
          %372 = vsyncadd [#allocation13], %s371
          %s373 = sshll.u32 [#allocation14], 4
          %s374 = int_to_ptr.vmem [resolvable:$true] %s373
          %379 = dma.hbm_to_vmem [thread:$0]  %s7, 2048, %s374, [#allocation13], 128, 128, 8
        $region36: #{tpu_custom_call.1} parent=11 // pred_fallthru
          _
        // Predicated region
        $region37: #{tpu_custom_call.1} parent=11 // pred_check
          %p380 = pneg %p228
        $region38: #{tpu_custom_call.1} parent=11 // pred_check_branch
          %382 = sbr.rel (%p380) target = $region40
        $region39: #{tpu_custom_call.1} parent=11 // pred_region
          _
        $region40: #{tpu_custom_call.1} parent=11 // pred_fallthru
          _
        // Predicated region
        $region41: #{tpu_custom_call.1} parent=11 // pred_check
          %p383 = pneg %p249
        $region42: #{tpu_custom_call.1} parent=11 // pred_check_branch
          %385 = sbr.rel (%p383) target = $region44
        $region43: #{tpu_custom_call.1} parent=11 // pred_region
          _
        $region44: #{tpu_custom_call.1} parent=11 // pred_fallthru
          _
        // Predicated region
        $region45: #{tpu_custom_call.1} parent=11 // pred_check
          %p386 = pneg %p270
        $region46: #{tpu_custom_call.1} parent=11 // pred_check_branch
          %388 = sbr.rel (%p386) target = $region48
        $region47: #{tpu_custom_call.1} parent=11 // pred_region
          %s390 = ssub.s32 19456, 19456
          %391 = vsyncadd [#allocation16], %s390
          %s392 = sshll.u32 [#allocation15], 4
          %s393 = int_to_ptr.vmem [resolvable:$true] %s392
          %398 = dma.hbm_to_vmem [thread:$0]  %s10, 19456, %s393, [#allocation16], 128, 128, 8
        $region48: #{tpu_custom_call.1} parent=11 // pred_fallthru
          _
        // Predicated region
        $region49: #{tpu_custom_call.1} parent=11 // pred_check
          %p399 = pneg %p291
        $region50: #{tpu_custom_call.1} parent=11 // pred_check_branch
          %401 = sbr.rel (%p399) target = $region52
        $region51: #{tpu_custom_call.1} parent=11 // pred_region
          _
        $region52: #{tpu_custom_call.1} parent=11 // pred_fallthru
          _
      $region12: #{tpu_custom_call.1} parent=5 // pred_fallthru
        _
      %p402 = scmp.lt.s32.totalorder %s29, 2
      // Predicated region
      $region53: #{tpu_custom_call.1} parent=5 // pred_check
        %p403 = pneg %p402
      $region54: #{tpu_custom_call.1} parent=5 // pred_check_branch
        %405 = sbr.rel (%p403) target = $region56
      $region55: #{tpu_custom_call.1} parent=5 // pred_region
        // Predicated region
        $region57: #{tpu_custom_call.1} parent=55 // pred_check
          %p406 = pneg %p49
        $region58: #{tpu_custom_call.1} parent=55 // pred_check_branch
          %408 = sbr.rel (%p406) target = $region60
        $region59: #{tpu_custom_call.1} parent=55 // pred_region
          %s409 = sand.u32 %s39, 1
          %s410 = scalar_lea.sflag [#allocation7], %s409
          %s411 = sand.u32 %s39, 1
          %s412 = smul.addr %s411, 256
          %s413 = scalar_lea.vmem [#allocation6], %s412
          %s414 = smul.u32 4, %s29
          %s416 = ssub.s32 4096, 4096
          %417 = vsyncadd %s410, %s416
          %s418 = smul.addr %s414, 8
          %s419 = smul.addr %s418, 128
          %s420 = scalar_lea.hbm %s0, %s419
          %s421 = sshll.u32 %s413, 4
          %s422 = int_to_ptr.vmem [resolvable:$true] %s421
          %427 = dma.hbm_to_vmem [thread:$0]  %s420, 4096, %s422, %s410, 128, 128, 8
        $region60: #{tpu_custom_call.1} parent=55 // pred_fallthru
          _
        // Predicated region
        $region61: #{tpu_custom_call.1} parent=55 // pred_check
          %p428 = pneg %p75
        $region62: #{tpu_custom_call.1} parent=55 // pred_check_branch
          %430 = sbr.rel (%p428) target = $region64
        $region63: #{tpu_custom_call.1} parent=55 // pred_region
          %s431 = sand.u32 %s29, 1
          %s432 = scalar_lea.sflag [#allocation10], %s431
          %s433 = sand.u32 %s65, 1
          %s434 = smul.addr %s433, 4
          %s435 = scalar_lea.vmem [#allocation9], %s434
          %s436 = smul.u32 4, %s29
          %s438 = ssub.s32 64, 64
          %439 = vsyncadd %s432, %s438
          %s440 = smul.addr %s436, 16
          %s441 = scalar_lea.hbm %s1, %s440
          %s442 = sshll.u32 %s435, 4
          %s443 = int_to_ptr.vmem [resolvable:$true] %s442
          %448 = dma.hbm_to_vmem [thread:$0]  %s441, 64, %s443, %s432, 16, 16, 1
        $region64: #{tpu_custom_call.1} parent=55 // pred_fallthru
          _
      $region56: #{tpu_custom_call.1} parent=5 // pred_fallthru
        _
      %p449 = scmp.le.s32.totalorder 1, %s29
      %p450 = scmp.lt.s32.totalorder %s29, 3
      %p451 = pnand %p449, %p450
      %p452 = pneg %p451
      // Predicated region
      $region65: #{tpu_custom_call.1} parent=5 // pred_check
        _
      $region66: #{tpu_custom_call.1} parent=5 // pred_check_branch
        %454 = sbr.rel (%p451) target = $region68
      $region67: #{tpu_custom_call.1} parent=5 // pred_region
        %s455 = ssub.s32 %s29, 1
        %s456 = sand.u32 %s42, 1
        %s457 = scalar_lea.sflag [#allocation7], %s456
        %s458 = sand.u32 %s42, 1
        %s459 = smul.addr %s458, 256
        %s460 = scalar_lea.vmem [#allocation6], %s459
        // Predicated region
        $region69: #{tpu_custom_call.1} parent=67 // pred_check
          %p461 = pneg %p55
        $region70: #{tpu_custom_call.1} parent=67 // pred_check_branch
          %463 = sbr.rel (%p461) target = $region72
        $region71: #{tpu_custom_call.1} parent=67 // pred_region
          %464 = dma.done %s457, 4096
        $region72: #{tpu_custom_call.1} parent=67 // pred_fallthru
          _
        %s465 = sand.u32 %s34, 1
        %s466 = scalar_lea.sflag [#allocation10], %s465
        %s467 = sand.u32 %s68, 1
        %s468 = smul.addr %s467, 4
        %s469 = scalar_lea.vmem [#allocation9], %s468
        // Predicated region
        $region73: #{tpu_custom_call.1} parent=67 // pred_check
          %p470 = pneg %p81
        $region74: #{tpu_custom_call.1} parent=67 // pred_check_branch
          %472 = sbr.rel (%p470) target = $region76
        $region75: #{tpu_custom_call.1} parent=67 // pred_region
          %473 = dma.done %s466, 64
        $region76: #{tpu_custom_call.1} parent=67 // pred_fallthru
          _
        // Predicated region
        $region77: #{tpu_custom_call.1} parent=67 // pred_check
          %p474 = pneg %p102
        $region78: #{tpu_custom_call.1} parent=67 // pred_check_branch
          %476 = sbr.rel (%p474) target = $region80
        $region79: #{tpu_custom_call.1} parent=67 // pred_region
          %477 = dma.done [#allocation10], 1024
        $region80: #{tpu_custom_call.1} parent=67 // pred_fallthru
          _
        // Predicated region
        $region81: #{tpu_custom_call.1} parent=67 // pred_check
          %p478 = pneg %p165
        $region82: #{tpu_custom_call.1} parent=67 // pred_check_branch
          %480 = sbr.rel (%p478) target = $region84
        $region83: #{tpu_custom_call.1} parent=67 // pred_region
          %481 = dma.done [#allocation13], 9216
        $region84: #{tpu_custom_call.1} parent=67 // pred_fallthru
          _
        // Predicated region
        $region85: #{tpu_custom_call.1} parent=67 // pred_check
          %p482 = pneg %p207
        $region86: #{tpu_custom_call.1} parent=67 // pred_check_branch
          %484 = sbr.rel (%p482) target = $region88
        $region87: #{tpu_custom_call.1} parent=67 // pred_region
          %485 = dma.done [#allocation13], 2048
        $region88: #{tpu_custom_call.1} parent=67 // pred_fallthru
          _
        // Predicated region
        $region89: #{tpu_custom_call.1} parent=67 // pred_check
          %p486 = pneg %p270
        $region90: #{tpu_custom_call.1} parent=67 // pred_check_branch
          %488 = sbr.rel (%p486) target = $region92
        $region91: #{tpu_custom_call.1} parent=67 // pred_region
          %489 = dma.done [#allocation16], 19456
        $region92: #{tpu_custom_call.1} parent=67 // pred_fallthru
          _
        %s490 = sand.u32 %s42, 1
        %s491 = scalar_lea.sflag [#allocation7], %s490
        %s492 = sand.u32 %s42, 1
        %s493 = smul.addr %s492, 256
        %s494 = scalar_lea.vmem [#allocation6], %s493
        %p495 = pneg %p55
        %p496 = pneg %p52
        %s497 = sand.u32 %s34, 1
        %s498 = scalar_lea.sflag [#allocation10], %s497
        %s499 = sand.u32 %s68, 1
        %s500 = smul.addr %s499, 4
        %s501 = scalar_lea.vmem [#allocation9], %s500
        %p502 = pneg %p81
        %p503 = pneg %p78
        %p504 = pneg %p102
        %p505 = pneg %p99
        %p506 = pneg %p123
        %p507 = pneg %p120
        %p508 = pneg %p144
        %p509 = pneg %p141
        %p510 = pneg %p165
        %p511 = pneg %p162
        %p512 = pneg %p186
        %p513 = pneg %p183
        %p514 = pneg %p207
        %p515 = pneg %p204
        %p516 = pneg %p228
        %p517 = pneg %p225
        %p518 = pneg %p249
        %p519 = pneg %p246
        %p520 = pneg %p270
        %p521 = pneg %p267
        %p522 = pneg %p291
        %p523 = pneg %p288
        %p524 = pneg %p317
        %p525 = pneg %p314
        %s526 = sand.u32 %s304, 1
        %s527 = scalar_lea.sflag [#allocation8], %s526
        %s528 = sand.u32 %s304, 1
        %s529 = smul.addr %s528, 256
        %s530 = scalar_lea.vmem [#allocation17], %s529
        %s531 = smul.u32 4, %s34
        %s532 = smul.u32 4, %s34
        %s533 = smul.u32 4, %s34
        %v534 = vld [vmem:[%s460] sm:$0xff]
        %v535 = vld [vmem:[%s460 + $0x8] sm:$0xff]
        %v536 = vld [vmem:[%s460 + $0x10] sm:$0xff]
        %v537 = vld [vmem:[%s460 + $0x18] sm:$0xff]
        %v538 = vld [vmem:[%s460 + $0x20] sm:$0xff]
        %v539 = vld [vmem:[%s460 + $0x28] sm:$0xff]
        %v540 = vld [vmem:[%s460 + $0x30] sm:$0xff]
        %v541 = vld [vmem:[%s460 + $0x38] sm:$0xff]
        %v542 = vld [vmem:[%s460 + $0x40] sm:$0xff]
        %v543 = vld [vmem:[%s460 + $0x48] sm:$0xff]
        %v544 = vld [vmem:[%s460 + $0x50] sm:$0xff]
        %v545 = vld [vmem:[%s460 + $0x58] sm:$0xff]
        %v546 = vld [vmem:[%s460 + $0x60] sm:$0xff]
        %v547 = vld [vmem:[%s460 + $0x68] sm:$0xff]
        %v548 = vld [vmem:[%s460 + $0x70] sm:$0xff]
        %v549 = vld [vmem:[%s460 + $0x78] sm:$0xff]
        %v550 = vld [vmem:[%s460 + $0x80] sm:$0xff]
        %v551 = vld [vmem:[%s460 + $0x88] sm:$0xff]
        %v552 = vld [vmem:[%s460 + $0x90] sm:$0xff]
        %v553 = vld [vmem:[%s460 + $0x98] sm:$0xff]
        %v554 = vld [vmem:[%s460 + $0xa0] sm:$0xff]
        %v555 = vld [vmem:[%s460 + $0xa8] sm:$0xff]
        %v556 = vld [vmem:[%s460 + $0xb0] sm:$0xff]
        %v557 = vld [vmem:[%s460 + $0xb8] sm:$0xff]
        %v558 = vld [vmem:[%s460 + $0xc0] sm:$0xff]
        %v559 = vld [vmem:[%s460 + $0xc8] sm:$0xff]
        %v560 = vld [vmem:[%s460 + $0xd0] sm:$0xff]
        %v561 = vld [vmem:[%s460 + $0xd8] sm:$0xff]
        %v562 = vld [vmem:[%s460 + $0xe0] sm:$0xff]
        %v563 = vld [vmem:[%s460 + $0xe8] sm:$0xff]
        %v564 = vld [vmem:[%s460 + $0xf0] sm:$0xff]
        %v565 = vld [vmem:[%s460 + $0xf8] sm:$0xff]
        %v566 = vld [vmem:[#allocation11] sm:$0xff]
        %v567 = vld [vmem:[#allocation11 + $0x8] sm:$0xff]
        %v568 = vld [vmem:[#allocation11 + $0x10] sm:$0xff]
        %v569 = vld [vmem:[#allocation11 + $0x18] sm:$0xff]
        %v570 = vld [vmem:[#allocation11 + $0x20] sm:$0xff]
        %v571 = vld [vmem:[#allocation11 + $0x28] sm:$0xff]
        %v572 = vld [vmem:[#allocation11 + $0x30] sm:$0xff]
        %v573 = vld [vmem:[#allocation11 + $0x38] sm:$0xff]
        %v574 = vld [vmem:[%s3] sm:$0x1]
        %v575 = vld [vmem:[%s4] sm:$0x1]
        %vm576 = vcmask 523264
        %v577 = vsel %vm576, %v534, 0.0
        %v578 = vsel %vm576, %v535, 0.0
        %v579 = vadd.f32 %v577, %v578
        %v580 = vsel %vm576, %v536, 0.0
        %v581 = vadd.f32 %v579, %v580
        %v582 = vsel %vm576, %v537, 0.0
        %v583 = vadd.f32 %v581, %v582
        %v584 = vsel %vm576, %v538, 0.0
        %v585 = vadd.f32 %v583, %v584
        %v586 = vsel %vm576, %v539, 0.0
        %v587 = vadd.f32 %v585, %v586
        %v588 = vsel %vm576, %v540, 0.0
        %v589 = vadd.f32 %v587, %v588
        %v590 = vsel %vm576, %v541, 0.0
        %v591 = vadd.f32 %v589, %v590
        %v592 = vrot.slane %v591, 4
        %v593 = vadd.f32 %v591, %v592
        %v594 = vrot.slane %v593, 2
        %v595 = vadd.f32 %v593, %v594
        %v596 = vrot.slane %v595, 1
        %v597 = vadd.f32 %v595, %v596
        %v598 = vsel %vm576, %v542, 0.0
        %v599 = vsel %vm576, %v543, 0.0
        %v600 = vadd.f32 %v598, %v599
        %v601 = vsel %vm576, %v544, 0.0
        %v602 = vadd.f32 %v600, %v601
        %v603 = vsel %vm576, %v545, 0.0
        %v604 = vadd.f32 %v602, %v603
        %v605 = vsel %vm576, %v546, 0.0
        %v606 = vadd.f32 %v604, %v605
        %v607 = vsel %vm576, %v547, 0.0
        %v608 = vadd.f32 %v606, %v607
        %v609 = vsel %vm576, %v548, 0.0
        %v610 = vadd.f32 %v608, %v609
        %v611 = vsel %vm576, %v549, 0.0
        %v612 = vadd.f32 %v610, %v611
        %v613 = vrot.slane %v612, 4
        %v614 = vadd.f32 %v612, %v613
        %v615 = vrot.slane %v614, 2
        %v616 = vadd.f32 %v614, %v615
        %v617 = vrot.slane %v616, 1
        %v618 = vadd.f32 %v616, %v617
        %v619 = vsel %vm576, %v550, 0.0
        %v620 = vsel %vm576, %v551, 0.0
        %v621 = vadd.f32 %v619, %v620
        %v622 = vsel %vm576, %v552, 0.0
        %v623 = vadd.f32 %v621, %v622
        %v624 = vsel %vm576, %v553, 0.0
        %v625 = vadd.f32 %v623, %v624
        %v626 = vsel %vm576, %v554, 0.0
        %v627 = vadd.f32 %v625, %v626
        %v628 = vsel %vm576, %v555, 0.0
        %v629 = vadd.f32 %v627, %v628
        %v630 = vsel %vm576, %v556, 0.0
        %v631 = vadd.f32 %v629, %v630
        %v632 = vsel %vm576, %v557, 0.0
        %v633 = vadd.f32 %v631, %v632
        %v634 = vrot.slane %v633, 4
        %v635 = vadd.f32 %v633, %v634
        %v636 = vrot.slane %v635, 2
        %v637 = vadd.f32 %v635, %v636
        %v638 = vrot.slane %v637, 1
        %v639 = vadd.f32 %v637, %v638
        %v640 = vsel %vm576, %v558, 0.0
        %v641 = vsel %vm576, %v559, 0.0
        %v642 = vadd.f32 %v640, %v641
        %v643 = vsel %vm576, %v560, 0.0
        %v644 = vadd.f32 %v642, %v643
        %v645 = vsel %vm576, %v561, 0.0
        %v646 = vadd.f32 %v644, %v645
        %v647 = vsel %vm576, %v562, 0.0
        %v648 = vadd.f32 %v646, %v647
        %v649 = vsel %vm576, %v563, 0.0
        %v650 = vadd.f32 %v648, %v649
        %v651 = vsel %vm576, %v564, 0.0
        %v652 = vadd.f32 %v650, %v651
        %v653 = vsel %vm576, %v565, 0.0
        %v654 = vadd.f32 %v652, %v653
        %v655 = vrot.slane %v654, 4
        %v656 = vadd.f32 %v654, %v655
        %v657 = vrot.slane %v656, 2
        %v658 = vadd.f32 %v656, %v657
        %v659 = vrot.slane %v658, 1
        %v660 = vadd.f32 %v658, %v659
        %vm665 = vcmask 1041409
        %v666 = vsel %vm665, %v618, %v597
        %vm667 = vcmask 1042434
        %v668 = vsel %vm667, %v639, %v666
        %vm669 = vcmask 1043459
        %v670 = vsel %vm669, %v660, %v668
        %v671 = vsel %vm576, %v670, 0
        %673 = vmatprep.subr.mxu0 0.0
        %674 = vmatpush1.msra.mxu0 %v566
        %675 = vmatprep.subr.mxu0 0.0
        %676 = vmatpush1.msra.mxu0 %v567
        %677 = vmatprep.subr.mxu0 0.0
        %678 = vmatpush1.msra.mxu0 %v568
        %679 = vmatprep.subr.mxu0 0.0
        %680 = vmatpush1.msra.mxu0 %v569
        %681 = vmatprep.subr.mxu0 0.0
        %682 = vmatpush1.msra.mxu0 %v570
        %683 = vmatprep.subr.mxu0 0.0
        %684 = vmatpush1.msra.mxu0 %v571
        %685 = vmatprep.subr.mxu0 0.0
        %686 = vmatpush1.msra.mxu0 %v572
        %687 = vmatprep.subr.mxu0 0.0
        %688 = vmatpush1.msra.mxu0 %v573
        %689 = vmatprep.subr.mxu0 0.0
        %690 = vmatpush1.msra.mxu0 0.0
        %691 = vmatprep.subr.mxu0 0.0
        %692 = vmatpush1.msra.mxu0 0.0
        %693 = vmatprep.subr.mxu0 0.0
        %694 = vmatpush1.msra.mxu0 0.0
        %695 = vmatprep.subr.mxu0 0.0
        %696 = vmatpush1.msra.mxu0 0.0
        %697 = vmatprep.subr.mxu0 0.0
        %698 = vmatpush1.msra.mxu0 0.0
        %699 = vmatprep.subr.mxu0 0.0
        %700 = vmatpush1.msra.mxu0 0.0
        %701 = vmatprep.subr.mxu0 0.0
        %702 = vmatpush1.msra.mxu0 0.0
        %703 = vmatprep.subr.mxu0 0.0
        %704 = vmatpush1.msra.mxu0 0.0
        %705 = vmatprep.subr.mxu0 0.0
        %706 = vmatpush1.msra.mxu0 0.0
        %707 = vmatprep.subr.mxu0 0.0
        %708 = vmatpush1.msra.mxu0 0.0
        %709 = vmatprep.subr.mxu0 0.0
        %710 = vmatpush1.msra.mxu0 0.0
        %711 = vmatprep.subr.mxu0 0.0
        %712 = vmatpush1.msra.mxu0 0.0
        %713 = vmatprep.subr.mxu0 0.0
        %714 = vmatpush1.msra.mxu0 0.0
        %715 = vmatprep.subr.mxu0 0.0
        %716 = vmatpush1.msra.mxu0 0.0
        %717 = vmatprep.subr.mxu0 0.0
        %718 = vmatpush1.msra.mxu0 0.0
        %719 = vmatprep.subr.mxu0 0.0
        %720 = vmatpush1.msra.mxu0 0.0
        %721 = vmatprep.subr.mxu0 0.0
        %722 = vmatpush1.msra.mxu0 0.0
        %723 = vmatprep.subr.mxu0 0.0
        %724 = vmatpush1.msra.mxu0 0.0
        %725 = vmatprep.subr.mxu0 0.0
        %726 = vmatpush1.msra.mxu0 0.0
        %727 = vmatprep.subr.mxu0 0.0
        %728 = vmatpush1.msra.mxu0 0.0
        %729 = vmatprep.subr.mxu0 0.0
        %730 = vmatpush1.msra.mxu0 0.0
        %731 = vmatprep.subr.mxu0 0.0
        %732 = vmatpush1.msra.mxu0 0.0
        %733 = vmatprep.subr.mxu0 0.0
        %734 = vmatpush1.msra.mxu0 0.0
        %735 = vmatprep.subr.mxu0 0.0
        %736 = vmatpush1.msra.mxu0 0.0
        %737 = vmatprep.mubr.f32.mxu0 0.0
        %738 = vmatmul.mubr.f32.gmra.mrb[0].mxu0 %v671
        %v739 = vpop.f32.mrb[0].mxu0
        %v740 = vadd.f32 0.0, %v739
        %v741 = vpop.f32.mrb[0].mxu0
        %742 = vdwg.mxu0
        %v745 = vunpack.c.l.s4 1966171168
        %v746 = vunpack.c.0.s8 %v745
        %v747 = vlaneseq
        %v748 = vshrl.u32 %v747, 7
        %v749 = vsub.s32 %v746, %v748
        %v750 = vrot.slane %v740, %v749
        %v751 = vcombine.high %v750, %v750
        %v753 = vunpack.c.l.s4 1966171168
        %v754 = vunpack.c.0.s8 %v753
        %v755 = vlaneseq
        %v756 = vshrl.u32 %v755, 7
        %v757 = vsub.s32 %v754, %v756
        %v758 = vrot.slane %v750, %v757
        %v760 = vunpack.c.l.s4 1966171168
        %v761 = vunpack.c.0.s8 %v760
        %v762 = vlaneseq
        %v763 = vshrl.u32 %v762, 7
        %v764 = vsub.s32 %v761, %v763
        %v765 = vrot.slane %v751, %v764
        %v766 = vcombine.high %v758, %v758
        %v767 = vcombine.high %v765, %v765
        %v768 = vlaneseq
        %v769 = vshrl.u32 %v768, 7
        %v770 = vsub.s32 0, %v769
        %v771 = vrot.slane %v758, %v770
        %v772 = vlaneseq
        %v773 = vshrl.u32 %v772, 7
        %v774 = vsub.s32 0, %v773
        %v775 = vrot.slane %v765, %v774
        %v776 = vlaneseq
        %v777 = vshrl.u32 %v776, 7
        %v778 = vsub.s32 0, %v777
        %v779 = vrot.slane %v766, %v778
        %v780 = vlaneseq
        %v781 = vshrl.u32 %v780, 7
        %v782 = vsub.s32 0, %v781
        %v783 = vrot.slane %v767, %v782
        %v788 = vsub.f32 %v534, %v771
        %v789 = vsub.f32 %v535, %v771
        %v790 = vsub.f32 %v536, %v771
        %v791 = vsub.f32 %v537, %v771
        %v792 = vsub.f32 %v538, %v771
        %v793 = vsub.f32 %v539, %v771
        %v794 = vsub.f32 %v540, %v771
        %v795 = vsub.f32 %v541, %v771
        %v796 = vsub.f32 %v542, %v775
        %v797 = vsub.f32 %v543, %v775
        %v798 = vsub.f32 %v544, %v775
        %v799 = vsub.f32 %v545, %v775
        %v800 = vsub.f32 %v546, %v775
        %v801 = vsub.f32 %v547, %v775
        %v802 = vsub.f32 %v548, %v775
        %v803 = vsub.f32 %v549, %v775
        %v804 = vsub.f32 %v550, %v779
        %v805 = vsub.f32 %v551, %v779
        %v806 = vsub.f32 %v552, %v779
        %v807 = vsub.f32 %v553, %v779
        %v808 = vsub.f32 %v554, %v779
        %v809 = vsub.f32 %v555, %v779
        %v810 = vsub.f32 %v556, %v779
        %v811 = vsub.f32 %v557, %v779
        %v812 = vsub.f32 %v558, %v783
        %v813 = vsub.f32 %v559, %v783
        %v814 = vsub.f32 %v560, %v783
        %v815 = vsub.f32 %v561, %v783
        %v816 = vsub.f32 %v562, %v783
        %v817 = vsub.f32 %v563, %v783
        %v818 = vsub.f32 %v564, %v783
        %v819 = vsub.f32 %v565, %v783
        %v820 = vmul.f32 %v788, %v788
        %v821 = vmul.f32 %v789, %v789
        %v822 = vmul.f32 %v790, %v790
        %v823 = vmul.f32 %v791, %v791
        %v824 = vmul.f32 %v792, %v792
        %v825 = vmul.f32 %v793, %v793
        %v826 = vmul.f32 %v794, %v794
        %v827 = vmul.f32 %v795, %v795
        %v828 = vmul.f32 %v796, %v796
        %v829 = vmul.f32 %v797, %v797
        %v830 = vmul.f32 %v798, %v798
        %v831 = vmul.f32 %v799, %v799
        %v832 = vmul.f32 %v800, %v800
        %v833 = vmul.f32 %v801, %v801
        %v834 = vmul.f32 %v802, %v802
        %v835 = vmul.f32 %v803, %v803
        %v836 = vmul.f32 %v804, %v804
        %v837 = vmul.f32 %v805, %v805
        %v838 = vmul.f32 %v806, %v806
        %v839 = vmul.f32 %v807, %v807
        %v840 = vmul.f32 %v808, %v808
        %v841 = vmul.f32 %v809, %v809
        %v842 = vmul.f32 %v810, %v810
        %v843 = vmul.f32 %v811, %v811
        %v844 = vmul.f32 %v812, %v812
        %v845 = vmul.f32 %v813, %v813
        %v846 = vmul.f32 %v814, %v814
        %v847 = vmul.f32 %v815, %v815
        %v848 = vmul.f32 %v816, %v816
        %v849 = vmul.f32 %v817, %v817
        %v850 = vmul.f32 %v818, %v818
        %v851 = vmul.f32 %v819, %v819
        %v852 = vsel %vm576, %v820, 0.0
        %v853 = vsel %vm576, %v821, 0.0
        %v854 = vadd.f32 %v852, %v853
        %v855 = vsel %vm576, %v822, 0.0
        %v856 = vadd.f32 %v854, %v855
        %v857 = vsel %vm576, %v823, 0.0
        %v858 = vadd.f32 %v856, %v857
        %v859 = vsel %vm576, %v824, 0.0
        %v860 = vadd.f32 %v858, %v859
        %v861 = vsel %vm576, %v825, 0.0
        %v862 = vadd.f32 %v860, %v861
        %v863 = vsel %vm576, %v826, 0.0
        %v864 = vadd.f32 %v862, %v863
        %v865 = vsel %vm576, %v827, 0.0
        %v866 = vadd.f32 %v864, %v865
        %v867 = vrot.slane %v866, 4
        %v868 = vadd.f32 %v866, %v867
        %v869 = vrot.slane %v868, 2
        %v870 = vadd.f32 %v868, %v869
        %v871 = vrot.slane %v870, 1
        %v872 = vadd.f32 %v870, %v871
        %v873 = vsel %vm576, %v828, 0.0
        %v874 = vsel %vm576, %v829, 0.0
        %v875 = vadd.f32 %v873, %v874
        %v876 = vsel %vm576, %v830, 0.0
        %v877 = vadd.f32 %v875, %v876
        %v878 = vsel %vm576, %v831, 0.0
        %v879 = vadd.f32 %v877, %v878
        %v880 = vsel %vm576, %v832, 0.0
        %v881 = vadd.f32 %v879, %v880
        %v882 = vsel %vm576, %v833, 0.0
        %v883 = vadd.f32 %v881, %v882
        %v884 = vsel %vm576, %v834, 0.0
        %v885 = vadd.f32 %v883, %v884
        %v886 = vsel %vm576, %v835, 0.0
        %v887 = vadd.f32 %v885, %v886
        %v888 = vrot.slane %v887, 4
        %v889 = vadd.f32 %v887, %v888
        %v890 = vrot.slane %v889, 2
        %v891 = vadd.f32 %v889, %v890
        %v892 = vrot.slane %v891, 1
        %v893 = vadd.f32 %v891, %v892
        %v894 = vsel %vm576, %v836, 0.0
        %v895 = vsel %vm576, %v837, 0.0
        %v896 = vadd.f32 %v894, %v895
        %v897 = vsel %vm576, %v838, 0.0
        %v898 = vadd.f32 %v896, %v897
        %v899 = vsel %vm576, %v839, 0.0
        %v900 = vadd.f32 %v898, %v899
        %v901 = vsel %vm576, %v840, 0.0
        %v902 = vadd.f32 %v900, %v901
        %v903 = vsel %vm576, %v841, 0.0
        %v904 = vadd.f32 %v902, %v903
        %v905 = vsel %vm576, %v842, 0.0
        %v906 = vadd.f32 %v904, %v905
        %v907 = vsel %vm576, %v843, 0.0
        %v908 = vadd.f32 %v906, %v907
        %v909 = vrot.slane %v908, 4
        %v910 = vadd.f32 %v908, %v909
        %v911 = vrot.slane %v910, 2
        %v912 = vadd.f32 %v910, %v911
        %v913 = vrot.slane %v912, 1
        %v914 = vadd.f32 %v912, %v913
        %v915 = vsel %vm576, %v844, 0.0
        %v916 = vsel %vm576, %v845, 0.0
        %v917 = vadd.f32 %v915, %v916
        %v918 = vsel %vm576, %v846, 0.0
        %v919 = vadd.f32 %v917, %v918
        %v920 = vsel %vm576, %v847, 0.0
        %v921 = vadd.f32 %v919, %v920
        %v922 = vsel %vm576, %v848, 0.0
        %v923 = vadd.f32 %v921, %v922
        %v924 = vsel %vm576, %v849, 0.0
        %v925 = vadd.f32 %v923, %v924
        %v926 = vsel %vm576, %v850, 0.0
        %v927 = vadd.f32 %v925, %v926
        %v928 = vsel %vm576, %v851, 0.0
        %v929 = vadd.f32 %v927, %v928
        %v930 = vrot.slane %v929, 4
        %v931 = vadd.f32 %v929, %v930
        %v932 = vrot.slane %v931, 2
        %v933 = vadd.f32 %v931, %v932
        %v934 = vrot.slane %v933, 1
        %v935 = vadd.f32 %v933, %v934
        %v940 = vsel %vm665, %v893, %v872
        %v941 = vsel %vm667, %v914, %v940
        %v942 = vsel %vm669, %v935, %v941
        %v943 = vsel %vm576, %v942, 0
        %945 = vmatprep.subr.mxu0 0.0
        %946 = vmatpush1.msra.mxu0 %v566
        %947 = vmatprep.subr.mxu0 0.0
        %948 = vmatpush1.msra.mxu0 %v567
        %949 = vmatprep.subr.mxu0 0.0
        %950 = vmatpush1.msra.mxu0 %v568
        %951 = vmatprep.subr.mxu0 0.0
        %952 = vmatpush1.msra.mxu0 %v569
        %953 = vmatprep.subr.mxu0 0.0
        %954 = vmatpush1.msra.mxu0 %v570
        %955 = vmatprep.subr.mxu0 0.0
        %956 = vmatpush1.msra.mxu0 %v571
        %957 = vmatprep.subr.mxu0 0.0
        %958 = vmatpush1.msra.mxu0 %v572
        %959 = vmatprep.subr.mxu0 0.0
        %960 = vmatpush1.msra.mxu0 %v573
        %961 = vmatprep.subr.mxu0 0.0
        %962 = vmatpush1.msra.mxu0 0.0
        %963 = vmatprep.subr.mxu0 0.0
        %964 = vmatpush1.msra.mxu0 0.0
        %965 = vmatprep.subr.mxu0 0.0
        %966 = vmatpush1.msra.mxu0 0.0
        %967 = vmatprep.subr.mxu0 0.0
        %968 = vmatpush1.msra.mxu0 0.0
        %969 = vmatprep.subr.mxu0 0.0
        %970 = vmatpush1.msra.mxu0 0.0
        %971 = vmatprep.subr.mxu0 0.0
        %972 = vmatpush1.msra.mxu0 0.0
        %973 = vmatprep.subr.mxu0 0.0
        %974 = vmatpush1.msra.mxu0 0.0
        %975 = vmatprep.subr.mxu0 0.0
        %976 = vmatpush1.msra.mxu0 0.0
        %977 = vmatprep.subr.mxu0 0.0
        %978 = vmatpush1.msra.mxu0 0.0
        %979 = vmatprep.subr.mxu0 0.0
        %980 = vmatpush1.msra.mxu0 0.0
        %981 = vmatprep.subr.mxu0 0.0
        %982 = vmatpush1.msra.mxu0 0.0
        %983 = vmatprep.subr.mxu0 0.0
        %984 = vmatpush1.msra.mxu0 0.0
        %985 = vmatprep.subr.mxu0 0.0
        %986 = vmatpush1.msra.mxu0 0.0
        %987 = vmatprep.subr.mxu0 0.0
        %988 = vmatpush1.msra.mxu0 0.0
        %989 = vmatprep.subr.mxu0 0.0
        %990 = vmatpush1.msra.mxu0 0.0
        %991 = vmatprep.subr.mxu0 0.0
        %992 = vmatpush1.msra.mxu0 0.0
        %993 = vmatprep.subr.mxu0 0.0
        %994 = vmatpush1.msra.mxu0 0.0
        %995 = vmatprep.subr.mxu0 0.0
        %996 = vmatpush1.msra.mxu0 0.0
        %997 = vmatprep.subr.mxu0 0.0
        %998 = vmatpush1.msra.mxu0 0.0
        %999 = vmatprep.subr.mxu0 0.0
        %1000 = vmatpush1.msra.mxu0 0.0
        %1001 = vmatprep.subr.mxu0 0.0
        %1002 = vmatpush1.msra.mxu0 0.0
        %1003 = vmatprep.subr.mxu0 0.0
        %1004 = vmatpush1.msra.mxu0 0.0
        %1005 = vmatprep.subr.mxu0 0.0
        %1006 = vmatpush1.msra.mxu0 0.0
        %1007 = vmatprep.subr.mxu0 0.0
        %1008 = vmatpush1.msra.mxu0 0.0
        %1009 = vmatprep.mubr.f32.mxu0 0.0
        %1010 = vmatmul.mubr.f32.gmra.mrb[0].mxu0 %v943
        %v1011 = vpop.f32.mrb[0].mxu0
        %v1012 = vadd.f32 1e-05, %v1011
        %v1013 = vpop.f32.mrb[0].mxu0
        %1014 = vdwg.mxu0
        %v1015 = vrsqrt.pop %v1012
        %v1018 = vunpack.c.l.s4 1966171168
        %v1019 = vunpack.c.0.s8 %v1018
        %v1020 = vlaneseq
        %v1021 = vshrl.u32 %v1020, 7
        %v1022 = vsub.s32 %v1019, %v1021
        %v1023 = vrot.slane %v1015, %v1022
        %v1024 = vcombine.high %v1023, %v1023
        %v1026 = vunpack.c.l.s4 1966171168
        %v1027 = vunpack.c.0.s8 %v1026
        %v1028 = vlaneseq
        %v1029 = vshrl.u32 %v1028, 7
        %v1030 = vsub.s32 %v1027, %v1029
        %v1031 = vrot.slane %v1023, %v1030
        %v1033 = vunpack.c.l.s4 1966171168
        %v1034 = vunpack.c.0.s8 %v1033
        %v1035 = vlaneseq
        %v1036 = vshrl.u32 %v1035, 7
        %v1037 = vsub.s32 %v1034, %v1036
        %v1038 = vrot.slane %v1024, %v1037
        %v1039 = vcombine.high %v1031, %v1031
        %v1040 = vcombine.high %v1038, %v1038
        %v1041 = vlaneseq
        %v1042 = vshrl.u32 %v1041, 7
        %v1043 = vsub.s32 0, %v1042
        %v1044 = vrot.slane %v1031, %v1043
        %v1045 = vlaneseq
        %v1046 = vshrl.u32 %v1045, 7
        %v1047 = vsub.s32 0, %v1046
        %v1048 = vrot.slane %v1038, %v1047
        %v1049 = vlaneseq
        %v1050 = vshrl.u32 %v1049, 7
        %v1051 = vsub.s32 0, %v1050
        %v1052 = vrot.slane %v1039, %v1051
        %v1053 = vlaneseq
        %v1054 = vshrl.u32 %v1053, 7
        %v1055 = vsub.s32 0, %v1054
        %v1056 = vrot.slane %v1040, %v1055
        %v1061 = vmul.f32 %v788, %v1044
        %v1062 = vmul.f32 %v789, %v1044
        %v1063 = vmul.f32 %v790, %v1044
        %v1064 = vmul.f32 %v791, %v1044
        %v1065 = vmul.f32 %v792, %v1044
        %v1066 = vmul.f32 %v793, %v1044
        %v1067 = vmul.f32 %v794, %v1044
        %v1068 = vmul.f32 %v795, %v1044
        %v1069 = vmul.f32 %v796, %v1048
        %v1070 = vmul.f32 %v797, %v1048
        %v1071 = vmul.f32 %v798, %v1048
        %v1072 = vmul.f32 %v799, %v1048
        %v1073 = vmul.f32 %v800, %v1048
        %v1074 = vmul.f32 %v801, %v1048
        %v1075 = vmul.f32 %v802, %v1048
        %v1076 = vmul.f32 %v803, %v1048
        %v1077 = vmul.f32 %v804, %v1052
        %v1078 = vmul.f32 %v805, %v1052
        %v1079 = vmul.f32 %v806, %v1052
        %v1080 = vmul.f32 %v807, %v1052
        %v1081 = vmul.f32 %v808, %v1052
        %v1082 = vmul.f32 %v809, %v1052
        %v1083 = vmul.f32 %v810, %v1052
        %v1084 = vmul.f32 %v811, %v1052
        %v1085 = vmul.f32 %v812, %v1056
        %v1086 = vmul.f32 %v813, %v1056
        %v1087 = vmul.f32 %v814, %v1056
        %v1088 = vmul.f32 %v815, %v1056
        %v1089 = vmul.f32 %v816, %v1056
        %v1090 = vmul.f32 %v817, %v1056
        %v1091 = vmul.f32 %v818, %v1056
        %v1092 = vmul.f32 %v819, %v1056
        %v1094 = vlaneseq
        %v1095 = vshrl.u32 %v1094, 7
        %v1096 = vsub.s32 0, %v1095
        %v1097 = vrot.slane %v574, %v1096
        %v1099 = vmul.f32 %v1061, %v1097
        %v1100 = vmul.f32 %v1062, %v1097
        %v1101 = vmul.f32 %v1063, %v1097
        %v1102 = vmul.f32 %v1064, %v1097
        %v1103 = vmul.f32 %v1065, %v1097
        %v1104 = vmul.f32 %v1066, %v1097
        %v1105 = vmul.f32 %v1067, %v1097
        %v1106 = vmul.f32 %v1068, %v1097
        %v1107 = vmul.f32 %v1069, %v1097
        %v1108 = vmul.f32 %v1070, %v1097
        %v1109 = vmul.f32 %v1071, %v1097
        %v1110 = vmul.f32 %v1072, %v1097
        %v1111 = vmul.f32 %v1073, %v1097
        %v1112 = vmul.f32 %v1074, %v1097
        %v1113 = vmul.f32 %v1075, %v1097
        %v1114 = vmul.f32 %v1076, %v1097
        %v1115 = vmul.f32 %v1077, %v1097
        %v1116 = vmul.f32 %v1078, %v1097
        %v1117 = vmul.f32 %v1079, %v1097
        %v1118 = vmul.f32 %v1080, %v1097
        %v1119 = vmul.f32 %v1081, %v1097
        %v1120 = vmul.f32 %v1082, %v1097
        %v1121 = vmul.f32 %v1083, %v1097
        %v1122 = vmul.f32 %v1084, %v1097
        %v1123 = vmul.f32 %v1085, %v1097
        %v1124 = vmul.f32 %v1086, %v1097
        %v1125 = vmul.f32 %v1087, %v1097
        %v1126 = vmul.f32 %v1088, %v1097
        %v1127 = vmul.f32 %v1089, %v1097
        %v1128 = vmul.f32 %v1090, %v1097
        %v1129 = vmul.f32 %v1091, %v1097
        %v1130 = vmul.f32 %v1092, %v1097
        %v1132 = vlaneseq
        %v1133 = vshrl.u32 %v1132, 7
        %v1134 = vsub.s32 0, %v1133
        %v1135 = vrot.slane %v575, %v1134
        %v1137 = vadd.f32 %v1099, %v1135
        %v1138 = vadd.f32 %v1100, %v1135
        %v1139 = vadd.f32 %v1101, %v1135
        %v1140 = vadd.f32 %v1102, %v1135
        %v1141 = vadd.f32 %v1103, %v1135
        %v1142 = vadd.f32 %v1104, %v1135
        %v1143 = vadd.f32 %v1105, %v1135
        %v1144 = vadd.f32 %v1106, %v1135
        %v1145 = vadd.f32 %v1107, %v1135
        %v1146 = vadd.f32 %v1108, %v1135
        %v1147 = vadd.f32 %v1109, %v1135
        %v1148 = vadd.f32 %v1110, %v1135
        %v1149 = vadd.f32 %v1111, %v1135
        %v1150 = vadd.f32 %v1112, %v1135
        %v1151 = vadd.f32 %v1113, %v1135
        %v1152 = vadd.f32 %v1114, %v1135
        %v1153 = vadd.f32 %v1115, %v1135
        %v1154 = vadd.f32 %v1116, %v1135
        %v1155 = vadd.f32 %v1117, %v1135
        %v1156 = vadd.f32 %v1118, %v1135
        %v1157 = vadd.f32 %v1119, %v1135
        %v1158 = vadd.f32 %v1120, %v1135
        %v1159 = vadd.f32 %v1121, %v1135
        %v1160 = vadd.f32 %v1122, %v1135
        %v1161 = vadd.f32 %v1123, %v1135
        %v1162 = vadd.f32 %v1124, %v1135
        %v1163 = vadd.f32 %v1125, %v1135
        %v1164 = vadd.f32 %v1126, %v1135
        %v1165 = vadd.f32 %v1127, %v1135
        %v1166 = vadd.f32 %v1128, %v1135
        %v1167 = vadd.f32 %v1129, %v1135
        %v1168 = vadd.f32 %v1130, %v1135
        %v1169 = vxor.u32 %v1137, 2147483648
        %v1170 = vxor.u32 %v1138, 2147483648
        %v1171 = vxor.u32 %v1139, 2147483648
        %v1172 = vxor.u32 %v1140, 2147483648
        %v1173 = vxor.u32 %v1141, 2147483648
        %v1174 = vxor.u32 %v1142, 2147483648
        %v1175 = vxor.u32 %v1143, 2147483648
        %v1176 = vxor.u32 %v1144, 2147483648
        %v1177 = vxor.u32 %v1145, 2147483648
        %v1178 = vxor.u32 %v1146, 2147483648
        %v1179 = vxor.u32 %v1147, 2147483648
        %v1180 = vxor.u32 %v1148, 2147483648
        %v1181 = vxor.u32 %v1149, 2147483648
        %v1182 = vxor.u32 %v1150, 2147483648
        %v1183 = vxor.u32 %v1151, 2147483648
        %v1184 = vxor.u32 %v1152, 2147483648
        %v1185 = vxor.u32 %v1153, 2147483648
        %v1186 = vxor.u32 %v1154, 2147483648
        %v1187 = vxor.u32 %v1155, 2147483648
        %v1188 = vxor.u32 %v1156, 2147483648
        %v1189 = vxor.u32 %v1157, 2147483648
        %v1190 = vxor.u32 %v1158, 2147483648
        %v1191 = vxor.u32 %v1159, 2147483648
        %v1192 = vxor.u32 %v1160, 2147483648
        %v1193 = vxor.u32 %v1161, 2147483648
        %v1194 = vxor.u32 %v1162, 2147483648
        %v1195 = vxor.u32 %v1163, 2147483648
        %v1196 = vxor.u32 %v1164, 2147483648
        %v1197 = vxor.u32 %v1165, 2147483648
        %v1198 = vxor.u32 %v1166, 2147483648
        %v1199 = vxor.u32 %v1167, 2147483648
        %v1200 = vxor.u32 %v1168, 2147483648
        %v1201 = vmul.f32 %v1169, 1.442695
        %v1202 = vpow.pop %v1201
        %v1203 = vmul.f32 %v1170, 1.442695
        %v1204 = vpow.pop %v1203
        %v1205 = vmul.f32 %v1171, 1.442695
        %v1206 = vpow.pop %v1205
        %v1207 = vmul.f32 %v1172, 1.442695
        %v1208 = vpow.pop %v1207
        %v1209 = vmul.f32 %v1173, 1.442695
        %v1210 = vpow.pop %v1209
        %v1211 = vmul.f32 %v1174, 1.442695
        %v1212 = vpow.pop %v1211
        %v1213 = vmul.f32 %v1175, 1.442695
        %v1214 = vpow.pop %v1213
        %v1215 = vmul.f32 %v1176, 1.442695
        %v1216 = vpow.pop %v1215
        %v1217 = vmul.f32 %v1177, 1.442695
        %v1218 = vpow.pop %v1217
        %v1219 = vmul.f32 %v1178, 1.442695
        %v1220 = vpow.pop %v1219
        %v1221 = vmul.f32 %v1179, 1.442695
        %v1222 = vpow.pop %v1221
        %v1223 = vmul.f32 %v1180, 1.442695
        %v1224 = vpow.pop %v1223
        %v1225 = vmul.f32 %v1181, 1.442695
        %v1226 = vpow.pop %v1225
        %v1227 = vmul.f32 %v1182, 1.442695
        %v1228 = vpow.pop %v1227
        %v1229 = vmul.f32 %v1183, 1.442695
        %v1230 = vpow.pop %v1229
        %v1231 = vmul.f32 %v1184, 1.442695
        %v1232 = vpow.pop %v1231
        %v1233 = vmul.f32 %v1185, 1.442695
        %v1234 = vpow.pop %v1233
        %v1235 = vmul.f32 %v1186, 1.442695
        %v1236 = vpow.pop %v1235
        %v1237 = vmul.f32 %v1187, 1.442695
        %v1238 = vpow.pop %v1237
        %v1239 = vmul.f32 %v1188, 1.442695
        %v1240 = vpow.pop %v1239
        %v1241 = vmul.f32 %v1189, 1.442695
        %v1242 = vpow.pop %v1241
        %v1243 = vmul.f32 %v1190, 1.442695
        %v1244 = vpow.pop %v1243
        %v1245 = vmul.f32 %v1191, 1.442695
        %v1246 = vpow.pop %v1245
        %v1247 = vmul.f32 %v1192, 1.442695
        %v1248 = vpow.pop %v1247
        %v1249 = vmul.f32 %v1193, 1.442695
        %v1250 = vpow.pop %v1249
        %v1251 = vmul.f32 %v1194, 1.442695
        %v1252 = vpow.pop %v1251
        %v1253 = vmul.f32 %v1195, 1.442695
        %v1254 = vpow.pop %v1253
        %v1255 = vmul.f32 %v1196, 1.442695
        %v1256 = vpow.pop %v1255
        %v1257 = vmul.f32 %v1197, 1.442695
        %v1258 = vpow.pop %v1257
        %v1259 = vmul.f32 %v1198, 1.442695
        %v1260 = vpow.pop %v1259
        %v1261 = vmul.f32 %v1199, 1.442695
        %v1262 = vpow.pop %v1261
        %v1263 = vmul.f32 %v1200, 1.442695
        %v1264 = vpow.pop %v1263
        %v1265 = vadd.f32 %v1202, 1.0
        %v1266 = vadd.f32 %v1204, 1.0
        %v1267 = vadd.f32 %v1206, 1.0
        %v1268 = vadd.f32 %v1208, 1.0
        %v1269 = vadd.f32 %v1210, 1.0
        %v1270 = vadd.f32 %v1212, 1.0
        %v1271 = vadd.f32 %v1214, 1.0
        %v1272 = vadd.f32 %v1216, 1.0
        %v1273 = vadd.f32 %v1218, 1.0
        %v1274 = vadd.f32 %v1220, 1.0
        %v1275 = vadd.f32 %v1222, 1.0
        %v1276 = vadd.f32 %v1224, 1.0
        %v1277 = vadd.f32 %v1226, 1.0
        %v1278 = vadd.f32 %v1228, 1.0
        %v1279 = vadd.f32 %v1230, 1.0
        %v1280 = vadd.f32 %v1232, 1.0
        %v1281 = vadd.f32 %v1234, 1.0
        %v1282 = vadd.f32 %v1236, 1.0
        %v1283 = vadd.f32 %v1238, 1.0
        %v1284 = vadd.f32 %v1240, 1.0
        %v1285 = vadd.f32 %v1242, 1.0
        %v1286 = vadd.f32 %v1244, 1.0
        %v1287 = vadd.f32 %v1246, 1.0
        %v1288 = vadd.f32 %v1248, 1.0
        %v1289 = vadd.f32 %v1250, 1.0
        %v1290 = vadd.f32 %v1252, 1.0
        %v1291 = vadd.f32 %v1254, 1.0
        %v1292 = vadd.f32 %v1256, 1.0
        %v1293 = vadd.f32 %v1258, 1.0
        %v1294 = vadd.f32 %v1260, 1.0
        %v1295 = vadd.f32 %v1262, 1.0
        %v1296 = vadd.f32 %v1264, 1.0
        %v1297 = vrcp.pop %v1265
        %v1298 = vmul.f32 1.0, %v1297
        %v1299 = vrcp.pop %v1266
        %v1300 = vmul.f32 1.0, %v1299
        %v1301 = vrcp.pop %v1267
        %v1302 = vmul.f32 1.0, %v1301
        %v1303 = vrcp.pop %v1268
        %v1304 = vmul.f32 1.0, %v1303
        %v1305 = vrcp.pop %v1269
        %v1306 = vmul.f32 1.0, %v1305
        %v1307 = vrcp.pop %v1270
        %v1308 = vmul.f32 1.0, %v1307
        %v1309 = vrcp.pop %v1271
        %v1310 = vmul.f32 1.0, %v1309
        %v1311 = vrcp.pop %v1272
        %v1312 = vmul.f32 1.0, %v1311
        %v1313 = vrcp.pop %v1273
        %v1314 = vmul.f32 1.0, %v1313
        %v1315 = vrcp.pop %v1274
        %v1316 = vmul.f32 1.0, %v1315
        %v1317 = vrcp.pop %v1275
        %v1318 = vmul.f32 1.0, %v1317
        %v1319 = vrcp.pop %v1276
        %v1320 = vmul.f32 1.0, %v1319
        %v1321 = vrcp.pop %v1277
        %v1322 = vmul.f32 1.0, %v1321
        %v1323 = vrcp.pop %v1278
        %v1324 = vmul.f32 1.0, %v1323
        %v1325 = vrcp.pop %v1279
        %v1326 = vmul.f32 1.0, %v1325
        %v1327 = vrcp.pop %v1280
        %v1328 = vmul.f32 1.0, %v1327
        %v1329 = vrcp.pop %v1281
        %v1330 = vmul.f32 1.0, %v1329
        %v1331 = vrcp.pop %v1282
        %v1332 = vmul.f32 1.0, %v1331
        %v1333 = vrcp.pop %v1283
        %v1334 = vmul.f32 1.0, %v1333
        %v1335 = vrcp.pop %v1284
        %v1336 = vmul.f32 1.0, %v1335
        %v1337 = vrcp.pop %v1285
        %v1338 = vmul.f32 1.0, %v1337
        %v1339 = vrcp.pop %v1286
        %v1340 = vmul.f32 1.0, %v1339
        %v1341 = vrcp.pop %v1287
        %v1342 = vmul.f32 1.0, %v1341
        %v1343 = vrcp.pop %v1288
        %v1344 = vmul.f32 1.0, %v1343
        %v1345 = vrcp.pop %v1289
        %v1346 = vmul.f32 1.0, %v1345
        %v1347 = vrcp.pop %v1290
        %v1348 = vmul.f32 1.0, %v1347
        %v1349 = vrcp.pop %v1291
        %v1350 = vmul.f32 1.0, %v1349
        %v1351 = vrcp.pop %v1292
        %v1352 = vmul.f32 1.0, %v1351
        %v1353 = vrcp.pop %v1293
        %v1354 = vmul.f32 1.0, %v1353
        %v1355 = vrcp.pop %v1294
        %v1356 = vmul.f32 1.0, %v1355
        %v1357 = vrcp.pop %v1295
        %v1358 = vmul.f32 1.0, %v1357
        %v1359 = vrcp.pop %v1296
        %v1360 = vmul.f32 1.0, %v1359
        %v1361 = vmul.f32 %v1137, %v1298
        %v1362 = vmul.f32 %v1138, %v1300
        %v1363 = vmul.f32 %v1139, %v1302
        %v1364 = vmul.f32 %v1140, %v1304
        %v1365 = vmul.f32 %v1141, %v1306
        %v1366 = vmul.f32 %v1142, %v1308
        %v1367 = vmul.f32 %v1143, %v1310
        %v1368 = vmul.f32 %v1144, %v1312
        %v1369 = vmul.f32 %v1145, %v1314
        %v1370 = vmul.f32 %v1146, %v1316
        %v1371 = vmul.f32 %v1147, %v1318
        %v1372 = vmul.f32 %v1148, %v1320
        %v1373 = vmul.f32 %v1149, %v1322
        %v1374 = vmul.f32 %v1150, %v1324
        %v1375 = vmul.f32 %v1151, %v1326
        %v1376 = vmul.f32 %v1152, %v1328
        %v1377 = vmul.f32 %v1153, %v1330
        %v1378 = vmul.f32 %v1154, %v1332
        %v1379 = vmul.f32 %v1155, %v1334
        %v1380 = vmul.f32 %v1156, %v1336
        %v1381 = vmul.f32 %v1157, %v1338
        %v1382 = vmul.f32 %v1158, %v1340
        %v1383 = vmul.f32 %v1159, %v1342
        %v1384 = vmul.f32 %v1160, %v1344
        %v1385 = vmul.f32 %v1161, %v1346
        %v1386 = vmul.f32 %v1162, %v1348
        %v1387 = vmul.f32 %v1163, %v1350
        %v1388 = vmul.f32 %v1164, %v1352
        %v1389 = vmul.f32 %v1165, %v1354
        %v1390 = vmul.f32 %v1166, %v1356
        %v1391 = vmul.f32 %v1167, %v1358
        %v1392 = vmul.f32 %v1168, %v1360
        %1393 = vst.msk [vmem:[#allocation2] sm:$0xff] %vm576, 0.0
        %vm1394 = vcmask 517120
        %1395 = vst.msk [vmem:[#allocation2 + $0x8] sm:$0x3] %vm1394, 0.0
        %1396 = vst.msk [vmem:[#allocation2 + $0xa0] sm:$0xff] %vm576, 0.0
        %1397 = vst.msk [vmem:[#allocation2 + $0xa8] sm:$0x3] %vm1394, 0.0
        %1398 = vst.msk [vmem:[#allocation2 + $0x140] sm:$0xff] %vm576, 0.0
        %1399 = vst.msk [vmem:[#allocation2 + $0x148] sm:$0x3] %vm1394, 0.0
        %1400 = vst.msk [vmem:[#allocation2 + $0x1e0] sm:$0xff] %vm576, 0.0
        %1401 = vst.msk [vmem:[#allocation2 + $0x1e8] sm:$0x3] %vm1394, 0.0
        %s1402 = scalar_lea.vmem [#allocation2], 144
        %1403 = vst.msk [vmem:[%s1402] sm:$0xff] %vm576, 0.0
        %1404 = vst.msk [vmem:[%s1402 + $0x8] sm:$0x3] %vm1394, 0.0
        %1405 = vst.msk [vmem:[%s1402 + $0xa0] sm:$0xff] %vm576, 0.0
        %1406 = vst.msk [vmem:[%s1402 + $0xa8] sm:$0x3] %vm1394, 0.0
        %1407 = vst.msk [vmem:[%s1402 + $0x140] sm:$0xff] %vm576, 0.0
        %1408 = vst.msk [vmem:[%s1402 + $0x148] sm:$0x3] %vm1394, 0.0
        %1409 = vst.msk [vmem:[%s1402 + $0x1e0] sm:$0xff] %vm576, 0.0
        %1410 = vst.msk [vmem:[%s1402 + $0x1e8] sm:$0x3] %vm1394, 0.0
        %vm1411 = vcmask 516096
        %1412 = vst.msk [vmem:[#allocation2] sm:$0x1] %vm1411, 0.0
        %1413 = vst.msk [vmem:[#allocation2 + $0x10] sm:$0x1] %vm1411, 0.0
        %1414 = vst.msk [vmem:[#allocation2 + $0x20] sm:$0x1] %vm1411, 0.0
        %1415 = vst.msk [vmem:[#allocation2 + $0x30] sm:$0x1] %vm1411, 0.0
        %1416 = vst.msk [vmem:[#allocation2 + $0x40] sm:$0x1] %vm1411, 0.0
        %1417 = vst.msk [vmem:[#allocation2 + $0x50] sm:$0x1] %vm1411, 0.0
        %1418 = vst.msk [vmem:[#allocation2 + $0x60] sm:$0x1] %vm1411, 0.0
        %1419 = vst.msk [vmem:[#allocation2 + $0x70] sm:$0x1] %vm1411, 0.0
        %1420 = vst.msk [vmem:[#allocation2 + $0x80] sm:$0x1] %vm1411, 0.0
        %1421 = vst.msk [vmem:[#allocation2 + $0x90] sm:$0x1] %vm1411, 0.0
        %1422 = vst.msk [vmem:[#allocation2 + $0xa0] sm:$0x1] %vm1411, 0.0
        %1423 = vst.msk [vmem:[#allocation2 + $0xb0] sm:$0x1] %vm1411, 0.0
        %1424 = vst.msk [vmem:[#allocation2 + $0xc0] sm:$0x1] %vm1411, 0.0
        %1425 = vst.msk [vmem:[#allocation2 + $0xd0] sm:$0x1] %vm1411, 0.0
        %1426 = vst.msk [vmem:[#allocation2 + $0xe0] sm:$0x1] %vm1411, 0.0
        %1427 = vst.msk [vmem:[#allocation2 + $0xf0] sm:$0x1] %vm1411, 0.0
        %1428 = vst.msk [vmem:[#allocation2 + $0x100] sm:$0x1] %vm1411, 0.0
        %1429 = vst.msk [vmem:[#allocation2 + $0x110] sm:$0x1] %vm1411, 0.0
        %1430 = vst.msk [vmem:[#allocation2 + $0x120] sm:$0x1] %vm1411, 0.0
        %1431 = vst.msk [vmem:[#allocation2 + $0x130] sm:$0x1] %vm1411, 0.0
        %1432 = vst.msk [vmem:[#allocation2 + $0x140] sm:$0x1] %vm1411, 0.0
        %1433 = vst.msk [vmem:[#allocation2 + $0x150] sm:$0x1] %vm1411, 0.0
        %1434 = vst.msk [vmem:[#allocation2 + $0x160] sm:$0x1] %vm1411, 0.0
        %1435 = vst.msk [vmem:[#allocation2 + $0x170] sm:$0x1] %vm1411, 0.0
        %1436 = vst.msk [vmem:[#allocation2 + $0x180] sm:$0x1] %vm1411, 0.0
        %1437 = vst.msk [vmem:[#allocation2 + $0x190] sm:$0x1] %vm1411, 0.0
        %1438 = vst.msk [vmem:[#allocation2 + $0x1a0] sm:$0x1] %vm1411, 0.0
        %1439 = vst.msk [vmem:[#allocation2 + $0x1b0] sm:$0x1] %vm1411, 0.0
        %1440 = vst.msk [vmem:[#allocation2 + $0x1c0] sm:$0x1] %vm1411, 0.0
        %1441 = vst.msk [vmem:[#allocation2 + $0x1d0] sm:$0x1] %vm1411, 0.0
        %1442 = vst.msk [vmem:[#allocation2 + $0x1e0] sm:$0x1] %vm1411, 0.0
        %1443 = vst.msk [vmem:[#allocation2 + $0x1f0] sm:$0x1] %vm1411, 0.0
        %1444 = vst.msk [vmem:[#allocation2 + $0x200] sm:$0x1] %vm1411, 0.0
        %1445 = vst.msk [vmem:[#allocation2 + $0x210] sm:$0x1] %vm1411, 0.0
        %1446 = vst.msk [vmem:[#allocation2 + $0x220] sm:$0x1] %vm1411, 0.0
        %1447 = vst.msk [vmem:[#allocation2 + $0x230] sm:$0x1] %vm1411, 0.0
        %1448 = vst.msk [vmem:[#allocation2 + $0x240] sm:$0x1] %vm1411, 0.0
        %1449 = vst.msk [vmem:[#allocation2 + $0x250] sm:$0x1] %vm1411, 0.0
        %1450 = vst.msk [vmem:[#allocation2 + $0x260] sm:$0x1] %vm1411, 0.0
        %1451 = vst.msk [vmem:[#allocation2 + $0x270] sm:$0x1] %vm1411, 0.0
        %1452 = vst.msk [vmem:[#allocation2 + $0x9] sm:$0x1] %vm1411, 0.0
        %1453 = vst.msk [vmem:[#allocation2 + $0x19] sm:$0x1] %vm1411, 0.0
        %1454 = vst.msk [vmem:[#allocation2 + $0x29] sm:$0x1] %vm1411, 0.0
        %1455 = vst.msk [vmem:[#allocation2 + $0x39] sm:$0x1] %vm1411, 0.0
        %1456 = vst.msk [vmem:[#allocation2 + $0x49] sm:$0x1] %vm1411, 0.0
        %1457 = vst.msk [vmem:[#allocation2 + $0x59] sm:$0x1] %vm1411, 0.0
        %1458 = vst.msk [vmem:[#allocation2 + $0x69] sm:$0x1] %vm1411, 0.0
        %1459 = vst.msk [vmem:[#allocation2 + $0x79] sm:$0x1] %vm1411, 0.0
        %1460 = vst.msk [vmem:[#allocation2 + $0x89] sm:$0x1] %vm1411, 0.0
        %1461 = vst.msk [vmem:[#allocation2 + $0x99] sm:$0x1] %vm1411, 0.0
        %1462 = vst.msk [vmem:[#allocation2 + $0xa9] sm:$0x1] %vm1411, 0.0
        %1463 = vst.msk [vmem:[#allocation2 + $0xb9] sm:$0x1] %vm1411, 0.0
        %1464 = vst.msk [vmem:[#allocation2 + $0xc9] sm:$0x1] %vm1411, 0.0
        %1465 = vst.msk [vmem:[#allocation2 + $0xd9] sm:$0x1] %vm1411, 0.0
        %1466 = vst.msk [vmem:[#allocation2 + $0xe9] sm:$0x1] %vm1411, 0.0
        %1467 = vst.msk [vmem:[#allocation2 + $0xf9] sm:$0x1] %vm1411, 0.0
        %1468 = vst.msk [vmem:[#allocation2 + $0x109] sm:$0x1] %vm1411, 0.0
        %1469 = vst.msk [vmem:[#allocation2 + $0x119] sm:$0x1] %vm1411, 0.0
        %1470 = vst.msk [vmem:[#allocation2 + $0x129] sm:$0x1] %vm1411, 0.0
        %1471 = vst.msk [vmem:[#allocation2 + $0x139] sm:$0x1] %vm1411, 0.0
        %1472 = vst.msk [vmem:[#allocation2 + $0x149] sm:$0x1] %vm1411, 0.0
        %1473 = vst.msk [vmem:[#allocation2 + $0x159] sm:$0x1] %vm1411, 0.0
        %1474 = vst.msk [vmem:[#allocation2 + $0x169] sm:$0x1] %vm1411, 0.0
        %1475 = vst.msk [vmem:[#allocation2 + $0x179] sm:$0x1] %vm1411, 0.0
        %1476 = vst.msk [vmem:[#allocation2 + $0x189] sm:$0x1] %vm1411, 0.0
        %1477 = vst.msk [vmem:[#allocation2 + $0x199] sm:$0x1] %vm1411, 0.0
        %1478 = vst.msk [vmem:[#allocation2 + $0x1a9] sm:$0x1] %vm1411, 0.0
        %1479 = vst.msk [vmem:[#allocation2 + $0x1b9] sm:$0x1] %vm1411, 0.0
        %1480 = vst.msk [vmem:[#allocation2 + $0x1c9] sm:$0x1] %vm1411, 0.0
        %1481 = vst.msk [vmem:[#allocation2 + $0x1d9] sm:$0x1] %vm1411, 0.0
        %1482 = vst.msk [vmem:[#allocation2 + $0x1e9] sm:$0x1] %vm1411, 0.0
        %1483 = vst.msk [vmem:[#allocation2 + $0x1f9] sm:$0x1] %vm1411, 0.0
        %1484 = vst.msk [vmem:[#allocation2 + $0x209] sm:$0x1] %vm1411, 0.0
        %1485 = vst.msk [vmem:[#allocation2 + $0x219] sm:$0x1] %vm1411, 0.0
        %1486 = vst.msk [vmem:[#allocation2 + $0x229] sm:$0x1] %vm1411, 0.0
        %1487 = vst.msk [vmem:[#allocation2 + $0x239] sm:$0x1] %vm1411, 0.0
        %1488 = vst.msk [vmem:[#allocation2 + $0x249] sm:$0x1] %vm1411, 0.0
        %1489 = vst.msk [vmem:[#allocation2 + $0x259] sm:$0x1] %vm1411, 0.0
        %1490 = vst.msk [vmem:[#allocation2 + $0x269] sm:$0x1] %vm1411, 0.0
        %1491 = vst.msk [vmem:[#allocation2 + $0x279] sm:$0x1] %vm1411, 0.0
        %s1492 = scalar_lea.vmem [#allocation2], 16
        %1493 = vst.msk [vmem:[%s1492 + $0x1] sm:$0xff] %vm576, %v1361
        %1494 = vst.msk [vmem:[%s1492 + $0x11] sm:$0xff] %vm576, %v1362
        %1495 = vst.msk [vmem:[%s1492 + $0x21] sm:$0xff] %vm576, %v1363
        %1496 = vst.msk [vmem:[%s1492 + $0x31] sm:$0xff] %vm576, %v1364
        %1497 = vst.msk [vmem:[%s1492 + $0x41] sm:$0xff] %vm576, %v1365
        %1498 = vst.msk [vmem:[%s1492 + $0x51] sm:$0xff] %vm576, %v1366
        %1499 = vst.msk [vmem:[%s1492 + $0x61] sm:$0xff] %vm576, %v1367
        %1500 = vst.msk [vmem:[%s1492 + $0x71] sm:$0xff] %vm576, %v1368
        %1501 = vst.msk [vmem:[%s1492 + $0xa1] sm:$0xff] %vm576, %v1369
        %1502 = vst.msk [vmem:[%s1492 + $0xb1] sm:$0xff] %vm576, %v1370
        %1503 = vst.msk [vmem:[%s1492 + $0xc1] sm:$0xff] %vm576, %v1371
        %1504 = vst.msk [vmem:[%s1492 + $0xd1] sm:$0xff] %vm576, %v1372
        %1505 = vst.msk [vmem:[%s1492 + $0xe1] sm:$0xff] %vm576, %v1373
        %1506 = vst.msk [vmem:[%s1492 + $0xf1] sm:$0xff] %vm576, %v1374
        %1507 = vst.msk [vmem:[%s1492 + $0x101] sm:$0xff] %vm576, %v1375
        %1508 = vst.msk [vmem:[%s1492 + $0x111] sm:$0xff] %vm576, %v1376
        %1509 = vst.msk [vmem:[%s1492 + $0x141] sm:$0xff] %vm576, %v1377
        %1510 = vst.msk [vmem:[%s1492 + $0x151] sm:$0xff] %vm576, %v1378
        %1511 = vst.msk [vmem:[%s1492 + $0x161] sm:$0xff] %vm576, %v1379
        %1512 = vst.msk [vmem:[%s1492 + $0x171] sm:$0xff] %vm576, %v1380
        %1513 = vst.msk [vmem:[%s1492 + $0x181] sm:$0xff] %vm576, %v1381
        %1514 = vst.msk [vmem:[%s1492 + $0x191] sm:$0xff] %vm576, %v1382
        %1515 = vst.msk [vmem:[%s1492 + $0x1a1] sm:$0xff] %vm576, %v1383
        %1516 = vst.msk [vmem:[%s1492 + $0x1b1] sm:$0xff] %vm576, %v1384
        %1517 = vst.msk [vmem:[%s1492 + $0x1e1] sm:$0xff] %vm576, %v1385
        %1518 = vst.msk [vmem:[%s1492 + $0x1f1] sm:$0xff] %vm576, %v1386
        %1519 = vst.msk [vmem:[%s1492 + $0x201] sm:$0xff] %vm576, %v1387
        %1520 = vst.msk [vmem:[%s1492 + $0x211] sm:$0xff] %vm576, %v1388
        %1521 = vst.msk [vmem:[%s1492 + $0x221] sm:$0xff] %vm576, %v1389
        %1522 = vst.msk [vmem:[%s1492 + $0x231] sm:$0xff] %vm576, %v1390
        %1523 = vst.msk [vmem:[%s1492 + $0x241] sm:$0xff] %vm576, %v1391
        %1524 = vst.msk [vmem:[%s1492 + $0x251] sm:$0xff] %vm576, %v1392
        %v1525 = vld [vmem:[#allocation2] sm:$0xff]
        %v1526 = vld [vmem:[#allocation2 + $0x10] sm:$0xff]
        %v1527 = vld [vmem:[#allocation2 + $0x20] sm:$0xff]
        %v1528 = vld [vmem:[#allocation2 + $0x30] sm:$0xff]
        %v1529 = vld [vmem:[#allocation2 + $0x40] sm:$0xff]
        %v1530 = vld [vmem:[#allocation2 + $0x50] sm:$0xff]
        %v1531 = vld [vmem:[#allocation2 + $0x60] sm:$0xff]
        %v1532 = vld [vmem:[#allocation2 + $0x70] sm:$0xff]
        %v1533 = vld [vmem:[#allocation2 + $0xa0] sm:$0xff]
        %v1534 = vld [vmem:[#allocation2 + $0xb0] sm:$0xff]
        %v1535 = vld [vmem:[#allocation2 + $0xc0] sm:$0xff]
        %v1536 = vld [vmem:[#allocation2 + $0xd0] sm:$0xff]
        %v1537 = vld [vmem:[#allocation2 + $0xe0] sm:$0xff]
        %v1538 = vld [vmem:[#allocation2 + $0xf0] sm:$0xff]
        %v1539 = vld [vmem:[#allocation2 + $0x100] sm:$0xff]
        %v1540 = vld [vmem:[#allocation2 + $0x110] sm:$0xff]
        %v1541 = vld [vmem:[#allocation2 + $0x140] sm:$0xff]
        %v1542 = vld [vmem:[#allocation2 + $0x150] sm:$0xff]
        %v1543 = vld [vmem:[#allocation2 + $0x160] sm:$0xff]
        %v1544 = vld [vmem:[#allocation2 + $0x170] sm:$0xff]
        %v1545 = vld [vmem:[#allocation2 + $0x180] sm:$0xff]
        %v1546 = vld [vmem:[#allocation2 + $0x190] sm:$0xff]
        %v1547 = vld [vmem:[#allocation2 + $0x1a0] sm:$0xff]
        %v1548 = vld [vmem:[#allocation2 + $0x1b0] sm:$0xff]
        %v1549 = vld [vmem:[#allocation2 + $0x1e0] sm:$0xff]
        %v1550 = vld [vmem:[#allocation2 + $0x1f0] sm:$0xff]
        %v1551 = vld [vmem:[#allocation2 + $0x200] sm:$0xff]
        %v1552 = vld [vmem:[#allocation2 + $0x210] sm:$0xff]
        %v1553 = vld [vmem:[#allocation2 + $0x220] sm:$0xff]
        %v1554 = vld [vmem:[#allocation2 + $0x230] sm:$0xff]
        %v1555 = vld [vmem:[#allocation2 + $0x240] sm:$0xff]
        %v1556 = vld [vmem:[#allocation2 + $0x250] sm:$0xff]
        %1557 = vst.msk [vmem:[#allocation4] sm:$0xff] %vm576, %v1525
        %1558 = vst.msk [vmem:[#allocation4 + $0x28] sm:$0xff] %vm576, %v1526
        %1559 = vst.msk [vmem:[#allocation4 + $0x50] sm:$0xff] %vm576, %v1527
        %1560 = vst.msk [vmem:[#allocation4 + $0x78] sm:$0xff] %vm576, %v1528
        %1561 = vst.msk [vmem:[#allocation4 + $0xa0] sm:$0xff] %vm576, %v1529
        %1562 = vst.msk [vmem:[#allocation4 + $0xc8] sm:$0xff] %vm576, %v1530
        %1563 = vst.msk [vmem:[#allocation4 + $0xf0] sm:$0xff] %vm576, %v1531
        %1564 = vst.msk [vmem:[#allocation4 + $0x118] sm:$0xff] %vm576, %v1532
        %1565 = vst.msk [vmem:[#allocation4 + $0x140] sm:$0xff] %vm576, %v1533
        %1566 = vst.msk [vmem:[#allocation4 + $0x168] sm:$0xff] %vm576, %v1534
        %1567 = vst.msk [vmem:[#allocation4 + $0x190] sm:$0xff] %vm576, %v1535
        %1568 = vst.msk [vmem:[#allocation4 + $0x1b8] sm:$0xff] %vm576, %v1536
        %1569 = vst.msk [vmem:[#allocation4 + $0x1e0] sm:$0xff] %vm576, %v1537
        %1570 = vst.msk [vmem:[#allocation4 + $0x208] sm:$0xff] %vm576, %v1538
        %1571 = vst.msk [vmem:[#allocation4 + $0x230] sm:$0xff] %vm576, %v1539
        %1572 = vst.msk [vmem:[#allocation4 + $0x258] sm:$0xff] %vm576, %v1540
        %1573 = vst.msk [vmem:[#allocation4 + $0x280] sm:$0xff] %vm576, %v1541
        %1574 = vst.msk [vmem:[#allocation4 + $0x2a8] sm:$0xff] %vm576, %v1542
        %1575 = vst.msk [vmem:[#allocation4 + $0x2d0] sm:$0xff] %vm576, %v1543
        %1576 = vst.msk [vmem:[#allocation4 + $0x2f8] sm:$0xff] %vm576, %v1544
        %1577 = vst.msk [vmem:[#allocation4 + $0x320] sm:$0xff] %vm576, %v1545
        %1578 = vst.msk [vmem:[#allocation4 + $0x348] sm:$0xff] %vm576, %v1546
        %1579 = vst.msk [vmem:[#allocation4 + $0x370] sm:$0xff] %vm576, %v1547
        %1580 = vst.msk [vmem:[#allocation4 + $0x398] sm:$0xff] %vm576, %v1548
        %1581 = vst.msk [vmem:[#allocation4 + $0x3c0] sm:$0xff] %vm576, %v1549
        %1582 = vst.msk [vmem:[#allocation4 + $0x3e8] sm:$0xff] %vm576, %v1550
        %1583 = vst.msk [vmem:[#allocation4 + $0x410] sm:$0xff] %vm576, %v1551
        %1584 = vst.msk [vmem:[#allocation4 + $0x438] sm:$0xff] %vm576, %v1552
        %1585 = vst.msk [vmem:[#allocation4 + $0x460] sm:$0xff] %vm576, %v1553
        %1586 = vst.msk [vmem:[#allocation4 + $0x488] sm:$0xff] %vm576, %v1554
        %1587 = vst.msk [vmem:[#allocation4 + $0x4b0] sm:$0xff] %vm576, %v1555
        %1588 = vst.msk [vmem:[#allocation4 + $0x4d8] sm:$0xff] %vm576, %v1556
        %v1589 = vld [vmem:[#allocation2 + $0x1] sm:$0xff]
        %v1590 = vld [vmem:[#allocation2 + $0x11] sm:$0xff]
        %v1591 = vld [vmem:[#allocation2 + $0x21] sm:$0xff]
        %v1592 = vld [vmem:[#allocation2 + $0x31] sm:$0xff]
        %v1593 = vld [vmem:[#allocation2 + $0x41] sm:$0xff]
        %v1594 = vld [vmem:[#allocation2 + $0x51] sm:$0xff]
        %v1595 = vld [vmem:[#allocation2 + $0x61] sm:$0xff]
        %v1596 = vld [vmem:[#allocation2 + $0x71] sm:$0xff]
        %v1597 = vld [vmem:[#allocation2 + $0xa1] sm:$0xff]
        %v1598 = vld [vmem:[#allocation2 + $0xb1] sm:$0xff]
        %v1599 = vld [vmem:[#allocation2 + $0xc1] sm:$0xff]
        %v1600 = vld [vmem:[#allocation2 + $0xd1] sm:$0xff]
        %v1601 = vld [vmem:[#allocation2 + $0xe1] sm:$0xff]
        %v1602 = vld [vmem:[#allocation2 + $0xf1] sm:$0xff]
        %v1603 = vld [vmem:[#allocation2 + $0x101] sm:$0xff]
        %v1604 = vld [vmem:[#allocation2 + $0x111] sm:$0xff]
        %v1605 = vld [vmem:[#allocation2 + $0x141] sm:$0xff]
        %v1606 = vld [vmem:[#allocation2 + $0x151] sm:$0xff]
        %v1607 = vld [vmem:[#allocation2 + $0x161] sm:$0xff]
        %v1608 = vld [vmem:[#allocation2 + $0x171] sm:$0xff]
        %v1609 = vld [vmem:[#allocation2 + $0x181] sm:$0xff]
        %v1610 = vld [vmem:[#allocation2 + $0x191] sm:$0xff]
        %v1611 = vld [vmem:[#allocation2 + $0x1a1] sm:$0xff]
        %v1612 = vld [vmem:[#allocation2 + $0x1b1] sm:$0xff]
        %v1613 = vld [vmem:[#allocation2 + $0x1e1] sm:$0xff]
        %v1614 = vld [vmem:[#allocation2 + $0x1f1] sm:$0xff]
        %v1615 = vld [vmem:[#allocation2 + $0x201] sm:$0xff]
        %v1616 = vld [vmem:[#allocation2 + $0x211] sm:$0xff]
        %v1617 = vld [vmem:[#allocation2 + $0x221] sm:$0xff]
        %v1618 = vld [vmem:[#allocation2 + $0x231] sm:$0xff]
        %v1619 = vld [vmem:[#allocation2 + $0x241] sm:$0xff]
        %v1620 = vld [vmem:[#allocation2 + $0x251] sm:$0xff]
        %1653 = vrot.lane.b32.xlu0 %v1589, 64
        %v1654 = vpop.permute.xlu0 %1653
        %1655 = vrot.lane.b32.xlu0 %v1590, 64
        %v1656 = vpop.permute.xlu0 %1655
        %1657 = vrot.lane.b32.xlu0 %v1591, 64
        %v1658 = vpop.permute.xlu0 %1657
        %1659 = vrot.lane.b32.xlu0 %v1592, 64
        %v1660 = vpop.permute.xlu0 %1659
        %1661 = vrot.lane.b32.xlu0 %v1593, 64
        %v1662 = vpop.permute.xlu0 %1661
        %1663 = vrot.lane.b32.xlu0 %v1594, 64
        %v1664 = vpop.permute.xlu0 %1663
        %1665 = vrot.lane.b32.xlu0 %v1595, 64
        %v1666 = vpop.permute.xlu0 %1665
        %1667 = vrot.lane.b32.xlu0 %v1596, 64
        %v1668 = vpop.permute.xlu0 %1667
        %1669 = vrot.lane.b32.xlu0 %v1597, 64
        %v1670 = vpop.permute.xlu0 %1669
        %1671 = vrot.lane.b32.xlu0 %v1598, 64
        %v1672 = vpop.permute.xlu0 %1671
        %1673 = vrot.lane.b32.xlu0 %v1599, 64
        %v1674 = vpop.permute.xlu0 %1673
        %1675 = vrot.lane.b32.xlu0 %v1600, 64
        %v1676 = vpop.permute.xlu0 %1675
        %1677 = vrot.lane.b32.xlu0 %v1601, 64
        %v1678 = vpop.permute.xlu0 %1677
        %1679 = vrot.lane.b32.xlu0 %v1602, 64
        %v1680 = vpop.permute.xlu0 %1679
        %1681 = vrot.lane.b32.xlu0 %v1603, 64
        %v1682 = vpop.permute.xlu0 %1681
        %1683 = vrot.lane.b32.xlu0 %v1604, 64
        %v1684 = vpop.permute.xlu0 %1683
        %1685 = vrot.lane.b32.xlu0 %v1605, 64
        %v1686 = vpop.permute.xlu0 %1685
        %1687 = vrot.lane.b32.xlu0 %v1606, 64
        %v1688 = vpop.permute.xlu0 %1687
        %1689 = vrot.lane.b32.xlu0 %v1607, 64
        %v1690 = vpop.permute.xlu0 %1689
        %1691 = vrot.lane.b32.xlu0 %v1608, 64
        %v1692 = vpop.permute.xlu0 %1691
        %1693 = vrot.lane.b32.xlu0 %v1609, 64
        %v1694 = vpop.permute.xlu0 %1693
        %1695 = vrot.lane.b32.xlu0 %v1610, 64
        %v1696 = vpop.permute.xlu0 %1695
        %1697 = vrot.lane.b32.xlu0 %v1611, 64
        %v1698 = vpop.permute.xlu0 %1697
        %1699 = vrot.lane.b32.xlu0 %v1612, 64
        %v1700 = vpop.permute.xlu0 %1699
        %1701 = vrot.lane.b32.xlu0 %v1613, 64
        %v1702 = vpop.permute.xlu0 %1701
        %1703 = vrot.lane.b32.xlu0 %v1614, 64
        %v1704 = vpop.permute.xlu0 %1703
        %1705 = vrot.lane.b32.xlu0 %v1615, 64
        %v1706 = vpop.permute.xlu0 %1705
        %1707 = vrot.lane.b32.xlu0 %v1616, 64
        %v1708 = vpop.permute.xlu0 %1707
        %1709 = vrot.lane.b32.xlu0 %v1617, 64
        %v1710 = vpop.permute.xlu0 %1709
        %1711 = vrot.lane.b32.xlu0 %v1618, 64
        %v1712 = vpop.permute.xlu0 %1711
        %1713 = vrot.lane.b32.xlu0 %v1619, 64
        %v1714 = vpop.permute.xlu0 %1713
        %1715 = vrot.lane.b32.xlu0 %v1620, 64
        %v1716 = vpop.permute.xlu0 %1715
        %vm1749 = vcmask 1048064
        %1750 = vst.msk [vmem:[#allocation4] sm:$0xff] %vm1749, %v1654
        %1751 = vst.msk [vmem:[#allocation4 + $0x28] sm:$0xff] %vm1749, %v1656
        %1752 = vst.msk [vmem:[#allocation4 + $0x50] sm:$0xff] %vm1749, %v1658
        %1753 = vst.msk [vmem:[#allocation4 + $0x78] sm:$0xff] %vm1749, %v1660
        %1754 = vst.msk [vmem:[#allocation4 + $0xa0] sm:$0xff] %vm1749, %v1662
        %1755 = vst.msk [vmem:[#allocation4 + $0xc8] sm:$0xff] %vm1749, %v1664
        %1756 = vst.msk [vmem:[#allocation4 + $0xf0] sm:$0xff] %vm1749, %v1666
        %1757 = vst.msk [vmem:[#allocation4 + $0x118] sm:$0xff] %vm1749, %v1668
        %1758 = vst.msk [vmem:[#allocation4 + $0x140] sm:$0xff] %vm1749, %v1670
        %1759 = vst.msk [vmem:[#allocation4 + $0x168] sm:$0xff] %vm1749, %v1672
        %1760 = vst.msk [vmem:[#allocation4 + $0x190] sm:$0xff] %vm1749, %v1674
        %1761 = vst.msk [vmem:[#allocation4 + $0x1b8] sm:$0xff] %vm1749, %v1676
        %1762 = vst.msk [vmem:[#allocation4 + $0x1e0] sm:$0xff] %vm1749, %v1678
        %1763 = vst.msk [vmem:[#allocation4 + $0x208] sm:$0xff] %vm1749, %v1680
        %1764 = vst.msk [vmem:[#allocation4 + $0x230] sm:$0xff] %vm1749, %v1682
        %1765 = vst.msk [vmem:[#allocation4 + $0x258] sm:$0xff] %vm1749, %v1684
        %1766 = vst.msk [vmem:[#allocation4 + $0x280] sm:$0xff] %vm1749, %v1686
        %1767 = vst.msk [vmem:[#allocation4 + $0x2a8] sm:$0xff] %vm1749, %v1688
        %1768 = vst.msk [vmem:[#allocation4 + $0x2d0] sm:$0xff] %vm1749, %v1690
        %1769 = vst.msk [vmem:[#allocation4 + $0x2f8] sm:$0xff] %vm1749, %v1692
        %1770 = vst.msk [vmem:[#allocation4 + $0x320] sm:$0xff] %vm1749, %v1694
        %1771 = vst.msk [vmem:[#allocation4 + $0x348] sm:$0xff] %vm1749, %v1696
        %1772 = vst.msk [vmem:[#allocation4 + $0x370] sm:$0xff] %vm1749, %v1698
        %1773 = vst.msk [vmem:[#allocation4 + $0x398] sm:$0xff] %vm1749, %v1700
        %1774 = vst.msk [vmem:[#allocation4 + $0x3c0] sm:$0xff] %vm1749, %v1702
        %1775 = vst.msk [vmem:[#allocation4 + $0x3e8] sm:$0xff] %vm1749, %v1704
        %1776 = vst.msk [vmem:[#allocation4 + $0x410] sm:$0xff] %vm1749, %v1706
        %1777 = vst.msk [vmem:[#allocation4 + $0x438] sm:$0xff] %vm1749, %v1708
        %1778 = vst.msk [vmem:[#allocation4 + $0x460] sm:$0xff] %vm1749, %v1710
        %1779 = vst.msk [vmem:[#allocation4 + $0x488] sm:$0xff] %vm1749, %v1712
        %1780 = vst.msk [vmem:[#allocation4 + $0x4b0] sm:$0xff] %vm1749, %v1714
        %1781 = vst.msk [vmem:[#allocation4 + $0x4d8] sm:$0xff] %vm1749, %v1716
        %v1782 = vld [vmem:[#allocation2 + $0x2] sm:$0xff]
        %v1783 = vld [vmem:[#allocation2 + $0x12] sm:$0xff]
        %v1784 = vld [vmem:[#allocation2 + $0x22] sm:$0xff]
        %v1785 = vld [vmem:[#allocation2 + $0x32] sm:$0xff]
        %v1786 = vld [vmem:[#allocation2 + $0x42] sm:$0xff]
        %v1787 = vld [vmem:[#allocation2 + $0x52] sm:$0xff]
        %v1788 = vld [vmem:[#allocation2 + $0x62] sm:$0xff]
        %v1789 = vld [vmem:[#allocation2 + $0x72] sm:$0xff]
        %v1790 = vld [vmem:[#allocation2 + $0xa2] sm:$0xff]
        %v1791 = vld [vmem:[#allocation2 + $0xb2] sm:$0xff]
        %v1792 = vld [vmem:[#allocation2 + $0xc2] sm:$0xff]
        %v1793 = vld [vmem:[#allocation2 + $0xd2] sm:$0xff]
        %v1794 = vld [vmem:[#allocation2 + $0xe2] sm:$0xff]
        %v1795 = vld [vmem:[#allocation2 + $0xf2] sm:$0xff]
        %v1796 = vld [vmem:[#allocation2 + $0x102] sm:$0xff]
        %v1797 = vld [vmem:[#allocation2 + $0x112] sm:$0xff]
        %v1798 = vld [vmem:[#allocation2 + $0x142] sm:$0xff]
        %v1799 = vld [vmem:[#allocation2 + $0x152] sm:$0xff]
        %v1800 = vld [vmem:[#allocation2 + $0x162] sm:$0xff]
        %v1801 = vld [vmem:[#allocation2 + $0x172] sm:$0xff]
        %v1802 = vld [vmem:[#allocation2 + $0x182] sm:$0xff]
        %v1803 = vld [vmem:[#allocation2 + $0x192] sm:$0xff]
        %v1804 = vld [vmem:[#allocation2 + $0x1a2] sm:$0xff]
        %v1805 = vld [vmem:[#allocation2 + $0x1b2] sm:$0xff]
        %v1806 = vld [vmem:[#allocation2 + $0x1e2] sm:$0xff]
        %v1807 = vld [vmem:[#allocation2 + $0x1f2] sm:$0xff]
        %v1808 = vld [vmem:[#allocation2 + $0x202] sm:$0xff]
        %v1809 = vld [vmem:[#allocation2 + $0x212] sm:$0xff]
        %v1810 = vld [vmem:[#allocation2 + $0x222] sm:$0xff]
        %v1811 = vld [vmem:[#allocation2 + $0x232] sm:$0xff]
        %v1812 = vld [vmem:[#allocation2 + $0x242] sm:$0xff]
        %v1813 = vld [vmem:[#allocation2 + $0x252] sm:$0xff]
        %1814 = vst.msk [vmem:[#allocation4 + $0x8] sm:$0xff] %vm576, %v1782
        %1815 = vst.msk [vmem:[#allocation4 + $0x30] sm:$0xff] %vm576, %v1783
        %1816 = vst.msk [vmem:[#allocation4 + $0x58] sm:$0xff] %vm576, %v1784
        %1817 = vst.msk [vmem:[#allocation4 + $0x80] sm:$0xff] %vm576, %v1785
        %1818 = vst.msk [vmem:[#allocation4 + $0xa8] sm:$0xff] %vm576, %v1786
        %1819 = vst.msk [vmem:[#allocation4 + $0xd0] sm:$0xff] %vm576, %v1787
        %1820 = vst.msk [vmem:[#allocation4 + $0xf8] sm:$0xff] %vm576, %v1788
        %1821 = vst.msk [vmem:[#allocation4 + $0x120] sm:$0xff] %vm576, %v1789
        %1822 = vst.msk [vmem:[#allocation4 + $0x148] sm:$0xff] %vm576, %v1790
        %1823 = vst.msk [vmem:[#allocation4 + $0x170] sm:$0xff] %vm576, %v1791
        %1824 = vst.msk [vmem:[#allocation4 + $0x198] sm:$0xff] %vm576, %v1792
        %1825 = vst.msk [vmem:[#allocation4 + $0x1c0] sm:$0xff] %vm576, %v1793
        %1826 = vst.msk [vmem:[#allocation4 + $0x1e8] sm:$0xff] %vm576, %v1794
        %1827 = vst.msk [vmem:[#allocation4 + $0x210] sm:$0xff] %vm576, %v1795
        %1828 = vst.msk [vmem:[#allocation4 + $0x238] sm:$0xff] %vm576, %v1796
        %1829 = vst.msk [vmem:[#allocation4 + $0x260] sm:$0xff] %vm576, %v1797
        %1830 = vst.msk [vmem:[#allocation4 + $0x288] sm:$0xff] %vm576, %v1798
        %1831 = vst.msk [vmem:[#allocation4 + $0x2b0] sm:$0xff] %vm576, %v1799
        %1832 = vst.msk [vmem:[#allocation4 + $0x2d8] sm:$0xff] %vm576, %v1800
        %1833 = vst.msk [vmem:[#allocation4 + $0x300] sm:$0xff] %vm576, %v1801
        %1834 = vst.msk [vmem:[#allocation4 + $0x328] sm:$0xff] %vm576, %v1802
        %1835 = vst.msk [vmem:[#allocation4 + $0x350] sm:$0xff] %vm576, %v1803
        %1836 = vst.msk [vmem:[#allocation4 + $0x378] sm:$0xff] %vm576, %v1804
        %1837 = vst.msk [vmem:[#allocation4 + $0x3a0] sm:$0xff] %vm576, %v1805
        %1838 = vst.msk [vmem:[#allocation4 + $0x3c8] sm:$0xff] %vm576, %v1806
        %1839 = vst.msk [vmem:[#allocation4 + $0x3f0] sm:$0xff] %vm576, %v1807
        %1840 = vst.msk [vmem:[#allocation4 + $0x418] sm:$0xff] %vm576, %v1808
        %1841 = vst.msk [vmem:[#allocation4 + $0x440] sm:$0xff] %vm576, %v1809
        %1842 = vst.msk [vmem:[#allocation4 + $0x468] sm:$0xff] %vm576, %v1810
        %1843 = vst.msk [vmem:[#allocation4 + $0x490] sm:$0xff] %vm576, %v1811
        %1844 = vst.msk [vmem:[#allocation4 + $0x4b8] sm:$0xff] %vm576, %v1812
        %1845 = vst.msk [vmem:[#allocation4 + $0x4e0] sm:$0xff] %vm576, %v1813
        %v1846 = vld [vmem:[%s1492] sm:$0xff]
        %v1847 = vld [vmem:[%s1492 + $0x10] sm:$0xff]
        %v1848 = vld [vmem:[%s1492 + $0x20] sm:$0xff]
        %v1849 = vld [vmem:[%s1492 + $0x30] sm:$0xff]
        %v1850 = vld [vmem:[%s1492 + $0x40] sm:$0xff]
        %v1851 = vld [vmem:[%s1492 + $0x50] sm:$0xff]
        %v1852 = vld [vmem:[%s1492 + $0x60] sm:$0xff]
        %v1853 = vld [vmem:[%s1492 + $0x70] sm:$0xff]
        %v1854 = vld [vmem:[%s1492 + $0xa0] sm:$0xff]
        %v1855 = vld [vmem:[%s1492 + $0xb0] sm:$0xff]
        %v1856 = vld [vmem:[%s1492 + $0xc0] sm:$0xff]
        %v1857 = vld [vmem:[%s1492 + $0xd0] sm:$0xff]
        %v1858 = vld [vmem:[%s1492 + $0xe0] sm:$0xff]
        %v1859 = vld [vmem:[%s1492 + $0xf0] sm:$0xff]
        %v1860 = vld [vmem:[%s1492 + $0x100] sm:$0xff]
        %v1861 = vld [vmem:[%s1492 + $0x110] sm:$0xff]
        %v1862 = vld [vmem:[%s1492 + $0x140] sm:$0xff]
        %v1863 = vld [vmem:[%s1492 + $0x150] sm:$0xff]
        %v1864 = vld [vmem:[%s1492 + $0x160] sm:$0xff]
        %v1865 = vld [vmem:[%s1492 + $0x170] sm:$0xff]
        %v1866 = vld [vmem:[%s1492 + $0x180] sm:$0xff]
        %v1867 = vld [vmem:[%s1492 + $0x190] sm:$0xff]
        %v1868 = vld [vmem:[%s1492 + $0x1a0] sm:$0xff]
        %v1869 = vld [vmem:[%s1492 + $0x1b0] sm:$0xff]
        %v1870 = vld [vmem:[%s1492 + $0x1e0] sm:$0xff]
        %v1871 = vld [vmem:[%s1492 + $0x1f0] sm:$0xff]
        %v1872 = vld [vmem:[%s1492 + $0x200] sm:$0xff]
        %v1873 = vld [vmem:[%s1492 + $0x210] sm:$0xff]
        %v1874 = vld [vmem:[%s1492 + $0x220] sm:$0xff]
        %v1875 = vld [vmem:[%s1492 + $0x230] sm:$0xff]
        %v1876 = vld [vmem:[%s1492 + $0x240] sm:$0xff]
        %v1877 = vld [vmem:[%s1492 + $0x250] sm:$0xff]
        %1910 = vrot.lane.b32.xlu0 %v1846, 64
        %v1911 = vpop.permute.xlu0 %1910
        %1912 = vrot.lane.b32.xlu0 %v1847, 64
        %v1913 = vpop.permute.xlu0 %1912
        %1914 = vrot.lane.b32.xlu0 %v1848, 64
        %v1915 = vpop.permute.xlu0 %1914
        %1916 = vrot.lane.b32.xlu0 %v1849, 64
        %v1917 = vpop.permute.xlu0 %1916
        %1918 = vrot.lane.b32.xlu0 %v1850, 64
        %v1919 = vpop.permute.xlu0 %1918
        %1920 = vrot.lane.b32.xlu0 %v1851, 64
        %v1921 = vpop.permute.xlu0 %1920
        %1922 = vrot.lane.b32.xlu0 %v1852, 64
        %v1923 = vpop.permute.xlu0 %1922
        %1924 = vrot.lane.b32.xlu0 %v1853, 64
        %v1925 = vpop.permute.xlu0 %1924
        %1926 = vrot.lane.b32.xlu0 %v1854, 64
        %v1927 = vpop.permute.xlu0 %1926
        %1928 = vrot.lane.b32.xlu0 %v1855, 64
        %v1929 = vpop.permute.xlu0 %1928
        %1930 = vrot.lane.b32.xlu0 %v1856, 64
        %v1931 = vpop.permute.xlu0 %1930
        %1932 = vrot.lane.b32.xlu0 %v1857, 64
        %v1933 = vpop.permute.xlu0 %1932
        %1934 = vrot.lane.b32.xlu0 %v1858, 64
        %v1935 = vpop.permute.xlu0 %1934
        %1936 = vrot.lane.b32.xlu0 %v1859, 64
        %v1937 = vpop.permute.xlu0 %1936
        %1938 = vrot.lane.b32.xlu0 %v1860, 64
        %v1939 = vpop.permute.xlu0 %1938
        %1940 = vrot.lane.b32.xlu0 %v1861, 64
        %v1941 = vpop.permute.xlu0 %1940
        %1942 = vrot.lane.b32.xlu0 %v1862, 64
        %v1943 = vpop.permute.xlu0 %1942
        %1944 = vrot.lane.b32.xlu0 %v1863, 64
        %v1945 = vpop.permute.xlu0 %1944
        %1946 = vrot.lane.b32.xlu0 %v1864, 64
        %v1947 = vpop.permute.xlu0 %1946
        %1948 = vrot.lane.b32.xlu0 %v1865, 64
        %v1949 = vpop.permute.xlu0 %1948
        %1950 = vrot.lane.b32.xlu0 %v1866, 64
        %v1951 = vpop.permute.xlu0 %1950
        %1952 = vrot.lane.b32.xlu0 %v1867, 64
        %v1953 = vpop.permute.xlu0 %1952
        %1954 = vrot.lane.b32.xlu0 %v1868, 64
        %v1955 = vpop.permute.xlu0 %1954
        %1956 = vrot.lane.b32.xlu0 %v1869, 64
        %v1957 = vpop.permute.xlu0 %1956
        %1958 = vrot.lane.b32.xlu0 %v1870, 64
        %v1959 = vpop.permute.xlu0 %1958
        %1960 = vrot.lane.b32.xlu0 %v1871, 64
        %v1961 = vpop.permute.xlu0 %1960
        %1962 = vrot.lane.b32.xlu0 %v1872, 64
        %v1963 = vpop.permute.xlu0 %1962
        %1964 = vrot.lane.b32.xlu0 %v1873, 64
        %v1965 = vpop.permute.xlu0 %1964
        %1966 = vrot.lane.b32.xlu0 %v1874, 64
        %v1967 = vpop.permute.xlu0 %1966
        %1968 = vrot.lane.b32.xlu0 %v1875, 64
        %v1969 = vpop.permute.xlu0 %1968
        %1970 = vrot.lane.b32.xlu0 %v1876, 64
        %v1971 = vpop.permute.xlu0 %1970
        %1972 = vrot.lane.b32.xlu0 %v1877, 64
        %v1973 = vpop.permute.xlu0 %1972
        %2006 = vst.msk [vmem:[#allocation4 + $0x8] sm:$0xff] %vm1749, %v1911
        %2007 = vst.msk [vmem:[#allocation4 + $0x30] sm:$0xff] %vm1749, %v1913
        %2008 = vst.msk [vmem:[#allocation4 + $0x58] sm:$0xff] %vm1749, %v1915
        %2009 = vst.msk [vmem:[#allocation4 + $0x80] sm:$0xff] %vm1749, %v1917
        %2010 = vst.msk [vmem:[#allocation4 + $0xa8] sm:$0xff] %vm1749, %v1919
        %2011 = vst.msk [vmem:[#allocation4 + $0xd0] sm:$0xff] %vm1749, %v1921
        %2012 = vst.msk [vmem:[#allocation4 + $0xf8] sm:$0xff] %vm1749, %v1923
        %2013 = vst.msk [vmem:[#allocation4 + $0x120] sm:$0xff] %vm1749, %v1925
        %2014 = vst.msk [vmem:[#allocation4 + $0x148] sm:$0xff] %vm1749, %v1927
        %2015 = vst.msk [vmem:[#allocation4 + $0x170] sm:$0xff] %vm1749, %v1929
        %2016 = vst.msk [vmem:[#allocation4 + $0x198] sm:$0xff] %vm1749, %v1931
        %2017 = vst.msk [vmem:[#allocation4 + $0x1c0] sm:$0xff] %vm1749, %v1933
        %2018 = vst.msk [vmem:[#allocation4 + $0x1e8] sm:$0xff] %vm1749, %v1935
        %2019 = vst.msk [vmem:[#allocation4 + $0x210] sm:$0xff] %vm1749, %v1937
        %2020 = vst.msk [vmem:[#allocation4 + $0x238] sm:$0xff] %vm1749, %v1939
        %2021 = vst.msk [vmem:[#allocation4 + $0x260] sm:$0xff] %vm1749, %v1941
        %2022 = vst.msk [vmem:[#allocation4 + $0x288] sm:$0xff] %vm1749, %v1943
        %2023 = vst.msk [vmem:[#allocation4 + $0x2b0] sm:$0xff] %vm1749, %v1945
        %2024 = vst.msk [vmem:[#allocation4 + $0x2d8] sm:$0xff] %vm1749, %v1947
        %2025 = vst.msk [vmem:[#allocation4 + $0x300] sm:$0xff] %vm1749, %v1949
        %2026 = vst.msk [vmem:[#allocation4 + $0x328] sm:$0xff] %vm1749, %v1951
        %2027 = vst.msk [vmem:[#allocation4 + $0x350] sm:$0xff] %vm1749, %v1953
        %2028 = vst.msk [vmem:[#allocation4 + $0x378] sm:$0xff] %vm1749, %v1955
        %2029 = vst.msk [vmem:[#allocation4 + $0x3a0] sm:$0xff] %vm1749, %v1957
        %2030 = vst.msk [vmem:[#allocation4 + $0x3c8] sm:$0xff] %vm1749, %v1959
        %2031 = vst.msk [vmem:[#allocation4 + $0x3f0] sm:$0xff] %vm1749, %v1961
        %2032 = vst.msk [vmem:[#allocation4 + $0x418] sm:$0xff] %vm1749, %v1963
        %2033 = vst.msk [vmem:[#allocation4 + $0x440] sm:$0xff] %vm1749, %v1965
        %2034 = vst.msk [vmem:[#allocation4 + $0x468] sm:$0xff] %vm1749, %v1967
        %2035 = vst.msk [vmem:[#allocation4 + $0x490] sm:$0xff] %vm1749, %v1969
        %2036 = vst.msk [vmem:[#allocation4 + $0x4b8] sm:$0xff] %vm1749, %v1971
        %2037 = vst.msk [vmem:[#allocation4 + $0x4e0] sm:$0xff] %vm1749, %v1973
        %v2038 = vld [vmem:[%s1492 + $0x1] sm:$0xff]
        %v2039 = vld [vmem:[%s1492 + $0x11] sm:$0xff]
        %v2040 = vld [vmem:[%s1492 + $0x21] sm:$0xff]
        %v2041 = vld [vmem:[%s1492 + $0x31] sm:$0xff]
        %v2042 = vld [vmem:[%s1492 + $0x41] sm:$0xff]
        %v2043 = vld [vmem:[%s1492 + $0x51] sm:$0xff]
        %v2044 = vld [vmem:[%s1492 + $0x61] sm:$0xff]
        %v2045 = vld [vmem:[%s1492 + $0x71] sm:$0xff]
        %v2046 = vld [vmem:[%s1492 + $0xa1] sm:$0xff]
        %v2047 = vld [vmem:[%s1492 + $0xb1] sm:$0xff]
        %v2048 = vld [vmem:[%s1492 + $0xc1] sm:$0xff]
        %v2049 = vld [vmem:[%s1492 + $0xd1] sm:$0xff]
        %v2050 = vld [vmem:[%s1492 + $0xe1] sm:$0xff]
        %v2051 = vld [vmem:[%s1492 + $0xf1] sm:$0xff]
        %v2052 = vld [vmem:[%s1492 + $0x101] sm:$0xff]
        %v2053 = vld [vmem:[%s1492 + $0x111] sm:$0xff]
        %v2054 = vld [vmem:[%s1492 + $0x141] sm:$0xff]
        %v2055 = vld [vmem:[%s1492 + $0x151] sm:$0xff]
        %v2056 = vld [vmem:[%s1492 + $0x161] sm:$0xff]
        %v2057 = vld [vmem:[%s1492 + $0x171] sm:$0xff]
        %v2058 = vld [vmem:[%s1492 + $0x181] sm:$0xff]
        %v2059 = vld [vmem:[%s1492 + $0x191] sm:$0xff]
        %v2060 = vld [vmem:[%s1492 + $0x1a1] sm:$0xff]
        %v2061 = vld [vmem:[%s1492 + $0x1b1] sm:$0xff]
        %v2062 = vld [vmem:[%s1492 + $0x1e1] sm:$0xff]
        %v2063 = vld [vmem:[%s1492 + $0x1f1] sm:$0xff]
        %v2064 = vld [vmem:[%s1492 + $0x201] sm:$0xff]
        %v2065 = vld [vmem:[%s1492 + $0x211] sm:$0xff]
        %v2066 = vld [vmem:[%s1492 + $0x221] sm:$0xff]
        %v2067 = vld [vmem:[%s1492 + $0x231] sm:$0xff]
        %v2068 = vld [vmem:[%s1492 + $0x241] sm:$0xff]
        %v2069 = vld [vmem:[%s1492 + $0x251] sm:$0xff]
        %2070 = vst.msk [vmem:[#allocation4 + $0x10] sm:$0xff] %vm576, %v2038
        %2071 = vst.msk [vmem:[#allocation4 + $0x38] sm:$0xff] %vm576, %v2039
        %2072 = vst.msk [vmem:[#allocation4 + $0x60] sm:$0xff] %vm576, %v2040
        %2073 = vst.msk [vmem:[#allocation4 + $0x88] sm:$0xff] %vm576, %v2041
        %2074 = vst.msk [vmem:[#allocation4 + $0xb0] sm:$0xff] %vm576, %v2042
        %2075 = vst.msk [vmem:[#allocation4 + $0xd8] sm:$0xff] %vm576, %v2043
        %2076 = vst.msk [vmem:[#allocation4 + $0x100] sm:$0xff] %vm576, %v2044
        %2077 = vst.msk [vmem:[#allocation4 + $0x128] sm:$0xff] %vm576, %v2045
        %2078 = vst.msk [vmem:[#allocation4 + $0x150] sm:$0xff] %vm576, %v2046
        %2079 = vst.msk [vmem:[#allocation4 + $0x178] sm:$0xff] %vm576, %v2047
        %2080 = vst.msk [vmem:[#allocation4 + $0x1a0] sm:$0xff] %vm576, %v2048
        %2081 = vst.msk [vmem:[#allocation4 + $0x1c8] sm:$0xff] %vm576, %v2049
        %2082 = vst.msk [vmem:[#allocation4 + $0x1f0] sm:$0xff] %vm576, %v2050
        %2083 = vst.msk [vmem:[#allocation4 + $0x218] sm:$0xff] %vm576, %v2051
        %2084 = vst.msk [vmem:[#allocation4 + $0x240] sm:$0xff] %vm576, %v2052
        %2085 = vst.msk [vmem:[#allocation4 + $0x268] sm:$0xff] %vm576, %v2053
        %2086 = vst.msk [vmem:[#allocation4 + $0x290] sm:$0xff] %vm576, %v2054
        %2087 = vst.msk [vmem:[#allocation4 + $0x2b8] sm:$0xff] %vm576, %v2055
        %2088 = vst.msk [vmem:[#allocation4 + $0x2e0] sm:$0xff] %vm576, %v2056
        %2089 = vst.msk [vmem:[#allocation4 + $0x308] sm:$0xff] %vm576, %v2057
        %2090 = vst.msk [vmem:[#allocation4 + $0x330] sm:$0xff] %vm576, %v2058
        %2091 = vst.msk [vmem:[#allocation4 + $0x358] sm:$0xff] %vm576, %v2059
        %2092 = vst.msk [vmem:[#allocation4 + $0x380] sm:$0xff] %vm576, %v2060
        %2093 = vst.msk [vmem:[#allocation4 + $0x3a8] sm:$0xff] %vm576, %v2061
        %2094 = vst.msk [vmem:[#allocation4 + $0x3d0] sm:$0xff] %vm576, %v2062
        %2095 = vst.msk [vmem:[#allocation4 + $0x3f8] sm:$0xff] %vm576, %v2063
        %2096 = vst.msk [vmem:[#allocation4 + $0x420] sm:$0xff] %vm576, %v2064
        %2097 = vst.msk [vmem:[#allocation4 + $0x448] sm:$0xff] %vm576, %v2065
        %2098 = vst.msk [vmem:[#allocation4 + $0x470] sm:$0xff] %vm576, %v2066
        %2099 = vst.msk [vmem:[#allocation4 + $0x498] sm:$0xff] %vm576, %v2067
        %2100 = vst.msk [vmem:[#allocation4 + $0x4c0] sm:$0xff] %vm576, %v2068
        %2101 = vst.msk [vmem:[#allocation4 + $0x4e8] sm:$0xff] %vm576, %v2069
        %v2102 = vld [vmem:[%s1492 + $0x2] sm:$0xff]
        %v2103 = vld [vmem:[%s1492 + $0x12] sm:$0xff]
        %v2104 = vld [vmem:[%s1492 + $0x22] sm:$0xff]
        %v2105 = vld [vmem:[%s1492 + $0x32] sm:$0xff]
        %v2106 = vld [vmem:[%s1492 + $0x42] sm:$0xff]
        %v2107 = vld [vmem:[%s1492 + $0x52] sm:$0xff]
        %v2108 = vld [vmem:[%s1492 + $0x62] sm:$0xff]
        %v2109 = vld [vmem:[%s1492 + $0x72] sm:$0xff]
        %v2110 = vld [vmem:[%s1492 + $0xa2] sm:$0xff]
        %v2111 = vld [vmem:[%s1492 + $0xb2] sm:$0xff]
        %v2112 = vld [vmem:[%s1492 + $0xc2] sm:$0xff]
        %v2113 = vld [vmem:[%s1492 + $0xd2] sm:$0xff]
        %v2114 = vld [vmem:[%s1492 + $0xe2] sm:$0xff]
        %v2115 = vld [vmem:[%s1492 + $0xf2] sm:$0xff]
        %v2116 = vld [vmem:[%s1492 + $0x102] sm:$0xff]
        %v2117 = vld [vmem:[%s1492 + $0x112] sm:$0xff]
        %v2118 = vld [vmem:[%s1492 + $0x142] sm:$0xff]
        %v2119 = vld [vmem:[%s1492 + $0x152] sm:$0xff]
        %v2120 = vld [vmem:[%s1492 + $0x162] sm:$0xff]
        %v2121 = vld [vmem:[%s1492 + $0x172] sm:$0xff]
        %v2122 = vld [vmem:[%s1492 + $0x182] sm:$0xff]
        %v2123 = vld [vmem:[%s1492 + $0x192] sm:$0xff]
        %v2124 = vld [vmem:[%s1492 + $0x1a2] sm:$0xff]
        %v2125 = vld [vmem:[%s1492 + $0x1b2] sm:$0xff]
        %v2126 = vld [vmem:[%s1492 + $0x1e2] sm:$0xff]
        %v2127 = vld [vmem:[%s1492 + $0x1f2] sm:$0xff]
        %v2128 = vld [vmem:[%s1492 + $0x202] sm:$0xff]
        %v2129 = vld [vmem:[%s1492 + $0x212] sm:$0xff]
        %v2130 = vld [vmem:[%s1492 + $0x222] sm:$0xff]
        %v2131 = vld [vmem:[%s1492 + $0x232] sm:$0xff]
        %v2132 = vld [vmem:[%s1492 + $0x242] sm:$0xff]
        %v2133 = vld [vmem:[%s1492 + $0x252] sm:$0xff]
        %2166 = vrot.lane.b32.xlu0 %v2102, 64
        %v2167 = vpop.permute.xlu0 %2166
        %2168 = vrot.lane.b32.xlu0 %v2103, 64
        %v2169 = vpop.permute.xlu0 %2168
        %2170 = vrot.lane.b32.xlu0 %v2104, 64
        %v2171 = vpop.permute.xlu0 %2170
        %2172 = vrot.lane.b32.xlu0 %v2105, 64
        %v2173 = vpop.permute.xlu0 %2172
        %2174 = vrot.lane.b32.xlu0 %v2106, 64
        %v2175 = vpop.permute.xlu0 %2174
        %2176 = vrot.lane.b32.xlu0 %v2107, 64
        %v2177 = vpop.permute.xlu0 %2176
        %2178 = vrot.lane.b32.xlu0 %v2108, 64
        %v2179 = vpop.permute.xlu0 %2178
        %2180 = vrot.lane.b32.xlu0 %v2109, 64
        %v2181 = vpop.permute.xlu0 %2180
        %2182 = vrot.lane.b32.xlu0 %v2110, 64
        %v2183 = vpop.permute.xlu0 %2182
        %2184 = vrot.lane.b32.xlu0 %v2111, 64
        %v2185 = vpop.permute.xlu0 %2184
        %2186 = vrot.lane.b32.xlu0 %v2112, 64
        %v2187 = vpop.permute.xlu0 %2186
        %2188 = vrot.lane.b32.xlu0 %v2113, 64
        %v2189 = vpop.permute.xlu0 %2188
        %2190 = vrot.lane.b32.xlu0 %v2114, 64
        %v2191 = vpop.permute.xlu0 %2190
        %2192 = vrot.lane.b32.xlu0 %v2115, 64
        %v2193 = vpop.permute.xlu0 %2192
        %2194 = vrot.lane.b32.xlu0 %v2116, 64
        %v2195 = vpop.permute.xlu0 %2194
        %2196 = vrot.lane.b32.xlu0 %v2117, 64
        %v2197 = vpop.permute.xlu0 %2196
        %2198 = vrot.lane.b32.xlu0 %v2118, 64
        %v2199 = vpop.permute.xlu0 %2198
        %2200 = vrot.lane.b32.xlu0 %v2119, 64
        %v2201 = vpop.permute.xlu0 %2200
        %2202 = vrot.lane.b32.xlu0 %v2120, 64
        %v2203 = vpop.permute.xlu0 %2202
        %2204 = vrot.lane.b32.xlu0 %v2121, 64
        %v2205 = vpop.permute.xlu0 %2204
        %2206 = vrot.lane.b32.xlu0 %v2122, 64
        %v2207 = vpop.permute.xlu0 %2206
        %2208 = vrot.lane.b32.xlu0 %v2123, 64
        %v2209 = vpop.permute.xlu0 %2208
        %2210 = vrot.lane.b32.xlu0 %v2124, 64
        %v2211 = vpop.permute.xlu0 %2210
        %2212 = vrot.lane.b32.xlu0 %v2125, 64
        %v2213 = vpop.permute.xlu0 %2212
        %2214 = vrot.lane.b32.xlu0 %v2126, 64
        %v2215 = vpop.permute.xlu0 %2214
        %2216 = vrot.lane.b32.xlu0 %v2127, 64
        %v2217 = vpop.permute.xlu0 %2216
        %2218 = vrot.lane.b32.xlu0 %v2128, 64
        %v2219 = vpop.permute.xlu0 %2218
        %2220 = vrot.lane.b32.xlu0 %v2129, 64
        %v2221 = vpop.permute.xlu0 %2220
        %2222 = vrot.lane.b32.xlu0 %v2130, 64
        %v2223 = vpop.permute.xlu0 %2222
        %2224 = vrot.lane.b32.xlu0 %v2131, 64
        %v2225 = vpop.permute.xlu0 %2224
        %2226 = vrot.lane.b32.xlu0 %v2132, 64
        %v2227 = vpop.permute.xlu0 %2226
        %2228 = vrot.lane.b32.xlu0 %v2133, 64
        %v2229 = vpop.permute.xlu0 %2228
        %2262 = vst.msk [vmem:[#allocation4 + $0x10] sm:$0xff] %vm1749, %v2167
        %2263 = vst.msk [vmem:[#allocation4 + $0x38] sm:$0xff] %vm1749, %v2169
        %2264 = vst.msk [vmem:[#allocation4 + $0x60] sm:$0xff] %vm1749, %v2171
        %2265 = vst.msk [vmem:[#allocation4 + $0x88] sm:$0xff] %vm1749, %v2173
        %2266 = vst.msk [vmem:[#allocation4 + $0xb0] sm:$0xff] %vm1749, %v2175
        %2267 = vst.msk [vmem:[#allocation4 + $0xd8] sm:$0xff] %vm1749, %v2177
        %2268 = vst.msk [vmem:[#allocation4 + $0x100] sm:$0xff] %vm1749, %v2179
        %2269 = vst.msk [vmem:[#allocation4 + $0x128] sm:$0xff] %vm1749, %v2181
        %2270 = vst.msk [vmem:[#allocation4 + $0x150] sm:$0xff] %vm1749, %v2183
        %2271 = vst.msk [vmem:[#allocation4 + $0x178] sm:$0xff] %vm1749, %v2185
        %2272 = vst.msk [vmem:[#allocation4 + $0x1a0] sm:$0xff] %vm1749, %v2187
        %2273 = vst.msk [vmem:[#allocation4 + $0x1c8] sm:$0xff] %vm1749, %v2189
        %2274 = vst.msk [vmem:[#allocation4 + $0x1f0] sm:$0xff] %vm1749, %v2191
        %2275 = vst.msk [vmem:[#allocation4 + $0x218] sm:$0xff] %vm1749, %v2193
        %2276 = vst.msk [vmem:[#allocation4 + $0x240] sm:$0xff] %vm1749, %v2195
        %2277 = vst.msk [vmem:[#allocation4 + $0x268] sm:$0xff] %vm1749, %v2197
        %2278 = vst.msk [vmem:[#allocation4 + $0x290] sm:$0xff] %vm1749, %v2199
        %2279 = vst.msk [vmem:[#allocation4 + $0x2b8] sm:$0xff] %vm1749, %v2201
        %2280 = vst.msk [vmem:[#allocation4 + $0x2e0] sm:$0xff] %vm1749, %v2203
        %2281 = vst.msk [vmem:[#allocation4 + $0x308] sm:$0xff] %vm1749, %v2205
        %2282 = vst.msk [vmem:[#allocation4 + $0x330] sm:$0xff] %vm1749, %v2207
        %2283 = vst.msk [vmem:[#allocation4 + $0x358] sm:$0xff] %vm1749, %v2209
        %2284 = vst.msk [vmem:[#allocation4 + $0x380] sm:$0xff] %vm1749, %v2211
        %2285 = vst.msk [vmem:[#allocation4 + $0x3a8] sm:$0xff] %vm1749, %v2213
        %2286 = vst.msk [vmem:[#allocation4 + $0x3d0] sm:$0xff] %vm1749, %v2215
        %2287 = vst.msk [vmem:[#allocation4 + $0x3f8] sm:$0xff] %vm1749, %v2217
        %2288 = vst.msk [vmem:[#allocation4 + $0x420] sm:$0xff] %vm1749, %v2219
        %2289 = vst.msk [vmem:[#allocation4 + $0x448] sm:$0xff] %vm1749, %v2221
        %2290 = vst.msk [vmem:[#allocation4 + $0x470] sm:$0xff] %vm1749, %v2223
        %2291 = vst.msk [vmem:[#allocation4 + $0x498] sm:$0xff] %vm1749, %v2225
        %2292 = vst.msk [vmem:[#allocation4 + $0x4c0] sm:$0xff] %vm1749, %v2227
        %2293 = vst.msk [vmem:[#allocation4 + $0x4e8] sm:$0xff] %vm1749, %v2229
        %s2294 = scalar_lea.vmem [#allocation2], 32
        %v2295 = vld [vmem:[%s2294] sm:$0xff]
        %v2296 = vld [vmem:[%s2294 + $0x10] sm:$0xff]
        %v2297 = vld [vmem:[%s2294 + $0x20] sm:$0xff]
        %v2298 = vld [vmem:[%s2294 + $0x30] sm:$0xff]
        %v2299 = vld [vmem:[%s2294 + $0x40] sm:$0xff]
        %v2300 = vld [vmem:[%s2294 + $0x50] sm:$0xff]
        %v2301 = vld [vmem:[%s2294 + $0x60] sm:$0xff]
        %v2302 = vld [vmem:[%s2294 + $0x70] sm:$0xff]
        %v2303 = vld [vmem:[%s2294 + $0xa0] sm:$0xff]
        %v2304 = vld [vmem:[%s2294 + $0xb0] sm:$0xff]
        %v2305 = vld [vmem:[%s2294 + $0xc0] sm:$0xff]
        %v2306 = vld [vmem:[%s2294 + $0xd0] sm:$0xff]
        %v2307 = vld [vmem:[%s2294 + $0xe0] sm:$0xff]
        %v2308 = vld [vmem:[%s2294 + $0xf0] sm:$0xff]
        %v2309 = vld [vmem:[%s2294 + $0x100] sm:$0xff]
        %v2310 = vld [vmem:[%s2294 + $0x110] sm:$0xff]
        %v2311 = vld [vmem:[%s2294 + $0x140] sm:$0xff]
        %v2312 = vld [vmem:[%s2294 + $0x150] sm:$0xff]
        %v2313 = vld [vmem:[%s2294 + $0x160] sm:$0xff]
        %v2314 = vld [vmem:[%s2294 + $0x170] sm:$0xff]
        %v2315 = vld [vmem:[%s2294 + $0x180] sm:$0xff]
        %v2316 = vld [vmem:[%s2294 + $0x190] sm:$0xff]
        %v2317 = vld [vmem:[%s2294 + $0x1a0] sm:$0xff]
        %v2318 = vld [vmem:[%s2294 + $0x1b0] sm:$0xff]
        %v2319 = vld [vmem:[%s2294 + $0x1e0] sm:$0xff]
        %v2320 = vld [vmem:[%s2294 + $0x1f0] sm:$0xff]
        %v2321 = vld [vmem:[%s2294 + $0x200] sm:$0xff]
        %v2322 = vld [vmem:[%s2294 + $0x210] sm:$0xff]
        %v2323 = vld [vmem:[%s2294 + $0x220] sm:$0xff]
        %v2324 = vld [vmem:[%s2294 + $0x230] sm:$0xff]
        %v2325 = vld [vmem:[%s2294 + $0x240] sm:$0xff]
        %v2326 = vld [vmem:[%s2294 + $0x250] sm:$0xff]
        %2327 = vst.msk [vmem:[#allocation4 + $0x18] sm:$0xff] %vm576, %v2295
        %2328 = vst.msk [vmem:[#allocation4 + $0x40] sm:$0xff] %vm576, %v2296
        %2329 = vst.msk [vmem:[#allocation4 + $0x68] sm:$0xff] %vm576, %v2297
        %2330 = vst.msk [vmem:[#allocation4 + $0x90] sm:$0xff] %vm576, %v2298
        %2331 = vst.msk [vmem:[#allocation4 + $0xb8] sm:$0xff] %vm576, %v2299
        %2332 = vst.msk [vmem:[#allocation4 + $0xe0] sm:$0xff] %vm576, %v2300
        %2333 = vst.msk [vmem:[#allocation4 + $0x108] sm:$0xff] %vm576, %v2301
        %2334 = vst.msk [vmem:[#allocation4 + $0x130] sm:$0xff] %vm576, %v2302
        %2335 = vst.msk [vmem:[#allocation4 + $0x158] sm:$0xff] %vm576, %v2303
        %2336 = vst.msk [vmem:[#allocation4 + $0x180] sm:$0xff] %vm576, %v2304
        %2337 = vst.msk [vmem:[#allocation4 + $0x1a8] sm:$0xff] %vm576, %v2305
        %2338 = vst.msk [vmem:[#allocation4 + $0x1d0] sm:$0xff] %vm576, %v2306
        %2339 = vst.msk [vmem:[#allocation4 + $0x1f8] sm:$0xff] %vm576, %v2307
        %2340 = vst.msk [vmem:[#allocation4 + $0x220] sm:$0xff] %vm576, %v2308
        %2341 = vst.msk [vmem:[#allocation4 + $0x248] sm:$0xff] %vm576, %v2309
        %2342 = vst.msk [vmem:[#allocation4 + $0x270] sm:$0xff] %vm576, %v2310
        %2343 = vst.msk [vmem:[#allocation4 + $0x298] sm:$0xff] %vm576, %v2311
        %2344 = vst.msk [vmem:[#allocation4 + $0x2c0] sm:$0xff] %vm576, %v2312
        %2345 = vst.msk [vmem:[#allocation4 + $0x2e8] sm:$0xff] %vm576, %v2313
        %2346 = vst.msk [vmem:[#allocation4 + $0x310] sm:$0xff] %vm576, %v2314
        %2347 = vst.msk [vmem:[#allocation4 + $0x338] sm:$0xff] %vm576, %v2315
        %2348 = vst.msk [vmem:[#allocation4 + $0x360] sm:$0xff] %vm576, %v2316
        %2349 = vst.msk [vmem:[#allocation4 + $0x388] sm:$0xff] %vm576, %v2317
        %2350 = vst.msk [vmem:[#allocation4 + $0x3b0] sm:$0xff] %vm576, %v2318
        %2351 = vst.msk [vmem:[#allocation4 + $0x3d8] sm:$0xff] %vm576, %v2319
        %2352 = vst.msk [vmem:[#allocation4 + $0x400] sm:$0xff] %vm576, %v2320
        %2353 = vst.msk [vmem:[#allocation4 + $0x428] sm:$0xff] %vm576, %v2321
        %2354 = vst.msk [vmem:[#allocation4 + $0x450] sm:$0xff] %vm576, %v2322
        %2355 = vst.msk [vmem:[#allocation4 + $0x478] sm:$0xff] %vm576, %v2323
        %2356 = vst.msk [vmem:[#allocation4 + $0x4a0] sm:$0xff] %vm576, %v2324
        %2357 = vst.msk [vmem:[#allocation4 + $0x4c8] sm:$0xff] %vm576, %v2325
        %2358 = vst.msk [vmem:[#allocation4 + $0x4f0] sm:$0xff] %vm576, %v2326
        %v2359 = vld [vmem:[%s2294 + $0x1] sm:$0xff]
        %v2360 = vld [vmem:[%s2294 + $0x11] sm:$0xff]
        %v2361 = vld [vmem:[%s2294 + $0x21] sm:$0xff]
        %v2362 = vld [vmem:[%s2294 + $0x31] sm:$0xff]
        %v2363 = vld [vmem:[%s2294 + $0x41] sm:$0xff]
        %v2364 = vld [vmem:[%s2294 + $0x51] sm:$0xff]
        %v2365 = vld [vmem:[%s2294 + $0x61] sm:$0xff]
        %v2366 = vld [vmem:[%s2294 + $0x71] sm:$0xff]
        %v2367 = vld [vmem:[%s2294 + $0xa1] sm:$0xff]
        %v2368 = vld [vmem:[%s2294 + $0xb1] sm:$0xff]
        %v2369 = vld [vmem:[%s2294 + $0xc1] sm:$0xff]
        %v2370 = vld [vmem:[%s2294 + $0xd1] sm:$0xff]
        %v2371 = vld [vmem:[%s2294 + $0xe1] sm:$0xff]
        %v2372 = vld [vmem:[%s2294 + $0xf1] sm:$0xff]
        %v2373 = vld [vmem:[%s2294 + $0x101] sm:$0xff]
        %v2374 = vld [vmem:[%s2294 + $0x111] sm:$0xff]
        %v2375 = vld [vmem:[%s2294 + $0x141] sm:$0xff]
        %v2376 = vld [vmem:[%s2294 + $0x151] sm:$0xff]
        %v2377 = vld [vmem:[%s2294 + $0x161] sm:$0xff]
        %v2378 = vld [vmem:[%s2294 + $0x171] sm:$0xff]
        %v2379 = vld [vmem:[%s2294 + $0x181] sm:$0xff]
        %v2380 = vld [vmem:[%s2294 + $0x191] sm:$0xff]
        %v2381 = vld [vmem:[%s2294 + $0x1a1] sm:$0xff]
        %v2382 = vld [vmem:[%s2294 + $0x1b1] sm:$0xff]
        %v2383 = vld [vmem:[%s2294 + $0x1e1] sm:$0xff]
        %v2384 = vld [vmem:[%s2294 + $0x1f1] sm:$0xff]
        %v2385 = vld [vmem:[%s2294 + $0x201] sm:$0xff]
        %v2386 = vld [vmem:[%s2294 + $0x211] sm:$0xff]
        %v2387 = vld [vmem:[%s2294 + $0x221] sm:$0xff]
        %v2388 = vld [vmem:[%s2294 + $0x231] sm:$0xff]
        %v2389 = vld [vmem:[%s2294 + $0x241] sm:$0xff]
        %v2390 = vld [vmem:[%s2294 + $0x251] sm:$0xff]
        %2423 = vrot.lane.b32.xlu0 %v2359, 64
        %v2424 = vpop.permute.xlu0 %2423
        %2425 = vrot.lane.b32.xlu0 %v2360, 64
        %v2426 = vpop.permute.xlu0 %2425
        %2427 = vrot.lane.b32.xlu0 %v2361, 64
        %v2428 = vpop.permute.xlu0 %2427
        %2429 = vrot.lane.b32.xlu0 %v2362, 64
        %v2430 = vpop.permute.xlu0 %2429
        %2431 = vrot.lane.b32.xlu0 %v2363, 64
        %v2432 = vpop.permute.xlu0 %2431
        %2433 = vrot.lane.b32.xlu0 %v2364, 64
        %v2434 = vpop.permute.xlu0 %2433
        %2435 = vrot.lane.b32.xlu0 %v2365, 64
        %v2436 = vpop.permute.xlu0 %2435
        %2437 = vrot.lane.b32.xlu0 %v2366, 64
        %v2438 = vpop.permute.xlu0 %2437
        %2439 = vrot.lane.b32.xlu0 %v2367, 64
        %v2440 = vpop.permute.xlu0 %2439
        %2441 = vrot.lane.b32.xlu0 %v2368, 64
        %v2442 = vpop.permute.xlu0 %2441
        %2443 = vrot.lane.b32.xlu0 %v2369, 64
        %v2444 = vpop.permute.xlu0 %2443
        %2445 = vrot.lane.b32.xlu0 %v2370, 64
        %v2446 = vpop.permute.xlu0 %2445
        %2447 = vrot.lane.b32.xlu0 %v2371, 64
        %v2448 = vpop.permute.xlu0 %2447
        %2449 = vrot.lane.b32.xlu0 %v2372, 64
        %v2450 = vpop.permute.xlu0 %2449
        %2451 = vrot.lane.b32.xlu0 %v2373, 64
        %v2452 = vpop.permute.xlu0 %2451
        %2453 = vrot.lane.b32.xlu0 %v2374, 64
        %v2454 = vpop.permute.xlu0 %2453
        %2455 = vrot.lane.b32.xlu0 %v2375, 64
        %v2456 = vpop.permute.xlu0 %2455
        %2457 = vrot.lane.b32.xlu0 %v2376, 64
        %v2458 = vpop.permute.xlu0 %2457
        %2459 = vrot.lane.b32.xlu0 %v2377, 64
        %v2460 = vpop.permute.xlu0 %2459
        %2461 = vrot.lane.b32.xlu0 %v2378, 64
        %v2462 = vpop.permute.xlu0 %2461
        %2463 = vrot.lane.b32.xlu0 %v2379, 64
        %v2464 = vpop.permute.xlu0 %2463
        %2465 = vrot.lane.b32.xlu0 %v2380, 64
        %v2466 = vpop.permute.xlu0 %2465
        %2467 = vrot.lane.b32.xlu0 %v2381, 64
        %v2468 = vpop.permute.xlu0 %2467
        %2469 = vrot.lane.b32.xlu0 %v2382, 64
        %v2470 = vpop.permute.xlu0 %2469
        %2471 = vrot.lane.b32.xlu0 %v2383, 64
        %v2472 = vpop.permute.xlu0 %2471
        %2473 = vrot.lane.b32.xlu0 %v2384, 64
        %v2474 = vpop.permute.xlu0 %2473
        %2475 = vrot.lane.b32.xlu0 %v2385, 64
        %v2476 = vpop.permute.xlu0 %2475
        %2477 = vrot.lane.b32.xlu0 %v2386, 64
        %v2478 = vpop.permute.xlu0 %2477
        %2479 = vrot.lane.b32.xlu0 %v2387, 64
        %v2480 = vpop.permute.xlu0 %2479
        %2481 = vrot.lane.b32.xlu0 %v2388, 64
        %v2482 = vpop.permute.xlu0 %2481
        %2483 = vrot.lane.b32.xlu0 %v2389, 64
        %v2484 = vpop.permute.xlu0 %2483
        %2485 = vrot.lane.b32.xlu0 %v2390, 64
        %v2486 = vpop.permute.xlu0 %2485
        %2519 = vst.msk [vmem:[#allocation4 + $0x18] sm:$0xff] %vm1749, %v2424
        %2520 = vst.msk [vmem:[#allocation4 + $0x40] sm:$0xff] %vm1749, %v2426
        %2521 = vst.msk [vmem:[#allocation4 + $0x68] sm:$0xff] %vm1749, %v2428
        %2522 = vst.msk [vmem:[#allocation4 + $0x90] sm:$0xff] %vm1749, %v2430
        %2523 = vst.msk [vmem:[#allocation4 + $0xb8] sm:$0xff] %vm1749, %v2432
        %2524 = vst.msk [vmem:[#allocation4 + $0xe0] sm:$0xff] %vm1749, %v2434
        %2525 = vst.msk [vmem:[#allocation4 + $0x108] sm:$0xff] %vm1749, %v2436
        %2526 = vst.msk [vmem:[#allocation4 + $0x130] sm:$0xff] %vm1749, %v2438
        %2527 = vst.msk [vmem:[#allocation4 + $0x158] sm:$0xff] %vm1749, %v2440
        %2528 = vst.msk [vmem:[#allocation4 + $0x180] sm:$0xff] %vm1749, %v2442
        %2529 = vst.msk [vmem:[#allocation4 + $0x1a8] sm:$0xff] %vm1749, %v2444
        %2530 = vst.msk [vmem:[#allocation4 + $0x1d0] sm:$0xff] %vm1749, %v2446
        %2531 = vst.msk [vmem:[#allocation4 + $0x1f8] sm:$0xff] %vm1749, %v2448
        %2532 = vst.msk [vmem:[#allocation4 + $0x220] sm:$0xff] %vm1749, %v2450
        %2533 = vst.msk [vmem:[#allocation4 + $0x248] sm:$0xff] %vm1749, %v2452
        %2534 = vst.msk [vmem:[#allocation4 + $0x270] sm:$0xff] %vm1749, %v2454
        %2535 = vst.msk [vmem:[#allocation4 + $0x298] sm:$0xff] %vm1749, %v2456
        %2536 = vst.msk [vmem:[#allocation4 + $0x2c0] sm:$0xff] %vm1749, %v2458
        %2537 = vst.msk [vmem:[#allocation4 + $0x2e8] sm:$0xff] %vm1749, %v2460
        %2538 = vst.msk [vmem:[#allocation4 + $0x310] sm:$0xff] %vm1749, %v2462
        %2539 = vst.msk [vmem:[#allocation4 + $0x338] sm:$0xff] %vm1749, %v2464
        %2540 = vst.msk [vmem:[#allocation4 + $0x360] sm:$0xff] %vm1749, %v2466
        %2541 = vst.msk [vmem:[#allocation4 + $0x388] sm:$0xff] %vm1749, %v2468
        %2542 = vst.msk [vmem:[#allocation4 + $0x3b0] sm:$0xff] %vm1749, %v2470
        %2543 = vst.msk [vmem:[#allocation4 + $0x3d8] sm:$0xff] %vm1749, %v2472
        %2544 = vst.msk [vmem:[#allocation4 + $0x400] sm:$0xff] %vm1749, %v2474
        %2545 = vst.msk [vmem:[#allocation4 + $0x428] sm:$0xff] %vm1749, %v2476
        %2546 = vst.msk [vmem:[#allocation4 + $0x450] sm:$0xff] %vm1749, %v2478
        %2547 = vst.msk [vmem:[#allocation4 + $0x478] sm:$0xff] %vm1749, %v2480
        %2548 = vst.msk [vmem:[#allocation4 + $0x4a0] sm:$0xff] %vm1749, %v2482
        %2549 = vst.msk [vmem:[#allocation4 + $0x4c8] sm:$0xff] %vm1749, %v2484
        %2550 = vst.msk [vmem:[#allocation4 + $0x4f0] sm:$0xff] %vm1749, %v2486
        %v2551 = vld [vmem:[%s2294 + $0x2] sm:$0xff]
        %v2552 = vld [vmem:[%s2294 + $0x12] sm:$0xff]
        %v2553 = vld [vmem:[%s2294 + $0x22] sm:$0xff]
        %v2554 = vld [vmem:[%s2294 + $0x32] sm:$0xff]
        %v2555 = vld [vmem:[%s2294 + $0x42] sm:$0xff]
        %v2556 = vld [vmem:[%s2294 + $0x52] sm:$0xff]
        %v2557 = vld [vmem:[%s2294 + $0x62] sm:$0xff]
        %v2558 = vld [vmem:[%s2294 + $0x72] sm:$0xff]
        %v2559 = vld [vmem:[%s2294 + $0xa2] sm:$0xff]
        %v2560 = vld [vmem:[%s2294 + $0xb2] sm:$0xff]
        %v2561 = vld [vmem:[%s2294 + $0xc2] sm:$0xff]
        %v2562 = vld [vmem:[%s2294 + $0xd2] sm:$0xff]
        %v2563 = vld [vmem:[%s2294 + $0xe2] sm:$0xff]
        %v2564 = vld [vmem:[%s2294 + $0xf2] sm:$0xff]
        %v2565 = vld [vmem:[%s2294 + $0x102] sm:$0xff]
        %v2566 = vld [vmem:[%s2294 + $0x112] sm:$0xff]
        %v2567 = vld [vmem:[%s2294 + $0x142] sm:$0xff]
        %v2568 = vld [vmem:[%s2294 + $0x152] sm:$0xff]
        %v2569 = vld [vmem:[%s2294 + $0x162] sm:$0xff]
        %v2570 = vld [vmem:[%s2294 + $0x172] sm:$0xff]
        %v2571 = vld [vmem:[%s2294 + $0x182] sm:$0xff]
        %v2572 = vld [vmem:[%s2294 + $0x192] sm:$0xff]
        %v2573 = vld [vmem:[%s2294 + $0x1a2] sm:$0xff]
        %v2574 = vld [vmem:[%s2294 + $0x1b2] sm:$0xff]
        %v2575 = vld [vmem:[%s2294 + $0x1e2] sm:$0xff]
        %v2576 = vld [vmem:[%s2294 + $0x1f2] sm:$0xff]
        %v2577 = vld [vmem:[%s2294 + $0x202] sm:$0xff]
        %v2578 = vld [vmem:[%s2294 + $0x212] sm:$0xff]
        %v2579 = vld [vmem:[%s2294 + $0x222] sm:$0xff]
        %v2580 = vld [vmem:[%s2294 + $0x232] sm:$0xff]
        %v2581 = vld [vmem:[%s2294 + $0x242] sm:$0xff]
        %v2582 = vld [vmem:[%s2294 + $0x252] sm:$0xff]
        %2583 = vst.msk [vmem:[#allocation4 + $0x20] sm:$0xff] %vm576, %v2551
        %2584 = vst.msk [vmem:[#allocation4 + $0x48] sm:$0xff] %vm576, %v2552
        %2585 = vst.msk [vmem:[#allocation4 + $0x70] sm:$0xff] %vm576, %v2553
        %2586 = vst.msk [vmem:[#allocation4 + $0x98] sm:$0xff] %vm576, %v2554
        %2587 = vst.msk [vmem:[#allocation4 + $0xc0] sm:$0xff] %vm576, %v2555
        %2588 = vst.msk [vmem:[#allocation4 + $0xe8] sm:$0xff] %vm576, %v2556
        %2589 = vst.msk [vmem:[#allocation4 + $0x110] sm:$0xff] %vm576, %v2557
        %2590 = vst.msk [vmem:[#allocation4 + $0x138] sm:$0xff] %vm576, %v2558
        %2591 = vst.msk [vmem:[#allocation4 + $0x160] sm:$0xff] %vm576, %v2559
        %2592 = vst.msk [vmem:[#allocation4 + $0x188] sm:$0xff] %vm576, %v2560
        %2593 = vst.msk [vmem:[#allocation4 + $0x1b0] sm:$0xff] %vm576, %v2561
        %2594 = vst.msk [vmem:[#allocation4 + $0x1d8] sm:$0xff] %vm576, %v2562
        %2595 = vst.msk [vmem:[#allocation4 + $0x200] sm:$0xff] %vm576, %v2563
        %2596 = vst.msk [vmem:[#allocation4 + $0x228] sm:$0xff] %vm576, %v2564
        %2597 = vst.msk [vmem:[#allocation4 + $0x250] sm:$0xff] %vm576, %v2565
        %2598 = vst.msk [vmem:[#allocation4 + $0x278] sm:$0xff] %vm576, %v2566
        %2599 = vst.msk [vmem:[#allocation4 + $0x2a0] sm:$0xff] %vm576, %v2567
        %2600 = vst.msk [vmem:[#allocation4 + $0x2c8] sm:$0xff] %vm576, %v2568
        %2601 = vst.msk [vmem:[#allocation4 + $0x2f0] sm:$0xff] %vm576, %v2569
        %2602 = vst.msk [vmem:[#allocation4 + $0x318] sm:$0xff] %vm576, %v2570
        %2603 = vst.msk [vmem:[#allocation4 + $0x340] sm:$0xff] %vm576, %v2571
        %2604 = vst.msk [vmem:[#allocation4 + $0x368] sm:$0xff] %vm576, %v2572
        %2605 = vst.msk [vmem:[#allocation4 + $0x390] sm:$0xff] %vm576, %v2573
        %2606 = vst.msk [vmem:[#allocation4 + $0x3b8] sm:$0xff] %vm576, %v2574
        %2607 = vst.msk [vmem:[#allocation4 + $0x3e0] sm:$0xff] %vm576, %v2575
        %2608 = vst.msk [vmem:[#allocation4 + $0x408] sm:$0xff] %vm576, %v2576
        %2609 = vst.msk [vmem:[#allocation4 + $0x430] sm:$0xff] %vm576, %v2577
        %2610 = vst.msk [vmem:[#allocation4 + $0x458] sm:$0xff] %vm576, %v2578
        %2611 = vst.msk [vmem:[#allocation4 + $0x480] sm:$0xff] %vm576, %v2579
        %2612 = vst.msk [vmem:[#allocation4 + $0x4a8] sm:$0xff] %vm576, %v2580
        %2613 = vst.msk [vmem:[#allocation4 + $0x4d0] sm:$0xff] %vm576, %v2581
        %2614 = vst.msk [vmem:[#allocation4 + $0x4f8] sm:$0xff] %vm576, %v2582
        %v2615 = vld [vmem:[#allocation4] sm:$0xff]
        %v2616 = vld [vmem:[#allocation4 + $0x8] sm:$0xff]
        %v2617 = vld [vmem:[#allocation4 + $0x10] sm:$0xff]
        %v2618 = vld [vmem:[#allocation4 + $0x18] sm:$0xff]
        %v2619 = vld [vmem:[#allocation4 + $0x20] sm:$0xff]
        %v2620 = vld [vmem:[#allocation4 + $0x28] sm:$0xff]
        %v2621 = vld [vmem:[#allocation4 + $0x30] sm:$0xff]
        %v2622 = vld [vmem:[#allocation4 + $0x38] sm:$0xff]
        %v2623 = vld [vmem:[#allocation4 + $0x40] sm:$0xff]
        %v2624 = vld [vmem:[#allocation4 + $0x48] sm:$0xff]
        %v2625 = vld [vmem:[#allocation4 + $0x50] sm:$0xff]
        %v2626 = vld [vmem:[#allocation4 + $0x58] sm:$0xff]
        %v2627 = vld [vmem:[#allocation4 + $0x60] sm:$0xff]
        %v2628 = vld [vmem:[#allocation4 + $0x68] sm:$0xff]
        %v2629 = vld [vmem:[#allocation4 + $0x70] sm:$0xff]
        %v2630 = vld [vmem:[#allocation4 + $0x78] sm:$0xff]
        %v2631 = vld [vmem:[#allocation4 + $0x80] sm:$0xff]
        %v2632 = vld [vmem:[#allocation4 + $0x88] sm:$0xff]
        %v2633 = vld [vmem:[#allocation4 + $0x90] sm:$0xff]
        %v2634 = vld [vmem:[#allocation4 + $0x98] sm:$0xff]
        %v2635 = vld [vmem:[#allocation4 + $0xa0] sm:$0xff]
        %v2636 = vld [vmem:[#allocation4 + $0xa8] sm:$0xff]
        %v2637 = vld [vmem:[#allocation4 + $0xb0] sm:$0xff]
        %v2638 = vld [vmem:[#allocation4 + $0xb8] sm:$0xff]
        %v2639 = vld [vmem:[#allocation4 + $0xc0] sm:$0xff]
        %v2640 = vld [vmem:[#allocation4 + $0xc8] sm:$0xff]
        %v2641 = vld [vmem:[#allocation4 + $0xd0] sm:$0xff]
        %v2642 = vld [vmem:[#allocation4 + $0xd8] sm:$0xff]
        %v2643 = vld [vmem:[#allocation4 + $0xe0] sm:$0xff]
        %v2644 = vld [vmem:[#allocation4 + $0xe8] sm:$0xff]
        %v2645 = vld [vmem:[#allocation4 + $0xf0] sm:$0xff]
        %v2646 = vld [vmem:[#allocation4 + $0xf8] sm:$0xff]
        %v2647 = vld [vmem:[#allocation4 + $0x100] sm:$0xff]
        %v2648 = vld [vmem:[#allocation4 + $0x108] sm:$0xff]
        %v2649 = vld [vmem:[#allocation4 + $0x110] sm:$0xff]
        %v2650 = vld [vmem:[#allocation4 + $0x118] sm:$0xff]
        %v2651 = vld [vmem:[#allocation4 + $0x120] sm:$0xff]
        %v2652 = vld [vmem:[#allocation4 + $0x128] sm:$0xff]
        %v2653 = vld [vmem:[#allocation4 + $0x130] sm:$0xff]
        %v2654 = vld [vmem:[#allocation4 + $0x138] sm:$0xff]
        %v2655 = vld [vmem:[#allocation4 + $0x140] sm:$0xff]
        %v2656 = vld [vmem:[#allocation4 + $0x148] sm:$0xff]
        %v2657 = vld [vmem:[#allocation4 + $0x150] sm:$0xff]
        %v2658 = vld [vmem:[#allocation4 + $0x158] sm:$0xff]
        %v2659 = vld [vmem:[#allocation4 + $0x160] sm:$0xff]
        %v2660 = vld [vmem:[#allocation4 + $0x168] sm:$0xff]
        %v2661 = vld [vmem:[#allocation4 + $0x170] sm:$0xff]
        %v2662 = vld [vmem:[#allocation4 + $0x178] sm:$0xff]
        %v2663 = vld [vmem:[#allocation4 + $0x180] sm:$0xff]
        %v2664 = vld [vmem:[#allocation4 + $0x188] sm:$0xff]
        %v2665 = vld [vmem:[#allocation4 + $0x190] sm:$0xff]
        %v2666 = vld [vmem:[#allocation4 + $0x198] sm:$0xff]
        %v2667 = vld [vmem:[#allocation4 + $0x1a0] sm:$0xff]
        %v2668 = vld [vmem:[#allocation4 + $0x1a8] sm:$0xff]
        %v2669 = vld [vmem:[#allocation4 + $0x1b0] sm:$0xff]
        %v2670 = vld [vmem:[#allocation4 + $0x1b8] sm:$0xff]
        %v2671 = vld [vmem:[#allocation4 + $0x1c0] sm:$0xff]
        %v2672 = vld [vmem:[#allocation4 + $0x1c8] sm:$0xff]
        %v2673 = vld [vmem:[#allocation4 + $0x1d0] sm:$0xff]
        %v2674 = vld [vmem:[#allocation4 + $0x1d8] sm:$0xff]
        %v2675 = vld [vmem:[#allocation4 + $0x1e0] sm:$0xff]
        %v2676 = vld [vmem:[#allocation4 + $0x1e8] sm:$0xff]
        %v2677 = vld [vmem:[#allocation4 + $0x1f0] sm:$0xff]
        %v2678 = vld [vmem:[#allocation4 + $0x1f8] sm:$0xff]
        %v2679 = vld [vmem:[#allocation4 + $0x200] sm:$0xff]
        %v2680 = vld [vmem:[#allocation4 + $0x208] sm:$0xff]
        %v2681 = vld [vmem:[#allocation4 + $0x210] sm:$0xff]
        %v2682 = vld [vmem:[#allocation4 + $0x218] sm:$0xff]
        %v2683 = vld [vmem:[#allocation4 + $0x220] sm:$0xff]
        %v2684 = vld [vmem:[#allocation4 + $0x228] sm:$0xff]
        %v2685 = vld [vmem:[#allocation4 + $0x230] sm:$0xff]
        %v2686 = vld [vmem:[#allocation4 + $0x238] sm:$0xff]
        %v2687 = vld [vmem:[#allocation4 + $0x240] sm:$0xff]
        %v2688 = vld [vmem:[#allocation4 + $0x248] sm:$0xff]
        %v2689 = vld [vmem:[#allocation4 + $0x250] sm:$0xff]
        %v2690 = vld [vmem:[#allocation4 + $0x258] sm:$0xff]
        %v2691 = vld [vmem:[#allocation4 + $0x260] sm:$0xff]
        %v2692 = vld [vmem:[#allocation4 + $0x268] sm:$0xff]
        %v2693 = vld [vmem:[#allocation4 + $0x270] sm:$0xff]
        %v2694 = vld [vmem:[#allocation4 + $0x278] sm:$0xff]
        %v2695 = vld [vmem:[#allocation4 + $0x280] sm:$0xff]
        %v2696 = vld [vmem:[#allocation4 + $0x288] sm:$0xff]
        %v2697 = vld [vmem:[#allocation4 + $0x290] sm:$0xff]
        %v2698 = vld [vmem:[#allocation4 + $0x298] sm:$0xff]
        %v2699 = vld [vmem:[#allocation4 + $0x2a0] sm:$0xff]
        %v2700 = vld [vmem:[#allocation4 + $0x2a8] sm:$0xff]
        %v2701 = vld [vmem:[#allocation4 + $0x2b0] sm:$0xff]
        %v2702 = vld [vmem:[#allocation4 + $0x2b8] sm:$0xff]
        %v2703 = vld [vmem:[#allocation4 + $0x2c0] sm:$0xff]
        %v2704 = vld [vmem:[#allocation4 + $0x2c8] sm:$0xff]
        %v2705 = vld [vmem:[#allocation4 + $0x2d0] sm:$0xff]
        %v2706 = vld [vmem:[#allocation4 + $0x2d8] sm:$0xff]
        %v2707 = vld [vmem:[#allocation4 + $0x2e0] sm:$0xff]
        %v2708 = vld [vmem:[#allocation4 + $0x2e8] sm:$0xff]
        %v2709 = vld [vmem:[#allocation4 + $0x2f0] sm:$0xff]
        %v2710 = vld [vmem:[#allocation4 + $0x2f8] sm:$0xff]
        %v2711 = vld [vmem:[#allocation4 + $0x300] sm:$0xff]
        %v2712 = vld [vmem:[#allocation4 + $0x308] sm:$0xff]
        %v2713 = vld [vmem:[#allocation4 + $0x310] sm:$0xff]
        %v2714 = vld [vmem:[#allocation4 + $0x318] sm:$0xff]
        %v2715 = vld [vmem:[#allocation4 + $0x320] sm:$0xff]
        %v2716 = vld [vmem:[#allocation4 + $0x328] sm:$0xff]
        %v2717 = vld [vmem:[#allocation4 + $0x330] sm:$0xff]
        %v2718 = vld [vmem:[#allocation4 + $0x338] sm:$0xff]
        %v2719 = vld [vmem:[#allocation4 + $0x340] sm:$0xff]
        %v2720 = vld [vmem:[#allocation4 + $0x348] sm:$0xff]
        %v2721 = vld [vmem:[#allocation4 + $0x350] sm:$0xff]
        %v2722 = vld [vmem:[#allocation4 + $0x358] sm:$0xff]
        %v2723 = vld [vmem:[#allocation4 + $0x360] sm:$0xff]
        %v2724 = vld [vmem:[#allocation4 + $0x368] sm:$0xff]
        %v2725 = vld [vmem:[#allocation4 + $0x370] sm:$0xff]
        %v2726 = vld [vmem:[#allocation4 + $0x378] sm:$0xff]
        %v2727 = vld [vmem:[#allocation4 + $0x380] sm:$0xff]
        %v2728 = vld [vmem:[#allocation4 + $0x388] sm:$0xff]
        %v2729 = vld [vmem:[#allocation4 + $0x390] sm:$0xff]
        %v2730 = vld [vmem:[#allocation4 + $0x398] sm:$0xff]
        %v2731 = vld [vmem:[#allocation4 + $0x3a0] sm:$0xff]
        %v2732 = vld [vmem:[#allocation4 + $0x3a8] sm:$0xff]
        %v2733 = vld [vmem:[#allocation4 + $0x3b0] sm:$0xff]
        %v2734 = vld [vmem:[#allocation4 + $0x3b8] sm:$0xff]
        %v2735 = vld [vmem:[#allocation4 + $0x3c0] sm:$0xff]
        %v2736 = vld [vmem:[#allocation4 + $0x3c8] sm:$0xff]
        %v2737 = vld [vmem:[#allocation4 + $0x3d0] sm:$0xff]
        %v2738 = vld [vmem:[#allocation4 + $0x3d8] sm:$0xff]
        %v2739 = vld [vmem:[#allocation4 + $0x3e0] sm:$0xff]
        %v2740 = vld [vmem:[#allocation4 + $0x3e8] sm:$0xff]
        %v2741 = vld [vmem:[#allocation4 + $0x3f0] sm:$0xff]
        %v2742 = vld [vmem:[#allocation4 + $0x3f8] sm:$0xff]
        %v2743 = vld [vmem:[#allocation4 + $0x400] sm:$0xff]
        %v2744 = vld [vmem:[#allocation4 + $0x408] sm:$0xff]
        %v2745 = vld [vmem:[#allocation4 + $0x410] sm:$0xff]
        %v2746 = vld [vmem:[#allocation4 + $0x418] sm:$0xff]
        %v2747 = vld [vmem:[#allocation4 + $0x420] sm:$0xff]
        %v2748 = vld [vmem:[#allocation4 + $0x428] sm:$0xff]
        %v2749 = vld [vmem:[#allocation4 + $0x430] sm:$0xff]
        %v2750 = vld [vmem:[#allocation4 + $0x438] sm:$0xff]
        %v2751 = vld [vmem:[#allocation4 + $0x440] sm:$0xff]
        %v2752 = vld [vmem:[#allocation4 + $0x448] sm:$0xff]
        %v2753 = vld [vmem:[#allocation4 + $0x450] sm:$0xff]
        %v2754 = vld [vmem:[#allocation4 + $0x458] sm:$0xff]
        %v2755 = vld [vmem:[#allocation4 + $0x460] sm:$0xff]
        %v2756 = vld [vmem:[#allocation4 + $0x468] sm:$0xff]
        %v2757 = vld [vmem:[#allocation4 + $0x470] sm:$0xff]
        %v2758 = vld [vmem:[#allocation4 + $0x478] sm:$0xff]
        %v2759 = vld [vmem:[#allocation4 + $0x480] sm:$0xff]
        %v2760 = vld [vmem:[#allocation4 + $0x488] sm:$0xff]
        %v2761 = vld [vmem:[#allocation4 + $0x490] sm:$0xff]
        %v2762 = vld [vmem:[#allocation4 + $0x498] sm:$0xff]
        %v2763 = vld [vmem:[#allocation4 + $0x4a0] sm:$0xff]
        %v2764 = vld [vmem:[#allocation4 + $0x4a8] sm:$0xff]
        %v2765 = vld [vmem:[#allocation4 + $0x4b0] sm:$0xff]
        %v2766 = vld [vmem:[#allocation4 + $0x4b8] sm:$0xff]
        %v2767 = vld [vmem:[#allocation4 + $0x4c0] sm:$0xff]
        %v2768 = vld [vmem:[#allocation4 + $0x4c8] sm:$0xff]
        %v2769 = vld [vmem:[#allocation4 + $0x4d0] sm:$0xff]
        %v2770 = vld [vmem:[#allocation4 + $0x4d8] sm:$0xff]
        %v2771 = vld [vmem:[#allocation4 + $0x4e0] sm:$0xff]
        %v2772 = vld [vmem:[#allocation4 + $0x4e8] sm:$0xff]
        %v2773 = vld [vmem:[#allocation4 + $0x4f0] sm:$0xff]
        %v2774 = vld [vmem:[#allocation4 + $0x4f8] sm:$0xff]
        %v2775 = vld [vmem:[#allocation12] sm:$0xff]
        %v2776 = vld [vmem:[#allocation12 + $0x8] sm:$0xff]
        %v2777 = vld [vmem:[#allocation12 + $0x10] sm:$0xff]
        %v2778 = vld [vmem:[#allocation12 + $0x18] sm:$0xff]
        %v2779 = vld [vmem:[#allocation12 + $0x20] sm:$0xff]
        %v2780 = vld [vmem:[#allocation12 + $0x28] sm:$0xff]
        %v2781 = vld [vmem:[#allocation12 + $0x30] sm:$0xff]
        %v2782 = vld [vmem:[#allocation12 + $0x38] sm:$0xff]
        %v2783 = vld [vmem:[#allocation12 + $0x40] sm:$0xff]
        %v2784 = vld [vmem:[#allocation12 + $0x48] sm:$0xff]
        %v2785 = vld [vmem:[#allocation12 + $0x50] sm:$0xff]
        %v2786 = vld [vmem:[#allocation12 + $0x58] sm:$0xff]
        %v2787 = vld [vmem:[#allocation12 + $0x60] sm:$0xff]
        %v2788 = vld [vmem:[#allocation12 + $0x68] sm:$0xff]
        %v2789 = vld [vmem:[#allocation12 + $0x70] sm:$0xff]
        %v2790 = vld [vmem:[#allocation12 + $0x78] sm:$0xff]
        %v2791 = vld [vmem:[#allocation12 + $0x80] sm:$0xff]
        %v2792 = vld [vmem:[#allocation12 + $0x88] sm:$0xff]
        %v2793 = vld [vmem:[#allocation12 + $0x90] sm:$0xff]
        %v2794 = vld [vmem:[#allocation12 + $0x98] sm:$0xff]
        %v2795 = vld [vmem:[#allocation12 + $0xa0] sm:$0xff]
        %v2796 = vld [vmem:[#allocation12 + $0xa8] sm:$0xff]
        %v2797 = vld [vmem:[#allocation12 + $0xb0] sm:$0xff]
        %v2798 = vld [vmem:[#allocation12 + $0xb8] sm:$0xff]
        %v2799 = vld [vmem:[#allocation12 + $0xc0] sm:$0xff]
        %v2800 = vld [vmem:[#allocation12 + $0xc8] sm:$0xff]
        %v2801 = vld [vmem:[#allocation12 + $0xd0] sm:$0xff]
        %v2802 = vld [vmem:[#allocation12 + $0xd8] sm:$0xff]
        %v2803 = vld [vmem:[#allocation12 + $0xe0] sm:$0xff]
        %v2804 = vld [vmem:[#allocation12 + $0xe8] sm:$0xff]
        %v2805 = vld [vmem:[#allocation12 + $0xf0] sm:$0xff]
        %v2806 = vld [vmem:[#allocation12 + $0xf8] sm:$0xff]
        %v2807 = vld [vmem:[#allocation12 + $0x100] sm:$0xff]
        %v2808 = vld [vmem:[#allocation12 + $0x108] sm:$0xff]
        %v2809 = vld [vmem:[#allocation12 + $0x110] sm:$0xff]
        %v2810 = vld [vmem:[#allocation12 + $0x118] sm:$0xff]
        %v2811 = vld [vmem:[#allocation12 + $0x120] sm:$0xff]
        %v2812 = vld [vmem:[#allocation12 + $0x128] sm:$0xff]
        %v2813 = vld [vmem:[#allocation12 + $0x130] sm:$0xff]
        %v2814 = vld [vmem:[#allocation12 + $0x138] sm:$0xff]
        %v2815 = vld [vmem:[#allocation12 + $0x140] sm:$0xff]
        %v2816 = vld [vmem:[#allocation12 + $0x148] sm:$0xff]
        %v2817 = vld [vmem:[#allocation12 + $0x150] sm:$0xff]
        %v2818 = vld [vmem:[#allocation12 + $0x158] sm:$0xff]
        %v2819 = vld [vmem:[#allocation12 + $0x160] sm:$0xff]
        %v2820 = vld [vmem:[#allocation12 + $0x168] sm:$0xff]
        %v2821 = vld [vmem:[#allocation12 + $0x170] sm:$0xff]
        %v2822 = vld [vmem:[#allocation12 + $0x178] sm:$0xff]
        %v2823 = vld [vmem:[#allocation12 + $0x180] sm:$0xff]
        %v2824 = vld [vmem:[#allocation12 + $0x188] sm:$0xff]
        %v2825 = vld [vmem:[#allocation12 + $0x190] sm:$0xff]
        %v2826 = vld [vmem:[#allocation12 + $0x198] sm:$0xff]
        %v2827 = vld [vmem:[#allocation12 + $0x1a0] sm:$0xff]
        %v2828 = vld [vmem:[#allocation12 + $0x1a8] sm:$0xff]
        %v2829 = vld [vmem:[#allocation12 + $0x1b0] sm:$0xff]
        %v2830 = vld [vmem:[#allocation12 + $0x1b8] sm:$0xff]
        %v2831 = vld [vmem:[#allocation12 + $0x1c0] sm:$0xff]
        %v2832 = vld [vmem:[#allocation12 + $0x1c8] sm:$0xff]
        %v2833 = vld [vmem:[#allocation12 + $0x1d0] sm:$0xff]
        %v2834 = vld [vmem:[#allocation12 + $0x1d8] sm:$0xff]
        %v2835 = vld [vmem:[#allocation12 + $0x1e0] sm:$0xff]
        %v2836 = vld [vmem:[#allocation12 + $0x1e8] sm:$0xff]
        %v2837 = vld [vmem:[#allocation12 + $0x1f0] sm:$0xff]
        %v2838 = vld [vmem:[#allocation12 + $0x1f8] sm:$0xff]
        %v2839 = vld [vmem:[#allocation12 + $0x200] sm:$0xff]
        %v2840 = vld [vmem:[#allocation12 + $0x208] sm:$0xff]
        %v2841 = vld [vmem:[#allocation12 + $0x210] sm:$0xff]
        %v2842 = vld [vmem:[#allocation12 + $0x218] sm:$0xff]
        %v2843 = vld [vmem:[#allocation12 + $0x220] sm:$0xff]
        %v2844 = vld [vmem:[#allocation12 + $0x228] sm:$0xff]
        %v2845 = vld [vmem:[#allocation12 + $0x230] sm:$0xff]
        %v2846 = vld [vmem:[#allocation12 + $0x238] sm:$0xff]
        %v2847 = vld [vmem:[%s6] sm:$0x1]
        %v2849 = vlaneseq
        %v2850 = vshrl.u32 %v2849, 7
        %v2851 = vsub.s32 0, %v2850
        %v2852 = vrot.slane %v2847, %v2851
        %v2855 = vsel %vm576, %v2619, 0
        %v2858 = vsel %vm576, %v2624, 0
        %v2861 = vsel %vm576, %v2629, 0
        %v2864 = vsel %vm576, %v2634, 0
        %v2867 = vsel %vm576, %v2639, 0
        %v2870 = vsel %vm576, %v2644, 0
        %v2873 = vsel %vm576, %v2649, 0
        %v2876 = vsel %vm576, %v2654, 0
        %v2879 = vsel %vm576, %v2659, 0
        %v2882 = vsel %vm576, %v2664, 0
        %v2885 = vsel %vm576, %v2669, 0
        %v2888 = vsel %vm576, %v2674, 0
        %v2891 = vsel %vm576, %v2679, 0
        %v2894 = vsel %vm576, %v2684, 0
        %v2897 = vsel %vm576, %v2689, 0
        %v2900 = vsel %vm576, %v2694, 0
        %v2903 = vsel %vm576, %v2699, 0
        %v2906 = vsel %vm576, %v2704, 0
        %v2909 = vsel %vm576, %v2709, 0
        %v2912 = vsel %vm576, %v2714, 0
        %v2915 = vsel %vm576, %v2719, 0
        %v2918 = vsel %vm576, %v2724, 0
        %v2921 = vsel %vm576, %v2729, 0
        %v2924 = vsel %vm576, %v2734, 0
        %v2927 = vsel %vm576, %v2739, 0
        %v2930 = vsel %vm576, %v2744, 0
        %v2933 = vsel %vm576, %v2749, 0
        %v2936 = vsel %vm576, %v2754, 0
        %v2939 = vsel %vm576, %v2759, 0
        %v2942 = vsel %vm576, %v2764, 0
        %v2945 = vsel %vm576, %v2769, 0
        %v2948 = vsel %vm576, %v2774, 0
        %2950 = vmatprep.subr.mxu0 0.0
        %2951 = vmatpush1.msra.mxu0 %v2775
        %2952 = vmatprep.subr.mxu0 0.0
        %2953 = vmatpush1.msra.mxu0 %v2776
        %2954 = vmatprep.subr.mxu0 0.0
        %2955 = vmatpush1.msra.mxu0 %v2777
        %2956 = vmatprep.subr.mxu0 0.0
        %2957 = vmatpush1.msra.mxu0 %v2778
        %2958 = vmatprep.subr.mxu0 0.0
        %2959 = vmatpush1.msra.mxu0 %v2779
        %2960 = vmatprep.subr.mxu0 0.0
        %2961 = vmatpush1.msra.mxu0 %v2780
        %2962 = vmatprep.subr.mxu0 0.0
        %2963 = vmatpush1.msra.mxu0 %v2781
        %2964 = vmatprep.subr.mxu0 0.0
        %2965 = vmatpush1.msra.mxu0 %v2782
        %2966 = vmatprep.subr.mxu0 0.0
        %2967 = vmatpush1.msra.mxu0 %v2783
        %2968 = vmatprep.subr.mxu0 0.0
        %2969 = vmatpush1.msra.mxu0 %v2784
        %2970 = vmatprep.subr.mxu0 0.0
        %2971 = vmatpush1.msra.mxu0 %v2785
        %2972 = vmatprep.subr.mxu0 0.0
        %2973 = vmatpush1.msra.mxu0 %v2786
        %2974 = vmatprep.subr.mxu0 0.0
        %2975 = vmatpush1.msra.mxu0 %v2787
        %2976 = vmatprep.subr.mxu0 0.0
        %2977 = vmatpush1.msra.mxu0 %v2788
        %2978 = vmatprep.subr.mxu0 0.0
        %2979 = vmatpush1.msra.mxu0 %v2789
        %2980 = vmatprep.subr.mxu0 0.0
        %2981 = vmatpush1.msra.mxu0 %v2790
        %2982 = vmatprep.subr.mxu0 0.0
        %2983 = vmatpush1.msra.mxu0 %v2791
        %2984 = vmatprep.subr.mxu0 0.0
        %2985 = vmatpush1.msra.mxu0 %v2792
        %2986 = vmatprep.subr.mxu0 0.0
        %2987 = vmatpush1.msra.mxu0 %v2793
        %2988 = vmatprep.subr.mxu0 0.0
        %2989 = vmatpush1.msra.mxu0 %v2794
        %2990 = vmatprep.subr.mxu0 0.0
        %2991 = vmatpush1.msra.mxu0 %v2795
        %2992 = vmatprep.subr.mxu0 0.0
        %2993 = vmatpush1.msra.mxu0 %v2796
        %2994 = vmatprep.subr.mxu0 0.0
        %2995 = vmatpush1.msra.mxu0 %v2797
        %2996 = vmatprep.subr.mxu0 0.0
        %2997 = vmatpush1.msra.mxu0 %v2798
        %2998 = vmatprep.subr.mxu0 0.0
        %2999 = vmatpush1.msra.mxu0 %v2799
        %3000 = vmatprep.subr.mxu0 0.0
        %3001 = vmatpush1.msra.mxu0 %v2800
        %3002 = vmatprep.subr.mxu0 0.0
        %3003 = vmatpush1.msra.mxu0 %v2801
        %3004 = vmatprep.subr.mxu0 0.0
        %3005 = vmatpush1.msra.mxu0 %v2802
        %3006 = vmatprep.subr.mxu0 0.0
        %3007 = vmatpush1.msra.mxu0 %v2803
        %3008 = vmatprep.subr.mxu0 0.0
        %3009 = vmatpush1.msra.mxu0 %v2804
        %3010 = vmatprep.subr.mxu0 0.0
        %3011 = vmatpush1.msra.mxu0 %v2805
        %3012 = vmatprep.subr.mxu0 0.0
        %3013 = vmatpush1.msra.mxu0 %v2806
        %3014 = vmatprep.mubr.f32.mxu0 %v2616
        %3015 = vmatmul.mubr.f32.gmra.mrb[0].mxu0 %v2615
        %v3016 = vpop.f32.mrb[0].mxu0
        %v3017 = vadd.f32 %v2852, %v3016
        %v3018 = vpop.f32.mrb[0].mxu0
        %3019 = vmatprep.mubr.f32.mxu0 %v2621
        %3020 = vmatmul.mubr.f32.gmra.mrb[0].mxu0 %v2620
        %v3021 = vpop.f32.mrb[0].mxu0
        %v3022 = vadd.f32 %v2852, %v3021
        %v3023 = vpop.f32.mrb[0].mxu0
        %3024 = vmatprep.mubr.f32.mxu0 %v2626
        %3025 = vmatmul.mubr.f32.gmra.mrb[0].mxu0 %v2625
        %v3026 = vpop.f32.mrb[0].mxu0
        %v3027 = vadd.f32 %v2852, %v3026
        %v3028 = vpop.f32.mrb[0].mxu0
        %3029 = vmatprep.mubr.f32.mxu0 %v2631
        %3030 = vmatmul.mubr.f32.gmra.mrb[0].mxu0 %v2630
        %v3031 = vpop.f32.mrb[0].mxu0
        %v3032 = vadd.f32 %v2852, %v3031
        %v3033 = vpop.f32.mrb[0].mxu0
        %3034 = vmatprep.mubr.f32.mxu0 %v2636
        %3035 = vmatmul.mubr.f32.gmra.mrb[0].mxu0 %v2635
        %v3036 = vpop.f32.mrb[0].mxu0
        %v3037 = vadd.f32 %v2852, %v3036
        %v3038 = vpop.f32.mrb[0].mxu0
        %3039 = vmatprep.mubr.f32.mxu0 %v2641
        %3040 = vmatmul.mubr.f32.gmra.mrb[0].mxu0 %v2640
        %v3041 = vpop.f32.mrb[0].mxu0
        %v3042 = vadd.f32 %v2852, %v3041
        %v3043 = vpop.f32.mrb[0].mxu0
        %3044 = vmatprep.mubr.f32.mxu0 %v2646
        %3045 = vmatmul.mubr.f32.gmra.mrb[0].mxu0 %v2645
        %v3046 = vpop.f32.mrb[0].mxu0
        %v3047 = vadd.f32 %v2852, %v3046
        %v3048 = vpop.f32.mrb[0].mxu0
        %3049 = vmatprep.mubr.f32.mxu0 %v2651
        %3050 = vmatmul.mubr.f32.gmra.mrb[0].mxu0 %v2650
        %v3051 = vpop.f32.mrb[0].mxu0
        %v3052 = vadd.f32 %v2852, %v3051
        %v3053 = vpop.f32.mrb[0].mxu0
        %3054 = vmatprep.mubr.f32.mxu0 %v2656
        %3055 = vmatmul.mubr.f32.gmra.mrb[0].mxu0 %v2655
        %v3056 = vpop.f32.mrb[0].mxu0
        %v3057 = vadd.f32 %v2852, %v3056
        %v3058 = vpop.f32.mrb[0].mxu0
        %3059 = vmatprep.mubr.f32.mxu0 %v2661
        %3060 = vmatmul.mubr.f32.gmra.mrb[0].mxu0 %v2660
        %v3061 = vpop.f32.mrb[0].mxu0
        %v3062 = vadd.f32 %v2852, %v3061
        %v3063 = vpop.f32.mrb[0].mxu0
        %3064 = vmatprep.mubr.f32.mxu0 %v2666
        %3065 = vmatmul.mubr.f32.gmra.mrb[0].mxu0 %v2665
        %v3066 = vpop.f32.mrb[0].mxu0
        %v3067 = vadd.f32 %v2852, %v3066
        %v3068 = vpop.f32.mrb[0].mxu0
        %3069 = vmatprep.mubr.f32.mxu0 %v2671
        %3070 = vmatmul.mubr.f32.gmra.mrb[0].mxu0 %v2670
        %v3071 = vpop.f32.mrb[0].mxu0
        %v3072 = vadd.f32 %v2852, %v3071
        %v3073 = vpop.f32.mrb[0].mxu0
        %3074 = vmatprep.mubr.f32.mxu0 %v2676
        %3075 = vmatmul.mubr.f32.gmra.mrb[0].mxu0 %v2675
        %v3076 = vpop.f32.mrb[0].mxu0
        %v3077 = vadd.f32 %v2852, %v3076
        %v3078 = vpop.f32.mrb[0].mxu0
        %3079 = vmatprep.mubr.f32.mxu0 %v2681
        %3080 = vmatmul.mubr.f32.gmra.mrb[0].mxu0 %v2680
        %v3081 = vpop.f32.mrb[0].mxu0
        %v3082 = vadd.f32 %v2852, %v3081
        %v3083 = vpop.f32.mrb[0].mxu0
        %3084 = vmatprep.mubr.f32.mxu0 %v2686
        %3085 = vmatmul.mubr.f32.gmra.mrb[0].mxu0 %v2685
        %v3086 = vpop.f32.mrb[0].mxu0
        %v3087 = vadd.f32 %v2852, %v3086
        %v3088 = vpop.f32.mrb[0].mxu0
        %3089 = vmatprep.mubr.f32.mxu0 %v2691
        %3090 = vmatmul.mubr.f32.gmra.mrb[0].mxu0 %v2690
        %v3091 = vpop.f32.mrb[0].mxu0
        %v3092 = vadd.f32 %v2852, %v3091
        %v3093 = vpop.f32.mrb[0].mxu0
        %3094 = vmatprep.mubr.f32.mxu0 %v2696
        %3095 = vmatmul.mubr.f32.gmra.mrb[0].mxu0 %v2695
        %v3096 = vpop.f32.mrb[0].mxu0
        %v3097 = vadd.f32 %v2852, %v3096
        %v3098 = vpop.f32.mrb[0].mxu0
        %3099 = vmatprep.mubr.f32.mxu0 %v2701
        %3100 = vmatmul.mubr.f32.gmra.mrb[0].mxu0 %v2700
        %v3101 = vpop.f32.mrb[0].mxu0
        %v3102 = vadd.f32 %v2852, %v3101
        %v3103 = vpop.f32.mrb[0].mxu0
        %3104 = vmatprep.mubr.f32.mxu0 %v2706
        %3105 = vmatmul.mubr.f32.gmra.mrb[0].mxu0 %v2705
        %v3106 = vpop.f32.mrb[0].mxu0
        %v3107 = vadd.f32 %v2852, %v3106
        %v3108 = vpop.f32.mrb[0].mxu0
        %3109 = vmatprep.mubr.f32.mxu0 %v2711
        %3110 = vmatmul.mubr.f32.gmra.mrb[0].mxu0 %v2710
        %v3111 = vpop.f32.mrb[0].mxu0
        %v3112 = vadd.f32 %v2852, %v3111
        %v3113 = vpop.f32.mrb[0].mxu0
        %3114 = vmatprep.mubr.f32.mxu0 %v2716
        %3115 = vmatmul.mubr.f32.gmra.mrb[0].mxu0 %v2715
        %v3116 = vpop.f32.mrb[0].mxu0
        %v3117 = vadd.f32 %v2852, %v3116
        %v3118 = vpop.f32.mrb[0].mxu0
        %3119 = vmatprep.mubr.f32.mxu0 %v2721
        %3120 = vmatmul.mubr.f32.gmra.mrb[0].mxu0 %v2720
        %v3121 = vpop.f32.mrb[0].mxu0
        %v3122 = vadd.f32 %v2852, %v3121
        %v3123 = vpop.f32.mrb[0].mxu0
        %3124 = vmatprep.mubr.f32.mxu0 %v2726
        %3125 = vmatmul.mubr.f32.gmra.mrb[0].mxu0 %v2725
        %v3126 = vpop.f32.mrb[0].mxu0
        %v3127 = vadd.f32 %v2852, %v3126
        %v3128 = vpop.f32.mrb[0].mxu0
        %3129 = vmatprep.mubr.f32.mxu0 %v2731
        %3130 = vmatmul.mubr.f32.gmra.mrb[0].mxu0 %v2730
        %v3131 = vpop.f32.mrb[0].mxu0
        %v3132 = vadd.f32 %v2852, %v3131
        %v3133 = vpop.f32.mrb[0].mxu0
        %3134 = vmatprep.mubr.f32.mxu0 %v2736
        %3135 = vmatmul.mubr.f32.gmra.mrb[0].mxu0 %v2735
        %v3136 = vpop.f32.mrb[0].mxu0
        %v3137 = vadd.f32 %v2852, %v3136
        %v3138 = vpop.f32.mrb[0].mxu0
        %3139 = vmatprep.mubr.f32.mxu0 %v2741
        %3140 = vmatmul.mubr.f32.gmra.mrb[0].mxu0 %v2740
        %v3141 = vpop.f32.mrb[0].mxu0
        %v3142 = vadd.f32 %v2852, %v3141
        %v3143 = vpop.f32.mrb[0].mxu0
        %3144 = vmatprep.mubr.f32.mxu0 %v2746
        %3145 = vmatmul.mubr.f32.gmra.mrb[0].mxu0 %v2745
        %v3146 = vpop.f32.mrb[0].mxu0
        %v3147 = vadd.f32 %v2852, %v3146
        %v3148 = vpop.f32.mrb[0].mxu0
        %3149 = vmatprep.mubr.f32.mxu0 %v2751
        %3150 = vmatmul.mubr.f32.gmra.mrb[0].mxu0 %v2750
        %v3151 = vpop.f32.mrb[0].mxu0
        %v3152 = vadd.f32 %v2852, %v3151
        %v3153 = vpop.f32.mrb[0].mxu0
        %3154 = vmatprep.mubr.f32.mxu0 %v2756
        %3155 = vmatmul.mubr.f32.gmra.mrb[0].mxu0 %v2755
        %v3156 = vpop.f32.mrb[0].mxu0
        %v3157 = vadd.f32 %v2852, %v3156
        %v3158 = vpop.f32.mrb[0].mxu0
        %3159 = vmatprep.mubr.f32.mxu0 %v2761
        %3160 = vmatmul.mubr.f32.gmra.mrb[0].mxu0 %v2760
        %v3161 = vpop.f32.mrb[0].mxu0
        %v3162 = vadd.f32 %v2852, %v3161
        %v3163 = vpop.f32.mrb[0].mxu0
        %3164 = vmatprep.mubr.f32.mxu0 %v2766
        %3165 = vmatmul.mubr.f32.gmra.mrb[0].mxu0 %v2765
        %v3166 = vpop.f32.mrb[0].mxu0
        %v3167 = vadd.f32 %v2852, %v3166
        %v3168 = vpop.f32.mrb[0].mxu0
        %3169 = vmatprep.mubr.f32.mxu0 %v2771
        %3170 = vmatmul.mubr.f32.gmra.mrb[0].mxu0 %v2770
        %v3171 = vpop.f32.mrb[0].mxu0
        %v3172 = vadd.f32 %v2852, %v3171
        %v3173 = vpop.f32.mrb[0].mxu0
        %3174 = vdwg.mxu0
        %3175 = vmatprep.subr.mxu0 0.0
        %3176 = vmatpush1.msra.mxu0 %v2807
        %3177 = vmatprep.subr.mxu0 0.0
        %3178 = vmatpush1.msra.mxu0 %v2808
        %3179 = vmatprep.subr.mxu0 0.0
        %3180 = vmatpush1.msra.mxu0 %v2809
        %3181 = vmatprep.subr.mxu0 0.0
        %3182 = vmatpush1.msra.mxu0 %v2810
        %3183 = vmatprep.subr.mxu0 0.0
        %3184 = vmatpush1.msra.mxu0 %v2811
        %3185 = vmatprep.subr.mxu0 0.0
        %3186 = vmatpush1.msra.mxu0 %v2812
        %3187 = vmatprep.subr.mxu0 0.0
        %3188 = vmatpush1.msra.mxu0 %v2813
        %3189 = vmatprep.subr.mxu0 0.0
        %3190 = vmatpush1.msra.mxu0 %v2814
        %3191 = vmatprep.subr.mxu0 0.0
        %3192 = vmatpush1.msra.mxu0 %v2815
        %3193 = vmatprep.subr.mxu0 0.0
        %3194 = vmatpush1.msra.mxu0 %v2816
        %3195 = vmatprep.subr.mxu0 0.0
        %3196 = vmatpush1.msra.mxu0 %v2817
        %3197 = vmatprep.subr.mxu0 0.0
        %3198 = vmatpush1.msra.mxu0 %v2818
        %3199 = vmatprep.subr.mxu0 0.0
        %3200 = vmatpush1.msra.mxu0 %v2819
        %3201 = vmatprep.subr.mxu0 0.0
        %3202 = vmatpush1.msra.mxu0 %v2820
        %3203 = vmatprep.subr.mxu0 0.0
        %3204 = vmatpush1.msra.mxu0 %v2821
        %3205 = vmatprep.subr.mxu0 0.0
        %3206 = vmatpush1.msra.mxu0 %v2822
        %3207 = vmatprep.subr.mxu0 0.0
        %3208 = vmatpush1.msra.mxu0 %v2823
        %3209 = vmatprep.subr.mxu0 0.0
        %3210 = vmatpush1.msra.mxu0 %v2824
        %3211 = vmatprep.subr.mxu0 0.0
        %3212 = vmatpush1.msra.mxu0 %v2825
        %3213 = vmatprep.subr.mxu0 0.0
        %3214 = vmatpush1.msra.mxu0 %v2826
        %3215 = vmatprep.subr.mxu0 0.0
        %3216 = vmatpush1.msra.mxu0 %v2827
        %3217 = vmatprep.subr.mxu0 0.0
        %3218 = vmatpush1.msra.mxu0 %v2828
        %3219 = vmatprep.subr.mxu0 0.0
        %3220 = vmatpush1.msra.mxu0 %v2829
        %3221 = vmatprep.subr.mxu0 0.0
        %3222 = vmatpush1.msra.mxu0 %v2830
        %3223 = vmatprep.subr.mxu0 0.0
        %3224 = vmatpush1.msra.mxu0 %v2831
        %3225 = vmatprep.subr.mxu0 0.0
        %3226 = vmatpush1.msra.mxu0 %v2832
        %3227 = vmatprep.subr.mxu0 0.0
        %3228 = vmatpush1.msra.mxu0 %v2833
        %3229 = vmatprep.subr.mxu0 0.0
        %3230 = vmatpush1.msra.mxu0 %v2834
        %3231 = vmatprep.subr.mxu0 0.0
        %3232 = vmatpush1.msra.mxu0 %v2835
        %3233 = vmatprep.subr.mxu0 0.0
        %3234 = vmatpush1.msra.mxu0 %v2836
        %3235 = vmatprep.subr.mxu0 0.0
        %3236 = vmatpush1.msra.mxu0 %v2837
        %3237 = vmatprep.subr.mxu0 0.0
        %3238 = vmatpush1.msra.mxu0 %v2838
        %3239 = vmatprep.mubr.f32.mxu0 %v2618
        %3240 = vmatmul.mubr.f32.gmra.mrb[0].mxu0 %v2617
        %v3241 = vpop.f32.mrb[0].mxu0
        %v3242 = vadd.f32 %v3017, %v3241
        %v3243 = vpop.f32.mrb[0].mxu0
        %3244 = vmatprep.mubr.f32.mxu0 %v2623
        %3245 = vmatmul.mubr.f32.gmra.mrb[0].mxu0 %v2622
        %v3246 = vpop.f32.mrb[0].mxu0
        %v3247 = vadd.f32 %v3022, %v3246
        %v3248 = vpop.f32.mrb[0].mxu0
        %3249 = vmatprep.mubr.f32.mxu0 %v2628
        %3250 = vmatmul.mubr.f32.gmra.mrb[0].mxu0 %v2627
        %v3251 = vpop.f32.mrb[0].mxu0
        %v3252 = vadd.f32 %v3027, %v3251
        %v3253 = vpop.f32.mrb[0].mxu0
        %3254 = vmatprep.mubr.f32.mxu0 %v2633
        %3255 = vmatmul.mubr.f32.gmra.mrb[0].mxu0 %v2632
        %v3256 = vpop.f32.mrb[0].mxu0
        %v3257 = vadd.f32 %v3032, %v3256
        %v3258 = vpop.f32.mrb[0].mxu0
        %3259 = vmatprep.mubr.f32.mxu0 %v2638
        %3260 = vmatmul.mubr.f32.gmra.mrb[0].mxu0 %v2637
        %v3261 = vpop.f32.mrb[0].mxu0
        %v3262 = vadd.f32 %v3037, %v3261
        %v3263 = vpop.f32.mrb[0].mxu0
        %3264 = vmatprep.mubr.f32.mxu0 %v2643
        %3265 = vmatmul.mubr.f32.gmra.mrb[0].mxu0 %v2642
        %v3266 = vpop.f32.mrb[0].mxu0
        %v3267 = vadd.f32 %v3042, %v3266
        %v3268 = vpop.f32.mrb[0].mxu0
        %3269 = vmatprep.mubr.f32.mxu0 %v2648
        %3270 = vmatmul.mubr.f32.gmra.mrb[0].mxu0 %v2647
        %v3271 = vpop.f32.mrb[0].mxu0
        %v3272 = vadd.f32 %v3047, %v3271
        %v3273 = vpop.f32.mrb[0].mxu0
        %3274 = vmatprep.mubr.f32.mxu0 %v2653
        %3275 = vmatmul.mubr.f32.gmra.mrb[0].mxu0 %v2652
        %v3276 = vpop.f32.mrb[0].mxu0
        %v3277 = vadd.f32 %v3052, %v3276
        %v3278 = vpop.f32.mrb[0].mxu0
        %3279 = vmatprep.mubr.f32.mxu0 %v2658
        %3280 = vmatmul.mubr.f32.gmra.mrb[0].mxu0 %v2657
        %v3281 = vpop.f32.mrb[0].mxu0
        %v3282 = vadd.f32 %v3057, %v3281
        %v3283 = vpop.f32.mrb[0].mxu0
        %3284 = vmatprep.mubr.f32.mxu0 %v2663
        %3285 = vmatmul.mubr.f32.gmra.mrb[0].mxu0 %v2662
        %v3286 = vpop.f32.mrb[0].mxu0
        %v3287 = vadd.f32 %v3062, %v3286
        %v3288 = vpop.f32.mrb[0].mxu0
        %3289 = vmatprep.mubr.f32.mxu0 %v2668
        %3290 = vmatmul.mubr.f32.gmra.mrb[0].mxu0 %v2667
        %v3291 = vpop.f32.mrb[0].mxu0
        %v3292 = vadd.f32 %v3067, %v3291
        %v3293 = vpop.f32.mrb[0].mxu0
        %3294 = vmatprep.mubr.f32.mxu0 %v2673
        %3295 = vmatmul.mubr.f32.gmra.mrb[0].mxu0 %v2672
        %v3296 = vpop.f32.mrb[0].mxu0
        %v3297 = vadd.f32 %v3072, %v3296
        %v3298 = vpop.f32.mrb[0].mxu0
        %3299 = vmatprep.mubr.f32.mxu0 %v2678
        %3300 = vmatmul.mubr.f32.gmra.mrb[0].mxu0 %v2677
        %v3301 = vpop.f32.mrb[0].mxu0
        %v3302 = vadd.f32 %v3077, %v3301
        %v3303 = vpop.f32.mrb[0].mxu0
        %3304 = vmatprep.mubr.f32.mxu0 %v2683
        %3305 = vmatmul.mubr.f32.gmra.mrb[0].mxu0 %v2682
        %v3306 = vpop.f32.mrb[0].mxu0
        %v3307 = vadd.f32 %v3082, %v3306
        %v3308 = vpop.f32.mrb[0].mxu0
        %3309 = vmatprep.mubr.f32.mxu0 %v2688
        %3310 = vmatmul.mubr.f32.gmra.mrb[0].mxu0 %v2687
        %v3311 = vpop.f32.mrb[0].mxu0
        %v3312 = vadd.f32 %v3087, %v3311
        %v3313 = vpop.f32.mrb[0].mxu0
        %3314 = vmatprep.mubr.f32.mxu0 %v2693
        %3315 = vmatmul.mubr.f32.gmra.mrb[0].mxu0 %v2692
        %v3316 = vpop.f32.mrb[0].mxu0
        %v3317 = vadd.f32 %v3092, %v3316
        %v3318 = vpop.f32.mrb[0].mxu0
        %3319 = vmatprep.mubr.f32.mxu0 %v2698
        %3320 = vmatmul.mubr.f32.gmra.mrb[0].mxu0 %v2697
        %v3321 = vpop.f32.mrb[0].mxu0
        %v3322 = vadd.f32 %v3097, %v3321
        %v3323 = vpop.f32.mrb[0].mxu0
        %3324 = vmatprep.mubr.f32.mxu0 %v2703
        %3325 = vmatmul.mubr.f32.gmra.mrb[0].mxu0 %v2702
        %v3326 = vpop.f32.mrb[0].mxu0
        %v3327 = vadd.f32 %v3102, %v3326
        %v3328 = vpop.f32.mrb[0].mxu0
        %3329 = vmatprep.mubr.f32.mxu0 %v2708
        %3330 = vmatmul.mubr.f32.gmra.mrb[0].mxu0 %v2707
        %v3331 = vpop.f32.mrb[0].mxu0
        %v3332 = vadd.f32 %v3107, %v3331
        %v3333 = vpop.f32.mrb[0].mxu0
        %3334 = vmatprep.mubr.f32.mxu0 %v2713
        %3335 = vmatmul.mubr.f32.gmra.mrb[0].mxu0 %v2712
        %v3336 = vpop.f32.mrb[0].mxu0
        %v3337 = vadd.f32 %v3112, %v3336
        %v3338 = vpop.f32.mrb[0].mxu0
        %3339 = vmatprep.mubr.f32.mxu0 %v2718
        %3340 = vmatmul.mubr.f32.gmra.mrb[0].mxu0 %v2717
        %v3341 = vpop.f32.mrb[0].mxu0
        %v3342 = vadd.f32 %v3117, %v3341
        %v3343 = vpop.f32.mrb[0].mxu0
        %3344 = vmatprep.mubr.f32.mxu0 %v2723
        %3345 = vmatmul.mubr.f32.gmra.mrb[0].mxu0 %v2722
        %v3346 = vpop.f32.mrb[0].mxu0
        %v3347 = vadd.f32 %v3122, %v3346
        %v3348 = vpop.f32.mrb[0].mxu0
        %3349 = vmatprep.mubr.f32.mxu0 %v2728
        %3350 = vmatmul.mubr.f32.gmra.mrb[0].mxu0 %v2727
        %v3351 = vpop.f32.mrb[0].mxu0
        %v3352 = vadd.f32 %v3127, %v3351
        %v3353 = vpop.f32.mrb[0].mxu0
        %3354 = vmatprep.mubr.f32.mxu0 %v2733
        %3355 = vmatmul.mubr.f32.gmra.mrb[0].mxu0 %v2732
        %v3356 = vpop.f32.mrb[0].mxu0
        %v3357 = vadd.f32 %v3132, %v3356
        %v3358 = vpop.f32.mrb[0].mxu0
        %3359 = vmatprep.mubr.f32.mxu0 %v2738
        %3360 = vmatmul.mubr.f32.gmra.mrb[0].mxu0 %v2737
        %v3361 = vpop.f32.mrb[0].mxu0
        %v3362 = vadd.f32 %v3137, %v3361
        %v3363 = vpop.f32.mrb[0].mxu0
        %3364 = vmatprep.mubr.f32.mxu0 %v2743
        %3365 = vmatmul.mubr.f32.gmra.mrb[0].mxu0 %v2742
        %v3366 = vpop.f32.mrb[0].mxu0
        %v3367 = vadd.f32 %v3142, %v3366
        %v3368 = vpop.f32.mrb[0].mxu0
        %3369 = vmatprep.mubr.f32.mxu0 %v2748
        %3370 = vmatmul.mubr.f32.gmra.mrb[0].mxu0 %v2747
        %v3371 = vpop.f32.mrb[0].mxu0
        %v3372 = vadd.f32 %v3147, %v3371
        %v3373 = vpop.f32.mrb[0].mxu0
        %3374 = vmatprep.mubr.f32.mxu0 %v2753
        %3375 = vmatmul.mubr.f32.gmra.mrb[0].mxu0 %v2752
        %v3376 = vpop.f32.mrb[0].mxu0
        %v3377 = vadd.f32 %v3152, %v3376
        %v3378 = vpop.f32.mrb[0].mxu0
        %3379 = vmatprep.mubr.f32.mxu0 %v2758
        %3380 = vmatmul.mubr.f32.gmra.mrb[0].mxu0 %v2757
        %v3381 = vpop.f32.mrb[0].mxu0
        %v3382 = vadd.f32 %v3157, %v3381
        %v3383 = vpop.f32.mrb[0].mxu0
        %3384 = vmatprep.mubr.f32.mxu0 %v2763
        %3385 = vmatmul.mubr.f32.gmra.mrb[0].mxu0 %v2762
        %v3386 = vpop.f32.mrb[0].mxu0
        %v3387 = vadd.f32 %v3162, %v3386
        %v3388 = vpop.f32.mrb[0].mxu0
        %3389 = vmatprep.mubr.f32.mxu0 %v2768
        %3390 = vmatmul.mubr.f32.gmra.mrb[0].mxu0 %v2767
        %v3391 = vpop.f32.mrb[0].mxu0
        %v3392 = vadd.f32 %v3167, %v3391
        %v3393 = vpop.f32.mrb[0].mxu0
        %3394 = vmatprep.mubr.f32.mxu0 %v2773
        %3395 = vmatmul.mubr.f32.gmra.mrb[0].mxu0 %v2772
        %v3396 = vpop.f32.mrb[0].mxu0
        %v3397 = vadd.f32 %v3172, %v3396
        %v3398 = vpop.f32.mrb[0].mxu0
        %3399 = vdwg.mxu0
        %3400 = vmatprep.subr.mxu0 0.0
        %3401 = vmatpush1.msra.mxu0 %v2839
        %3402 = vmatprep.subr.mxu0 0.0
        %3403 = vmatpush1.msra.mxu0 %v2840
        %3404 = vmatprep.subr.mxu0 0.0
        %3405 = vmatpush1.msra.mxu0 %v2841
        %3406 = vmatprep.subr.mxu0 0.0
        %3407 = vmatpush1.msra.mxu0 %v2842
        %3408 = vmatprep.subr.mxu0 0.0
        %3409 = vmatpush1.msra.mxu0 %v2843
        %3410 = vmatprep.subr.mxu0 0.0
        %3411 = vmatpush1.msra.mxu0 %v2844
        %3412 = vmatprep.subr.mxu0 0.0
        %3413 = vmatpush1.msra.mxu0 %v2845
        %3414 = vmatprep.subr.mxu0 0.0
        %3415 = vmatpush1.msra.mxu0 %v2846
        %3416 = vmatprep.subr.mxu0 0.0
        %3417 = vmatpush1.msra.mxu0 0.0
        %3418 = vmatprep.subr.mxu0 0.0
        %3419 = vmatpush1.msra.mxu0 0.0
        %3420 = vmatprep.subr.mxu0 0.0
        %3421 = vmatpush1.msra.mxu0 0.0
        %3422 = vmatprep.subr.mxu0 0.0
        %3423 = vmatpush1.msra.mxu0 0.0
        %3424 = vmatprep.subr.mxu0 0.0
        %3425 = vmatpush1.msra.mxu0 0.0
        %3426 = vmatprep.subr.mxu0 0.0
        %3427 = vmatpush1.msra.mxu0 0.0
        %3428 = vmatprep.subr.mxu0 0.0
        %3429 = vmatpush1.msra.mxu0 0.0
        %3430 = vmatprep.subr.mxu0 0.0
        %3431 = vmatpush1.msra.mxu0 0.0
        %3432 = vmatprep.subr.mxu0 0.0
        %3433 = vmatpush1.msra.mxu0 0.0
        %3434 = vmatprep.subr.mxu0 0.0
        %3435 = vmatpush1.msra.mxu0 0.0
        %3436 = vmatprep.subr.mxu0 0.0
        %3437 = vmatpush1.msra.mxu0 0.0
        %3438 = vmatprep.subr.mxu0 0.0
        %3439 = vmatpush1.msra.mxu0 0.0
        %3440 = vmatprep.subr.mxu0 0.0
        %3441 = vmatpush1.msra.mxu0 0.0
        %3442 = vmatprep.subr.mxu0 0.0
        %3443 = vmatpush1.msra.mxu0 0.0
        %3444 = vmatprep.subr.mxu0 0.0
        %3445 = vmatpush1.msra.mxu0 0.0
        %3446 = vmatprep.subr.mxu0 0.0
        %3447 = vmatpush1.msra.mxu0 0.0
        %3448 = vmatprep.subr.mxu0 0.0
        %3449 = vmatpush1.msra.mxu0 0.0
        %3450 = vmatprep.subr.mxu0 0.0
        %3451 = vmatpush1.msra.mxu0 0.0
        %3452 = vmatprep.subr.mxu0 0.0
        %3453 = vmatpush1.msra.mxu0 0.0
        %3454 = vmatprep.subr.mxu0 0.0
        %3455 = vmatpush1.msra.mxu0 0.0
        %3456 = vmatprep.subr.mxu0 0.0
        %3457 = vmatpush1.msra.mxu0 0.0
        %3458 = vmatprep.subr.mxu0 0.0
        %3459 = vmatpush1.msra.mxu0 0.0
        %3460 = vmatprep.subr.mxu0 0.0
        %3461 = vmatpush1.msra.mxu0 0.0
        %3462 = vmatprep.subr.mxu0 0.0
        %3463 = vmatpush1.msra.mxu0 0.0
        %3464 = vmatprep.mubr.f32.mxu0 0.0
        %3465 = vmatmul.mubr.f32.gmra.mrb[0].mxu0 %v2855
        %v3466 = vpop.f32.mrb[0].mxu0
        %v3467 = vadd.f32 %v3242, %v3466
        %v3468 = vpop.f32.mrb[0].mxu0
        %3469 = vmatprep.mubr.f32.mxu0 0.0
        %3470 = vmatmul.mubr.f32.gmra.mrb[0].mxu0 %v2858
        %v3471 = vpop.f32.mrb[0].mxu0
        %v3472 = vadd.f32 %v3247, %v3471
        %v3473 = vpop.f32.mrb[0].mxu0
        %3474 = vmatprep.mubr.f32.mxu0 0.0
        %3475 = vmatmul.mubr.f32.gmra.mrb[0].mxu0 %v2861
        %v3476 = vpop.f32.mrb[0].mxu0
        %v3477 = vadd.f32 %v3252, %v3476
        %v3478 = vpop.f32.mrb[0].mxu0
        %3479 = vmatprep.mubr.f32.mxu0 0.0
        %3480 = vmatmul.mubr.f32.gmra.mrb[0].mxu0 %v2864
        %v3481 = vpop.f32.mrb[0].mxu0
        %v3482 = vadd.f32 %v3257, %v3481
        %v3483 = vpop.f32.mrb[0].mxu0
        %3484 = vmatprep.mubr.f32.mxu0 0.0
        %3485 = vmatmul.mubr.f32.gmra.mrb[0].mxu0 %v2867
        %v3486 = vpop.f32.mrb[0].mxu0
        %v3487 = vadd.f32 %v3262, %v3486
        %v3488 = vpop.f32.mrb[0].mxu0
        %3489 = vmatprep.mubr.f32.mxu0 0.0
        %3490 = vmatmul.mubr.f32.gmra.mrb[0].mxu0 %v2870
        %v3491 = vpop.f32.mrb[0].mxu0
        %v3492 = vadd.f32 %v3267, %v3491
        %v3493 = vpop.f32.mrb[0].mxu0
        %3494 = vmatprep.mubr.f32.mxu0 0.0
        %3495 = vmatmul.mubr.f32.gmra.mrb[0].mxu0 %v2873
        %v3496 = vpop.f32.mrb[0].mxu0
        %v3497 = vadd.f32 %v3272, %v3496
        %v3498 = vpop.f32.mrb[0].mxu0
        %3499 = vmatprep.mubr.f32.mxu0 0.0
        %3500 = vmatmul.mubr.f32.gmra.mrb[0].mxu0 %v2876
        %v3501 = vpop.f32.mrb[0].mxu0
        %v3502 = vadd.f32 %v3277, %v3501
        %v3503 = vpop.f32.mrb[0].mxu0
        %3504 = vmatprep.mubr.f32.mxu0 0.0
        %3505 = vmatmul.mubr.f32.gmra.mrb[0].mxu0 %v2879
        %v3506 = vpop.f32.mrb[0].mxu0
        %v3507 = vadd.f32 %v3282, %v3506
        %v3508 = vpop.f32.mrb[0].mxu0
        %3509 = vmatprep.mubr.f32.mxu0 0.0
        %3510 = vmatmul.mubr.f32.gmra.mrb[0].mxu0 %v2882
        %v3511 = vpop.f32.mrb[0].mxu0
        %v3512 = vadd.f32 %v3287, %v3511
        %v3513 = vpop.f32.mrb[0].mxu0
        %3514 = vmatprep.mubr.f32.mxu0 0.0
        %3515 = vmatmul.mubr.f32.gmra.mrb[0].mxu0 %v2885
        %v3516 = vpop.f32.mrb[0].mxu0
        %v3517 = vadd.f32 %v3292, %v3516
        %v3518 = vpop.f32.mrb[0].mxu0
        %3519 = vmatprep.mubr.f32.mxu0 0.0
        %3520 = vmatmul.mubr.f32.gmra.mrb[0].mxu0 %v2888
        %v3521 = vpop.f32.mrb[0].mxu0
        %v3522 = vadd.f32 %v3297, %v3521
        %v3523 = vpop.f32.mrb[0].mxu0
        %3524 = vmatprep.mubr.f32.mxu0 0.0
        %3525 = vmatmul.mubr.f32.gmra.mrb[0].mxu0 %v2891
        %v3526 = vpop.f32.mrb[0].mxu0
        %v3527 = vadd.f32 %v3302, %v3526
        %v3528 = vpop.f32.mrb[0].mxu0
        %3529 = vmatprep.mubr.f32.mxu0 0.0
        %3530 = vmatmul.mubr.f32.gmra.mrb[0].mxu0 %v2894
        %v3531 = vpop.f32.mrb[0].mxu0
        %v3532 = vadd.f32 %v3307, %v3531
        %v3533 = vpop.f32.mrb[0].mxu0
        %3534 = vmatprep.mubr.f32.mxu0 0.0
        %3535 = vmatmul.mubr.f32.gmra.mrb[0].mxu0 %v2897
        %v3536 = vpop.f32.mrb[0].mxu0
        %v3537 = vadd.f32 %v3312, %v3536
        %v3538 = vpop.f32.mrb[0].mxu0
        %3539 = vmatprep.mubr.f32.mxu0 0.0
        %3540 = vmatmul.mubr.f32.gmra.mrb[0].mxu0 %v2900
        %v3541 = vpop.f32.mrb[0].mxu0
        %v3542 = vadd.f32 %v3317, %v3541
        %v3543 = vpop.f32.mrb[0].mxu0
        %3544 = vmatprep.mubr.f32.mxu0 0.0
        %3545 = vmatmul.mubr.f32.gmra.mrb[0].mxu0 %v2903
        %v3546 = vpop.f32.mrb[0].mxu0
        %v3547 = vadd.f32 %v3322, %v3546
        %v3548 = vpop.f32.mrb[0].mxu0
        %3549 = vmatprep.mubr.f32.mxu0 0.0
        %3550 = vmatmul.mubr.f32.gmra.mrb[0].mxu0 %v2906
        %v3551 = vpop.f32.mrb[0].mxu0
        %v3552 = vadd.f32 %v3327, %v3551
        %v3553 = vpop.f32.mrb[0].mxu0
        %3554 = vmatprep.mubr.f32.mxu0 0.0
        %3555 = vmatmul.mubr.f32.gmra.mrb[0].mxu0 %v2909
        %v3556 = vpop.f32.mrb[0].mxu0
        %v3557 = vadd.f32 %v3332, %v3556
        %v3558 = vpop.f32.mrb[0].mxu0
        %3559 = vmatprep.mubr.f32.mxu0 0.0
        %3560 = vmatmul.mubr.f32.gmra.mrb[0].mxu0 %v2912
        %v3561 = vpop.f32.mrb[0].mxu0
        %v3562 = vadd.f32 %v3337, %v3561
        %v3563 = vpop.f32.mrb[0].mxu0
        %3564 = vmatprep.mubr.f32.mxu0 0.0
        %3565 = vmatmul.mubr.f32.gmra.mrb[0].mxu0 %v2915
        %v3566 = vpop.f32.mrb[0].mxu0
        %v3567 = vadd.f32 %v3342, %v3566
        %v3568 = vpop.f32.mrb[0].mxu0
        %3569 = vmatprep.mubr.f32.mxu0 0.0
        %3570 = vmatmul.mubr.f32.gmra.mrb[0].mxu0 %v2918
        %v3571 = vpop.f32.mrb[0].mxu0
        %v3572 = vadd.f32 %v3347, %v3571
        %v3573 = vpop.f32.mrb[0].mxu0
        %3574 = vmatprep.mubr.f32.mxu0 0.0
        %3575 = vmatmul.mubr.f32.gmra.mrb[0].mxu0 %v2921
        %v3576 = vpop.f32.mrb[0].mxu0
        %v3577 = vadd.f32 %v3352, %v3576
        %v3578 = vpop.f32.mrb[0].mxu0
        %3579 = vmatprep.mubr.f32.mxu0 0.0
        %3580 = vmatmul.mubr.f32.gmra.mrb[0].mxu0 %v2924
        %v3581 = vpop.f32.mrb[0].mxu0
        %v3582 = vadd.f32 %v3357, %v3581
        %v3583 = vpop.f32.mrb[0].mxu0
        %3584 = vmatprep.mubr.f32.mxu0 0.0
        %3585 = vmatmul.mubr.f32.gmra.mrb[0].mxu0 %v2927
        %v3586 = vpop.f32.mrb[0].mxu0
        %v3587 = vadd.f32 %v3362, %v3586
        %v3588 = vpop.f32.mrb[0].mxu0
        %3589 = vmatprep.mubr.f32.mxu0 0.0
        %3590 = vmatmul.mubr.f32.gmra.mrb[0].mxu0 %v2930
        %v3591 = vpop.f32.mrb[0].mxu0
        %v3592 = vadd.f32 %v3367, %v3591
        %v3593 = vpop.f32.mrb[0].mxu0
        %3594 = vmatprep.mubr.f32.mxu0 0.0
        %3595 = vmatmul.mubr.f32.gmra.mrb[0].mxu0 %v2933
        %v3596 = vpop.f32.mrb[0].mxu0
        %v3597 = vadd.f32 %v3372, %v3596
        %v3598 = vpop.f32.mrb[0].mxu0
        %3599 = vmatprep.mubr.f32.mxu0 0.0
        %3600 = vmatmul.mubr.f32.gmra.mrb[0].mxu0 %v2936
        %v3601 = vpop.f32.mrb[0].mxu0
        %v3602 = vadd.f32 %v3377, %v3601
        %v3603 = vpop.f32.mrb[0].mxu0
        %3604 = vmatprep.mubr.f32.mxu0 0.0
        %3605 = vmatmul.mubr.f32.gmra.mrb[0].mxu0 %v2939
        %v3606 = vpop.f32.mrb[0].mxu0
        %v3607 = vadd.f32 %v3382, %v3606
        %v3608 = vpop.f32.mrb[0].mxu0
        %3609 = vmatprep.mubr.f32.mxu0 0.0
        %3610 = vmatmul.mubr.f32.gmra.mrb[0].mxu0 %v2942
        %v3611 = vpop.f32.mrb[0].mxu0
        %v3612 = vadd.f32 %v3387, %v3611
        %v3613 = vpop.f32.mrb[0].mxu0
        %3614 = vmatprep.mubr.f32.mxu0 0.0
        %3615 = vmatmul.mubr.f32.gmra.mrb[0].mxu0 %v2945
        %v3616 = vpop.f32.mrb[0].mxu0
        %v3617 = vadd.f32 %v3392, %v3616
        %v3618 = vpop.f32.mrb[0].mxu0
        %3619 = vmatprep.mubr.f32.mxu0 0.0
        %3620 = vmatmul.mubr.f32.gmra.mrb[0].mxu0 %v2948
        %v3621 = vpop.f32.mrb[0].mxu0
        %v3622 = vadd.f32 %v3397, %v3621
        %v3623 = vpop.f32.mrb[0].mxu0
        %3624 = vdwg.mxu0
        %v3625 = vld [vmem:[%s469] sm:$0x1]
        %v3626 = vld [vmem:[%s469 + $0x1] sm:$0x1]
        %v3627 = vld [vmem:[%s469 + $0x2] sm:$0x1]
        %v3628 = vld [vmem:[%s469 + $0x3] sm:$0x1]
        %v3633 = vlaneseq
        %v3634 = vshrl.u32 %v3633, 7
        %v3635 = vsub.s32 0, %v3634
        %v3636 = vrot.slane %v3625, %v3635
        %v3637 = vlaneseq
        %v3638 = vshrl.u32 %v3637, 7
        %v3639 = vsub.s32 0, %v3638
        %v3640 = vrot.slane %v3626, %v3639
        %v3641 = vlaneseq
        %v3642 = vshrl.u32 %v3641, 7
        %v3643 = vsub.s32 0, %v3642
        %v3644 = vrot.slane %v3627, %v3643
        %v3645 = vlaneseq
        %v3646 = vshrl.u32 %v3645, 7
        %v3647 = vsub.s32 0, %v3646
        %v3648 = vrot.slane %v3628, %v3647
        %v3653 = vadd.f32 %v3467, %v3636
        %v3654 = vadd.f32 %v3472, %v3636
        %v3655 = vadd.f32 %v3477, %v3636
        %v3656 = vadd.f32 %v3482, %v3636
        %v3657 = vadd.f32 %v3487, %v3636
        %v3658 = vadd.f32 %v3492, %v3636
        %v3659 = vadd.f32 %v3497, %v3636
        %v3660 = vadd.f32 %v3502, %v3636
        %v3661 = vadd.f32 %v3507, %v3640
        %v3662 = vadd.f32 %v3512, %v3640
        %v3663 = vadd.f32 %v3517, %v3640
        %v3664 = vadd.f32 %v3522, %v3640
        %v3665 = vadd.f32 %v3527, %v3640
        %v3666 = vadd.f32 %v3532, %v3640
        %v3667 = vadd.f32 %v3537, %v3640
        %v3668 = vadd.f32 %v3542, %v3640
        %v3669 = vadd.f32 %v3547, %v3644
        %v3670 = vadd.f32 %v3552, %v3644
        %v3671 = vadd.f32 %v3557, %v3644
        %v3672 = vadd.f32 %v3562, %v3644
        %v3673 = vadd.f32 %v3567, %v3644
        %v3674 = vadd.f32 %v3572, %v3644
        %v3675 = vadd.f32 %v3577, %v3644
        %v3676 = vadd.f32 %v3582, %v3644
        %v3677 = vadd.f32 %v3587, %v3648
        %v3678 = vadd.f32 %v3592, %v3648
        %v3679 = vadd.f32 %v3597, %v3648
        %v3680 = vadd.f32 %v3602, %v3648
        %v3681 = vadd.f32 %v3607, %v3648
        %v3682 = vadd.f32 %v3612, %v3648
        %v3683 = vadd.f32 %v3617, %v3648
        %v3684 = vadd.f32 %v3622, %v3648
        %v3685 = vld [vmem:[#allocation14] sm:$0xff]
        %v3686 = vld [vmem:[#allocation14 + $0x8] sm:$0xff]
        %v3687 = vld [vmem:[#allocation14 + $0x10] sm:$0xff]
        %v3688 = vld [vmem:[#allocation14 + $0x18] sm:$0xff]
        %v3689 = vld [vmem:[#allocation14 + $0x20] sm:$0xff]
        %v3690 = vld [vmem:[#allocation14 + $0x28] sm:$0xff]
        %v3691 = vld [vmem:[#allocation14 + $0x30] sm:$0xff]
        %v3692 = vld [vmem:[#allocation14 + $0x38] sm:$0xff]
        %v3693 = vld [vmem:[#allocation14 + $0x40] sm:$0xff]
        %v3694 = vld [vmem:[#allocation14 + $0x48] sm:$0xff]
        %v3695 = vld [vmem:[#allocation14 + $0x50] sm:$0xff]
        %v3696 = vld [vmem:[#allocation14 + $0x58] sm:$0xff]
        %v3697 = vld [vmem:[#allocation14 + $0x60] sm:$0xff]
        %v3698 = vld [vmem:[#allocation14 + $0x68] sm:$0xff]
        %v3699 = vld [vmem:[#allocation14 + $0x70] sm:$0xff]
        %v3700 = vld [vmem:[#allocation14 + $0x78] sm:$0xff]
        %v3701 = vld [vmem:[%s8] sm:$0x1]
        %v3702 = vld [vmem:[%s9] sm:$0x1]
        %v3703 = vadd.f32 %v3653, %v3654
        %v3704 = vadd.f32 %v3703, %v3655
        %v3705 = vadd.f32 %v3704, %v3656
        %v3706 = vadd.f32 %v3705, %v3657
        %v3707 = vadd.f32 %v3706, %v3658
        %v3708 = vadd.f32 %v3707, %v3659
        %v3709 = vadd.f32 %v3708, %v3660
        %v3710 = vrot.slane %v3709, 4
        %v3711 = vadd.f32 %v3709, %v3710
        %v3712 = vrot.slane %v3711, 2
        %v3713 = vadd.f32 %v3711, %v3712
        %v3714 = vrot.slane %v3713, 1
        %v3715 = vadd.f32 %v3713, %v3714
        %v3716 = vadd.f32 %v3661, %v3662
        %v3717 = vadd.f32 %v3716, %v3663
        %v3718 = vadd.f32 %v3717, %v3664
        %v3719 = vadd.f32 %v3718, %v3665
        %v3720 = vadd.f32 %v3719, %v3666
        %v3721 = vadd.f32 %v3720, %v3667
        %v3722 = vadd.f32 %v3721, %v3668
        %v3723 = vrot.slane %v3722, 4
        %v3724 = vadd.f32 %v3722, %v3723
        %v3725 = vrot.slane %v3724, 2
        %v3726 = vadd.f32 %v3724, %v3725
        %v3727 = vrot.slane %v3726, 1
        %v3728 = vadd.f32 %v3726, %v3727
        %v3729 = vadd.f32 %v3669, %v3670
        %v3730 = vadd.f32 %v3729, %v3671
        %v3731 = vadd.f32 %v3730, %v3672
        %v3732 = vadd.f32 %v3731, %v3673
        %v3733 = vadd.f32 %v3732, %v3674
        %v3734 = vadd.f32 %v3733, %v3675
        %v3735 = vadd.f32 %v3734, %v3676
        %v3736 = vrot.slane %v3735, 4
        %v3737 = vadd.f32 %v3735, %v3736
        %v3738 = vrot.slane %v3737, 2
        %v3739 = vadd.f32 %v3737, %v3738
        %v3740 = vrot.slane %v3739, 1
        %v3741 = vadd.f32 %v3739, %v3740
        %v3742 = vadd.f32 %v3677, %v3678
        %v3743 = vadd.f32 %v3742, %v3679
        %v3744 = vadd.f32 %v3743, %v3680
        %v3745 = vadd.f32 %v3744, %v3681
        %v3746 = vadd.f32 %v3745, %v3682
        %v3747 = vadd.f32 %v3746, %v3683
        %v3748 = vadd.f32 %v3747, %v3684
        %v3749 = vrot.slane %v3748, 4
        %v3750 = vadd.f32 %v3748, %v3749
        %v3751 = vrot.slane %v3750, 2
        %v3752 = vadd.f32 %v3750, %v3751
        %v3753 = vrot.slane %v3752, 1
        %v3754 = vadd.f32 %v3752, %v3753
        %v3759 = vsel %vm665, %v3728, %v3715
        %v3760 = vsel %vm667, %v3741, %v3759
        %v3761 = vsel %vm669, %v3754, %v3760
        %3763 = vmatprep.subr.mxu0 0.0
        %3764 = vmatpush1.msra.mxu0 %v3685
        %3765 = vmatprep.subr.mxu0 0.0
        %3766 = vmatpush1.msra.mxu0 %v3686
        %3767 = vmatprep.subr.mxu0 0.0
        %3768 = vmatpush1.msra.mxu0 %v3687
        %3769 = vmatprep.subr.mxu0 0.0
        %3770 = vmatpush1.msra.mxu0 %v3688
        %3771 = vmatprep.subr.mxu0 0.0
        %3772 = vmatpush1.msra.mxu0 %v3689
        %3773 = vmatprep.subr.mxu0 0.0
        %3774 = vmatpush1.msra.mxu0 %v3690
        %3775 = vmatprep.subr.mxu0 0.0
        %3776 = vmatpush1.msra.mxu0 %v3691
        %3777 = vmatprep.subr.mxu0 0.0
        %3778 = vmatpush1.msra.mxu0 %v3692
        %3779 = vmatprep.subr.mxu0 0.0
        %3780 = vmatpush1.msra.mxu0 %v3693
        %3781 = vmatprep.subr.mxu0 0.0
        %3782 = vmatpush1.msra.mxu0 %v3694
        %3783 = vmatprep.subr.mxu0 0.0
        %3784 = vmatpush1.msra.mxu0 %v3695
        %3785 = vmatprep.subr.mxu0 0.0
        %3786 = vmatpush1.msra.mxu0 %v3696
        %3787 = vmatprep.subr.mxu0 0.0
        %3788 = vmatpush1.msra.mxu0 %v3697
        %3789 = vmatprep.subr.mxu0 0.0
        %3790 = vmatpush1.msra.mxu0 %v3698
        %3791 = vmatprep.subr.mxu0 0.0
        %3792 = vmatpush1.msra.mxu0 %v3699
        %3793 = vmatprep.subr.mxu0 0.0
        %3794 = vmatpush1.msra.mxu0 %v3700
        %3795 = vmatprep.subr.mxu0 0.0
        %3796 = vmatpush1.msra.mxu0 0.0
        %3797 = vmatprep.subr.mxu0 0.0
        %3798 = vmatpush1.msra.mxu0 0.0
        %3799 = vmatprep.subr.mxu0 0.0
        %3800 = vmatpush1.msra.mxu0 0.0
        %3801 = vmatprep.subr.mxu0 0.0
        %3802 = vmatpush1.msra.mxu0 0.0
        %3803 = vmatprep.subr.mxu0 0.0
        %3804 = vmatpush1.msra.mxu0 0.0
        %3805 = vmatprep.subr.mxu0 0.0
        %3806 = vmatpush1.msra.mxu0 0.0
        %3807 = vmatprep.subr.mxu0 0.0
        %3808 = vmatpush1.msra.mxu0 0.0
        %3809 = vmatprep.subr.mxu0 0.0
        %3810 = vmatpush1.msra.mxu0 0.0
        %3811 = vmatprep.subr.mxu0 0.0
        %3812 = vmatpush1.msra.mxu0 0.0
        %3813 = vmatprep.subr.mxu0 0.0
        %3814 = vmatpush1.msra.mxu0 0.0
        %3815 = vmatprep.subr.mxu0 0.0
        %3816 = vmatpush1.msra.mxu0 0.0
        %3817 = vmatprep.subr.mxu0 0.0
        %3818 = vmatpush1.msra.mxu0 0.0
        %3819 = vmatprep.subr.mxu0 0.0
        %3820 = vmatpush1.msra.mxu0 0.0
        %3821 = vmatprep.subr.mxu0 0.0
        %3822 = vmatpush1.msra.mxu0 0.0
        %3823 = vmatprep.subr.mxu0 0.0
        %3824 = vmatpush1.msra.mxu0 0.0
        %3825 = vmatprep.subr.mxu0 0.0
        %3826 = vmatpush1.msra.mxu0 0.0
        %3827 = vmatprep.mubr.f32.mxu0 0.0
        %3828 = vmatmul.mubr.f32.gmra.mrb[0].mxu0 %v3761
        %v3829 = vpop.f32.mrb[0].mxu0
        %v3830 = vadd.f32 0.0, %v3829
        %v3831 = vpop.f32.mrb[0].mxu0
        %3832 = vdwg.mxu0
        %v3835 = vunpack.c.l.s4 1966171168
        %v3836 = vunpack.c.0.s8 %v3835
        %v3837 = vlaneseq
        %v3838 = vshrl.u32 %v3837, 7
        %v3839 = vsub.s32 %v3836, %v3838
        %v3840 = vrot.slane %v3830, %v3839
        %v3841 = vcombine.high %v3840, %v3840
        %v3843 = vunpack.c.l.s4 1966171168
        %v3844 = vunpack.c.0.s8 %v3843
        %v3845 = vlaneseq
        %v3846 = vshrl.u32 %v3845, 7
        %v3847 = vsub.s32 %v3844, %v3846
        %v3848 = vrot.slane %v3840, %v3847
        %v3850 = vunpack.c.l.s4 1966171168
        %v3851 = vunpack.c.0.s8 %v3850
        %v3852 = vlaneseq
        %v3853 = vshrl.u32 %v3852, 7
        %v3854 = vsub.s32 %v3851, %v3853
        %v3855 = vrot.slane %v3841, %v3854
        %v3856 = vcombine.high %v3848, %v3848
        %v3857 = vcombine.high %v3855, %v3855
        %v3858 = vlaneseq
        %v3859 = vshrl.u32 %v3858, 7
        %v3860 = vsub.s32 0, %v3859
        %v3861 = vrot.slane %v3848, %v3860
        %v3862 = vlaneseq
        %v3863 = vshrl.u32 %v3862, 7
        %v3864 = vsub.s32 0, %v3863
        %v3865 = vrot.slane %v3855, %v3864
        %v3866 = vlaneseq
        %v3867 = vshrl.u32 %v3866, 7
        %v3868 = vsub.s32 0, %v3867
        %v3869 = vrot.slane %v3856, %v3868
        %v3870 = vlaneseq
        %v3871 = vshrl.u32 %v3870, 7
        %v3872 = vsub.s32 0, %v3871
        %v3873 = vrot.slane %v3857, %v3872
        %v3878 = vsub.f32 %v3653, %v3861
        %v3879 = vsub.f32 %v3654, %v3861
        %v3880 = vsub.f32 %v3655, %v3861
        %v3881 = vsub.f32 %v3656, %v3861
        %v3882 = vsub.f32 %v3657, %v3861
        %v3883 = vsub.f32 %v3658, %v3861
        %v3884 = vsub.f32 %v3659, %v3861
        %v3885 = vsub.f32 %v3660, %v3861
        %v3886 = vsub.f32 %v3661, %v3865
        %v3887 = vsub.f32 %v3662, %v3865
        %v3888 = vsub.f32 %v3663, %v3865
        %v3889 = vsub.f32 %v3664, %v3865
        %v3890 = vsub.f32 %v3665, %v3865
        %v3891 = vsub.f32 %v3666, %v3865
        %v3892 = vsub.f32 %v3667, %v3865
        %v3893 = vsub.f32 %v3668, %v3865
        %v3894 = vsub.f32 %v3669, %v3869
        %v3895 = vsub.f32 %v3670, %v3869
        %v3896 = vsub.f32 %v3671, %v3869
        %v3897 = vsub.f32 %v3672, %v3869
        %v3898 = vsub.f32 %v3673, %v3869
        %v3899 = vsub.f32 %v3674, %v3869
        %v3900 = vsub.f32 %v3675, %v3869
        %v3901 = vsub.f32 %v3676, %v3869
        %v3902 = vsub.f32 %v3677, %v3873
        %v3903 = vsub.f32 %v3678, %v3873
        %v3904 = vsub.f32 %v3679, %v3873
        %v3905 = vsub.f32 %v3680, %v3873
        %v3906 = vsub.f32 %v3681, %v3873
        %v3907 = vsub.f32 %v3682, %v3873
        %v3908 = vsub.f32 %v3683, %v3873
        %v3909 = vsub.f32 %v3684, %v3873
        %v3910 = vmul.f32 %v3878, %v3878
        %v3911 = vmul.f32 %v3879, %v3879
        %v3912 = vmul.f32 %v3880, %v3880
        %v3913 = vmul.f32 %v3881, %v3881
        %v3914 = vmul.f32 %v3882, %v3882
        %v3915 = vmul.f32 %v3883, %v3883
        %v3916 = vmul.f32 %v3884, %v3884
        %v3917 = vmul.f32 %v3885, %v3885
        %v3918 = vmul.f32 %v3886, %v3886
        %v3919 = vmul.f32 %v3887, %v3887
        %v3920 = vmul.f32 %v3888, %v3888
        %v3921 = vmul.f32 %v3889, %v3889
        %v3922 = vmul.f32 %v3890, %v3890
        %v3923 = vmul.f32 %v3891, %v3891
        %v3924 = vmul.f32 %v3892, %v3892
        %v3925 = vmul.f32 %v3893, %v3893
        %v3926 = vmul.f32 %v3894, %v3894
        %v3927 = vmul.f32 %v3895, %v3895
        %v3928 = vmul.f32 %v3896, %v3896
        %v3929 = vmul.f32 %v3897, %v3897
        %v3930 = vmul.f32 %v3898, %v3898
        %v3931 = vmul.f32 %v3899, %v3899
        %v3932 = vmul.f32 %v3900, %v3900
        %v3933 = vmul.f32 %v3901, %v3901
        %v3934 = vmul.f32 %v3902, %v3902
        %v3935 = vmul.f32 %v3903, %v3903
        %v3936 = vmul.f32 %v3904, %v3904
        %v3937 = vmul.f32 %v3905, %v3905
        %v3938 = vmul.f32 %v3906, %v3906
        %v3939 = vmul.f32 %v3907, %v3907
        %v3940 = vmul.f32 %v3908, %v3908
        %v3941 = vmul.f32 %v3909, %v3909
        %v3942 = vadd.f32 %v3910, %v3911
        %v3943 = vadd.f32 %v3942, %v3912
        %v3944 = vadd.f32 %v3943, %v3913
        %v3945 = vadd.f32 %v3944, %v3914
        %v3946 = vadd.f32 %v3945, %v3915
        %v3947 = vadd.f32 %v3946, %v3916
        %v3948 = vadd.f32 %v3947, %v3917
        %v3949 = vrot.slane %v3948, 4
        %v3950 = vadd.f32 %v3948, %v3949
        %v3951 = vrot.slane %v3950, 2
        %v3952 = vadd.f32 %v3950, %v3951
        %v3953 = vrot.slane %v3952, 1
        %v3954 = vadd.f32 %v3952, %v3953
        %v3955 = vadd.f32 %v3918, %v3919
        %v3956 = vadd.f32 %v3955, %v3920
        %v3957 = vadd.f32 %v3956, %v3921
        %v3958 = vadd.f32 %v3957, %v3922
        %v3959 = vadd.f32 %v3958, %v3923
        %v3960 = vadd.f32 %v3959, %v3924
        %v3961 = vadd.f32 %v3960, %v3925
        %v3962 = vrot.slane %v3961, 4
        %v3963 = vadd.f32 %v3961, %v3962
        %v3964 = vrot.slane %v3963, 2
        %v3965 = vadd.f32 %v3963, %v3964
        %v3966 = vrot.slane %v3965, 1
        %v3967 = vadd.f32 %v3965, %v3966
        %v3968 = vadd.f32 %v3926, %v3927
        %v3969 = vadd.f32 %v3968, %v3928
        %v3970 = vadd.f32 %v3969, %v3929
        %v3971 = vadd.f32 %v3970, %v3930
        %v3972 = vadd.f32 %v3971, %v3931
        %v3973 = vadd.f32 %v3972, %v3932
        %v3974 = vadd.f32 %v3973, %v3933
        %v3975 = vrot.slane %v3974, 4
        %v3976 = vadd.f32 %v3974, %v3975
        %v3977 = vrot.slane %v3976, 2
        %v3978 = vadd.f32 %v3976, %v3977
        %v3979 = vrot.slane %v3978, 1
        %v3980 = vadd.f32 %v3978, %v3979
        %v3981 = vadd.f32 %v3934, %v3935
        %v3982 = vadd.f32 %v3981, %v3936
        %v3983 = vadd.f32 %v3982, %v3937
        %v3984 = vadd.f32 %v3983, %v3938
        %v3985 = vadd.f32 %v3984, %v3939
        %v3986 = vadd.f32 %v3985, %v3940
        %v3987 = vadd.f32 %v3986, %v3941
        %v3988 = vrot.slane %v3987, 4
        %v3989 = vadd.f32 %v3987, %v3988
        %v3990 = vrot.slane %v3989, 2
        %v3991 = vadd.f32 %v3989, %v3990
        %v3992 = vrot.slane %v3991, 1
        %v3993 = vadd.f32 %v3991, %v3992
        %v3998 = vsel %vm665, %v3967, %v3954
        %v3999 = vsel %vm667, %v3980, %v3998
        %v4000 = vsel %vm669, %v3993, %v3999
        %4002 = vmatprep.subr.mxu0 0.0
        %4003 = vmatpush1.msra.mxu0 %v3685
        %4004 = vmatprep.subr.mxu0 0.0
        %4005 = vmatpush1.msra.mxu0 %v3686
        %4006 = vmatprep.subr.mxu0 0.0
        %4007 = vmatpush1.msra.mxu0 %v3687
        %4008 = vmatprep.subr.mxu0 0.0
        %4009 = vmatpush1.msra.mxu0 %v3688
        %4010 = vmatprep.subr.mxu0 0.0
        %4011 = vmatpush1.msra.mxu0 %v3689
        %4012 = vmatprep.subr.mxu0 0.0
        %4013 = vmatpush1.msra.mxu0 %v3690
        %4014 = vmatprep.subr.mxu0 0.0
        %4015 = vmatpush1.msra.mxu0 %v3691
        %4016 = vmatprep.subr.mxu0 0.0
        %4017 = vmatpush1.msra.mxu0 %v3692
        %4018 = vmatprep.subr.mxu0 0.0
        %4019 = vmatpush1.msra.mxu0 %v3693
        %4020 = vmatprep.subr.mxu0 0.0
        %4021 = vmatpush1.msra.mxu0 %v3694
        %4022 = vmatprep.subr.mxu0 0.0
        %4023 = vmatpush1.msra.mxu0 %v3695
        %4024 = vmatprep.subr.mxu0 0.0
        %4025 = vmatpush1.msra.mxu0 %v3696
        %4026 = vmatprep.subr.mxu0 0.0
        %4027 = vmatpush1.msra.mxu0 %v3697
        %4028 = vmatprep.subr.mxu0 0.0
        %4029 = vmatpush1.msra.mxu0 %v3698
        %4030 = vmatprep.subr.mxu0 0.0
        %4031 = vmatpush1.msra.mxu0 %v3699
        %4032 = vmatprep.subr.mxu0 0.0
        %4033 = vmatpush1.msra.mxu0 %v3700
        %4034 = vmatprep.subr.mxu0 0.0
        %4035 = vmatpush1.msra.mxu0 0.0
        %4036 = vmatprep.subr.mxu0 0.0
        %4037 = vmatpush1.msra.mxu0 0.0
        %4038 = vmatprep.subr.mxu0 0.0
        %4039 = vmatpush1.msra.mxu0 0.0
        %4040 = vmatprep.subr.mxu0 0.0
        %4041 = vmatpush1.msra.mxu0 0.0
        %4042 = vmatprep.subr.mxu0 0.0
        %4043 = vmatpush1.msra.mxu0 0.0
        %4044 = vmatprep.subr.mxu0 0.0
        %4045 = vmatpush1.msra.mxu0 0.0
        %4046 = vmatprep.subr.mxu0 0.0
        %4047 = vmatpush1.msra.mxu0 0.0
        %4048 = vmatprep.subr.mxu0 0.0
        %4049 = vmatpush1.msra.mxu0 0.0
        %4050 = vmatprep.subr.mxu0 0.0
        %4051 = vmatpush1.msra.mxu0 0.0
        %4052 = vmatprep.subr.mxu0 0.0
        %4053 = vmatpush1.msra.mxu0 0.0
        %4054 = vmatprep.subr.mxu0 0.0
        %4055 = vmatpush1.msra.mxu0 0.0
        %4056 = vmatprep.subr.mxu0 0.0
        %4057 = vmatpush1.msra.mxu0 0.0
        %4058 = vmatprep.subr.mxu0 0.0
        %4059 = vmatpush1.msra.mxu0 0.0
        %4060 = vmatprep.subr.mxu0 0.0
        %4061 = vmatpush1.msra.mxu0 0.0
        %4062 = vmatprep.subr.mxu0 0.0
        %4063 = vmatpush1.msra.mxu0 0.0
        %4064 = vmatprep.subr.mxu0 0.0
        %4065 = vmatpush1.msra.mxu0 0.0
        %4066 = vmatprep.mubr.f32.mxu0 0.0
        %4067 = vmatmul.mubr.f32.gmra.mrb[0].mxu0 %v4000
        %v4068 = vpop.f32.mrb[0].mxu0
        %v4069 = vadd.f32 1e-05, %v4068
        %v4070 = vpop.f32.mrb[0].mxu0
        %4071 = vdwg.mxu0
        %v4072 = vrsqrt.pop %v4069
        %v4075 = vunpack.c.l.s4 1966171168
        %v4076 = vunpack.c.0.s8 %v4075
        %v4077 = vlaneseq
        %v4078 = vshrl.u32 %v4077, 7
        %v4079 = vsub.s32 %v4076, %v4078
        %v4080 = vrot.slane %v4072, %v4079
        %v4081 = vcombine.high %v4080, %v4080
        %v4083 = vunpack.c.l.s4 1966171168
        %v4084 = vunpack.c.0.s8 %v4083
        %v4085 = vlaneseq
        %v4086 = vshrl.u32 %v4085, 7
        %v4087 = vsub.s32 %v4084, %v4086
        %v4088 = vrot.slane %v4080, %v4087
        %v4090 = vunpack.c.l.s4 1966171168
        %v4091 = vunpack.c.0.s8 %v4090
        %v4092 = vlaneseq
        %v4093 = vshrl.u32 %v4092, 7
        %v4094 = vsub.s32 %v4091, %v4093
        %v4095 = vrot.slane %v4081, %v4094
        %v4096 = vcombine.high %v4088, %v4088
        %v4097 = vcombine.high %v4095, %v4095
        %v4098 = vlaneseq
        %v4099 = vshrl.u32 %v4098, 7
        %v4100 = vsub.s32 0, %v4099
        %v4101 = vrot.slane %v4088, %v4100
        %v4102 = vlaneseq
        %v4103 = vshrl.u32 %v4102, 7
        %v4104 = vsub.s32 0, %v4103
        %v4105 = vrot.slane %v4095, %v4104
        %v4106 = vlaneseq
        %v4107 = vshrl.u32 %v4106, 7
        %v4108 = vsub.s32 0, %v4107
        %v4109 = vrot.slane %v4096, %v4108
        %v4110 = vlaneseq
        %v4111 = vshrl.u32 %v4110, 7
        %v4112 = vsub.s32 0, %v4111
        %v4113 = vrot.slane %v4097, %v4112
        %v4118 = vmul.f32 %v3878, %v4101
        %v4119 = vmul.f32 %v3879, %v4101
        %v4120 = vmul.f32 %v3880, %v4101
        %v4121 = vmul.f32 %v3881, %v4101
        %v4122 = vmul.f32 %v3882, %v4101
        %v4123 = vmul.f32 %v3883, %v4101
        %v4124 = vmul.f32 %v3884, %v4101
        %v4125 = vmul.f32 %v3885, %v4101
        %v4126 = vmul.f32 %v3886, %v4105
        %v4127 = vmul.f32 %v3887, %v4105
        %v4128 = vmul.f32 %v3888, %v4105
        %v4129 = vmul.f32 %v3889, %v4105
        %v4130 = vmul.f32 %v3890, %v4105
        %v4131 = vmul.f32 %v3891, %v4105
        %v4132 = vmul.f32 %v3892, %v4105
        %v4133 = vmul.f32 %v3893, %v4105
        %v4134 = vmul.f32 %v3894, %v4109
        %v4135 = vmul.f32 %v3895, %v4109
        %v4136 = vmul.f32 %v3896, %v4109
        %v4137 = vmul.f32 %v3897, %v4109
        %v4138 = vmul.f32 %v3898, %v4109
        %v4139 = vmul.f32 %v3899, %v4109
        %v4140 = vmul.f32 %v3900, %v4109
        %v4141 = vmul.f32 %v3901, %v4109
        %v4142 = vmul.f32 %v3902, %v4113
        %v4143 = vmul.f32 %v3903, %v4113
        %v4144 = vmul.f32 %v3904, %v4113
        %v4145 = vmul.f32 %v3905, %v4113
        %v4146 = vmul.f32 %v3906, %v4113
        %v4147 = vmul.f32 %v3907, %v4113
        %v4148 = vmul.f32 %v3908, %v4113
        %v4149 = vmul.f32 %v3909, %v4113
        %v4151 = vlaneseq
        %v4152 = vshrl.u32 %v4151, 7
        %v4153 = vsub.s32 0, %v4152
        %v4154 = vrot.slane %v3701, %v4153
        %v4156 = vmul.f32 %v4118, %v4154
        %v4157 = vmul.f32 %v4119, %v4154
        %v4158 = vmul.f32 %v4120, %v4154
        %v4159 = vmul.f32 %v4121, %v4154
        %v4160 = vmul.f32 %v4122, %v4154
        %v4161 = vmul.f32 %v4123, %v4154
        %v4162 = vmul.f32 %v4124, %v4154
        %v4163 = vmul.f32 %v4125, %v4154
        %v4164 = vmul.f32 %v4126, %v4154
        %v4165 = vmul.f32 %v4127, %v4154
        %v4166 = vmul.f32 %v4128, %v4154
        %v4167 = vmul.f32 %v4129, %v4154
        %v4168 = vmul.f32 %v4130, %v4154
        %v4169 = vmul.f32 %v4131, %v4154
        %v4170 = vmul.f32 %v4132, %v4154
        %v4171 = vmul.f32 %v4133, %v4154
        %v4172 = vmul.f32 %v4134, %v4154
        %v4173 = vmul.f32 %v4135, %v4154
        %v4174 = vmul.f32 %v4136, %v4154
        %v4175 = vmul.f32 %v4137, %v4154
        %v4176 = vmul.f32 %v4138, %v4154
        %v4177 = vmul.f32 %v4139, %v4154
        %v4178 = vmul.f32 %v4140, %v4154
        %v4179 = vmul.f32 %v4141, %v4154
        %v4180 = vmul.f32 %v4142, %v4154
        %v4181 = vmul.f32 %v4143, %v4154
        %v4182 = vmul.f32 %v4144, %v4154
        %v4183 = vmul.f32 %v4145, %v4154
        %v4184 = vmul.f32 %v4146, %v4154
        %v4185 = vmul.f32 %v4147, %v4154
        %v4186 = vmul.f32 %v4148, %v4154
        %v4187 = vmul.f32 %v4149, %v4154
        %v4189 = vlaneseq
        %v4190 = vshrl.u32 %v4189, 7
        %v4191 = vsub.s32 0, %v4190
        %v4192 = vrot.slane %v3702, %v4191
        %v4194 = vadd.f32 %v4156, %v4192
        %v4195 = vadd.f32 %v4157, %v4192
        %v4196 = vadd.f32 %v4158, %v4192
        %v4197 = vadd.f32 %v4159, %v4192
        %v4198 = vadd.f32 %v4160, %v4192
        %v4199 = vadd.f32 %v4161, %v4192
        %v4200 = vadd.f32 %v4162, %v4192
        %v4201 = vadd.f32 %v4163, %v4192
        %v4202 = vadd.f32 %v4164, %v4192
        %v4203 = vadd.f32 %v4165, %v4192
        %v4204 = vadd.f32 %v4166, %v4192
        %v4205 = vadd.f32 %v4167, %v4192
        %v4206 = vadd.f32 %v4168, %v4192
        %v4207 = vadd.f32 %v4169, %v4192
        %v4208 = vadd.f32 %v4170, %v4192
        %v4209 = vadd.f32 %v4171, %v4192
        %v4210 = vadd.f32 %v4172, %v4192
        %v4211 = vadd.f32 %v4173, %v4192
        %v4212 = vadd.f32 %v4174, %v4192
        %v4213 = vadd.f32 %v4175, %v4192
        %v4214 = vadd.f32 %v4176, %v4192
        %v4215 = vadd.f32 %v4177, %v4192
        %v4216 = vadd.f32 %v4178, %v4192
        %v4217 = vadd.f32 %v4179, %v4192
        %v4218 = vadd.f32 %v4180, %v4192
        %v4219 = vadd.f32 %v4181, %v4192
        %v4220 = vadd.f32 %v4182, %v4192
        %v4221 = vadd.f32 %v4183, %v4192
        %v4222 = vadd.f32 %v4184, %v4192
        %v4223 = vadd.f32 %v4185, %v4192
        %v4224 = vadd.f32 %v4186, %v4192
        %v4225 = vadd.f32 %v4187, %v4192
        %v4226 = vxor.u32 %v4194, 2147483648
        %v4227 = vxor.u32 %v4195, 2147483648
        %v4228 = vxor.u32 %v4196, 2147483648
        %v4229 = vxor.u32 %v4197, 2147483648
        %v4230 = vxor.u32 %v4198, 2147483648
        %v4231 = vxor.u32 %v4199, 2147483648
        %v4232 = vxor.u32 %v4200, 2147483648
        %v4233 = vxor.u32 %v4201, 2147483648
        %v4234 = vxor.u32 %v4202, 2147483648
        %v4235 = vxor.u32 %v4203, 2147483648
        %v4236 = vxor.u32 %v4204, 2147483648
        %v4237 = vxor.u32 %v4205, 2147483648
        %v4238 = vxor.u32 %v4206, 2147483648
        %v4239 = vxor.u32 %v4207, 2147483648
        %v4240 = vxor.u32 %v4208, 2147483648
        %v4241 = vxor.u32 %v4209, 2147483648
        %v4242 = vxor.u32 %v4210, 2147483648
        %v4243 = vxor.u32 %v4211, 2147483648
        %v4244 = vxor.u32 %v4212, 2147483648
        %v4245 = vxor.u32 %v4213, 2147483648
        %v4246 = vxor.u32 %v4214, 2147483648
        %v4247 = vxor.u32 %v4215, 2147483648
        %v4248 = vxor.u32 %v4216, 2147483648
        %v4249 = vxor.u32 %v4217, 2147483648
        %v4250 = vxor.u32 %v4218, 2147483648
        %v4251 = vxor.u32 %v4219, 2147483648
        %v4252 = vxor.u32 %v4220, 2147483648
        %v4253 = vxor.u32 %v4221, 2147483648
        %v4254 = vxor.u32 %v4222, 2147483648
        %v4255 = vxor.u32 %v4223, 2147483648
        %v4256 = vxor.u32 %v4224, 2147483648
        %v4257 = vxor.u32 %v4225, 2147483648
        %v4258 = vmul.f32 %v4226, 1.442695
        %v4259 = vpow.pop %v4258
        %v4260 = vmul.f32 %v4227, 1.442695
        %v4261 = vpow.pop %v4260
        %v4262 = vmul.f32 %v4228, 1.442695
        %v4263 = vpow.pop %v4262
        %v4264 = vmul.f32 %v4229, 1.442695
        %v4265 = vpow.pop %v4264
        %v4266 = vmul.f32 %v4230, 1.442695
        %v4267 = vpow.pop %v4266
        %v4268 = vmul.f32 %v4231, 1.442695
        %v4269 = vpow.pop %v4268
        %v4270 = vmul.f32 %v4232, 1.442695
        %v4271 = vpow.pop %v4270
        %v4272 = vmul.f32 %v4233, 1.442695
        %v4273 = vpow.pop %v4272
        %v4274 = vmul.f32 %v4234, 1.442695
        %v4275 = vpow.pop %v4274
        %v4276 = vmul.f32 %v4235, 1.442695
        %v4277 = vpow.pop %v4276
        %v4278 = vmul.f32 %v4236, 1.442695
        %v4279 = vpow.pop %v4278
        %v4280 = vmul.f32 %v4237, 1.442695
        %v4281 = vpow.pop %v4280
        %v4282 = vmul.f32 %v4238, 1.442695
        %v4283 = vpow.pop %v4282
        %v4284 = vmul.f32 %v4239, 1.442695
        %v4285 = vpow.pop %v4284
        %v4286 = vmul.f32 %v4240, 1.442695
        %v4287 = vpow.pop %v4286
        %v4288 = vmul.f32 %v4241, 1.442695
        %v4289 = vpow.pop %v4288
        %v4290 = vmul.f32 %v4242, 1.442695
        %v4291 = vpow.pop %v4290
        %v4292 = vmul.f32 %v4243, 1.442695
        %v4293 = vpow.pop %v4292
        %v4294 = vmul.f32 %v4244, 1.442695
        %v4295 = vpow.pop %v4294
        %v4296 = vmul.f32 %v4245, 1.442695
        %v4297 = vpow.pop %v4296
        %v4298 = vmul.f32 %v4246, 1.442695
        %v4299 = vpow.pop %v4298
        %v4300 = vmul.f32 %v4247, 1.442695
        %v4301 = vpow.pop %v4300
        %v4302 = vmul.f32 %v4248, 1.442695
        %v4303 = vpow.pop %v4302
        %v4304 = vmul.f32 %v4249, 1.442695
        %v4305 = vpow.pop %v4304
        %v4306 = vmul.f32 %v4250, 1.442695
        %v4307 = vpow.pop %v4306
        %v4308 = vmul.f32 %v4251, 1.442695
        %v4309 = vpow.pop %v4308
        %v4310 = vmul.f32 %v4252, 1.442695
        %v4311 = vpow.pop %v4310
        %v4312 = vmul.f32 %v4253, 1.442695
        %v4313 = vpow.pop %v4312
        %v4314 = vmul.f32 %v4254, 1.442695
        %v4315 = vpow.pop %v4314
        %v4316 = vmul.f32 %v4255, 1.442695
        %v4317 = vpow.pop %v4316
        %v4318 = vmul.f32 %v4256, 1.442695
        %v4319 = vpow.pop %v4318
        %v4320 = vmul.f32 %v4257, 1.442695
        %v4321 = vpow.pop %v4320
        %v4322 = vadd.f32 %v4259, 1.0
        %v4323 = vadd.f32 %v4261, 1.0
        %v4324 = vadd.f32 %v4263, 1.0
        %v4325 = vadd.f32 %v4265, 1.0
        %v4326 = vadd.f32 %v4267, 1.0
        %v4327 = vadd.f32 %v4269, 1.0
        %v4328 = vadd.f32 %v4271, 1.0
        %v4329 = vadd.f32 %v4273, 1.0
        %v4330 = vadd.f32 %v4275, 1.0
        %v4331 = vadd.f32 %v4277, 1.0
        %v4332 = vadd.f32 %v4279, 1.0
        %v4333 = vadd.f32 %v4281, 1.0
        %v4334 = vadd.f32 %v4283, 1.0
        %v4335 = vadd.f32 %v4285, 1.0
        %v4336 = vadd.f32 %v4287, 1.0
        %v4337 = vadd.f32 %v4289, 1.0
        %v4338 = vadd.f32 %v4291, 1.0
        %v4339 = vadd.f32 %v4293, 1.0
        %v4340 = vadd.f32 %v4295, 1.0
        %v4341 = vadd.f32 %v4297, 1.0
        %v4342 = vadd.f32 %v4299, 1.0
        %v4343 = vadd.f32 %v4301, 1.0
        %v4344 = vadd.f32 %v4303, 1.0
        %v4345 = vadd.f32 %v4305, 1.0
        %v4346 = vadd.f32 %v4307, 1.0
        %v4347 = vadd.f32 %v4309, 1.0
        %v4348 = vadd.f32 %v4311, 1.0
        %v4349 = vadd.f32 %v4313, 1.0
        %v4350 = vadd.f32 %v4315, 1.0
        %v4351 = vadd.f32 %v4317, 1.0
        %v4352 = vadd.f32 %v4319, 1.0
        %v4353 = vadd.f32 %v4321, 1.0
        %v4354 = vrcp.pop %v4322
        %v4355 = vmul.f32 1.0, %v4354
        %v4356 = vrcp.pop %v4323
        %v4357 = vmul.f32 1.0, %v4356
        %v4358 = vrcp.pop %v4324
        %v4359 = vmul.f32 1.0, %v4358
        %v4360 = vrcp.pop %v4325
        %v4361 = vmul.f32 1.0, %v4360
        %v4362 = vrcp.pop %v4326
        %v4363 = vmul.f32 1.0, %v4362
        %v4364 = vrcp.pop %v4327
        %v4365 = vmul.f32 1.0, %v4364
        %v4366 = vrcp.pop %v4328
        %v4367 = vmul.f32 1.0, %v4366
        %v4368 = vrcp.pop %v4329
        %v4369 = vmul.f32 1.0, %v4368
        %v4370 = vrcp.pop %v4330
        %v4371 = vmul.f32 1.0, %v4370
        %v4372 = vrcp.pop %v4331
        %v4373 = vmul.f32 1.0, %v4372
        %v4374 = vrcp.pop %v4332
        %v4375 = vmul.f32 1.0, %v4374
        %v4376 = vrcp.pop %v4333
        %v4377 = vmul.f32 1.0, %v4376
        %v4378 = vrcp.pop %v4334
        %v4379 = vmul.f32 1.0, %v4378
        %v4380 = vrcp.pop %v4335
        %v4381 = vmul.f32 1.0, %v4380
        %v4382 = vrcp.pop %v4336
        %v4383 = vmul.f32 1.0, %v4382
        %v4384 = vrcp.pop %v4337
        %v4385 = vmul.f32 1.0, %v4384
        %v4386 = vrcp.pop %v4338
        %v4387 = vmul.f32 1.0, %v4386
        %v4388 = vrcp.pop %v4339
        %v4389 = vmul.f32 1.0, %v4388
        %v4390 = vrcp.pop %v4340
        %v4391 = vmul.f32 1.0, %v4390
        %v4392 = vrcp.pop %v4341
        %v4393 = vmul.f32 1.0, %v4392
        %v4394 = vrcp.pop %v4342
        %v4395 = vmul.f32 1.0, %v4394
        %v4396 = vrcp.pop %v4343
        %v4397 = vmul.f32 1.0, %v4396
        %v4398 = vrcp.pop %v4344
        %v4399 = vmul.f32 1.0, %v4398
        %v4400 = vrcp.pop %v4345
        %v4401 = vmul.f32 1.0, %v4400
        %v4402 = vrcp.pop %v4346
        %v4403 = vmul.f32 1.0, %v4402
        %v4404 = vrcp.pop %v4347
        %v4405 = vmul.f32 1.0, %v4404
        %v4406 = vrcp.pop %v4348
        %v4407 = vmul.f32 1.0, %v4406
        %v4408 = vrcp.pop %v4349
        %v4409 = vmul.f32 1.0, %v4408
        %v4410 = vrcp.pop %v4350
        %v4411 = vmul.f32 1.0, %v4410
        %v4412 = vrcp.pop %v4351
        %v4413 = vmul.f32 1.0, %v4412
        %v4414 = vrcp.pop %v4352
        %v4415 = vmul.f32 1.0, %v4414
        %v4416 = vrcp.pop %v4353
        %v4417 = vmul.f32 1.0, %v4416
        %v4418 = vmul.f32 %v4194, %v4355
        %v4419 = vmul.f32 %v4195, %v4357
        %v4420 = vmul.f32 %v4196, %v4359
        %v4421 = vmul.f32 %v4197, %v4361
        %v4422 = vmul.f32 %v4198, %v4363
        %v4423 = vmul.f32 %v4199, %v4365
        %v4424 = vmul.f32 %v4200, %v4367
        %v4425 = vmul.f32 %v4201, %v4369
        %v4426 = vmul.f32 %v4202, %v4371
        %v4427 = vmul.f32 %v4203, %v4373
        %v4428 = vmul.f32 %v4204, %v4375
        %v4429 = vmul.f32 %v4205, %v4377
        %v4430 = vmul.f32 %v4206, %v4379
        %v4431 = vmul.f32 %v4207, %v4381
        %v4432 = vmul.f32 %v4208, %v4383
        %v4433 = vmul.f32 %v4209, %v4385
        %v4434 = vmul.f32 %v4210, %v4387
        %v4435 = vmul.f32 %v4211, %v4389
        %v4436 = vmul.f32 %v4212, %v4391
        %v4437 = vmul.f32 %v4213, %v4393
        %v4438 = vmul.f32 %v4214, %v4395
        %v4439 = vmul.f32 %v4215, %v4397
        %v4440 = vmul.f32 %v4216, %v4399
        %v4441 = vmul.f32 %v4217, %v4401
        %v4442 = vmul.f32 %v4218, %v4403
        %v4443 = vmul.f32 %v4219, %v4405
        %v4444 = vmul.f32 %v4220, %v4407
        %v4445 = vmul.f32 %v4221, %v4409
        %v4446 = vmul.f32 %v4222, %v4411
        %v4447 = vmul.f32 %v4223, %v4413
        %v4448 = vmul.f32 %v4224, %v4415
        %v4449 = vmul.f32 %v4225, %v4417
        %4450 = vst [vmem:[#allocation3] sm:$0xff] 0.0
        %4451 = vst [vmem:[#allocation3 + $0x8] sm:$0x3] 0.0
        %4452 = vst [vmem:[#allocation3 + $0xa0] sm:$0xff] 0.0
        %4453 = vst [vmem:[#allocation3 + $0xa8] sm:$0x3] 0.0
        %4454 = vst [vmem:[#allocation3 + $0x140] sm:$0xff] 0.0
        %4455 = vst [vmem:[#allocation3 + $0x148] sm:$0x3] 0.0
        %4456 = vst [vmem:[#allocation3 + $0x1e0] sm:$0xff] 0.0
        %4457 = vst [vmem:[#allocation3 + $0x1e8] sm:$0x3] 0.0
        %s4458 = scalar_lea.vmem [#allocation3], 144
        %4459 = vst [vmem:[%s4458] sm:$0xff] 0.0
        %4460 = vst [vmem:[%s4458 + $0x8] sm:$0x3] 0.0
        %4461 = vst [vmem:[%s4458 + $0xa0] sm:$0xff] 0.0
        %4462 = vst [vmem:[%s4458 + $0xa8] sm:$0x3] 0.0
        %4463 = vst [vmem:[%s4458 + $0x140] sm:$0xff] 0.0
        %4464 = vst [vmem:[%s4458 + $0x148] sm:$0x3] 0.0
        %4465 = vst [vmem:[%s4458 + $0x1e0] sm:$0xff] 0.0
        %4466 = vst [vmem:[%s4458 + $0x1e8] sm:$0x3] 0.0
        %4467 = vst [vmem:[#allocation3] sm:$0x1] 0.0
        %4468 = vst [vmem:[#allocation3 + $0x10] sm:$0x1] 0.0
        %4469 = vst [vmem:[#allocation3 + $0x20] sm:$0x1] 0.0
        %4470 = vst [vmem:[#allocation3 + $0x30] sm:$0x1] 0.0
        %4471 = vst [vmem:[#allocation3 + $0x40] sm:$0x1] 0.0
        %4472 = vst [vmem:[#allocation3 + $0x50] sm:$0x1] 0.0
        %4473 = vst [vmem:[#allocation3 + $0x60] sm:$0x1] 0.0
        %4474 = vst [vmem:[#allocation3 + $0x70] sm:$0x1] 0.0
        %4475 = vst [vmem:[#allocation3 + $0x80] sm:$0x1] 0.0
        %4476 = vst [vmem:[#allocation3 + $0x90] sm:$0x1] 0.0
        %4477 = vst [vmem:[#allocation3 + $0xa0] sm:$0x1] 0.0
        %4478 = vst [vmem:[#allocation3 + $0xb0] sm:$0x1] 0.0
        %4479 = vst [vmem:[#allocation3 + $0xc0] sm:$0x1] 0.0
        %4480 = vst [vmem:[#allocation3 + $0xd0] sm:$0x1] 0.0
        %4481 = vst [vmem:[#allocation3 + $0xe0] sm:$0x1] 0.0
        %4482 = vst [vmem:[#allocation3 + $0xf0] sm:$0x1] 0.0
        %4483 = vst [vmem:[#allocation3 + $0x100] sm:$0x1] 0.0
        %4484 = vst [vmem:[#allocation3 + $0x110] sm:$0x1] 0.0
        %4485 = vst [vmem:[#allocation3 + $0x120] sm:$0x1] 0.0
        %4486 = vst [vmem:[#allocation3 + $0x130] sm:$0x1] 0.0
        %4487 = vst [vmem:[#allocation3 + $0x140] sm:$0x1] 0.0
        %4488 = vst [vmem:[#allocation3 + $0x150] sm:$0x1] 0.0
        %4489 = vst [vmem:[#allocation3 + $0x160] sm:$0x1] 0.0
        %4490 = vst [vmem:[#allocation3 + $0x170] sm:$0x1] 0.0
        %4491 = vst [vmem:[#allocation3 + $0x180] sm:$0x1] 0.0
        %4492 = vst [vmem:[#allocation3 + $0x190] sm:$0x1] 0.0
        %4493 = vst [vmem:[#allocation3 + $0x1a0] sm:$0x1] 0.0
        %4494 = vst [vmem:[#allocation3 + $0x1b0] sm:$0x1] 0.0
        %4495 = vst [vmem:[#allocation3 + $0x1c0] sm:$0x1] 0.0
        %4496 = vst [vmem:[#allocation3 + $0x1d0] sm:$0x1] 0.0
        %4497 = vst [vmem:[#allocation3 + $0x1e0] sm:$0x1] 0.0
        %4498 = vst [vmem:[#allocation3 + $0x1f0] sm:$0x1] 0.0
        %4499 = vst [vmem:[#allocation3 + $0x200] sm:$0x1] 0.0
        %4500 = vst [vmem:[#allocation3 + $0x210] sm:$0x1] 0.0
        %4501 = vst [vmem:[#allocation3 + $0x220] sm:$0x1] 0.0
        %4502 = vst [vmem:[#allocation3 + $0x230] sm:$0x1] 0.0
        %4503 = vst [vmem:[#allocation3 + $0x240] sm:$0x1] 0.0
        %4504 = vst [vmem:[#allocation3 + $0x250] sm:$0x1] 0.0
        %4505 = vst [vmem:[#allocation3 + $0x260] sm:$0x1] 0.0
        %4506 = vst [vmem:[#allocation3 + $0x270] sm:$0x1] 0.0
        %4507 = vst [vmem:[#allocation3 + $0x9] sm:$0x1] 0.0
        %4508 = vst [vmem:[#allocation3 + $0x19] sm:$0x1] 0.0
        %4509 = vst [vmem:[#allocation3 + $0x29] sm:$0x1] 0.0
        %4510 = vst [vmem:[#allocation3 + $0x39] sm:$0x1] 0.0
        %4511 = vst [vmem:[#allocation3 + $0x49] sm:$0x1] 0.0
        %4512 = vst [vmem:[#allocation3 + $0x59] sm:$0x1] 0.0
        %4513 = vst [vmem:[#allocation3 + $0x69] sm:$0x1] 0.0
        %4514 = vst [vmem:[#allocation3 + $0x79] sm:$0x1] 0.0
        %4515 = vst [vmem:[#allocation3 + $0x89] sm:$0x1] 0.0
        %4516 = vst [vmem:[#allocation3 + $0x99] sm:$0x1] 0.0
        %4517 = vst [vmem:[#allocation3 + $0xa9] sm:$0x1] 0.0
        %4518 = vst [vmem:[#allocation3 + $0xb9] sm:$0x1] 0.0
        %4519 = vst [vmem:[#allocation3 + $0xc9] sm:$0x1] 0.0
        %4520 = vst [vmem:[#allocation3 + $0xd9] sm:$0x1] 0.0
        %4521 = vst [vmem:[#allocation3 + $0xe9] sm:$0x1] 0.0
        %4522 = vst [vmem:[#allocation3 + $0xf9] sm:$0x1] 0.0
        %4523 = vst [vmem:[#allocation3 + $0x109] sm:$0x1] 0.0
        %4524 = vst [vmem:[#allocation3 + $0x119] sm:$0x1] 0.0
        %4525 = vst [vmem:[#allocation3 + $0x129] sm:$0x1] 0.0
        %4526 = vst [vmem:[#allocation3 + $0x139] sm:$0x1] 0.0
        %4527 = vst [vmem:[#allocation3 + $0x149] sm:$0x1] 0.0
        %4528 = vst [vmem:[#allocation3 + $0x159] sm:$0x1] 0.0
        %4529 = vst [vmem:[#allocation3 + $0x169] sm:$0x1] 0.0
        %4530 = vst [vmem:[#allocation3 + $0x179] sm:$0x1] 0.0
        %4531 = vst [vmem:[#allocation3 + $0x189] sm:$0x1] 0.0
        %4532 = vst [vmem:[#allocation3 + $0x199] sm:$0x1] 0.0
        %4533 = vst [vmem:[#allocation3 + $0x1a9] sm:$0x1] 0.0
        %4534 = vst [vmem:[#allocation3 + $0x1b9] sm:$0x1] 0.0
        %4535 = vst [vmem:[#allocation3 + $0x1c9] sm:$0x1] 0.0
        %4536 = vst [vmem:[#allocation3 + $0x1d9] sm:$0x1] 0.0
        %4537 = vst [vmem:[#allocation3 + $0x1e9] sm:$0x1] 0.0
        %4538 = vst [vmem:[#allocation3 + $0x1f9] sm:$0x1] 0.0
        %4539 = vst [vmem:[#allocation3 + $0x209] sm:$0x1] 0.0
        %4540 = vst [vmem:[#allocation3 + $0x219] sm:$0x1] 0.0
        %4541 = vst [vmem:[#allocation3 + $0x229] sm:$0x1] 0.0
        %4542 = vst [vmem:[#allocation3 + $0x239] sm:$0x1] 0.0
        %4543 = vst [vmem:[#allocation3 + $0x249] sm:$0x1] 0.0
        %4544 = vst [vmem:[#allocation3 + $0x259] sm:$0x1] 0.0
        %4545 = vst [vmem:[#allocation3 + $0x269] sm:$0x1] 0.0
        %4546 = vst [vmem:[#allocation3 + $0x279] sm:$0x1] 0.0
        %s4547 = scalar_lea.vmem [#allocation3], 16
        %4548 = vst [vmem:[%s4547 + $0x1] sm:$0xff] %v4418
        %4549 = vst [vmem:[%s4547 + $0x11] sm:$0xff] %v4419
        %4550 = vst [vmem:[%s4547 + $0x21] sm:$0xff] %v4420
        %4551 = vst [vmem:[%s4547 + $0x31] sm:$0xff] %v4421
        %4552 = vst [vmem:[%s4547 + $0x41] sm:$0xff] %v4422
        %4553 = vst [vmem:[%s4547 + $0x51] sm:$0xff] %v4423
        %4554 = vst [vmem:[%s4547 + $0x61] sm:$0xff] %v4424
        %4555 = vst [vmem:[%s4547 + $0x71] sm:$0xff] %v4425
        %4556 = vst [vmem:[%s4547 + $0xa1] sm:$0xff] %v4426
        %4557 = vst [vmem:[%s4547 + $0xb1] sm:$0xff] %v4427
        %4558 = vst [vmem:[%s4547 + $0xc1] sm:$0xff] %v4428
        %4559 = vst [vmem:[%s4547 + $0xd1] sm:$0xff] %v4429
        %4560 = vst [vmem:[%s4547 + $0xe1] sm:$0xff] %v4430
        %4561 = vst [vmem:[%s4547 + $0xf1] sm:$0xff] %v4431
        %4562 = vst [vmem:[%s4547 + $0x101] sm:$0xff] %v4432
        %4563 = vst [vmem:[%s4547 + $0x111] sm:$0xff] %v4433
        %4564 = vst [vmem:[%s4547 + $0x141] sm:$0xff] %v4434
        %4565 = vst [vmem:[%s4547 + $0x151] sm:$0xff] %v4435
        %4566 = vst [vmem:[%s4547 + $0x161] sm:$0xff] %v4436
        %4567 = vst [vmem:[%s4547 + $0x171] sm:$0xff] %v4437
        %4568 = vst [vmem:[%s4547 + $0x181] sm:$0xff] %v4438
        %4569 = vst [vmem:[%s4547 + $0x191] sm:$0xff] %v4439
        %4570 = vst [vmem:[%s4547 + $0x1a1] sm:$0xff] %v4440
        %4571 = vst [vmem:[%s4547 + $0x1b1] sm:$0xff] %v4441
        %4572 = vst [vmem:[%s4547 + $0x1e1] sm:$0xff] %v4442
        %4573 = vst [vmem:[%s4547 + $0x1f1] sm:$0xff] %v4443
        %4574 = vst [vmem:[%s4547 + $0x201] sm:$0xff] %v4444
        %4575 = vst [vmem:[%s4547 + $0x211] sm:$0xff] %v4445
        %4576 = vst [vmem:[%s4547 + $0x221] sm:$0xff] %v4446
        %4577 = vst [vmem:[%s4547 + $0x231] sm:$0xff] %v4447
        %4578 = vst [vmem:[%s4547 + $0x241] sm:$0xff] %v4448
        %4579 = vst [vmem:[%s4547 + $0x251] sm:$0xff] %v4449
        %v4580 = vld [vmem:[#allocation3] sm:$0xff]
        %v4581 = vld [vmem:[#allocation3 + $0x10] sm:$0xff]
        %v4582 = vld [vmem:[#allocation3 + $0x20] sm:$0xff]
        %v4583 = vld [vmem:[#allocation3 + $0x30] sm:$0xff]
        %v4584 = vld [vmem:[#allocation3 + $0x40] sm:$0xff]
        %v4585 = vld [vmem:[#allocation3 + $0x50] sm:$0xff]
        %v4586 = vld [vmem:[#allocation3 + $0x60] sm:$0xff]
        %v4587 = vld [vmem:[#allocation3 + $0x70] sm:$0xff]
        %v4588 = vld [vmem:[#allocation3 + $0xa0] sm:$0xff]
        %v4589 = vld [vmem:[#allocation3 + $0xb0] sm:$0xff]
        %v4590 = vld [vmem:[#allocation3 + $0xc0] sm:$0xff]
        %v4591 = vld [vmem:[#allocation3 + $0xd0] sm:$0xff]
        %v4592 = vld [vmem:[#allocation3 + $0xe0] sm:$0xff]
        %v4593 = vld [vmem:[#allocation3 + $0xf0] sm:$0xff]
        %v4594 = vld [vmem:[#allocation3 + $0x100] sm:$0xff]
        %v4595 = vld [vmem:[#allocation3 + $0x110] sm:$0xff]
        %v4596 = vld [vmem:[#allocation3 + $0x140] sm:$0xff]
        %v4597 = vld [vmem:[#allocation3 + $0x150] sm:$0xff]
        %v4598 = vld [vmem:[#allocation3 + $0x160] sm:$0xff]
        %v4599 = vld [vmem:[#allocation3 + $0x170] sm:$0xff]
        %v4600 = vld [vmem:[#allocation3 + $0x180] sm:$0xff]
        %v4601 = vld [vmem:[#allocation3 + $0x190] sm:$0xff]
        %v4602 = vld [vmem:[#allocation3 + $0x1a0] sm:$0xff]
        %v4603 = vld [vmem:[#allocation3 + $0x1b0] sm:$0xff]
        %v4604 = vld [vmem:[#allocation3 + $0x1e0] sm:$0xff]
        %v4605 = vld [vmem:[#allocation3 + $0x1f0] sm:$0xff]
        %v4606 = vld [vmem:[#allocation3 + $0x200] sm:$0xff]
        %v4607 = vld [vmem:[#allocation3 + $0x210] sm:$0xff]
        %v4608 = vld [vmem:[#allocation3 + $0x220] sm:$0xff]
        %v4609 = vld [vmem:[#allocation3 + $0x230] sm:$0xff]
        %v4610 = vld [vmem:[#allocation3 + $0x240] sm:$0xff]
        %v4611 = vld [vmem:[#allocation3 + $0x250] sm:$0xff]
        %4612 = vst [vmem:[#allocation5] sm:$0xff] %v4580
        %4613 = vst [vmem:[#allocation5 + $0x50] sm:$0xff] %v4581
        %4614 = vst [vmem:[#allocation5 + $0xa0] sm:$0xff] %v4582
        %4615 = vst [vmem:[#allocation5 + $0xf0] sm:$0xff] %v4583
        %4616 = vst [vmem:[#allocation5 + $0x140] sm:$0xff] %v4584
        %4617 = vst [vmem:[#allocation5 + $0x190] sm:$0xff] %v4585
        %4618 = vst [vmem:[#allocation5 + $0x1e0] sm:$0xff] %v4586
        %4619 = vst [vmem:[#allocation5 + $0x230] sm:$0xff] %v4587
        %4620 = vst [vmem:[#allocation5 + $0x280] sm:$0xff] %v4588
        %4621 = vst [vmem:[#allocation5 + $0x2d0] sm:$0xff] %v4589
        %4622 = vst [vmem:[#allocation5 + $0x320] sm:$0xff] %v4590
        %4623 = vst [vmem:[#allocation5 + $0x370] sm:$0xff] %v4591
        %4624 = vst [vmem:[#allocation5 + $0x3c0] sm:$0xff] %v4592
        %4625 = vst [vmem:[#allocation5 + $0x410] sm:$0xff] %v4593
        %4626 = vst [vmem:[#allocation5 + $0x460] sm:$0xff] %v4594
        %4627 = vst [vmem:[#allocation5 + $0x4b0] sm:$0xff] %v4595
        %4628 = vst [vmem:[#allocation5 + $0x500] sm:$0xff] %v4596
        %4629 = vst [vmem:[#allocation5 + $0x550] sm:$0xff] %v4597
        %4630 = vst [vmem:[#allocation5 + $0x5a0] sm:$0xff] %v4598
        %4631 = vst [vmem:[#allocation5 + $0x5f0] sm:$0xff] %v4599
        %4632 = vst [vmem:[#allocation5 + $0x640] sm:$0xff] %v4600
        %4633 = vst [vmem:[#allocation5 + $0x690] sm:$0xff] %v4601
        %4634 = vst [vmem:[#allocation5 + $0x6e0] sm:$0xff] %v4602
        %4635 = vst [vmem:[#allocation5 + $0x730] sm:$0xff] %v4603
        %4636 = vst [vmem:[#allocation5 + $0x780] sm:$0xff] %v4604
        %4637 = vst [vmem:[#allocation5 + $0x7d0] sm:$0xff] %v4605
        %4638 = vst [vmem:[#allocation5 + $0x820] sm:$0xff] %v4606
        %4639 = vst [vmem:[#allocation5 + $0x870] sm:$0xff] %v4607
        %4640 = vst [vmem:[#allocation5 + $0x8c0] sm:$0xff] %v4608
        %4641 = vst [vmem:[#allocation5 + $0x910] sm:$0xff] %v4609
        %4642 = vst [vmem:[#allocation5 + $0x960] sm:$0xff] %v4610
        %4643 = vst [vmem:[#allocation5 + $0x9b0] sm:$0xff] %v4611
        %v4644 = vld [vmem:[#allocation3 + $0x1] sm:$0xff]
        %v4645 = vld [vmem:[#allocation3 + $0x11] sm:$0xff]
        %v4646 = vld [vmem:[#allocation3 + $0x21] sm:$0xff]
        %v4647 = vld [vmem:[#allocation3 + $0x31] sm:$0xff]
        %v4648 = vld [vmem:[#allocation3 + $0x41] sm:$0xff]
        %v4649 = vld [vmem:[#allocation3 + $0x51] sm:$0xff]
        %v4650 = vld [vmem:[#allocation3 + $0x61] sm:$0xff]
        %v4651 = vld [vmem:[#allocation3 + $0x71] sm:$0xff]
        %v4652 = vld [vmem:[#allocation3 + $0xa1] sm:$0xff]
        %v4653 = vld [vmem:[#allocation3 + $0xb1] sm:$0xff]
        %v4654 = vld [vmem:[#allocation3 + $0xc1] sm:$0xff]
        %v4655 = vld [vmem:[#allocation3 + $0xd1] sm:$0xff]
        %v4656 = vld [vmem:[#allocation3 + $0xe1] sm:$0xff]
        %v4657 = vld [vmem:[#allocation3 + $0xf1] sm:$0xff]
        %v4658 = vld [vmem:[#allocation3 + $0x101] sm:$0xff]
        %v4659 = vld [vmem:[#allocation3 + $0x111] sm:$0xff]
        %v4660 = vld [vmem:[#allocation3 + $0x141] sm:$0xff]
        %v4661 = vld [vmem:[#allocation3 + $0x151] sm:$0xff]
        %v4662 = vld [vmem:[#allocation3 + $0x161] sm:$0xff]
        %v4663 = vld [vmem:[#allocation3 + $0x171] sm:$0xff]
        %v4664 = vld [vmem:[#allocation3 + $0x181] sm:$0xff]
        %v4665 = vld [vmem:[#allocation3 + $0x191] sm:$0xff]
        %v4666 = vld [vmem:[#allocation3 + $0x1a1] sm:$0xff]
        %v4667 = vld [vmem:[#allocation3 + $0x1b1] sm:$0xff]
        %v4668 = vld [vmem:[#allocation3 + $0x1e1] sm:$0xff]
        %v4669 = vld [vmem:[#allocation3 + $0x1f1] sm:$0xff]
        %v4670 = vld [vmem:[#allocation3 + $0x201] sm:$0xff]
        %v4671 = vld [vmem:[#allocation3 + $0x211] sm:$0xff]
        %v4672 = vld [vmem:[#allocation3 + $0x221] sm:$0xff]
        %v4673 = vld [vmem:[#allocation3 + $0x231] sm:$0xff]
        %v4674 = vld [vmem:[#allocation3 + $0x241] sm:$0xff]
        %v4675 = vld [vmem:[#allocation3 + $0x251] sm:$0xff]
        %4676 = vst [vmem:[#allocation5 + $0x8] sm:$0xff] %v4644
        %4677 = vst [vmem:[#allocation5 + $0x58] sm:$0xff] %v4645
        %4678 = vst [vmem:[#allocation5 + $0xa8] sm:$0xff] %v4646
        %4679 = vst [vmem:[#allocation5 + $0xf8] sm:$0xff] %v4647
        %4680 = vst [vmem:[#allocation5 + $0x148] sm:$0xff] %v4648
        %4681 = vst [vmem:[#allocation5 + $0x198] sm:$0xff] %v4649
        %4682 = vst [vmem:[#allocation5 + $0x1e8] sm:$0xff] %v4650
        %4683 = vst [vmem:[#allocation5 + $0x238] sm:$0xff] %v4651
        %4684 = vst [vmem:[#allocation5 + $0x288] sm:$0xff] %v4652
        %4685 = vst [vmem:[#allocation5 + $0x2d8] sm:$0xff] %v4653
        %4686 = vst [vmem:[#allocation5 + $0x328] sm:$0xff] %v4654
        %4687 = vst [vmem:[#allocation5 + $0x378] sm:$0xff] %v4655
        %4688 = vst [vmem:[#allocation5 + $0x3c8] sm:$0xff] %v4656
        %4689 = vst [vmem:[#allocation5 + $0x418] sm:$0xff] %v4657
        %4690 = vst [vmem:[#allocation5 + $0x468] sm:$0xff] %v4658
        %4691 = vst [vmem:[#allocation5 + $0x4b8] sm:$0xff] %v4659
        %4692 = vst [vmem:[#allocation5 + $0x508] sm:$0xff] %v4660
        %4693 = vst [vmem:[#allocation5 + $0x558] sm:$0xff] %v4661
        %4694 = vst [vmem:[#allocation5 + $0x5a8] sm:$0xff] %v4662
        %4695 = vst [vmem:[#allocation5 + $0x5f8] sm:$0xff] %v4663
        %4696 = vst [vmem:[#allocation5 + $0x648] sm:$0xff] %v4664
        %4697 = vst [vmem:[#allocation5 + $0x698] sm:$0xff] %v4665
        %4698 = vst [vmem:[#allocation5 + $0x6e8] sm:$0xff] %v4666
        %4699 = vst [vmem:[#allocation5 + $0x738] sm:$0xff] %v4667
        %4700 = vst [vmem:[#allocation5 + $0x788] sm:$0xff] %v4668
        %4701 = vst [vmem:[#allocation5 + $0x7d8] sm:$0xff] %v4669
        %4702 = vst [vmem:[#allocation5 + $0x828] sm:$0xff] %v4670
        %4703 = vst [vmem:[#allocation5 + $0x878] sm:$0xff] %v4671
        %4704 = vst [vmem:[#allocation5 + $0x8c8] sm:$0xff] %v4672
        %4705 = vst [vmem:[#allocation5 + $0x918] sm:$0xff] %v4673
        %4706 = vst [vmem:[#allocation5 + $0x968] sm:$0xff] %v4674
        %4707 = vst [vmem:[#allocation5 + $0x9b8] sm:$0xff] %v4675
        %v4708 = vld [vmem:[#allocation3 + $0x2] sm:$0xff]
        %v4709 = vld [vmem:[#allocation3 + $0x12] sm:$0xff]
        %v4710 = vld [vmem:[#allocation3 + $0x22] sm:$0xff]
        %v4711 = vld [vmem:[#allocation3 + $0x32] sm:$0xff]
        %v4712 = vld [vmem:[#allocation3 + $0x42] sm:$0xff]
        %v4713 = vld [vmem:[#allocation3 + $0x52] sm:$0xff]
        %v4714 = vld [vmem:[#allocation3 + $0x62] sm:$0xff]
        %v4715 = vld [vmem:[#allocation3 + $0x72] sm:$0xff]
        %v4716 = vld [vmem:[#allocation3 + $0xa2] sm:$0xff]
        %v4717 = vld [vmem:[#allocation3 + $0xb2] sm:$0xff]
        %v4718 = vld [vmem:[#allocation3 + $0xc2] sm:$0xff]
        %v4719 = vld [vmem:[#allocation3 + $0xd2] sm:$0xff]
        %v4720 = vld [vmem:[#allocation3 + $0xe2] sm:$0xff]
        %v4721 = vld [vmem:[#allocation3 + $0xf2] sm:$0xff]
        %v4722 = vld [vmem:[#allocation3 + $0x102] sm:$0xff]
        %v4723 = vld [vmem:[#allocation3 + $0x112] sm:$0xff]
        %v4724 = vld [vmem:[#allocation3 + $0x142] sm:$0xff]
        %v4725 = vld [vmem:[#allocation3 + $0x152] sm:$0xff]
        %v4726 = vld [vmem:[#allocation3 + $0x162] sm:$0xff]
        %v4727 = vld [vmem:[#allocation3 + $0x172] sm:$0xff]
        %v4728 = vld [vmem:[#allocation3 + $0x182] sm:$0xff]
        %v4729 = vld [vmem:[#allocation3 + $0x192] sm:$0xff]
        %v4730 = vld [vmem:[#allocation3 + $0x1a2] sm:$0xff]
        %v4731 = vld [vmem:[#allocation3 + $0x1b2] sm:$0xff]
        %v4732 = vld [vmem:[#allocation3 + $0x1e2] sm:$0xff]
        %v4733 = vld [vmem:[#allocation3 + $0x1f2] sm:$0xff]
        %v4734 = vld [vmem:[#allocation3 + $0x202] sm:$0xff]
        %v4735 = vld [vmem:[#allocation3 + $0x212] sm:$0xff]
        %v4736 = vld [vmem:[#allocation3 + $0x222] sm:$0xff]
        %v4737 = vld [vmem:[#allocation3 + $0x232] sm:$0xff]
        %v4738 = vld [vmem:[#allocation3 + $0x242] sm:$0xff]
        %v4739 = vld [vmem:[#allocation3 + $0x252] sm:$0xff]
        %4740 = vst [vmem:[#allocation5 + $0x10] sm:$0xff] %v4708
        %4741 = vst [vmem:[#allocation5 + $0x60] sm:$0xff] %v4709
        %4742 = vst [vmem:[#allocation5 + $0xb0] sm:$0xff] %v4710
        %4743 = vst [vmem:[#allocation5 + $0x100] sm:$0xff] %v4711
        %4744 = vst [vmem:[#allocation5 + $0x150] sm:$0xff] %v4712
        %4745 = vst [vmem:[#allocation5 + $0x1a0] sm:$0xff] %v4713
        %4746 = vst [vmem:[#allocation5 + $0x1f0] sm:$0xff] %v4714
        %4747 = vst [vmem:[#allocation5 + $0x240] sm:$0xff] %v4715
        %4748 = vst [vmem:[#allocation5 + $0x290] sm:$0xff] %v4716
        %4749 = vst [vmem:[#allocation5 + $0x2e0] sm:$0xff] %v4717
        %4750 = vst [vmem:[#allocation5 + $0x330] sm:$0xff] %v4718
        %4751 = vst [vmem:[#allocation5 + $0x380] sm:$0xff] %v4719
        %4752 = vst [vmem:[#allocation5 + $0x3d0] sm:$0xff] %v4720
        %4753 = vst [vmem:[#allocation5 + $0x420] sm:$0xff] %v4721
        %4754 = vst [vmem:[#allocation5 + $0x470] sm:$0xff] %v4722
        %4755 = vst [vmem:[#allocation5 + $0x4c0] sm:$0xff] %v4723
        %4756 = vst [vmem:[#allocation5 + $0x510] sm:$0xff] %v4724
        %4757 = vst [vmem:[#allocation5 + $0x560] sm:$0xff] %v4725
        %4758 = vst [vmem:[#allocation5 + $0x5b0] sm:$0xff] %v4726
        %4759 = vst [vmem:[#allocation5 + $0x600] sm:$0xff] %v4727
        %4760 = vst [vmem:[#allocation5 + $0x650] sm:$0xff] %v4728
        %4761 = vst [vmem:[#allocation5 + $0x6a0] sm:$0xff] %v4729
        %4762 = vst [vmem:[#allocation5 + $0x6f0] sm:$0xff] %v4730
        %4763 = vst [vmem:[#allocation5 + $0x740] sm:$0xff] %v4731
        %4764 = vst [vmem:[#allocation5 + $0x790] sm:$0xff] %v4732
        %4765 = vst [vmem:[#allocation5 + $0x7e0] sm:$0xff] %v4733
        %4766 = vst [vmem:[#allocation5 + $0x830] sm:$0xff] %v4734
        %4767 = vst [vmem:[#allocation5 + $0x880] sm:$0xff] %v4735
        %4768 = vst [vmem:[#allocation5 + $0x8d0] sm:$0xff] %v4736
        %4769 = vst [vmem:[#allocation5 + $0x920] sm:$0xff] %v4737
        %4770 = vst [vmem:[#allocation5 + $0x970] sm:$0xff] %v4738
        %4771 = vst [vmem:[#allocation5 + $0x9c0] sm:$0xff] %v4739
        %v4772 = vld [vmem:[%s4547] sm:$0xff]
        %v4773 = vld [vmem:[%s4547 + $0x10] sm:$0xff]
        %v4774 = vld [vmem:[%s4547 + $0x20] sm:$0xff]
        %v4775 = vld [vmem:[%s4547 + $0x30] sm:$0xff]
        %v4776 = vld [vmem:[%s4547 + $0x40] sm:$0xff]
        %v4777 = vld [vmem:[%s4547 + $0x50] sm:$0xff]
        %v4778 = vld [vmem:[%s4547 + $0x60] sm:$0xff]
        %v4779 = vld [vmem:[%s4547 + $0x70] sm:$0xff]
        %v4780 = vld [vmem:[%s4547 + $0xa0] sm:$0xff]
        %v4781 = vld [vmem:[%s4547 + $0xb0] sm:$0xff]
        %v4782 = vld [vmem:[%s4547 + $0xc0] sm:$0xff]
        %v4783 = vld [vmem:[%s4547 + $0xd0] sm:$0xff]
        %v4784 = vld [vmem:[%s4547 + $0xe0] sm:$0xff]
        %v4785 = vld [vmem:[%s4547 + $0xf0] sm:$0xff]
        %v4786 = vld [vmem:[%s4547 + $0x100] sm:$0xff]
        %v4787 = vld [vmem:[%s4547 + $0x110] sm:$0xff]
        %v4788 = vld [vmem:[%s4547 + $0x140] sm:$0xff]
        %v4789 = vld [vmem:[%s4547 + $0x150] sm:$0xff]
        %v4790 = vld [vmem:[%s4547 + $0x160] sm:$0xff]
        %v4791 = vld [vmem:[%s4547 + $0x170] sm:$0xff]
        %v4792 = vld [vmem:[%s4547 + $0x180] sm:$0xff]
        %v4793 = vld [vmem:[%s4547 + $0x190] sm:$0xff]
        %v4794 = vld [vmem:[%s4547 + $0x1a0] sm:$0xff]
        %v4795 = vld [vmem:[%s4547 + $0x1b0] sm:$0xff]
        %v4796 = vld [vmem:[%s4547 + $0x1e0] sm:$0xff]
        %v4797 = vld [vmem:[%s4547 + $0x1f0] sm:$0xff]
        %v4798 = vld [vmem:[%s4547 + $0x200] sm:$0xff]
        %v4799 = vld [vmem:[%s4547 + $0x210] sm:$0xff]
        %v4800 = vld [vmem:[%s4547 + $0x220] sm:$0xff]
        %v4801 = vld [vmem:[%s4547 + $0x230] sm:$0xff]
        %v4802 = vld [vmem:[%s4547 + $0x240] sm:$0xff]
        %v4803 = vld [vmem:[%s4547 + $0x250] sm:$0xff]
        %4804 = vst [vmem:[#allocation5 + $0x18] sm:$0xff] %v4772
        %4805 = vst [vmem:[#allocation5 + $0x68] sm:$0xff] %v4773
        %4806 = vst [vmem:[#allocation5 + $0xb8] sm:$0xff] %v4774
        %4807 = vst [vmem:[#allocation5 + $0x108] sm:$0xff] %v4775
        %4808 = vst [vmem:[#allocation5 + $0x158] sm:$0xff] %v4776
        %4809 = vst [vmem:[#allocation5 + $0x1a8] sm:$0xff] %v4777
        %4810 = vst [vmem:[#allocation5 + $0x1f8] sm:$0xff] %v4778
        %4811 = vst [vmem:[#allocation5 + $0x248] sm:$0xff] %v4779
        %4812 = vst [vmem:[#allocation5 + $0x298] sm:$0xff] %v4780
        %4813 = vst [vmem:[#allocation5 + $0x2e8] sm:$0xff] %v4781
        %4814 = vst [vmem:[#allocation5 + $0x338] sm:$0xff] %v4782
        %4815 = vst [vmem:[#allocation5 + $0x388] sm:$0xff] %v4783
        %4816 = vst [vmem:[#allocation5 + $0x3d8] sm:$0xff] %v4784
        %4817 = vst [vmem:[#allocation5 + $0x428] sm:$0xff] %v4785
        %4818 = vst [vmem:[#allocation5 + $0x478] sm:$0xff] %v4786
        %4819 = vst [vmem:[#allocation5 + $0x4c8] sm:$0xff] %v4787
        %4820 = vst [vmem:[#allocation5 + $0x518] sm:$0xff] %v4788
        %4821 = vst [vmem:[#allocation5 + $0x568] sm:$0xff] %v4789
        %4822 = vst [vmem:[#allocation5 + $0x5b8] sm:$0xff] %v4790
        %4823 = vst [vmem:[#allocation5 + $0x608] sm:$0xff] %v4791
        %4824 = vst [vmem:[#allocation5 + $0x658] sm:$0xff] %v4792
        %4825 = vst [vmem:[#allocation5 + $0x6a8] sm:$0xff] %v4793
        %4826 = vst [vmem:[#allocation5 + $0x6f8] sm:$0xff] %v4794
        %4827 = vst [vmem:[#allocation5 + $0x748] sm:$0xff] %v4795
        %4828 = vst [vmem:[#allocation5 + $0x798] sm:$0xff] %v4796
        %4829 = vst [vmem:[#allocation5 + $0x7e8] sm:$0xff] %v4797
        %4830 = vst [vmem:[#allocation5 + $0x838] sm:$0xff] %v4798
        %4831 = vst [vmem:[#allocation5 + $0x888] sm:$0xff] %v4799
        %4832 = vst [vmem:[#allocation5 + $0x8d8] sm:$0xff] %v4800
        %4833 = vst [vmem:[#allocation5 + $0x928] sm:$0xff] %v4801
        %4834 = vst [vmem:[#allocation5 + $0x978] sm:$0xff] %v4802
        %4835 = vst [vmem:[#allocation5 + $0x9c8] sm:$0xff] %v4803
        %v4836 = vld [vmem:[%s4547 + $0x1] sm:$0xff]
        %v4837 = vld [vmem:[%s4547 + $0x11] sm:$0xff]
        %v4838 = vld [vmem:[%s4547 + $0x21] sm:$0xff]
        %v4839 = vld [vmem:[%s4547 + $0x31] sm:$0xff]
        %v4840 = vld [vmem:[%s4547 + $0x41] sm:$0xff]
        %v4841 = vld [vmem:[%s4547 + $0x51] sm:$0xff]
        %v4842 = vld [vmem:[%s4547 + $0x61] sm:$0xff]
        %v4843 = vld [vmem:[%s4547 + $0x71] sm:$0xff]
        %v4844 = vld [vmem:[%s4547 + $0xa1] sm:$0xff]
        %v4845 = vld [vmem:[%s4547 + $0xb1] sm:$0xff]
        %v4846 = vld [vmem:[%s4547 + $0xc1] sm:$0xff]
        %v4847 = vld [vmem:[%s4547 + $0xd1] sm:$0xff]
        %v4848 = vld [vmem:[%s4547 + $0xe1] sm:$0xff]
        %v4849 = vld [vmem:[%s4547 + $0xf1] sm:$0xff]
        %v4850 = vld [vmem:[%s4547 + $0x101] sm:$0xff]
        %v4851 = vld [vmem:[%s4547 + $0x111] sm:$0xff]
        %v4852 = vld [vmem:[%s4547 + $0x141] sm:$0xff]
        %v4853 = vld [vmem:[%s4547 + $0x151] sm:$0xff]
        %v4854 = vld [vmem:[%s4547 + $0x161] sm:$0xff]
        %v4855 = vld [vmem:[%s4547 + $0x171] sm:$0xff]
        %v4856 = vld [vmem:[%s4547 + $0x181] sm:$0xff]
        %v4857 = vld [vmem:[%s4547 + $0x191] sm:$0xff]
        %v4858 = vld [vmem:[%s4547 + $0x1a1] sm:$0xff]
        %v4859 = vld [vmem:[%s4547 + $0x1b1] sm:$0xff]
        %v4860 = vld [vmem:[%s4547 + $0x1e1] sm:$0xff]
        %v4861 = vld [vmem:[%s4547 + $0x1f1] sm:$0xff]
        %v4862 = vld [vmem:[%s4547 + $0x201] sm:$0xff]
        %v4863 = vld [vmem:[%s4547 + $0x211] sm:$0xff]
        %v4864 = vld [vmem:[%s4547 + $0x221] sm:$0xff]
        %v4865 = vld [vmem:[%s4547 + $0x231] sm:$0xff]
        %v4866 = vld [vmem:[%s4547 + $0x241] sm:$0xff]
        %v4867 = vld [vmem:[%s4547 + $0x251] sm:$0xff]
        %4868 = vst [vmem:[#allocation5 + $0x20] sm:$0xff] %v4836
        %4869 = vst [vmem:[#allocation5 + $0x70] sm:$0xff] %v4837
        %4870 = vst [vmem:[#allocation5 + $0xc0] sm:$0xff] %v4838
        %4871 = vst [vmem:[#allocation5 + $0x110] sm:$0xff] %v4839
        %4872 = vst [vmem:[#allocation5 + $0x160] sm:$0xff] %v4840
        %4873 = vst [vmem:[#allocation5 + $0x1b0] sm:$0xff] %v4841
        %4874 = vst [vmem:[#allocation5 + $0x200] sm:$0xff] %v4842
        %4875 = vst [vmem:[#allocation5 + $0x250] sm:$0xff] %v4843
        %4876 = vst [vmem:[#allocation5 + $0x2a0] sm:$0xff] %v4844
        %4877 = vst [vmem:[#allocation5 + $0x2f0] sm:$0xff] %v4845
        %4878 = vst [vmem:[#allocation5 + $0x340] sm:$0xff] %v4846
        %4879 = vst [vmem:[#allocation5 + $0x390] sm:$0xff] %v4847
        %4880 = vst [vmem:[#allocation5 + $0x3e0] sm:$0xff] %v4848
        %4881 = vst [vmem:[#allocation5 + $0x430] sm:$0xff] %v4849
        %4882 = vst [vmem:[#allocation5 + $0x480] sm:$0xff] %v4850
        %4883 = vst [vmem:[#allocation5 + $0x4d0] sm:$0xff] %v4851
        %4884 = vst [vmem:[#allocation5 + $0x520] sm:$0xff] %v4852
        %4885 = vst [vmem:[#allocation5 + $0x570] sm:$0xff] %v4853
        %4886 = vst [vmem:[#allocation5 + $0x5c0] sm:$0xff] %v4854
        %4887 = vst [vmem:[#allocation5 + $0x610] sm:$0xff] %v4855
        %4888 = vst [vmem:[#allocation5 + $0x660] sm:$0xff] %v4856
        %4889 = vst [vmem:[#allocation5 + $0x6b0] sm:$0xff] %v4857
        %4890 = vst [vmem:[#allocation5 + $0x700] sm:$0xff] %v4858
        %4891 = vst [vmem:[#allocation5 + $0x750] sm:$0xff] %v4859
        %4892 = vst [vmem:[#allocation5 + $0x7a0] sm:$0xff] %v4860
        %4893 = vst [vmem:[#allocation5 + $0x7f0] sm:$0xff] %v4861
        %4894 = vst [vmem:[#allocation5 + $0x840] sm:$0xff] %v4862
        %4895 = vst [vmem:[#allocation5 + $0x890] sm:$0xff] %v4863
        %4896 = vst [vmem:[#allocation5 + $0x8e0] sm:$0xff] %v4864
        %4897 = vst [vmem:[#allocation5 + $0x930] sm:$0xff] %v4865
        %4898 = vst [vmem:[#allocation5 + $0x980] sm:$0xff] %v4866
        %4899 = vst [vmem:[#allocation5 + $0x9d0] sm:$0xff] %v4867
        %v4900 = vld [vmem:[%s4547 + $0x2] sm:$0xff]
        %v4901 = vld [vmem:[%s4547 + $0x12] sm:$0xff]
        %v4902 = vld [vmem:[%s4547 + $0x22] sm:$0xff]
        %v4903 = vld [vmem:[%s4547 + $0x32] sm:$0xff]
        %v4904 = vld [vmem:[%s4547 + $0x42] sm:$0xff]
        %v4905 = vld [vmem:[%s4547 + $0x52] sm:$0xff]
        %v4906 = vld [vmem:[%s4547 + $0x62] sm:$0xff]
        %v4907 = vld [vmem:[%s4547 + $0x72] sm:$0xff]
        %v4908 = vld [vmem:[%s4547 + $0xa2] sm:$0xff]
        %v4909 = vld [vmem:[%s4547 + $0xb2] sm:$0xff]
        %v4910 = vld [vmem:[%s4547 + $0xc2] sm:$0xff]
        %v4911 = vld [vmem:[%s4547 + $0xd2] sm:$0xff]
        %v4912 = vld [vmem:[%s4547 + $0xe2] sm:$0xff]
        %v4913 = vld [vmem:[%s4547 + $0xf2] sm:$0xff]
        %v4914 = vld [vmem:[%s4547 + $0x102] sm:$0xff]
        %v4915 = vld [vmem:[%s4547 + $0x112] sm:$0xff]
        %v4916 = vld [vmem:[%s4547 + $0x142] sm:$0xff]
        %v4917 = vld [vmem:[%s4547 + $0x152] sm:$0xff]
        %v4918 = vld [vmem:[%s4547 + $0x162] sm:$0xff]
        %v4919 = vld [vmem:[%s4547 + $0x172] sm:$0xff]
        %v4920 = vld [vmem:[%s4547 + $0x182] sm:$0xff]
        %v4921 = vld [vmem:[%s4547 + $0x192] sm:$0xff]
        %v4922 = vld [vmem:[%s4547 + $0x1a2] sm:$0xff]
        %v4923 = vld [vmem:[%s4547 + $0x1b2] sm:$0xff]
        %v4924 = vld [vmem:[%s4547 + $0x1e2] sm:$0xff]
        %v4925 = vld [vmem:[%s4547 + $0x1f2] sm:$0xff]
        %v4926 = vld [vmem:[%s4547 + $0x202] sm:$0xff]
        %v4927 = vld [vmem:[%s4547 + $0x212] sm:$0xff]
        %v4928 = vld [vmem:[%s4547 + $0x222] sm:$0xff]
        %v4929 = vld [vmem:[%s4547 + $0x232] sm:$0xff]
        %v4930 = vld [vmem:[%s4547 + $0x242] sm:$0xff]
        %v4931 = vld [vmem:[%s4547 + $0x252] sm:$0xff]
        %4932 = vst [vmem:[#allocation5 + $0x28] sm:$0xff] %v4900
        %4933 = vst [vmem:[#allocation5 + $0x78] sm:$0xff] %v4901
        %4934 = vst [vmem:[#allocation5 + $0xc8] sm:$0xff] %v4902
        %4935 = vst [vmem:[#allocation5 + $0x118] sm:$0xff] %v4903
        %4936 = vst [vmem:[#allocation5 + $0x168] sm:$0xff] %v4904
        %4937 = vst [vmem:[#allocation5 + $0x1b8] sm:$0xff] %v4905
        %4938 = vst [vmem:[#allocation5 + $0x208] sm:$0xff] %v4906
        %4939 = vst [vmem:[#allocation5 + $0x258] sm:$0xff] %v4907
        %4940 = vst [vmem:[#allocation5 + $0x2a8] sm:$0xff] %v4908
        %4941 = vst [vmem:[#allocation5 + $0x2f8] sm:$0xff] %v4909
        %4942 = vst [vmem:[#allocation5 + $0x348] sm:$0xff] %v4910
        %4943 = vst [vmem:[#allocation5 + $0x398] sm:$0xff] %v4911
        %4944 = vst [vmem:[#allocation5 + $0x3e8] sm:$0xff] %v4912
        %4945 = vst [vmem:[#allocation5 + $0x438] sm:$0xff] %v4913
        %4946 = vst [vmem:[#allocation5 + $0x488] sm:$0xff] %v4914
        %4947 = vst [vmem:[#allocation5 + $0x4d8] sm:$0xff] %v4915
        %4948 = vst [vmem:[#allocation5 + $0x528] sm:$0xff] %v4916
        %4949 = vst [vmem:[#allocation5 + $0x578] sm:$0xff] %v4917
        %4950 = vst [vmem:[#allocation5 + $0x5c8] sm:$0xff] %v4918
        %4951 = vst [vmem:[#allocation5 + $0x618] sm:$0xff] %v4919
        %4952 = vst [vmem:[#allocation5 + $0x668] sm:$0xff] %v4920
        %4953 = vst [vmem:[#allocation5 + $0x6b8] sm:$0xff] %v4921
        %4954 = vst [vmem:[#allocation5 + $0x708] sm:$0xff] %v4922
        %4955 = vst [vmem:[#allocation5 + $0x758] sm:$0xff] %v4923
        %4956 = vst [vmem:[#allocation5 + $0x7a8] sm:$0xff] %v4924
        %4957 = vst [vmem:[#allocation5 + $0x7f8] sm:$0xff] %v4925
        %4958 = vst [vmem:[#allocation5 + $0x848] sm:$0xff] %v4926
        %4959 = vst [vmem:[#allocation5 + $0x898] sm:$0xff] %v4927
        %4960 = vst [vmem:[#allocation5 + $0x8e8] sm:$0xff] %v4928
        %4961 = vst [vmem:[#allocation5 + $0x938] sm:$0xff] %v4929
        %4962 = vst [vmem:[#allocation5 + $0x988] sm:$0xff] %v4930
        %4963 = vst [vmem:[#allocation5 + $0x9d8] sm:$0xff] %v4931
        %s4964 = scalar_lea.vmem [#allocation3], 32
        %v4965 = vld [vmem:[%s4964] sm:$0xff]
        %v4966 = vld [vmem:[%s4964 + $0x10] sm:$0xff]
        %v4967 = vld [vmem:[%s4964 + $0x20] sm:$0xff]
        %v4968 = vld [vmem:[%s4964 + $0x30] sm:$0xff]
        %v4969 = vld [vmem:[%s4964 + $0x40] sm:$0xff]
        %v4970 = vld [vmem:[%s4964 + $0x50] sm:$0xff]
        %v4971 = vld [vmem:[%s4964 + $0x60] sm:$0xff]
        %v4972 = vld [vmem:[%s4964 + $0x70] sm:$0xff]
        %v4973 = vld [vmem:[%s4964 + $0xa0] sm:$0xff]
        %v4974 = vld [vmem:[%s4964 + $0xb0] sm:$0xff]
        %v4975 = vld [vmem:[%s4964 + $0xc0] sm:$0xff]
        %v4976 = vld [vmem:[%s4964 + $0xd0] sm:$0xff]
        %v4977 = vld [vmem:[%s4964 + $0xe0] sm:$0xff]
        %v4978 = vld [vmem:[%s4964 + $0xf0] sm:$0xff]
        %v4979 = vld [vmem:[%s4964 + $0x100] sm:$0xff]
        %v4980 = vld [vmem:[%s4964 + $0x110] sm:$0xff]
        %v4981 = vld [vmem:[%s4964 + $0x140] sm:$0xff]
        %v4982 = vld [vmem:[%s4964 + $0x150] sm:$0xff]
        %v4983 = vld [vmem:[%s4964 + $0x160] sm:$0xff]
        %v4984 = vld [vmem:[%s4964 + $0x170] sm:$0xff]
        %v4985 = vld [vmem:[%s4964 + $0x180] sm:$0xff]
        %v4986 = vld [vmem:[%s4964 + $0x190] sm:$0xff]
        %v4987 = vld [vmem:[%s4964 + $0x1a0] sm:$0xff]
        %v4988 = vld [vmem:[%s4964 + $0x1b0] sm:$0xff]
        %v4989 = vld [vmem:[%s4964 + $0x1e0] sm:$0xff]
        %v4990 = vld [vmem:[%s4964 + $0x1f0] sm:$0xff]
        %v4991 = vld [vmem:[%s4964 + $0x200] sm:$0xff]
        %v4992 = vld [vmem:[%s4964 + $0x210] sm:$0xff]
        %v4993 = vld [vmem:[%s4964 + $0x220] sm:$0xff]
        %v4994 = vld [vmem:[%s4964 + $0x230] sm:$0xff]
        %v4995 = vld [vmem:[%s4964 + $0x240] sm:$0xff]
        %v4996 = vld [vmem:[%s4964 + $0x250] sm:$0xff]
        %4997 = vst [vmem:[#allocation5 + $0x30] sm:$0xff] %v4965
        %4998 = vst [vmem:[#allocation5 + $0x80] sm:$0xff] %v4966
        %4999 = vst [vmem:[#allocation5 + $0xd0] sm:$0xff] %v4967
        %5000 = vst [vmem:[#allocation5 + $0x120] sm:$0xff] %v4968
        %5001 = vst [vmem:[#allocation5 + $0x170] sm:$0xff] %v4969
        %5002 = vst [vmem:[#allocation5 + $0x1c0] sm:$0xff] %v4970
        %5003 = vst [vmem:[#allocation5 + $0x210] sm:$0xff] %v4971
        %5004 = vst [vmem:[#allocation5 + $0x260] sm:$0xff] %v4972
        %5005 = vst [vmem:[#allocation5 + $0x2b0] sm:$0xff] %v4973
        %5006 = vst [vmem:[#allocation5 + $0x300] sm:$0xff] %v4974
        %5007 = vst [vmem:[#allocation5 + $0x350] sm:$0xff] %v4975
        %5008 = vst [vmem:[#allocation5 + $0x3a0] sm:$0xff] %v4976
        %5009 = vst [vmem:[#allocation5 + $0x3f0] sm:$0xff] %v4977
        %5010 = vst [vmem:[#allocation5 + $0x440] sm:$0xff] %v4978
        %5011 = vst [vmem:[#allocation5 + $0x490] sm:$0xff] %v4979
        %5012 = vst [vmem:[#allocation5 + $0x4e0] sm:$0xff] %v4980
        %5013 = vst [vmem:[#allocation5 + $0x530] sm:$0xff] %v4981
        %5014 = vst [vmem:[#allocation5 + $0x580] sm:$0xff] %v4982
        %5015 = vst [vmem:[#allocation5 + $0x5d0] sm:$0xff] %v4983
        %5016 = vst [vmem:[#allocation5 + $0x620] sm:$0xff] %v4984
        %5017 = vst [vmem:[#allocation5 + $0x670] sm:$0xff] %v4985
        %5018 = vst [vmem:[#allocation5 + $0x6c0] sm:$0xff] %v4986
        %5019 = vst [vmem:[#allocation5 + $0x710] sm:$0xff] %v4987
        %5020 = vst [vmem:[#allocation5 + $0x760] sm:$0xff] %v4988
        %5021 = vst [vmem:[#allocation5 + $0x7b0] sm:$0xff] %v4989
        %5022 = vst [vmem:[#allocation5 + $0x800] sm:$0xff] %v4990
        %5023 = vst [vmem:[#allocation5 + $0x850] sm:$0xff] %v4991
        %5024 = vst [vmem:[#allocation5 + $0x8a0] sm:$0xff] %v4992
        %5025 = vst [vmem:[#allocation5 + $0x8f0] sm:$0xff] %v4993
        %5026 = vst [vmem:[#allocation5 + $0x940] sm:$0xff] %v4994
        %5027 = vst [vmem:[#allocation5 + $0x990] sm:$0xff] %v4995
        %5028 = vst [vmem:[#allocation5 + $0x9e0] sm:$0xff] %v4996
        %v5029 = vld [vmem:[%s4964 + $0x1] sm:$0xff]
        %v5030 = vld [vmem:[%s4964 + $0x11] sm:$0xff]
        %v5031 = vld [vmem:[%s4964 + $0x21] sm:$0xff]
        %v5032 = vld [vmem:[%s4964 + $0x31] sm:$0xff]
        %v5033 = vld [vmem:[%s4964 + $0x41] sm:$0xff]
        %v5034 = vld [vmem:[%s4964 + $0x51] sm:$0xff]
        %v5035 = vld [vmem:[%s4964 + $0x61] sm:$0xff]
        %v5036 = vld [vmem:[%s4964 + $0x71] sm:$0xff]
        %v5037 = vld [vmem:[%s4964 + $0xa1] sm:$0xff]
        %v5038 = vld [vmem:[%s4964 + $0xb1] sm:$0xff]
        %v5039 = vld [vmem:[%s4964 + $0xc1] sm:$0xff]
        %v5040 = vld [vmem:[%s4964 + $0xd1] sm:$0xff]
        %v5041 = vld [vmem:[%s4964 + $0xe1] sm:$0xff]
        %v5042 = vld [vmem:[%s4964 + $0xf1] sm:$0xff]
        %v5043 = vld [vmem:[%s4964 + $0x101] sm:$0xff]
        %v5044 = vld [vmem:[%s4964 + $0x111] sm:$0xff]
        %v5045 = vld [vmem:[%s4964 + $0x141] sm:$0xff]
        %v5046 = vld [vmem:[%s4964 + $0x151] sm:$0xff]
        %v5047 = vld [vmem:[%s4964 + $0x161] sm:$0xff]
        %v5048 = vld [vmem:[%s4964 + $0x171] sm:$0xff]
        %v5049 = vld [vmem:[%s4964 + $0x181] sm:$0xff]
        %v5050 = vld [vmem:[%s4964 + $0x191] sm:$0xff]
        %v5051 = vld [vmem:[%s4964 + $0x1a1] sm:$0xff]
        %v5052 = vld [vmem:[%s4964 + $0x1b1] sm:$0xff]
        %v5053 = vld [vmem:[%s4964 + $0x1e1] sm:$0xff]
        %v5054 = vld [vmem:[%s4964 + $0x1f1] sm:$0xff]
        %v5055 = vld [vmem:[%s4964 + $0x201] sm:$0xff]
        %v5056 = vld [vmem:[%s4964 + $0x211] sm:$0xff]
        %v5057 = vld [vmem:[%s4964 + $0x221] sm:$0xff]
        %v5058 = vld [vmem:[%s4964 + $0x231] sm:$0xff]
        %v5059 = vld [vmem:[%s4964 + $0x241] sm:$0xff]
        %v5060 = vld [vmem:[%s4964 + $0x251] sm:$0xff]
        %5061 = vst [vmem:[#allocation5 + $0x38] sm:$0xff] %v5029
        %5062 = vst [vmem:[#allocation5 + $0x88] sm:$0xff] %v5030
        %5063 = vst [vmem:[#allocation5 + $0xd8] sm:$0xff] %v5031
        %5064 = vst [vmem:[#allocation5 + $0x128] sm:$0xff] %v5032
        %5065 = vst [vmem:[#allocation5 + $0x178] sm:$0xff] %v5033
        %5066 = vst [vmem:[#allocation5 + $0x1c8] sm:$0xff] %v5034
        %5067 = vst [vmem:[#allocation5 + $0x218] sm:$0xff] %v5035
        %5068 = vst [vmem:[#allocation5 + $0x268] sm:$0xff] %v5036
        %5069 = vst [vmem:[#allocation5 + $0x2b8] sm:$0xff] %v5037
        %5070 = vst [vmem:[#allocation5 + $0x308] sm:$0xff] %v5038
        %5071 = vst [vmem:[#allocation5 + $0x358] sm:$0xff] %v5039
        %5072 = vst [vmem:[#allocation5 + $0x3a8] sm:$0xff] %v5040
        %5073 = vst [vmem:[#allocation5 + $0x3f8] sm:$0xff] %v5041
        %5074 = vst [vmem:[#allocation5 + $0x448] sm:$0xff] %v5042
        %5075 = vst [vmem:[#allocation5 + $0x498] sm:$0xff] %v5043
        %5076 = vst [vmem:[#allocation5 + $0x4e8] sm:$0xff] %v5044
        %5077 = vst [vmem:[#allocation5 + $0x538] sm:$0xff] %v5045
        %5078 = vst [vmem:[#allocation5 + $0x588] sm:$0xff] %v5046
        %5079 = vst [vmem:[#allocation5 + $0x5d8] sm:$0xff] %v5047
        %5080 = vst [vmem:[#allocation5 + $0x628] sm:$0xff] %v5048
        %5081 = vst [vmem:[#allocation5 + $0x678] sm:$0xff] %v5049
        %5082 = vst [vmem:[#allocation5 + $0x6c8] sm:$0xff] %v5050
        %5083 = vst [vmem:[#allocation5 + $0x718] sm:$0xff] %v5051
        %5084 = vst [vmem:[#allocation5 + $0x768] sm:$0xff] %v5052
        %5085 = vst [vmem:[#allocation5 + $0x7b8] sm:$0xff] %v5053
        %5086 = vst [vmem:[#allocation5 + $0x808] sm:$0xff] %v5054
        %5087 = vst [vmem:[#allocation5 + $0x858] sm:$0xff] %v5055
        %5088 = vst [vmem:[#allocation5 + $0x8a8] sm:$0xff] %v5056
        %5089 = vst [vmem:[#allocation5 + $0x8f8] sm:$0xff] %v5057
        %5090 = vst [vmem:[#allocation5 + $0x948] sm:$0xff] %v5058
        %5091 = vst [vmem:[#allocation5 + $0x998] sm:$0xff] %v5059
        %5092 = vst [vmem:[#allocation5 + $0x9e8] sm:$0xff] %v5060
        %v5093 = vld [vmem:[%s4964 + $0x2] sm:$0xff]
        %v5094 = vld [vmem:[%s4964 + $0x12] sm:$0xff]
        %v5095 = vld [vmem:[%s4964 + $0x22] sm:$0xff]
        %v5096 = vld [vmem:[%s4964 + $0x32] sm:$0xff]
        %v5097 = vld [vmem:[%s4964 + $0x42] sm:$0xff]
        %v5098 = vld [vmem:[%s4964 + $0x52] sm:$0xff]
        %v5099 = vld [vmem:[%s4964 + $0x62] sm:$0xff]
        %v5100 = vld [vmem:[%s4964 + $0x72] sm:$0xff]
        %v5101 = vld [vmem:[%s4964 + $0xa2] sm:$0xff]
        %v5102 = vld [vmem:[%s4964 + $0xb2] sm:$0xff]
        %v5103 = vld [vmem:[%s4964 + $0xc2] sm:$0xff]
        %v5104 = vld [vmem:[%s4964 + $0xd2] sm:$0xff]
        %v5105 = vld [vmem:[%s4964 + $0xe2] sm:$0xff]
        %v5106 = vld [vmem:[%s4964 + $0xf2] sm:$0xff]
        %v5107 = vld [vmem:[%s4964 + $0x102] sm:$0xff]
        %v5108 = vld [vmem:[%s4964 + $0x112] sm:$0xff]
        %v5109 = vld [vmem:[%s4964 + $0x142] sm:$0xff]
        %v5110 = vld [vmem:[%s4964 + $0x152] sm:$0xff]
        %v5111 = vld [vmem:[%s4964 + $0x162] sm:$0xff]
        %v5112 = vld [vmem:[%s4964 + $0x172] sm:$0xff]
        %v5113 = vld [vmem:[%s4964 + $0x182] sm:$0xff]
        %v5114 = vld [vmem:[%s4964 + $0x192] sm:$0xff]
        %v5115 = vld [vmem:[%s4964 + $0x1a2] sm:$0xff]
        %v5116 = vld [vmem:[%s4964 + $0x1b2] sm:$0xff]
        %v5117 = vld [vmem:[%s4964 + $0x1e2] sm:$0xff]
        %v5118 = vld [vmem:[%s4964 + $0x1f2] sm:$0xff]
        %v5119 = vld [vmem:[%s4964 + $0x202] sm:$0xff]
        %v5120 = vld [vmem:[%s4964 + $0x212] sm:$0xff]
        %v5121 = vld [vmem:[%s4964 + $0x222] sm:$0xff]
        %v5122 = vld [vmem:[%s4964 + $0x232] sm:$0xff]
        %v5123 = vld [vmem:[%s4964 + $0x242] sm:$0xff]
        %v5124 = vld [vmem:[%s4964 + $0x252] sm:$0xff]
        %5125 = vst [vmem:[#allocation5 + $0x40] sm:$0xff] %v5093
        %5126 = vst [vmem:[#allocation5 + $0x90] sm:$0xff] %v5094
        %5127 = vst [vmem:[#allocation5 + $0xe0] sm:$0xff] %v5095
        %5128 = vst [vmem:[#allocation5 + $0x130] sm:$0xff] %v5096
        %5129 = vst [vmem:[#allocation5 + $0x180] sm:$0xff] %v5097
        %5130 = vst [vmem:[#allocation5 + $0x1d0] sm:$0xff] %v5098
        %5131 = vst [vmem:[#allocation5 + $0x220] sm:$0xff] %v5099
        %5132 = vst [vmem:[#allocation5 + $0x270] sm:$0xff] %v5100
        %5133 = vst [vmem:[#allocation5 + $0x2c0] sm:$0xff] %v5101
        %5134 = vst [vmem:[#allocation5 + $0x310] sm:$0xff] %v5102
        %5135 = vst [vmem:[#allocation5 + $0x360] sm:$0xff] %v5103
        %5136 = vst [vmem:[#allocation5 + $0x3b0] sm:$0xff] %v5104
        %5137 = vst [vmem:[#allocation5 + $0x400] sm:$0xff] %v5105
        %5138 = vst [vmem:[#allocation5 + $0x450] sm:$0xff] %v5106
        %5139 = vst [vmem:[#allocation5 + $0x4a0] sm:$0xff] %v5107
        %5140 = vst [vmem:[#allocation5 + $0x4f0] sm:$0xff] %v5108
        %5141 = vst [vmem:[#allocation5 + $0x540] sm:$0xff] %v5109
        %5142 = vst [vmem:[#allocation5 + $0x590] sm:$0xff] %v5110
        %5143 = vst [vmem:[#allocation5 + $0x5e0] sm:$0xff] %v5111
        %5144 = vst [vmem:[#allocation5 + $0x630] sm:$0xff] %v5112
        %5145 = vst [vmem:[#allocation5 + $0x680] sm:$0xff] %v5113
        %5146 = vst [vmem:[#allocation5 + $0x6d0] sm:$0xff] %v5114
        %5147 = vst [vmem:[#allocation5 + $0x720] sm:$0xff] %v5115
        %5148 = vst [vmem:[#allocation5 + $0x770] sm:$0xff] %v5116
        %5149 = vst [vmem:[#allocation5 + $0x7c0] sm:$0xff] %v5117
        %5150 = vst [vmem:[#allocation5 + $0x810] sm:$0xff] %v5118
        %5151 = vst [vmem:[#allocation5 + $0x860] sm:$0xff] %v5119
        %5152 = vst [vmem:[#allocation5 + $0x8b0] sm:$0xff] %v5120
        %5153 = vst [vmem:[#allocation5 + $0x900] sm:$0xff] %v5121
        %5154 = vst [vmem:[#allocation5 + $0x950] sm:$0xff] %v5122
        %5155 = vst [vmem:[#allocation5 + $0x9a0] sm:$0xff] %v5123
        %5156 = vst [vmem:[#allocation5 + $0x9f0] sm:$0xff] %v5124
        %5157 = vst.msk [vmem:[#allocation5 + $0x48] sm:$0xff] %vm576, %v534
        %5158 = vst.msk [vmem:[#allocation5 + $0x98] sm:$0xff] %vm576, %v535
        %5159 = vst.msk [vmem:[#allocation5 + $0xe8] sm:$0xff] %vm576, %v536
        %5160 = vst.msk [vmem:[#allocation5 + $0x138] sm:$0xff] %vm576, %v537
        %5161 = vst.msk [vmem:[#allocation5 + $0x188] sm:$0xff] %vm576, %v538
        %5162 = vst.msk [vmem:[#allocation5 + $0x1d8] sm:$0xff] %vm576, %v539
        %5163 = vst.msk [vmem:[#allocation5 + $0x228] sm:$0xff] %vm576, %v540
        %5164 = vst.msk [vmem:[#allocation5 + $0x278] sm:$0xff] %vm576, %v541
        %5165 = vst.msk [vmem:[#allocation5 + $0x2c8] sm:$0xff] %vm576, %v542
        %5166 = vst.msk [vmem:[#allocation5 + $0x318] sm:$0xff] %vm576, %v543
        %5167 = vst.msk [vmem:[#allocation5 + $0x368] sm:$0xff] %vm576, %v544
        %5168 = vst.msk [vmem:[#allocation5 + $0x3b8] sm:$0xff] %vm576, %v545
        %5169 = vst.msk [vmem:[#allocation5 + $0x408] sm:$0xff] %vm576, %v546
        %5170 = vst.msk [vmem:[#allocation5 + $0x458] sm:$0xff] %vm576, %v547
        %5171 = vst.msk [vmem:[#allocation5 + $0x4a8] sm:$0xff] %vm576, %v548
        %5172 = vst.msk [vmem:[#allocation5 + $0x4f8] sm:$0xff] %vm576, %v549
        %5173 = vst.msk [vmem:[#allocation5 + $0x548] sm:$0xff] %vm576, %v550
        %5174 = vst.msk [vmem:[#allocation5 + $0x598] sm:$0xff] %vm576, %v551
        %5175 = vst.msk [vmem:[#allocation5 + $0x5e8] sm:$0xff] %vm576, %v552
        %5176 = vst.msk [vmem:[#allocation5 + $0x638] sm:$0xff] %vm576, %v553
        %5177 = vst.msk [vmem:[#allocation5 + $0x688] sm:$0xff] %vm576, %v554
        %5178 = vst.msk [vmem:[#allocation5 + $0x6d8] sm:$0xff] %vm576, %v555
        %5179 = vst.msk [vmem:[#allocation5 + $0x728] sm:$0xff] %vm576, %v556
        %5180 = vst.msk [vmem:[#allocation5 + $0x778] sm:$0xff] %vm576, %v557
        %5181 = vst.msk [vmem:[#allocation5 + $0x7c8] sm:$0xff] %vm576, %v558
        %5182 = vst.msk [vmem:[#allocation5 + $0x818] sm:$0xff] %vm576, %v559
        %5183 = vst.msk [vmem:[#allocation5 + $0x868] sm:$0xff] %vm576, %v560
        %5184 = vst.msk [vmem:[#allocation5 + $0x8b8] sm:$0xff] %vm576, %v561
        %5185 = vst.msk [vmem:[#allocation5 + $0x908] sm:$0xff] %vm576, %v562
        %5186 = vst.msk [vmem:[#allocation5 + $0x958] sm:$0xff] %vm576, %v563
        %5187 = vst.msk [vmem:[#allocation5 + $0x9a8] sm:$0xff] %vm576, %v564
        %5188 = vst.msk [vmem:[#allocation5 + $0x9f8] sm:$0xff] %vm576, %v565
        %v5189 = vld [vmem:[#allocation5] sm:$0xff]
        %v5190 = vld [vmem:[#allocation5 + $0x8] sm:$0xff]
        %v5191 = vld [vmem:[#allocation5 + $0x10] sm:$0xff]
        %v5192 = vld [vmem:[#allocation5 + $0x18] sm:$0xff]
        %v5193 = vld [vmem:[#allocation5 + $0x20] sm:$0xff]
        %v5194 = vld [vmem:[#allocation5 + $0x28] sm:$0xff]
        %v5195 = vld [vmem:[#allocation5 + $0x30] sm:$0xff]
        %v5196 = vld [vmem:[#allocation5 + $0x38] sm:$0xff]
        %v5197 = vld [vmem:[#allocation5 + $0x40] sm:$0xff]
        %v5198 = vld [vmem:[#allocation5 + $0x48] sm:$0xff]
        %v5199 = vld [vmem:[#allocation5 + $0x50] sm:$0xff]
        %v5200 = vld [vmem:[#allocation5 + $0x58] sm:$0xff]
        %v5201 = vld [vmem:[#allocation5 + $0x60] sm:$0xff]
        %v5202 = vld [vmem:[#allocation5 + $0x68] sm:$0xff]
        %v5203 = vld [vmem:[#allocation5 + $0x70] sm:$0xff]
        %v5204 = vld [vmem:[#allocation5 + $0x78] sm:$0xff]
        %v5205 = vld [vmem:[#allocation5 + $0x80] sm:$0xff]
        %v5206 = vld [vmem:[#allocation5 + $0x88] sm:$0xff]
        %v5207 = vld [vmem:[#allocation5 + $0x90] sm:$0xff]
        %v5208 = vld [vmem:[#allocation5 + $0x98] sm:$0xff]
        %v5209 = vld [vmem:[#allocation5 + $0xa0] sm:$0xff]
        %v5210 = vld [vmem:[#allocation5 + $0xa8] sm:$0xff]
        %v5211 = vld [vmem:[#allocation5 + $0xb0] sm:$0xff]
        %v5212 = vld [vmem:[#allocation5 + $0xb8] sm:$0xff]
        %v5213 = vld [vmem:[#allocation5 + $0xc0] sm:$0xff]
        %v5214 = vld [vmem:[#allocation5 + $0xc8] sm:$0xff]
        %v5215 = vld [vmem:[#allocation5 + $0xd0] sm:$0xff]
        %v5216 = vld [vmem:[#allocation5 + $0xd8] sm:$0xff]
        %v5217 = vld [vmem:[#allocation5 + $0xe0] sm:$0xff]
        %v5218 = vld [vmem:[#allocation5 + $0xe8] sm:$0xff]
        %v5219 = vld [vmem:[#allocation5 + $0xf0] sm:$0xff]
        %v5220 = vld [vmem:[#allocation5 + $0xf8] sm:$0xff]
        %v5221 = vld [vmem:[#allocation5 + $0x100] sm:$0xff]
        %v5222 = vld [vmem:[#allocation5 + $0x108] sm:$0xff]
        %v5223 = vld [vmem:[#allocation5 + $0x110] sm:$0xff]
        %v5224 = vld [vmem:[#allocation5 + $0x118] sm:$0xff]
        %v5225 = vld [vmem:[#allocation5 + $0x120] sm:$0xff]
        %v5226 = vld [vmem:[#allocation5 + $0x128] sm:$0xff]
        %v5227 = vld [vmem:[#allocation5 + $0x130] sm:$0xff]
        %v5228 = vld [vmem:[#allocation5 + $0x138] sm:$0xff]
        %v5229 = vld [vmem:[#allocation5 + $0x140] sm:$0xff]
        %v5230 = vld [vmem:[#allocation5 + $0x148] sm:$0xff]
        %v5231 = vld [vmem:[#allocation5 + $0x150] sm:$0xff]
        %v5232 = vld [vmem:[#allocation5 + $0x158] sm:$0xff]
        %v5233 = vld [vmem:[#allocation5 + $0x160] sm:$0xff]
        %v5234 = vld [vmem:[#allocation5 + $0x168] sm:$0xff]
        %v5235 = vld [vmem:[#allocation5 + $0x170] sm:$0xff]
        %v5236 = vld [vmem:[#allocation5 + $0x178] sm:$0xff]
        %v5237 = vld [vmem:[#allocation5 + $0x180] sm:$0xff]
        %v5238 = vld [vmem:[#allocation5 + $0x188] sm:$0xff]
        %v5239 = vld [vmem:[#allocation5 + $0x190] sm:$0xff]
        %v5240 = vld [vmem:[#allocation5 + $0x198] sm:$0xff]
        %v5241 = vld [vmem:[#allocation5 + $0x1a0] sm:$0xff]
        %v5242 = vld [vmem:[#allocation5 + $0x1a8] sm:$0xff]
        %v5243 = vld [vmem:[#allocation5 + $0x1b0] sm:$0xff]
        %v5244 = vld [vmem:[#allocation5 + $0x1b8] sm:$0xff]
        %v5245 = vld [vmem:[#allocation5 + $0x1c0] sm:$0xff]
        %v5246 = vld [vmem:[#allocation5 + $0x1c8] sm:$0xff]
        %v5247 = vld [vmem:[#allocation5 + $0x1d0] sm:$0xff]
        %v5248 = vld [vmem:[#allocation5 + $0x1d8] sm:$0xff]
        %v5249 = vld [vmem:[#allocation5 + $0x1e0] sm:$0xff]
        %v5250 = vld [vmem:[#allocation5 + $0x1e8] sm:$0xff]
        %v5251 = vld [vmem:[#allocation5 + $0x1f0] sm:$0xff]
        %v5252 = vld [vmem:[#allocation5 + $0x1f8] sm:$0xff]
        %v5253 = vld [vmem:[#allocation5 + $0x200] sm:$0xff]
        %v5254 = vld [vmem:[#allocation5 + $0x208] sm:$0xff]
        %v5255 = vld [vmem:[#allocation5 + $0x210] sm:$0xff]
        %v5256 = vld [vmem:[#allocation5 + $0x218] sm:$0xff]
        %v5257 = vld [vmem:[#allocation5 + $0x220] sm:$0xff]
        %v5258 = vld [vmem:[#allocation5 + $0x228] sm:$0xff]
        %v5259 = vld [vmem:[#allocation5 + $0x230] sm:$0xff]
        %v5260 = vld [vmem:[#allocation5 + $0x238] sm:$0xff]
        %v5261 = vld [vmem:[#allocation5 + $0x240] sm:$0xff]
        %v5262 = vld [vmem:[#allocation5 + $0x248] sm:$0xff]
        %v5263 = vld [vmem:[#allocation5 + $0x250] sm:$0xff]
        %v5264 = vld [vmem:[#allocation5 + $0x258] sm:$0xff]
        %v5265 = vld [vmem:[#allocation5 + $0x260] sm:$0xff]
        %v5266 = vld [vmem:[#allocation5 + $0x268] sm:$0xff]
        %v5267 = vld [vmem:[#allocation5 + $0x270] sm:$0xff]
        %v5268 = vld [vmem:[#allocation5 + $0x278] sm:$0xff]
        %v5269 = vld [vmem:[#allocation5 + $0x280] sm:$0xff]
        %v5270 = vld [vmem:[#allocation5 + $0x288] sm:$0xff]
        %v5271 = vld [vmem:[#allocation5 + $0x290] sm:$0xff]
        %v5272 = vld [vmem:[#allocation5 + $0x298] sm:$0xff]
        %v5273 = vld [vmem:[#allocation5 + $0x2a0] sm:$0xff]
        %v5274 = vld [vmem:[#allocation5 + $0x2a8] sm:$0xff]
        %v5275 = vld [vmem:[#allocation5 + $0x2b0] sm:$0xff]
        %v5276 = vld [vmem:[#allocation5 + $0x2b8] sm:$0xff]
        %v5277 = vld [vmem:[#allocation5 + $0x2c0] sm:$0xff]
        %v5278 = vld [vmem:[#allocation5 + $0x2c8] sm:$0xff]
        %v5279 = vld [vmem:[#allocation5 + $0x2d0] sm:$0xff]
        %v5280 = vld [vmem:[#allocation5 + $0x2d8] sm:$0xff]
        %v5281 = vld [vmem:[#allocation5 + $0x2e0] sm:$0xff]
        %v5282 = vld [vmem:[#allocation5 + $0x2e8] sm:$0xff]
        %v5283 = vld [vmem:[#allocation5 + $0x2f0] sm:$0xff]
        %v5284 = vld [vmem:[#allocation5 + $0x2f8] sm:$0xff]
        %v5285 = vld [vmem:[#allocation5 + $0x300] sm:$0xff]
        %v5286 = vld [vmem:[#allocation5 + $0x308] sm:$0xff]
        %v5287 = vld [vmem:[#allocation5 + $0x310] sm:$0xff]
        %v5288 = vld [vmem:[#allocation5 + $0x318] sm:$0xff]
        %v5289 = vld [vmem:[#allocation5 + $0x320] sm:$0xff]
        %v5290 = vld [vmem:[#allocation5 + $0x328] sm:$0xff]
        %v5291 = vld [vmem:[#allocation5 + $0x330] sm:$0xff]
        %v5292 = vld [vmem:[#allocation5 + $0x338] sm:$0xff]
        %v5293 = vld [vmem:[#allocation5 + $0x340] sm:$0xff]
        %v5294 = vld [vmem:[#allocation5 + $0x348] sm:$0xff]
        %v5295 = vld [vmem:[#allocation5 + $0x350] sm:$0xff]
        %v5296 = vld [vmem:[#allocation5 + $0x358] sm:$0xff]
        %v5297 = vld [vmem:[#allocation5 + $0x360] sm:$0xff]
        %v5298 = vld [vmem:[#allocation5 + $0x368] sm:$0xff]
        %v5299 = vld [vmem:[#allocation5 + $0x370] sm:$0xff]
        %v5300 = vld [vmem:[#allocation5 + $0x378] sm:$0xff]
        %v5301 = vld [vmem:[#allocation5 + $0x380] sm:$0xff]
        %v5302 = vld [vmem:[#allocation5 + $0x388] sm:$0xff]
        %v5303 = vld [vmem:[#allocation5 + $0x390] sm:$0xff]
        %v5304 = vld [vmem:[#allocation5 + $0x398] sm:$0xff]
        %v5305 = vld [vmem:[#allocation5 + $0x3a0] sm:$0xff]
        %v5306 = vld [vmem:[#allocation5 + $0x3a8] sm:$0xff]
        %v5307 = vld [vmem:[#allocation5 + $0x3b0] sm:$0xff]
        %v5308 = vld [vmem:[#allocation5 + $0x3b8] sm:$0xff]
        %v5309 = vld [vmem:[#allocation5 + $0x3c0] sm:$0xff]
        %v5310 = vld [vmem:[#allocation5 + $0x3c8] sm:$0xff]
        %v5311 = vld [vmem:[#allocation5 + $0x3d0] sm:$0xff]
        %v5312 = vld [vmem:[#allocation5 + $0x3d8] sm:$0xff]
        %v5313 = vld [vmem:[#allocation5 + $0x3e0] sm:$0xff]
        %v5314 = vld [vmem:[#allocation5 + $0x3e8] sm:$0xff]
        %v5315 = vld [vmem:[#allocation5 + $0x3f0] sm:$0xff]
        %v5316 = vld [vmem:[#allocation5 + $0x3f8] sm:$0xff]
        %v5317 = vld [vmem:[#allocation5 + $0x400] sm:$0xff]
        %v5318 = vld [vmem:[#allocation5 + $0x408] sm:$0xff]
        %v5319 = vld [vmem:[#allocation5 + $0x410] sm:$0xff]
        %v5320 = vld [vmem:[#allocation5 + $0x418] sm:$0xff]
        %v5321 = vld [vmem:[#allocation5 + $0x420] sm:$0xff]
        %v5322 = vld [vmem:[#allocation5 + $0x428] sm:$0xff]
        %v5323 = vld [vmem:[#allocation5 + $0x430] sm:$0xff]
        %v5324 = vld [vmem:[#allocation5 + $0x438] sm:$0xff]
        %v5325 = vld [vmem:[#allocation5 + $0x440] sm:$0xff]
        %v5326 = vld [vmem:[#allocation5 + $0x448] sm:$0xff]
        %v5327 = vld [vmem:[#allocation5 + $0x450] sm:$0xff]
        %v5328 = vld [vmem:[#allocation5 + $0x458] sm:$0xff]
        %v5329 = vld [vmem:[#allocation5 + $0x460] sm:$0xff]
        %v5330 = vld [vmem:[#allocation5 + $0x468] sm:$0xff]
        %v5331 = vld [vmem:[#allocation5 + $0x470] sm:$0xff]
        %v5332 = vld [vmem:[#allocation5 + $0x478] sm:$0xff]
        %v5333 = vld [vmem:[#allocation5 + $0x480] sm:$0xff]
        %v5334 = vld [vmem:[#allocation5 + $0x488] sm:$0xff]
        %v5335 = vld [vmem:[#allocation5 + $0x490] sm:$0xff]
        %v5336 = vld [vmem:[#allocation5 + $0x498] sm:$0xff]
        %v5337 = vld [vmem:[#allocation5 + $0x4a0] sm:$0xff]
        %v5338 = vld [vmem:[#allocation5 + $0x4a8] sm:$0xff]
        %v5339 = vld [vmem:[#allocation5 + $0x4b0] sm:$0xff]
        %v5340 = vld [vmem:[#allocation5 + $0x4b8] sm:$0xff]
        %v5341 = vld [vmem:[#allocation5 + $0x4c0] sm:$0xff]
        %v5342 = vld [vmem:[#allocation5 + $0x4c8] sm:$0xff]
        %v5343 = vld [vmem:[#allocation5 + $0x4d0] sm:$0xff]
        %v5344 = vld [vmem:[#allocation5 + $0x4d8] sm:$0xff]
        %v5345 = vld [vmem:[#allocation5 + $0x4e0] sm:$0xff]
        %v5346 = vld [vmem:[#allocation5 + $0x4e8] sm:$0xff]
        %v5347 = vld [vmem:[#allocation5 + $0x4f0] sm:$0xff]
        %v5348 = vld [vmem:[#allocation5 + $0x4f8] sm:$0xff]
        %v5349 = vld [vmem:[#allocation5 + $0x500] sm:$0xff]
        %v5350 = vld [vmem:[#allocation5 + $0x508] sm:$0xff]
        %v5351 = vld [vmem:[#allocation5 + $0x510] sm:$0xff]
        %v5352 = vld [vmem:[#allocation5 + $0x518] sm:$0xff]
        %v5353 = vld [vmem:[#allocation5 + $0x520] sm:$0xff]
        %v5354 = vld [vmem:[#allocation5 + $0x528] sm:$0xff]
        %v5355 = vld [vmem:[#allocation5 + $0x530] sm:$0xff]
        %v5356 = vld [vmem:[#allocation5 + $0x538] sm:$0xff]
        %v5357 = vld [vmem:[#allocation5 + $0x540] sm:$0xff]
        %v5358 = vld [vmem:[#allocation5 + $0x548] sm:$0xff]
        %v5359 = vld [vmem:[#allocation5 + $0x550] sm:$0xff]
        %v5360 = vld [vmem:[#allocation5 + $0x558] sm:$0xff]
        %v5361 = vld [vmem:[#allocation5 + $0x560] sm:$0xff]
        %v5362 = vld [vmem:[#allocation5 + $0x568] sm:$0xff]
        %v5363 = vld [vmem:[#allocation5 + $0x570] sm:$0xff]
        %v5364 = vld [vmem:[#allocation5 + $0x578] sm:$0xff]
        %v5365 = vld [vmem:[#allocation5 + $0x580] sm:$0xff]
        %v5366 = vld [vmem:[#allocation5 + $0x588] sm:$0xff]
        %v5367 = vld [vmem:[#allocation5 + $0x590] sm:$0xff]
        %v5368 = vld [vmem:[#allocation5 + $0x598] sm:$0xff]
        %v5369 = vld [vmem:[#allocation5 + $0x5a0] sm:$0xff]
        %v5370 = vld [vmem:[#allocation5 + $0x5a8] sm:$0xff]
        %v5371 = vld [vmem:[#allocation5 + $0x5b0] sm:$0xff]
        %v5372 = vld [vmem:[#allocation5 + $0x5b8] sm:$0xff]
        %v5373 = vld [vmem:[#allocation5 + $0x5c0] sm:$0xff]
        %v5374 = vld [vmem:[#allocation5 + $0x5c8] sm:$0xff]
        %v5375 = vld [vmem:[#allocation5 + $0x5d0] sm:$0xff]
        %v5376 = vld [vmem:[#allocation5 + $0x5d8] sm:$0xff]
        %v5377 = vld [vmem:[#allocation5 + $0x5e0] sm:$0xff]
        %v5378 = vld [vmem:[#allocation5 + $0x5e8] sm:$0xff]
        %v5379 = vld [vmem:[#allocation5 + $0x5f0] sm:$0xff]
        %v5380 = vld [vmem:[#allocation5 + $0x5f8] sm:$0xff]
        %v5381 = vld [vmem:[#allocation5 + $0x600] sm:$0xff]
        %v5382 = vld [vmem:[#allocation5 + $0x608] sm:$0xff]
        %v5383 = vld [vmem:[#allocation5 + $0x610] sm:$0xff]
        %v5384 = vld [vmem:[#allocation5 + $0x618] sm:$0xff]
        %v5385 = vld [vmem:[#allocation5 + $0x620] sm:$0xff]
        %v5386 = vld [vmem:[#allocation5 + $0x628] sm:$0xff]
        %v5387 = vld [vmem:[#allocation5 + $0x630] sm:$0xff]
        %v5388 = vld [vmem:[#allocation5 + $0x638] sm:$0xff]
        %v5389 = vld [vmem:[#allocation5 + $0x640] sm:$0xff]
        %v5390 = vld [vmem:[#allocation5 + $0x648] sm:$0xff]
        %v5391 = vld [vmem:[#allocation5 + $0x650] sm:$0xff]
        %v5392 = vld [vmem:[#allocation5 + $0x658] sm:$0xff]
        %v5393 = vld [vmem:[#allocation5 + $0x660] sm:$0xff]
        %v5394 = vld [vmem:[#allocation5 + $0x668] sm:$0xff]
        %v5395 = vld [vmem:[#allocation5 + $0x670] sm:$0xff]
        %v5396 = vld [vmem:[#allocation5 + $0x678] sm:$0xff]
        %v5397 = vld [vmem:[#allocation5 + $0x680] sm:$0xff]
        %v5398 = vld [vmem:[#allocation5 + $0x688] sm:$0xff]
        %v5399 = vld [vmem:[#allocation5 + $0x690] sm:$0xff]
        %v5400 = vld [vmem:[#allocation5 + $0x698] sm:$0xff]
        %v5401 = vld [vmem:[#allocation5 + $0x6a0] sm:$0xff]
        %v5402 = vld [vmem:[#allocation5 + $0x6a8] sm:$0xff]
        %v5403 = vld [vmem:[#allocation5 + $0x6b0] sm:$0xff]
        %v5404 = vld [vmem:[#allocation5 + $0x6b8] sm:$0xff]
        %v5405 = vld [vmem:[#allocation5 + $0x6c0] sm:$0xff]
        %v5406 = vld [vmem:[#allocation5 + $0x6c8] sm:$0xff]
        %v5407 = vld [vmem:[#allocation5 + $0x6d0] sm:$0xff]
        %v5408 = vld [vmem:[#allocation5 + $0x6d8] sm:$0xff]
        %v5409 = vld [vmem:[#allocation5 + $0x6e0] sm:$0xff]
        %v5410 = vld [vmem:[#allocation5 + $0x6e8] sm:$0xff]
        %v5411 = vld [vmem:[#allocation5 + $0x6f0] sm:$0xff]
        %v5412 = vld [vmem:[#allocation5 + $0x6f8] sm:$0xff]
        %v5413 = vld [vmem:[#allocation5 + $0x700] sm:$0xff]
        %v5414 = vld [vmem:[#allocation5 + $0x708] sm:$0xff]
        %v5415 = vld [vmem:[#allocation5 + $0x710] sm:$0xff]
        %v5416 = vld [vmem:[#allocation5 + $0x718] sm:$0xff]
        %v5417 = vld [vmem:[#allocation5 + $0x720] sm:$0xff]
        %v5418 = vld [vmem:[#allocation5 + $0x728] sm:$0xff]
        %v5419 = vld [vmem:[#allocation5 + $0x730] sm:$0xff]
        %v5420 = vld [vmem:[#allocation5 + $0x738] sm:$0xff]
        %v5421 = vld [vmem:[#allocation5 + $0x740] sm:$0xff]
        %v5422 = vld [vmem:[#allocation5 + $0x748] sm:$0xff]
        %v5423 = vld [vmem:[#allocation5 + $0x750] sm:$0xff]
        %v5424 = vld [vmem:[#allocation5 + $0x758] sm:$0xff]
        %v5425 = vld [vmem:[#allocation5 + $0x760] sm:$0xff]
        %v5426 = vld [vmem:[#allocation5 + $0x768] sm:$0xff]
        %v5427 = vld [vmem:[#allocation5 + $0x770] sm:$0xff]
        %v5428 = vld [vmem:[#allocation5 + $0x778] sm:$0xff]
        %v5429 = vld [vmem:[#allocation5 + $0x780] sm:$0xff]
        %v5430 = vld [vmem:[#allocation5 + $0x788] sm:$0xff]
        %v5431 = vld [vmem:[#allocation5 + $0x790] sm:$0xff]
        %v5432 = vld [vmem:[#allocation5 + $0x798] sm:$0xff]
        %v5433 = vld [vmem:[#allocation5 + $0x7a0] sm:$0xff]
        %v5434 = vld [vmem:[#allocation5 + $0x7a8] sm:$0xff]
        %v5435 = vld [vmem:[#allocation5 + $0x7b0] sm:$0xff]
        %v5436 = vld [vmem:[#allocation5 + $0x7b8] sm:$0xff]
        %v5437 = vld [vmem:[#allocation5 + $0x7c0] sm:$0xff]
        %v5438 = vld [vmem:[#allocation5 + $0x7c8] sm:$0xff]
        %v5439 = vld [vmem:[#allocation5 + $0x7d0] sm:$0xff]
        %v5440 = vld [vmem:[#allocation5 + $0x7d8] sm:$0xff]
        %v5441 = vld [vmem:[#allocation5 + $0x7e0] sm:$0xff]
        %v5442 = vld [vmem:[#allocation5 + $0x7e8] sm:$0xff]
        %v5443 = vld [vmem:[#allocation5 + $0x7f0] sm:$0xff]
        %v5444 = vld [vmem:[#allocation5 + $0x7f8] sm:$0xff]
        %v5445 = vld [vmem:[#allocation5 + $0x800] sm:$0xff]
        %v5446 = vld [vmem:[#allocation5 + $0x808] sm:$0xff]
        %v5447 = vld [vmem:[#allocation5 + $0x810] sm:$0xff]
        %v5448 = vld [vmem:[#allocation5 + $0x818] sm:$0xff]
        %v5449 = vld [vmem:[#allocation5 + $0x820] sm:$0xff]
        %v5450 = vld [vmem:[#allocation5 + $0x828] sm:$0xff]
        %v5451 = vld [vmem:[#allocation5 + $0x830] sm:$0xff]
        %v5452 = vld [vmem:[#allocation5 + $0x838] sm:$0xff]
        %v5453 = vld [vmem:[#allocation5 + $0x840] sm:$0xff]
        %v5454 = vld [vmem:[#allocation5 + $0x848] sm:$0xff]
        %v5455 = vld [vmem:[#allocation5 + $0x850] sm:$0xff]
        %v5456 = vld [vmem:[#allocation5 + $0x858] sm:$0xff]
        %v5457 = vld [vmem:[#allocation5 + $0x860] sm:$0xff]
        %v5458 = vld [vmem:[#allocation5 + $0x868] sm:$0xff]
        %v5459 = vld [vmem:[#allocation5 + $0x870] sm:$0xff]
        %v5460 = vld [vmem:[#allocation5 + $0x878] sm:$0xff]
        %v5461 = vld [vmem:[#allocation5 + $0x880] sm:$0xff]
        %v5462 = vld [vmem:[#allocation5 + $0x888] sm:$0xff]
        %v5463 = vld [vmem:[#allocation5 + $0x890] sm:$0xff]
        %v5464 = vld [vmem:[#allocation5 + $0x898] sm:$0xff]
        %v5465 = vld [vmem:[#allocation5 + $0x8a0] sm:$0xff]
        %v5466 = vld [vmem:[#allocation5 + $0x8a8] sm:$0xff]
        %v5467 = vld [vmem:[#allocation5 + $0x8b0] sm:$0xff]
        %v5468 = vld [vmem:[#allocation5 + $0x8b8] sm:$0xff]
        %v5469 = vld [vmem:[#allocation5 + $0x8c0] sm:$0xff]
        %v5470 = vld [vmem:[#allocation5 + $0x8c8] sm:$0xff]
        %v5471 = vld [vmem:[#allocation5 + $0x8d0] sm:$0xff]
        %v5472 = vld [vmem:[#allocation5 + $0x8d8] sm:$0xff]
        %v5473 = vld [vmem:[#allocation5 + $0x8e0] sm:$0xff]
        %v5474 = vld [vmem:[#allocation5 + $0x8e8] sm:$0xff]
        %v5475 = vld [vmem:[#allocation5 + $0x8f0] sm:$0xff]
        %v5476 = vld [vmem:[#allocation5 + $0x8f8] sm:$0xff]
        %v5477 = vld [vmem:[#allocation5 + $0x900] sm:$0xff]
        %v5478 = vld [vmem:[#allocation5 + $0x908] sm:$0xff]
        %v5479 = vld [vmem:[#allocation5 + $0x910] sm:$0xff]
        %v5480 = vld [vmem:[#allocation5 + $0x918] sm:$0xff]
        %v5481 = vld [vmem:[#allocation5 + $0x920] sm:$0xff]
        %v5482 = vld [vmem:[#allocation5 + $0x928] sm:$0xff]
        %v5483 = vld [vmem:[#allocation5 + $0x930] sm:$0xff]
        %v5484 = vld [vmem:[#allocation5 + $0x938] sm:$0xff]
        %v5485 = vld [vmem:[#allocation5 + $0x940] sm:$0xff]
        %v5486 = vld [vmem:[#allocation5 + $0x948] sm:$0xff]
        %v5487 = vld [vmem:[#allocation5 + $0x950] sm:$0xff]
        %v5488 = vld [vmem:[#allocation5 + $0x958] sm:$0xff]
        %v5489 = vld [vmem:[#allocation5 + $0x960] sm:$0xff]
        %v5490 = vld [vmem:[#allocation5 + $0x968] sm:$0xff]
        %v5491 = vld [vmem:[#allocation5 + $0x970] sm:$0xff]
        %v5492 = vld [vmem:[#allocation5 + $0x978] sm:$0xff]
        %v5493 = vld [vmem:[#allocation5 + $0x980] sm:$0xff]
        %v5494 = vld [vmem:[#allocation5 + $0x988] sm:$0xff]
        %v5495 = vld [vmem:[#allocation5 + $0x990] sm:$0xff]
        %v5496 = vld [vmem:[#allocation5 + $0x998] sm:$0xff]
        %v5497 = vld [vmem:[#allocation5 + $0x9a0] sm:$0xff]
        %v5498 = vld [vmem:[#allocation5 + $0x9a8] sm:$0xff]
        %v5499 = vld [vmem:[#allocation5 + $0x9b0] sm:$0xff]
        %v5500 = vld [vmem:[#allocation5 + $0x9b8] sm:$0xff]
        %v5501 = vld [vmem:[#allocation5 + $0x9c0] sm:$0xff]
        %v5502 = vld [vmem:[#allocation5 + $0x9c8] sm:$0xff]
        %v5503 = vld [vmem:[#allocation5 + $0x9d0] sm:$0xff]
        %v5504 = vld [vmem:[#allocation5 + $0x9d8] sm:$0xff]
        %v5505 = vld [vmem:[#allocation5 + $0x9e0] sm:$0xff]
        %v5506 = vld [vmem:[#allocation5 + $0x9e8] sm:$0xff]
        %v5507 = vld [vmem:[#allocation5 + $0x9f0] sm:$0xff]
        %v5508 = vld [vmem:[#allocation5 + $0x9f8] sm:$0xff]
        %v5509 = vld [vmem:[#allocation15] sm:$0xff]
        %v5510 = vld [vmem:[#allocation15 + $0x8] sm:$0xff]
        %v5511 = vld [vmem:[#allocation15 + $0x10] sm:$0xff]
        %v5512 = vld [vmem:[#allocation15 + $0x18] sm:$0xff]
        %v5513 = vld [vmem:[#allocation15 + $0x20] sm:$0xff]
        %v5514 = vld [vmem:[#allocation15 + $0x28] sm:$0xff]
        %v5515 = vld [vmem:[#allocation15 + $0x30] sm:$0xff]
        %v5516 = vld [vmem:[#allocation15 + $0x38] sm:$0xff]
        %v5517 = vld [vmem:[#allocation15 + $0x40] sm:$0xff]
        %v5518 = vld [vmem:[#allocation15 + $0x48] sm:$0xff]
        %v5519 = vld [vmem:[#allocation15 + $0x50] sm:$0xff]
        %v5520 = vld [vmem:[#allocation15 + $0x58] sm:$0xff]
        %v5521 = vld [vmem:[#allocation15 + $0x60] sm:$0xff]
        %v5522 = vld [vmem:[#allocation15 + $0x68] sm:$0xff]
        %v5523 = vld [vmem:[#allocation15 + $0x70] sm:$0xff]
        %v5524 = vld [vmem:[#allocation15 + $0x78] sm:$0xff]
        %v5525 = vld [vmem:[#allocation15 + $0x80] sm:$0xff]
        %v5526 = vld [vmem:[#allocation15 + $0x88] sm:$0xff]
        %v5527 = vld [vmem:[#allocation15 + $0x90] sm:$0xff]
        %v5528 = vld [vmem:[#allocation15 + $0x98] sm:$0xff]
        %v5529 = vld [vmem:[#allocation15 + $0xa0] sm:$0xff]
        %v5530 = vld [vmem:[#allocation15 + $0xa8] sm:$0xff]
        %v5531 = vld [vmem:[#allocation15 + $0xb0] sm:$0xff]
        %v5532 = vld [vmem:[#allocation15 + $0xb8] sm:$0xff]
        %v5533 = vld [vmem:[#allocation15 + $0xc0] sm:$0xff]
        %v5534 = vld [vmem:[#allocation15 + $0xc8] sm:$0xff]
        %v5535 = vld [vmem:[#allocation15 + $0xd0] sm:$0xff]
        %v5536 = vld [vmem:[#allocation15 + $0xd8] sm:$0xff]
        %v5537 = vld [vmem:[#allocation15 + $0xe0] sm:$0xff]
        %v5538 = vld [vmem:[#allocation15 + $0xe8] sm:$0xff]
        %v5539 = vld [vmem:[#allocation15 + $0xf0] sm:$0xff]
        %v5540 = vld [vmem:[#allocation15 + $0xf8] sm:$0xff]
        %v5541 = vld [vmem:[#allocation15 + $0x100] sm:$0xff]
        %v5542 = vld [vmem:[#allocation15 + $0x108] sm:$0xff]
        %v5543 = vld [vmem:[#allocation15 + $0x110] sm:$0xff]
        %v5544 = vld [vmem:[#allocation15 + $0x118] sm:$0xff]
        %v5545 = vld [vmem:[#allocation15 + $0x120] sm:$0xff]
        %v5546 = vld [vmem:[#allocation15 + $0x128] sm:$0xff]
        %v5547 = vld [vmem:[#allocation15 + $0x130] sm:$0xff]
        %v5548 = vld [vmem:[#allocation15 + $0x138] sm:$0xff]
        %v5549 = vld [vmem:[#allocation15 + $0x140] sm:$0xff]
        %v5550 = vld [vmem:[#allocation15 + $0x148] sm:$0xff]
        %v5551 = vld [vmem:[#allocation15 + $0x150] sm:$0xff]
        %v5552 = vld [vmem:[#allocation15 + $0x158] sm:$0xff]
        %v5553 = vld [vmem:[#allocation15 + $0x160] sm:$0xff]
        %v5554 = vld [vmem:[#allocation15 + $0x168] sm:$0xff]
        %v5555 = vld [vmem:[#allocation15 + $0x170] sm:$0xff]
        %v5556 = vld [vmem:[#allocation15 + $0x178] sm:$0xff]
        %v5557 = vld [vmem:[#allocation15 + $0x180] sm:$0xff]
        %v5558 = vld [vmem:[#allocation15 + $0x188] sm:$0xff]
        %v5559 = vld [vmem:[#allocation15 + $0x190] sm:$0xff]
        %v5560 = vld [vmem:[#allocation15 + $0x198] sm:$0xff]
        %v5561 = vld [vmem:[#allocation15 + $0x1a0] sm:$0xff]
        %v5562 = vld [vmem:[#allocation15 + $0x1a8] sm:$0xff]
        %v5563 = vld [vmem:[#allocation15 + $0x1b0] sm:$0xff]
        %v5564 = vld [vmem:[#allocation15 + $0x1b8] sm:$0xff]
        %v5565 = vld [vmem:[#allocation15 + $0x1c0] sm:$0xff]
        %v5566 = vld [vmem:[#allocation15 + $0x1c8] sm:$0xff]
        %v5567 = vld [vmem:[#allocation15 + $0x1d0] sm:$0xff]
        %v5568 = vld [vmem:[#allocation15 + $0x1d8] sm:$0xff]
        %v5569 = vld [vmem:[#allocation15 + $0x1e0] sm:$0xff]
        %v5570 = vld [vmem:[#allocation15 + $0x1e8] sm:$0xff]
        %v5571 = vld [vmem:[#allocation15 + $0x1f0] sm:$0xff]
        %v5572 = vld [vmem:[#allocation15 + $0x1f8] sm:$0xff]
        %v5573 = vld [vmem:[#allocation15 + $0x200] sm:$0xff]
        %v5574 = vld [vmem:[#allocation15 + $0x208] sm:$0xff]
        %v5575 = vld [vmem:[#allocation15 + $0x210] sm:$0xff]
        %v5576 = vld [vmem:[#allocation15 + $0x218] sm:$0xff]
        %v5577 = vld [vmem:[#allocation15 + $0x220] sm:$0xff]
        %v5578 = vld [vmem:[#allocation15 + $0x228] sm:$0xff]
        %v5579 = vld [vmem:[#allocation15 + $0x230] sm:$0xff]
        %v5580 = vld [vmem:[#allocation15 + $0x238] sm:$0xff]
        %v5581 = vld [vmem:[#allocation15 + $0x240] sm:$0xff]
        %v5582 = vld [vmem:[#allocation15 + $0x248] sm:$0xff]
        %v5583 = vld [vmem:[#allocation15 + $0x250] sm:$0xff]
        %v5584 = vld [vmem:[#allocation15 + $0x258] sm:$0xff]
        %v5585 = vld [vmem:[#allocation15 + $0x260] sm:$0xff]
        %v5586 = vld [vmem:[#allocation15 + $0x268] sm:$0xff]
        %v5587 = vld [vmem:[#allocation15 + $0x270] sm:$0xff]
        %v5588 = vld [vmem:[#allocation15 + $0x278] sm:$0xff]
        %v5589 = vld [vmem:[#allocation15 + $0x280] sm:$0xff]
        %v5590 = vld [vmem:[#allocation15 + $0x288] sm:$0xff]
        %v5591 = vld [vmem:[#allocation15 + $0x290] sm:$0xff]
        %v5592 = vld [vmem:[#allocation15 + $0x298] sm:$0xff]
        %v5593 = vld [vmem:[#allocation15 + $0x2a0] sm:$0xff]
        %v5594 = vld [vmem:[#allocation15 + $0x2a8] sm:$0xff]
        %v5595 = vld [vmem:[#allocation15 + $0x2b0] sm:$0xff]
        %v5596 = vld [vmem:[#allocation15 + $0x2b8] sm:$0xff]
        %v5597 = vld [vmem:[#allocation15 + $0x2c0] sm:$0xff]
        %v5598 = vld [vmem:[#allocation15 + $0x2c8] sm:$0xff]
        %v5599 = vld [vmem:[#allocation15 + $0x2d0] sm:$0xff]
        %v5600 = vld [vmem:[#allocation15 + $0x2d8] sm:$0xff]
        %v5601 = vld [vmem:[#allocation15 + $0x2e0] sm:$0xff]
        %v5602 = vld [vmem:[#allocation15 + $0x2e8] sm:$0xff]
        %v5603 = vld [vmem:[#allocation15 + $0x2f0] sm:$0xff]
        %v5604 = vld [vmem:[#allocation15 + $0x2f8] sm:$0xff]
        %v5605 = vld [vmem:[#allocation15 + $0x300] sm:$0xff]
        %v5606 = vld [vmem:[#allocation15 + $0x308] sm:$0xff]
        %v5607 = vld [vmem:[#allocation15 + $0x310] sm:$0xff]
        %v5608 = vld [vmem:[#allocation15 + $0x318] sm:$0xff]
        %v5609 = vld [vmem:[#allocation15 + $0x320] sm:$0xff]
        %v5610 = vld [vmem:[#allocation15 + $0x328] sm:$0xff]
        %v5611 = vld [vmem:[#allocation15 + $0x330] sm:$0xff]
        %v5612 = vld [vmem:[#allocation15 + $0x338] sm:$0xff]
        %v5613 = vld [vmem:[#allocation15 + $0x340] sm:$0xff]
        %v5614 = vld [vmem:[#allocation15 + $0x348] sm:$0xff]
        %v5615 = vld [vmem:[#allocation15 + $0x350] sm:$0xff]
        %v5616 = vld [vmem:[#allocation15 + $0x358] sm:$0xff]
        %v5617 = vld [vmem:[#allocation15 + $0x360] sm:$0xff]
        %v5618 = vld [vmem:[#allocation15 + $0x368] sm:$0xff]
        %v5619 = vld [vmem:[#allocation15 + $0x370] sm:$0xff]
        %v5620 = vld [vmem:[#allocation15 + $0x378] sm:$0xff]
        %v5621 = vld [vmem:[#allocation15 + $0x380] sm:$0xff]
        %v5622 = vld [vmem:[#allocation15 + $0x388] sm:$0xff]
        %v5623 = vld [vmem:[#allocation15 + $0x390] sm:$0xff]
        %v5624 = vld [vmem:[#allocation15 + $0x398] sm:$0xff]
        %v5625 = vld [vmem:[#allocation15 + $0x3a0] sm:$0xff]
        %v5626 = vld [vmem:[#allocation15 + $0x3a8] sm:$0xff]
        %v5627 = vld [vmem:[#allocation15 + $0x3b0] sm:$0xff]
        %v5628 = vld [vmem:[#allocation15 + $0x3b8] sm:$0xff]
        %v5629 = vld [vmem:[#allocation15 + $0x3c0] sm:$0xff]
        %v5630 = vld [vmem:[#allocation15 + $0x3c8] sm:$0xff]
        %v5631 = vld [vmem:[#allocation15 + $0x3d0] sm:$0xff]
        %v5632 = vld [vmem:[#allocation15 + $0x3d8] sm:$0xff]
        %v5633 = vld [vmem:[#allocation15 + $0x3e0] sm:$0xff]
        %v5634 = vld [vmem:[#allocation15 + $0x3e8] sm:$0xff]
        %v5635 = vld [vmem:[#allocation15 + $0x3f0] sm:$0xff]
        %v5636 = vld [vmem:[#allocation15 + $0x3f8] sm:$0xff]
        %v5637 = vld [vmem:[#allocation15 + $0x400] sm:$0xff]
        %v5638 = vld [vmem:[#allocation15 + $0x408] sm:$0xff]
        %v5639 = vld [vmem:[#allocation15 + $0x410] sm:$0xff]
        %v5640 = vld [vmem:[#allocation15 + $0x418] sm:$0xff]
        %v5641 = vld [vmem:[#allocation15 + $0x420] sm:$0xff]
        %v5642 = vld [vmem:[#allocation15 + $0x428] sm:$0xff]
        %v5643 = vld [vmem:[#allocation15 + $0x430] sm:$0xff]
        %v5644 = vld [vmem:[#allocation15 + $0x438] sm:$0xff]
        %v5645 = vld [vmem:[#allocation15 + $0x440] sm:$0xff]
        %v5646 = vld [vmem:[#allocation15 + $0x448] sm:$0xff]
        %v5647 = vld [vmem:[#allocation15 + $0x450] sm:$0xff]
        %v5648 = vld [vmem:[#allocation15 + $0x458] sm:$0xff]
        %v5649 = vld [vmem:[#allocation15 + $0x460] sm:$0xff]
        %v5650 = vld [vmem:[#allocation15 + $0x468] sm:$0xff]
        %v5651 = vld [vmem:[#allocation15 + $0x470] sm:$0xff]
        %v5652 = vld [vmem:[#allocation15 + $0x478] sm:$0xff]
        %v5653 = vld [vmem:[#allocation15 + $0x480] sm:$0xff]
        %v5654 = vld [vmem:[#allocation15 + $0x488] sm:$0xff]
        %v5655 = vld [vmem:[#allocation15 + $0x490] sm:$0xff]
        %v5656 = vld [vmem:[#allocation15 + $0x498] sm:$0xff]
        %v5657 = vld [vmem:[#allocation15 + $0x4a0] sm:$0xff]
        %v5658 = vld [vmem:[#allocation15 + $0x4a8] sm:$0xff]
        %v5659 = vld [vmem:[#allocation15 + $0x4b0] sm:$0xff]
        %v5660 = vld [vmem:[#allocation15 + $0x4b8] sm:$0xff]
        %v5661 = vld [vmem:[%s11] sm:$0x1]
        %v5663 = vlaneseq
        %v5664 = vshrl.u32 %v5663, 7
        %v5665 = vsub.s32 0, %v5664
        %v5666 = vrot.slane %v5661, %v5665
        %v5669 = vsel %vm576, %v5198, 0
        %v5672 = vsel %vm576, %v5208, 0
        %v5675 = vsel %vm576, %v5218, 0
        %v5678 = vsel %vm576, %v5228, 0
        %v5681 = vsel %vm576, %v5238, 0
        %v5684 = vsel %vm576, %v5248, 0
        %v5687 = vsel %vm576, %v5258, 0
        %v5690 = vsel %vm576, %v5268, 0
        %v5693 = vsel %vm576, %v5278, 0
        %v5696 = vsel %vm576, %v5288, 0
        %v5699 = vsel %vm576, %v5298, 0
        %v5702 = vsel %vm576, %v5308, 0
        %v5705 = vsel %vm576, %v5318, 0
        %v5708 = vsel %vm576, %v5328, 0
        %v5711 = vsel %vm576, %v5338, 0
        %v5714 = vsel %vm576, %v5348, 0
        %v5717 = vsel %vm576, %v5358, 0
        %v5720 = vsel %vm576, %v5368, 0
        %v5723 = vsel %vm576, %v5378, 0
        %v5726 = vsel %vm576, %v5388, 0
        %v5729 = vsel %vm576, %v5398, 0
        %v5732 = vsel %vm576, %v5408, 0
        %v5735 = vsel %vm576, %v5418, 0
        %v5738 = vsel %vm576, %v5428, 0
        %v5741 = vsel %vm576, %v5438, 0
        %v5744 = vsel %vm576, %v5448, 0
        %v5747 = vsel %vm576, %v5458, 0
        %v5750 = vsel %vm576, %v5468, 0
        %v5753 = vsel %vm576, %v5478, 0
        %v5756 = vsel %vm576, %v5488, 0
        %v5759 = vsel %vm576, %v5498, 0
        %v5762 = vsel %vm576, %v5508, 0
        %5764 = vmatprep.subr.mxu0 0.0
        %5765 = vmatpush1.msra.mxu0 %v5509
        %5766 = vmatprep.subr.mxu0 0.0
        %5767 = vmatpush1.msra.mxu0 %v5510
        %5768 = vmatprep.subr.mxu0 0.0
        %5769 = vmatpush1.msra.mxu0 %v5511
        %5770 = vmatprep.subr.mxu0 0.0
        %5771 = vmatpush1.msra.mxu0 %v5512
        %5772 = vmatprep.subr.mxu0 0.0
        %5773 = vmatpush1.msra.mxu0 %v5513
        %5774 = vmatprep.subr.mxu0 0.0
        %5775 = vmatpush1.msra.mxu0 %v5514
        %5776 = vmatprep.subr.mxu0 0.0
        %5777 = vmatpush1.msra.mxu0 %v5515
        %5778 = vmatprep.subr.mxu0 0.0
        %5779 = vmatpush1.msra.mxu0 %v5516
        %5780 = vmatprep.subr.mxu0 0.0
        %5781 = vmatpush1.msra.mxu0 %v5517
        %5782 = vmatprep.subr.mxu0 0.0
        %5783 = vmatpush1.msra.mxu0 %v5518
        %5784 = vmatprep.subr.mxu0 0.0
        %5785 = vmatpush1.msra.mxu0 %v5519
        %5786 = vmatprep.subr.mxu0 0.0
        %5787 = vmatpush1.msra.mxu0 %v5520
        %5788 = vmatprep.subr.mxu0 0.0
        %5789 = vmatpush1.msra.mxu0 %v5521
        %5790 = vmatprep.subr.mxu0 0.0
        %5791 = vmatpush1.msra.mxu0 %v5522
        %5792 = vmatprep.subr.mxu0 0.0
        %5793 = vmatpush1.msra.mxu0 %v5523
        %5794 = vmatprep.subr.mxu0 0.0
        %5795 = vmatpush1.msra.mxu0 %v5524
        %5796 = vmatprep.subr.mxu0 0.0
        %5797 = vmatpush1.msra.mxu0 %v5525
        %5798 = vmatprep.subr.mxu0 0.0
        %5799 = vmatpush1.msra.mxu0 %v5526
        %5800 = vmatprep.subr.mxu0 0.0
        %5801 = vmatpush1.msra.mxu0 %v5527
        %5802 = vmatprep.subr.mxu0 0.0
        %5803 = vmatpush1.msra.mxu0 %v5528
        %5804 = vmatprep.subr.mxu0 0.0
        %5805 = vmatpush1.msra.mxu0 %v5529
        %5806 = vmatprep.subr.mxu0 0.0
        %5807 = vmatpush1.msra.mxu0 %v5530
        %5808 = vmatprep.subr.mxu0 0.0
        %5809 = vmatpush1.msra.mxu0 %v5531
        %5810 = vmatprep.subr.mxu0 0.0
        %5811 = vmatpush1.msra.mxu0 %v5532
        %5812 = vmatprep.subr.mxu0 0.0
        %5813 = vmatpush1.msra.mxu0 %v5533
        %5814 = vmatprep.subr.mxu0 0.0
        %5815 = vmatpush1.msra.mxu0 %v5534
        %5816 = vmatprep.subr.mxu0 0.0
        %5817 = vmatpush1.msra.mxu0 %v5535
        %5818 = vmatprep.subr.mxu0 0.0
        %5819 = vmatpush1.msra.mxu0 %v5536
        %5820 = vmatprep.subr.mxu0 0.0
        %5821 = vmatpush1.msra.mxu0 %v5537
        %5822 = vmatprep.subr.mxu0 0.0
        %5823 = vmatpush1.msra.mxu0 %v5538
        %5824 = vmatprep.subr.mxu0 0.0
        %5825 = vmatpush1.msra.mxu0 %v5539
        %5826 = vmatprep.subr.mxu0 0.0
        %5827 = vmatpush1.msra.mxu0 %v5540
        %5828 = vmatprep.mubr.f32.mxu0 %v5190
        %5829 = vmatmul.mubr.f32.gmra.mrb[0].mxu0 %v5189
        %v5830 = vpop.f32.mrb[0].mxu0
        %v5831 = vadd.f32 %v5666, %v5830
        %v5832 = vpop.f32.mrb[0].mxu0
        %5833 = vmatprep.mubr.f32.mxu0 %v5200
        %5834 = vmatmul.mubr.f32.gmra.mrb[0].mxu0 %v5199
        %v5835 = vpop.f32.mrb[0].mxu0
        %v5836 = vadd.f32 %v5666, %v5835
        %v5837 = vpop.f32.mrb[0].mxu0
        %5838 = vmatprep.mubr.f32.mxu0 %v5210
        %5839 = vmatmul.mubr.f32.gmra.mrb[0].mxu0 %v5209
        %v5840 = vpop.f32.mrb[0].mxu0
        %v5841 = vadd.f32 %v5666, %v5840
        %v5842 = vpop.f32.mrb[0].mxu0
        %5843 = vmatprep.mubr.f32.mxu0 %v5220
        %5844 = vmatmul.mubr.f32.gmra.mrb[0].mxu0 %v5219
        %v5845 = vpop.f32.mrb[0].mxu0
        %v5846 = vadd.f32 %v5666, %v5845
        %v5847 = vpop.f32.mrb[0].mxu0
        %5848 = vmatprep.mubr.f32.mxu0 %v5230
        %5849 = vmatmul.mubr.f32.gmra.mrb[0].mxu0 %v5229
        %v5850 = vpop.f32.mrb[0].mxu0
        %v5851 = vadd.f32 %v5666, %v5850
        %v5852 = vpop.f32.mrb[0].mxu0
        %5853 = vmatprep.mubr.f32.mxu0 %v5240
        %5854 = vmatmul.mubr.f32.gmra.mrb[0].mxu0 %v5239
        %v5855 = vpop.f32.mrb[0].mxu0
        %v5856 = vadd.f32 %v5666, %v5855
        %v5857 = vpop.f32.mrb[0].mxu0
        %5858 = vmatprep.mubr.f32.mxu0 %v5250
        %5859 = vmatmul.mubr.f32.gmra.mrb[0].mxu0 %v5249
        %v5860 = vpop.f32.mrb[0].mxu0
        %v5861 = vadd.f32 %v5666, %v5860
        %v5862 = vpop.f32.mrb[0].mxu0
        %5863 = vmatprep.mubr.f32.mxu0 %v5260
        %5864 = vmatmul.mubr.f32.gmra.mrb[0].mxu0 %v5259
        %v5865 = vpop.f32.mrb[0].mxu0
        %v5866 = vadd.f32 %v5666, %v5865
        %v5867 = vpop.f32.mrb[0].mxu0
        %5868 = vmatprep.mubr.f32.mxu0 %v5270
        %5869 = vmatmul.mubr.f32.gmra.mrb[0].mxu0 %v5269
        %v5870 = vpop.f32.mrb[0].mxu0
        %v5871 = vadd.f32 %v5666, %v5870
        %v5872 = vpop.f32.mrb[0].mxu0
        %5873 = vmatprep.mubr.f32.mxu0 %v5280
        %5874 = vmatmul.mubr.f32.gmra.mrb[0].mxu0 %v5279
        %v5875 = vpop.f32.mrb[0].mxu0
        %v5876 = vadd.f32 %v5666, %v5875
        %v5877 = vpop.f32.mrb[0].mxu0
        %5878 = vmatprep.mubr.f32.mxu0 %v5290
        %5879 = vmatmul.mubr.f32.gmra.mrb[0].mxu0 %v5289
        %v5880 = vpop.f32.mrb[0].mxu0
        %v5881 = vadd.f32 %v5666, %v5880
        %v5882 = vpop.f32.mrb[0].mxu0
        %5883 = vmatprep.mubr.f32.mxu0 %v5300
        %5884 = vmatmul.mubr.f32.gmra.mrb[0].mxu0 %v5299
        %v5885 = vpop.f32.mrb[0].mxu0
        %v5886 = vadd.f32 %v5666, %v5885
        %v5887 = vpop.f32.mrb[0].mxu0
        %5888 = vmatprep.mubr.f32.mxu0 %v5310
        %5889 = vmatmul.mubr.f32.gmra.mrb[0].mxu0 %v5309
        %v5890 = vpop.f32.mrb[0].mxu0
        %v5891 = vadd.f32 %v5666, %v5890
        %v5892 = vpop.f32.mrb[0].mxu0
        %5893 = vmatprep.mubr.f32.mxu0 %v5320
        %5894 = vmatmul.mubr.f32.gmra.mrb[0].mxu0 %v5319
        %v5895 = vpop.f32.mrb[0].mxu0
        %v5896 = vadd.f32 %v5666, %v5895
        %v5897 = vpop.f32.mrb[0].mxu0
        %5898 = vmatprep.mubr.f32.mxu0 %v5330
        %5899 = vmatmul.mubr.f32.gmra.mrb[0].mxu0 %v5329
        %v5900 = vpop.f32.mrb[0].mxu0
        %v5901 = vadd.f32 %v5666, %v5900
        %v5902 = vpop.f32.mrb[0].mxu0
        %5903 = vmatprep.mubr.f32.mxu0 %v5340
        %5904 = vmatmul.mubr.f32.gmra.mrb[0].mxu0 %v5339
        %v5905 = vpop.f32.mrb[0].mxu0
        %v5906 = vadd.f32 %v5666, %v5905
        %v5907 = vpop.f32.mrb[0].mxu0
        %5908 = vmatprep.mubr.f32.mxu0 %v5350
        %5909 = vmatmul.mubr.f32.gmra.mrb[0].mxu0 %v5349
        %v5910 = vpop.f32.mrb[0].mxu0
        %v5911 = vadd.f32 %v5666, %v5910
        %v5912 = vpop.f32.mrb[0].mxu0
        %5913 = vmatprep.mubr.f32.mxu0 %v5360
        %5914 = vmatmul.mubr.f32.gmra.mrb[0].mxu0 %v5359
        %v5915 = vpop.f32.mrb[0].mxu0
        %v5916 = vadd.f32 %v5666, %v5915
        %v5917 = vpop.f32.mrb[0].mxu0
        %5918 = vmatprep.mubr.f32.mxu0 %v5370
        %5919 = vmatmul.mubr.f32.gmra.mrb[0].mxu0 %v5369
        %v5920 = vpop.f32.mrb[0].mxu0
        %v5921 = vadd.f32 %v5666, %v5920
        %v5922 = vpop.f32.mrb[0].mxu0
        %5923 = vmatprep.mubr.f32.mxu0 %v5380
        %5924 = vmatmul.mubr.f32.gmra.mrb[0].mxu0 %v5379
        %v5925 = vpop.f32.mrb[0].mxu0
        %v5926 = vadd.f32 %v5666, %v5925
        %v5927 = vpop.f32.mrb[0].mxu0
        %5928 = vmatprep.mubr.f32.mxu0 %v5390
        %5929 = vmatmul.mubr.f32.gmra.mrb[0].mxu0 %v5389
        %v5930 = vpop.f32.mrb[0].mxu0
        %v5931 = vadd.f32 %v5666, %v5930
        %v5932 = vpop.f32.mrb[0].mxu0
        %5933 = vmatprep.mubr.f32.mxu0 %v5400
        %5934 = vmatmul.mubr.f32.gmra.mrb[0].mxu0 %v5399
        %v5935 = vpop.f32.mrb[0].mxu0
        %v5936 = vadd.f32 %v5666, %v5935
        %v5937 = vpop.f32.mrb[0].mxu0
        %5938 = vmatprep.mubr.f32.mxu0 %v5410
        %5939 = vmatmul.mubr.f32.gmra.mrb[0].mxu0 %v5409
        %v5940 = vpop.f32.mrb[0].mxu0
        %v5941 = vadd.f32 %v5666, %v5940
        %v5942 = vpop.f32.mrb[0].mxu0
        %5943 = vmatprep.mubr.f32.mxu0 %v5420
        %5944 = vmatmul.mubr.f32.gmra.mrb[0].mxu0 %v5419
        %v5945 = vpop.f32.mrb[0].mxu0
        %v5946 = vadd.f32 %v5666, %v5945
        %v5947 = vpop.f32.mrb[0].mxu0
        %5948 = vmatprep.mubr.f32.mxu0 %v5430
        %5949 = vmatmul.mubr.f32.gmra.mrb[0].mxu0 %v5429
        %v5950 = vpop.f32.mrb[0].mxu0
        %v5951 = vadd.f32 %v5666, %v5950
        %v5952 = vpop.f32.mrb[0].mxu0
        %5953 = vmatprep.mubr.f32.mxu0 %v5440
        %5954 = vmatmul.mubr.f32.gmra.mrb[0].mxu0 %v5439
        %v5955 = vpop.f32.mrb[0].mxu0
        %v5956 = vadd.f32 %v5666, %v5955
        %v5957 = vpop.f32.mrb[0].mxu0
        %5958 = vmatprep.mubr.f32.mxu0 %v5450
        %5959 = vmatmul.mubr.f32.gmra.mrb[0].mxu0 %v5449
        %v5960 = vpop.f32.mrb[0].mxu0
        %v5961 = vadd.f32 %v5666, %v5960
        %v5962 = vpop.f32.mrb[0].mxu0
        %5963 = vmatprep.mubr.f32.mxu0 %v5460
        %5964 = vmatmul.mubr.f32.gmra.mrb[0].mxu0 %v5459
        %v5965 = vpop.f32.mrb[0].mxu0
        %v5966 = vadd.f32 %v5666, %v5965
        %v5967 = vpop.f32.mrb[0].mxu0
        %5968 = vmatprep.mubr.f32.mxu0 %v5470
        %5969 = vmatmul.mubr.f32.gmra.mrb[0].mxu0 %v5469
        %v5970 = vpop.f32.mrb[0].mxu0
        %v5971 = vadd.f32 %v5666, %v5970
        %v5972 = vpop.f32.mrb[0].mxu0
        %5973 = vmatprep.mubr.f32.mxu0 %v5480
        %5974 = vmatmul.mubr.f32.gmra.mrb[0].mxu0 %v5479
        %v5975 = vpop.f32.mrb[0].mxu0
        %v5976 = vadd.f32 %v5666, %v5975
        %v5977 = vpop.f32.mrb[0].mxu0
        %5978 = vmatprep.mubr.f32.mxu0 %v5490
        %5979 = vmatmul.mubr.f32.gmra.mrb[0].mxu0 %v5489
        %v5980 = vpop.f32.mrb[0].mxu0
        %v5981 = vadd.f32 %v5666, %v5980
        %v5982 = vpop.f32.mrb[0].mxu0
        %5983 = vmatprep.mubr.f32.mxu0 %v5500
        %5984 = vmatmul.mubr.f32.gmra.mrb[0].mxu0 %v5499
        %v5985 = vpop.f32.mrb[0].mxu0
        %v5986 = vadd.f32 %v5666, %v5985
        %v5987 = vpop.f32.mrb[0].mxu0
        %5988 = vdwg.mxu0
        %5989 = vmatprep.subr.mxu0 0.0
        %5990 = vmatpush1.msra.mxu0 %v5541
        %5991 = vmatprep.subr.mxu0 0.0
        %5992 = vmatpush1.msra.mxu0 %v5542
        %5993 = vmatprep.subr.mxu0 0.0
        %5994 = vmatpush1.msra.mxu0 %v5543
        %5995 = vmatprep.subr.mxu0 0.0
        %5996 = vmatpush1.msra.mxu0 %v5544
        %5997 = vmatprep.subr.mxu0 0.0
        %5998 = vmatpush1.msra.mxu0 %v5545
        %5999 = vmatprep.subr.mxu0 0.0
        %6000 = vmatpush1.msra.mxu0 %v5546
        %6001 = vmatprep.subr.mxu0 0.0
        %6002 = vmatpush1.msra.mxu0 %v5547
        %6003 = vmatprep.subr.mxu0 0.0
        %6004 = vmatpush1.msra.mxu0 %v5548
        %6005 = vmatprep.subr.mxu0 0.0
        %6006 = vmatpush1.msra.mxu0 %v5549
        %6007 = vmatprep.subr.mxu0 0.0
        %6008 = vmatpush1.msra.mxu0 %v5550
        %6009 = vmatprep.subr.mxu0 0.0
        %6010 = vmatpush1.msra.mxu0 %v5551
        %6011 = vmatprep.subr.mxu0 0.0
        %6012 = vmatpush1.msra.mxu0 %v5552
        %6013 = vmatprep.subr.mxu0 0.0
        %6014 = vmatpush1.msra.mxu0 %v5553
        %6015 = vmatprep.subr.mxu0 0.0
        %6016 = vmatpush1.msra.mxu0 %v5554
        %6017 = vmatprep.subr.mxu0 0.0
        %6018 = vmatpush1.msra.mxu0 %v5555
        %6019 = vmatprep.subr.mxu0 0.0
        %6020 = vmatpush1.msra.mxu0 %v5556
        %6021 = vmatprep.subr.mxu0 0.0
        %6022 = vmatpush1.msra.mxu0 %v5557
        %6023 = vmatprep.subr.mxu0 0.0
        %6024 = vmatpush1.msra.mxu0 %v5558
        %6025 = vmatprep.subr.mxu0 0.0
        %6026 = vmatpush1.msra.mxu0 %v5559
        %6027 = vmatprep.subr.mxu0 0.0
        %6028 = vmatpush1.msra.mxu0 %v5560
        %6029 = vmatprep.subr.mxu0 0.0
        %6030 = vmatpush1.msra.mxu0 %v5561
        %6031 = vmatprep.subr.mxu0 0.0
        %6032 = vmatpush1.msra.mxu0 %v5562
        %6033 = vmatprep.subr.mxu0 0.0
        %6034 = vmatpush1.msra.mxu0 %v5563
        %6035 = vmatprep.subr.mxu0 0.0
        %6036 = vmatpush1.msra.mxu0 %v5564
        %6037 = vmatprep.subr.mxu0 0.0
        %6038 = vmatpush1.msra.mxu0 %v5565
        %6039 = vmatprep.subr.mxu0 0.0
        %6040 = vmatpush1.msra.mxu0 %v5566
        %6041 = vmatprep.subr.mxu0 0.0
        %6042 = vmatpush1.msra.mxu0 %v5567
        %6043 = vmatprep.subr.mxu0 0.0
        %6044 = vmatpush1.msra.mxu0 %v5568
        %6045 = vmatprep.subr.mxu0 0.0
        %6046 = vmatpush1.msra.mxu0 %v5569
        %6047 = vmatprep.subr.mxu0 0.0
        %6048 = vmatpush1.msra.mxu0 %v5570
        %6049 = vmatprep.subr.mxu0 0.0
        %6050 = vmatpush1.msra.mxu0 %v5571
        %6051 = vmatprep.subr.mxu0 0.0
        %6052 = vmatpush1.msra.mxu0 %v5572
        %6053 = vmatprep.mubr.f32.mxu0 %v5192
        %6054 = vmatmul.mubr.f32.gmra.mrb[0].mxu0 %v5191
        %v6055 = vpop.f32.mrb[0].mxu0
        %v6056 = vadd.f32 %v5831, %v6055
        %v6057 = vpop.f32.mrb[0].mxu0
        %6058 = vmatprep.mubr.f32.mxu0 %v5202
        %6059 = vmatmul.mubr.f32.gmra.mrb[0].mxu0 %v5201
        %v6060 = vpop.f32.mrb[0].mxu0
        %v6061 = vadd.f32 %v5836, %v6060
        %v6062 = vpop.f32.mrb[0].mxu0
        %6063 = vmatprep.mubr.f32.mxu0 %v5212
        %6064 = vmatmul.mubr.f32.gmra.mrb[0].mxu0 %v5211
        %v6065 = vpop.f32.mrb[0].mxu0
        %v6066 = vadd.f32 %v5841, %v6065
        %v6067 = vpop.f32.mrb[0].mxu0
        %6068 = vmatprep.mubr.f32.mxu0 %v5222
        %6069 = vmatmul.mubr.f32.gmra.mrb[0].mxu0 %v5221
        %v6070 = vpop.f32.mrb[0].mxu0
        %v6071 = vadd.f32 %v5846, %v6070
        %v6072 = vpop.f32.mrb[0].mxu0
        %6073 = vmatprep.mubr.f32.mxu0 %v5232
        %6074 = vmatmul.mubr.f32.gmra.mrb[0].mxu0 %v5231
        %v6075 = vpop.f32.mrb[0].mxu0
        %v6076 = vadd.f32 %v5851, %v6075
        %v6077 = vpop.f32.mrb[0].mxu0
        %6078 = vmatprep.mubr.f32.mxu0 %v5242
        %6079 = vmatmul.mubr.f32.gmra.mrb[0].mxu0 %v5241
        %v6080 = vpop.f32.mrb[0].mxu0
        %v6081 = vadd.f32 %v5856, %v6080
        %v6082 = vpop.f32.mrb[0].mxu0
        %6083 = vmatprep.mubr.f32.mxu0 %v5252
        %6084 = vmatmul.mubr.f32.gmra.mrb[0].mxu0 %v5251
        %v6085 = vpop.f32.mrb[0].mxu0
        %v6086 = vadd.f32 %v5861, %v6085
        %v6087 = vpop.f32.mrb[0].mxu0
        %6088 = vmatprep.mubr.f32.mxu0 %v5262
        %6089 = vmatmul.mubr.f32.gmra.mrb[0].mxu0 %v5261
        %v6090 = vpop.f32.mrb[0].mxu0
        %v6091 = vadd.f32 %v5866, %v6090
        %v6092 = vpop.f32.mrb[0].mxu0
        %6093 = vmatprep.mubr.f32.mxu0 %v5272
        %6094 = vmatmul.mubr.f32.gmra.mrb[0].mxu0 %v5271
        %v6095 = vpop.f32.mrb[0].mxu0
        %v6096 = vadd.f32 %v5871, %v6095
        %v6097 = vpop.f32.mrb[0].mxu0
        %6098 = vmatprep.mubr.f32.mxu0 %v5282
        %6099 = vmatmul.mubr.f32.gmra.mrb[0].mxu0 %v5281
        %v6100 = vpop.f32.mrb[0].mxu0
        %v6101 = vadd.f32 %v5876, %v6100
        %v6102 = vpop.f32.mrb[0].mxu0
        %6103 = vmatprep.mubr.f32.mxu0 %v5292
        %6104 = vmatmul.mubr.f32.gmra.mrb[0].mxu0 %v5291
        %v6105 = vpop.f32.mrb[0].mxu0
        %v6106 = vadd.f32 %v5881, %v6105
        %v6107 = vpop.f32.mrb[0].mxu0
        %6108 = vmatprep.mubr.f32.mxu0 %v5302
        %6109 = vmatmul.mubr.f32.gmra.mrb[0].mxu0 %v5301
        %v6110 = vpop.f32.mrb[0].mxu0
        %v6111 = vadd.f32 %v5886, %v6110
        %v6112 = vpop.f32.mrb[0].mxu0
        %6113 = vmatprep.mubr.f32.mxu0 %v5312
        %6114 = vmatmul.mubr.f32.gmra.mrb[0].mxu0 %v5311
        %v6115 = vpop.f32.mrb[0].mxu0
        %v6116 = vadd.f32 %v5891, %v6115
        %v6117 = vpop.f32.mrb[0].mxu0
        %6118 = vmatprep.mubr.f32.mxu0 %v5322
        %6119 = vmatmul.mubr.f32.gmra.mrb[0].mxu0 %v5321
        %v6120 = vpop.f32.mrb[0].mxu0
        %v6121 = vadd.f32 %v5896, %v6120
        %v6122 = vpop.f32.mrb[0].mxu0
        %6123 = vmatprep.mubr.f32.mxu0 %v5332
        %6124 = vmatmul.mubr.f32.gmra.mrb[0].mxu0 %v5331
        %v6125 = vpop.f32.mrb[0].mxu0
        %v6126 = vadd.f32 %v5901, %v6125
        %v6127 = vpop.f32.mrb[0].mxu0
        %6128 = vmatprep.mubr.f32.mxu0 %v5342
        %6129 = vmatmul.mubr.f32.gmra.mrb[0].mxu0 %v5341
        %v6130 = vpop.f32.mrb[0].mxu0
        %v6131 = vadd.f32 %v5906, %v6130
        %v6132 = vpop.f32.mrb[0].mxu0
        %6133 = vmatprep.mubr.f32.mxu0 %v5352
        %6134 = vmatmul.mubr.f32.gmra.mrb[0].mxu0 %v5351
        %v6135 = vpop.f32.mrb[0].mxu0
        %v6136 = vadd.f32 %v5911, %v6135
        %v6137 = vpop.f32.mrb[0].mxu0
        %6138 = vmatprep.mubr.f32.mxu0 %v5362
        %6139 = vmatmul.mubr.f32.gmra.mrb[0].mxu0 %v5361
        %v6140 = vpop.f32.mrb[0].mxu0
        %v6141 = vadd.f32 %v5916, %v6140
        %v6142 = vpop.f32.mrb[0].mxu0
        %6143 = vmatprep.mubr.f32.mxu0 %v5372
        %6144 = vmatmul.mubr.f32.gmra.mrb[0].mxu0 %v5371
        %v6145 = vpop.f32.mrb[0].mxu0
        %v6146 = vadd.f32 %v5921, %v6145
        %v6147 = vpop.f32.mrb[0].mxu0
        %6148 = vmatprep.mubr.f32.mxu0 %v5382
        %6149 = vmatmul.mubr.f32.gmra.mrb[0].mxu0 %v5381
        %v6150 = vpop.f32.mrb[0].mxu0
        %v6151 = vadd.f32 %v5926, %v6150
        %v6152 = vpop.f32.mrb[0].mxu0
        %6153 = vmatprep.mubr.f32.mxu0 %v5392
        %6154 = vmatmul.mubr.f32.gmra.mrb[0].mxu0 %v5391
        %v6155 = vpop.f32.mrb[0].mxu0
        %v6156 = vadd.f32 %v5931, %v6155
        %v6157 = vpop.f32.mrb[0].mxu0
        %6158 = vmatprep.mubr.f32.mxu0 %v5402
        %6159 = vmatmul.mubr.f32.gmra.mrb[0].mxu0 %v5401
        %v6160 = vpop.f32.mrb[0].mxu0
        %v6161 = vadd.f32 %v5936, %v6160
        %v6162 = vpop.f32.mrb[0].mxu0
        %6163 = vmatprep.mubr.f32.mxu0 %v5412
        %6164 = vmatmul.mubr.f32.gmra.mrb[0].mxu0 %v5411
        %v6165 = vpop.f32.mrb[0].mxu0
        %v6166 = vadd.f32 %v5941, %v6165
        %v6167 = vpop.f32.mrb[0].mxu0
        %6168 = vmatprep.mubr.f32.mxu0 %v5422
        %6169 = vmatmul.mubr.f32.gmra.mrb[0].mxu0 %v5421
        %v6170 = vpop.f32.mrb[0].mxu0
        %v6171 = vadd.f32 %v5946, %v6170
        %v6172 = vpop.f32.mrb[0].mxu0
        %6173 = vmatprep.mubr.f32.mxu0 %v5432
        %6174 = vmatmul.mubr.f32.gmra.mrb[0].mxu0 %v5431
        %v6175 = vpop.f32.mrb[0].mxu0
        %v6176 = vadd.f32 %v5951, %v6175
        %v6177 = vpop.f32.mrb[0].mxu0
        %6178 = vmatprep.mubr.f32.mxu0 %v5442
        %6179 = vmatmul.mubr.f32.gmra.mrb[0].mxu0 %v5441
        %v6180 = vpop.f32.mrb[0].mxu0
        %v6181 = vadd.f32 %v5956, %v6180
        %v6182 = vpop.f32.mrb[0].mxu0
        %6183 = vmatprep.mubr.f32.mxu0 %v5452
        %6184 = vmatmul.mubr.f32.gmra.mrb[0].mxu0 %v5451
        %v6185 = vpop.f32.mrb[0].mxu0
        %v6186 = vadd.f32 %v5961, %v6185
        %v6187 = vpop.f32.mrb[0].mxu0
        %6188 = vmatprep.mubr.f32.mxu0 %v5462
        %6189 = vmatmul.mubr.f32.gmra.mrb[0].mxu0 %v5461
        %v6190 = vpop.f32.mrb[0].mxu0
        %v6191 = vadd.f32 %v5966, %v6190
        %v6192 = vpop.f32.mrb[0].mxu0
        %6193 = vmatprep.mubr.f32.mxu0 %v5472
        %6194 = vmatmul.mubr.f32.gmra.mrb[0].mxu0 %v5471
        %v6195 = vpop.f32.mrb[0].mxu0
        %v6196 = vadd.f32 %v5971, %v6195
        %v6197 = vpop.f32.mrb[0].mxu0
        %6198 = vmatprep.mubr.f32.mxu0 %v5482
        %6199 = vmatmul.mubr.f32.gmra.mrb[0].mxu0 %v5481
        %v6200 = vpop.f32.mrb[0].mxu0
        %v6201 = vadd.f32 %v5976, %v6200
        %v6202 = vpop.f32.mrb[0].mxu0
        %6203 = vmatprep.mubr.f32.mxu0 %v5492
        %6204 = vmatmul.mubr.f32.gmra.mrb[0].mxu0 %v5491
        %v6205 = vpop.f32.mrb[0].mxu0
        %v6206 = vadd.f32 %v5981, %v6205
        %v6207 = vpop.f32.mrb[0].mxu0
        %6208 = vmatprep.mubr.f32.mxu0 %v5502
        %6209 = vmatmul.mubr.f32.gmra.mrb[0].mxu0 %v5501
        %v6210 = vpop.f32.mrb[0].mxu0
        %v6211 = vadd.f32 %v5986, %v6210
        %v6212 = vpop.f32.mrb[0].mxu0
        %6213 = vdwg.mxu0
        %6214 = vmatprep.subr.mxu0 0.0
        %6215 = vmatpush1.msra.mxu0 %v5573
        %6216 = vmatprep.subr.mxu0 0.0
        %6217 = vmatpush1.msra.mxu0 %v5574
        %6218 = vmatprep.subr.mxu0 0.0
        %6219 = vmatpush1.msra.mxu0 %v5575
        %6220 = vmatprep.subr.mxu0 0.0
        %6221 = vmatpush1.msra.mxu0 %v5576
        %6222 = vmatprep.subr.mxu0 0.0
        %6223 = vmatpush1.msra.mxu0 %v5577
        %6224 = vmatprep.subr.mxu0 0.0
        %6225 = vmatpush1.msra.mxu0 %v5578
        %6226 = vmatprep.subr.mxu0 0.0
        %6227 = vmatpush1.msra.mxu0 %v5579
        %6228 = vmatprep.subr.mxu0 0.0
        %6229 = vmatpush1.msra.mxu0 %v5580
        %6230 = vmatprep.subr.mxu0 0.0
        %6231 = vmatpush1.msra.mxu0 %v5581
        %6232 = vmatprep.subr.mxu0 0.0
        %6233 = vmatpush1.msra.mxu0 %v5582
        %6234 = vmatprep.subr.mxu0 0.0
        %6235 = vmatpush1.msra.mxu0 %v5583
        %6236 = vmatprep.subr.mxu0 0.0
        %6237 = vmatpush1.msra.mxu0 %v5584
        %6238 = vmatprep.subr.mxu0 0.0
        %6239 = vmatpush1.msra.mxu0 %v5585
        %6240 = vmatprep.subr.mxu0 0.0
        %6241 = vmatpush1.msra.mxu0 %v5586
        %6242 = vmatprep.subr.mxu0 0.0
        %6243 = vmatpush1.msra.mxu0 %v5587
        %6244 = vmatprep.subr.mxu0 0.0
        %6245 = vmatpush1.msra.mxu0 %v5588
        %6246 = vmatprep.subr.mxu0 0.0
        %6247 = vmatpush1.msra.mxu0 %v5589
        %6248 = vmatprep.subr.mxu0 0.0
        %6249 = vmatpush1.msra.mxu0 %v5590
        %6250 = vmatprep.subr.mxu0 0.0
        %6251 = vmatpush1.msra.mxu0 %v5591
        %6252 = vmatprep.subr.mxu0 0.0
        %6253 = vmatpush1.msra.mxu0 %v5592
        %6254 = vmatprep.subr.mxu0 0.0
        %6255 = vmatpush1.msra.mxu0 %v5593
        %6256 = vmatprep.subr.mxu0 0.0
        %6257 = vmatpush1.msra.mxu0 %v5594
        %6258 = vmatprep.subr.mxu0 0.0
        %6259 = vmatpush1.msra.mxu0 %v5595
        %6260 = vmatprep.subr.mxu0 0.0
        %6261 = vmatpush1.msra.mxu0 %v5596
        %6262 = vmatprep.subr.mxu0 0.0
        %6263 = vmatpush1.msra.mxu0 %v5597
        %6264 = vmatprep.subr.mxu0 0.0
        %6265 = vmatpush1.msra.mxu0 %v5598
        %6266 = vmatprep.subr.mxu0 0.0
        %6267 = vmatpush1.msra.mxu0 %v5599
        %6268 = vmatprep.subr.mxu0 0.0
        %6269 = vmatpush1.msra.mxu0 %v5600
        %6270 = vmatprep.subr.mxu0 0.0
        %6271 = vmatpush1.msra.mxu0 %v5601
        %6272 = vmatprep.subr.mxu0 0.0
        %6273 = vmatpush1.msra.mxu0 %v5602
        %6274 = vmatprep.subr.mxu0 0.0
        %6275 = vmatpush1.msra.mxu0 %v5603
        %6276 = vmatprep.subr.mxu0 0.0
        %6277 = vmatpush1.msra.mxu0 %v5604
        %6278 = vmatprep.mubr.f32.mxu0 %v5194
        %6279 = vmatmul.mubr.f32.gmra.mrb[0].mxu0 %v5193
        %v6280 = vpop.f32.mrb[0].mxu0
        %v6281 = vadd.f32 %v6056, %v6280
        %v6282 = vpop.f32.mrb[0].mxu0
        %6283 = vmatprep.mubr.f32.mxu0 %v5204
        %6284 = vmatmul.mubr.f32.gmra.mrb[0].mxu0 %v5203
        %v6285 = vpop.f32.mrb[0].mxu0
        %v6286 = vadd.f32 %v6061, %v6285
        %v6287 = vpop.f32.mrb[0].mxu0
        %6288 = vmatprep.mubr.f32.mxu0 %v5214
        %6289 = vmatmul.mubr.f32.gmra.mrb[0].mxu0 %v5213
        %v6290 = vpop.f32.mrb[0].mxu0
        %v6291 = vadd.f32 %v6066, %v6290
        %v6292 = vpop.f32.mrb[0].mxu0
        %6293 = vmatprep.mubr.f32.mxu0 %v5224
        %6294 = vmatmul.mubr.f32.gmra.mrb[0].mxu0 %v5223
        %v6295 = vpop.f32.mrb[0].mxu0
        %v6296 = vadd.f32 %v6071, %v6295
        %v6297 = vpop.f32.mrb[0].mxu0
        %6298 = vmatprep.mubr.f32.mxu0 %v5234
        %6299 = vmatmul.mubr.f32.gmra.mrb[0].mxu0 %v5233
        %v6300 = vpop.f32.mrb[0].mxu0
        %v6301 = vadd.f32 %v6076, %v6300
        %v6302 = vpop.f32.mrb[0].mxu0
        %6303 = vmatprep.mubr.f32.mxu0 %v5244
        %6304 = vmatmul.mubr.f32.gmra.mrb[0].mxu0 %v5243
        %v6305 = vpop.f32.mrb[0].mxu0
        %v6306 = vadd.f32 %v6081, %v6305
        %v6307 = vpop.f32.mrb[0].mxu0
        %6308 = vmatprep.mubr.f32.mxu0 %v5254
        %6309 = vmatmul.mubr.f32.gmra.mrb[0].mxu0 %v5253
        %v6310 = vpop.f32.mrb[0].mxu0
        %v6311 = vadd.f32 %v6086, %v6310
        %v6312 = vpop.f32.mrb[0].mxu0
        %6313 = vmatprep.mubr.f32.mxu0 %v5264
        %6314 = vmatmul.mubr.f32.gmra.mrb[0].mxu0 %v5263
        %v6315 = vpop.f32.mrb[0].mxu0
        %v6316 = vadd.f32 %v6091, %v6315
        %v6317 = vpop.f32.mrb[0].mxu0
        %6318 = vmatprep.mubr.f32.mxu0 %v5274
        %6319 = vmatmul.mubr.f32.gmra.mrb[0].mxu0 %v5273
        %v6320 = vpop.f32.mrb[0].mxu0
        %v6321 = vadd.f32 %v6096, %v6320
        %v6322 = vpop.f32.mrb[0].mxu0
        %6323 = vmatprep.mubr.f32.mxu0 %v5284
        %6324 = vmatmul.mubr.f32.gmra.mrb[0].mxu0 %v5283
        %v6325 = vpop.f32.mrb[0].mxu0
        %v6326 = vadd.f32 %v6101, %v6325
        %v6327 = vpop.f32.mrb[0].mxu0
        %6328 = vmatprep.mubr.f32.mxu0 %v5294
        %6329 = vmatmul.mubr.f32.gmra.mrb[0].mxu0 %v5293
        %v6330 = vpop.f32.mrb[0].mxu0
        %v6331 = vadd.f32 %v6106, %v6330
        %v6332 = vpop.f32.mrb[0].mxu0
        %6333 = vmatprep.mubr.f32.mxu0 %v5304
        %6334 = vmatmul.mubr.f32.gmra.mrb[0].mxu0 %v5303
        %v6335 = vpop.f32.mrb[0].mxu0
        %v6336 = vadd.f32 %v6111, %v6335
        %v6337 = vpop.f32.mrb[0].mxu0
        %6338 = vmatprep.mubr.f32.mxu0 %v5314
        %6339 = vmatmul.mubr.f32.gmra.mrb[0].mxu0 %v5313
        %v6340 = vpop.f32.mrb[0].mxu0
        %v6341 = vadd.f32 %v6116, %v6340
        %v6342 = vpop.f32.mrb[0].mxu0
        %6343 = vmatprep.mubr.f32.mxu0 %v5324
        %6344 = vmatmul.mubr.f32.gmra.mrb[0].mxu0 %v5323
        %v6345 = vpop.f32.mrb[0].mxu0
        %v6346 = vadd.f32 %v6121, %v6345
        %v6347 = vpop.f32.mrb[0].mxu0
        %6348 = vmatprep.mubr.f32.mxu0 %v5334
        %6349 = vmatmul.mubr.f32.gmra.mrb[0].mxu0 %v5333
        %v6350 = vpop.f32.mrb[0].mxu0
        %v6351 = vadd.f32 %v6126, %v6350
        %v6352 = vpop.f32.mrb[0].mxu0
        %6353 = vmatprep.mubr.f32.mxu0 %v5344
        %6354 = vmatmul.mubr.f32.gmra.mrb[0].mxu0 %v5343
        %v6355 = vpop.f32.mrb[0].mxu0
        %v6356 = vadd.f32 %v6131, %v6355
        %v6357 = vpop.f32.mrb[0].mxu0
        %6358 = vmatprep.mubr.f32.mxu0 %v5354
        %6359 = vmatmul.mubr.f32.gmra.mrb[0].mxu0 %v5353
        %v6360 = vpop.f32.mrb[0].mxu0
        %v6361 = vadd.f32 %v6136, %v6360
        %v6362 = vpop.f32.mrb[0].mxu0
        %6363 = vmatprep.mubr.f32.mxu0 %v5364
        %6364 = vmatmul.mubr.f32.gmra.mrb[0].mxu0 %v5363
        %v6365 = vpop.f32.mrb[0].mxu0
        %v6366 = vadd.f32 %v6141, %v6365
        %v6367 = vpop.f32.mrb[0].mxu0
        %6368 = vmatprep.mubr.f32.mxu0 %v5374
        %6369 = vmatmul.mubr.f32.gmra.mrb[0].mxu0 %v5373
        %v6370 = vpop.f32.mrb[0].mxu0
        %v6371 = vadd.f32 %v6146, %v6370
        %v6372 = vpop.f32.mrb[0].mxu0
        %6373 = vmatprep.mubr.f32.mxu0 %v5384
        %6374 = vmatmul.mubr.f32.gmra.mrb[0].mxu0 %v5383
        %v6375 = vpop.f32.mrb[0].mxu0
        %v6376 = vadd.f32 %v6151, %v6375
        %v6377 = vpop.f32.mrb[0].mxu0
        %6378 = vmatprep.mubr.f32.mxu0 %v5394
        %6379 = vmatmul.mubr.f32.gmra.mrb[0].mxu0 %v5393
        %v6380 = vpop.f32.mrb[0].mxu0
        %v6381 = vadd.f32 %v6156, %v6380
        %v6382 = vpop.f32.mrb[0].mxu0
        %6383 = vmatprep.mubr.f32.mxu0 %v5404
        %6384 = vmatmul.mubr.f32.gmra.mrb[0].mxu0 %v5403
        %v6385 = vpop.f32.mrb[0].mxu0
        %v6386 = vadd.f32 %v6161, %v6385
        %v6387 = vpop.f32.mrb[0].mxu0
        %6388 = vmatprep.mubr.f32.mxu0 %v5414
        %6389 = vmatmul.mubr.f32.gmra.mrb[0].mxu0 %v5413
        %v6390 = vpop.f32.mrb[0].mxu0
        %v6391 = vadd.f32 %v6166, %v6390
        %v6392 = vpop.f32.mrb[0].mxu0
        %6393 = vmatprep.mubr.f32.mxu0 %v5424
        %6394 = vmatmul.mubr.f32.gmra.mrb[0].mxu0 %v5423
        %v6395 = vpop.f32.mrb[0].mxu0
        %v6396 = vadd.f32 %v6171, %v6395
        %v6397 = vpop.f32.mrb[0].mxu0
        %6398 = vmatprep.mubr.f32.mxu0 %v5434
        %6399 = vmatmul.mubr.f32.gmra.mrb[0].mxu0 %v5433
        %v6400 = vpop.f32.mrb[0].mxu0
        %v6401 = vadd.f32 %v6176, %v6400
        %v6402 = vpop.f32.mrb[0].mxu0
        %6403 = vmatprep.mubr.f32.mxu0 %v5444
        %6404 = vmatmul.mubr.f32.gmra.mrb[0].mxu0 %v5443
        %v6405 = vpop.f32.mrb[0].mxu0
        %v6406 = vadd.f32 %v6181, %v6405
        %v6407 = vpop.f32.mrb[0].mxu0
        %6408 = vmatprep.mubr.f32.mxu0 %v5454
        %6409 = vmatmul.mubr.f32.gmra.mrb[0].mxu0 %v5453
        %v6410 = vpop.f32.mrb[0].mxu0
        %v6411 = vadd.f32 %v6186, %v6410
        %v6412 = vpop.f32.mrb[0].mxu0
        %6413 = vmatprep.mubr.f32.mxu0 %v5464
        %6414 = vmatmul.mubr.f32.gmra.mrb[0].mxu0 %v5463
        %v6415 = vpop.f32.mrb[0].mxu0
        %v6416 = vadd.f32 %v6191, %v6415
        %v6417 = vpop.f32.mrb[0].mxu0
        %6418 = vmatprep.mubr.f32.mxu0 %v5474
        %6419 = vmatmul.mubr.f32.gmra.mrb[0].mxu0 %v5473
        %v6420 = vpop.f32.mrb[0].mxu0
        %v6421 = vadd.f32 %v6196, %v6420
        %v6422 = vpop.f32.mrb[0].mxu0
        %6423 = vmatprep.mubr.f32.mxu0 %v5484
        %6424 = vmatmul.mubr.f32.gmra.mrb[0].mxu0 %v5483
        %v6425 = vpop.f32.mrb[0].mxu0
        %v6426 = vadd.f32 %v6201, %v6425
        %v6427 = vpop.f32.mrb[0].mxu0
        %6428 = vmatprep.mubr.f32.mxu0 %v5494
        %6429 = vmatmul.mubr.f32.gmra.mrb[0].mxu0 %v5493
        %v6430 = vpop.f32.mrb[0].mxu0
        %v6431 = vadd.f32 %v6206, %v6430
        %v6432 = vpop.f32.mrb[0].mxu0
        %6433 = vmatprep.mubr.f32.mxu0 %v5504
        %6434 = vmatmul.mubr.f32.gmra.mrb[0].mxu0 %v5503
        %v6435 = vpop.f32.mrb[0].mxu0
        %v6436 = vadd.f32 %v6211, %v6435
        %v6437 = vpop.f32.mrb[0].mxu0
        %6438 = vdwg.mxu0
        %6439 = vmatprep.subr.mxu0 0.0
        %6440 = vmatpush1.msra.mxu0 %v5605
        %6441 = vmatprep.subr.mxu0 0.0
        %6442 = vmatpush1.msra.mxu0 %v5606
        %6443 = vmatprep.subr.mxu0 0.0
        %6444 = vmatpush1.msra.mxu0 %v5607
        %6445 = vmatprep.subr.mxu0 0.0
        %6446 = vmatpush1.msra.mxu0 %v5608
        %6447 = vmatprep.subr.mxu0 0.0
        %6448 = vmatpush1.msra.mxu0 %v5609
        %6449 = vmatprep.subr.mxu0 0.0
        %6450 = vmatpush1.msra.mxu0 %v5610
        %6451 = vmatprep.subr.mxu0 0.0
        %6452 = vmatpush1.msra.mxu0 %v5611
        %6453 = vmatprep.subr.mxu0 0.0
        %6454 = vmatpush1.msra.mxu0 %v5612
        %6455 = vmatprep.subr.mxu0 0.0
        %6456 = vmatpush1.msra.mxu0 %v5613
        %6457 = vmatprep.subr.mxu0 0.0
        %6458 = vmatpush1.msra.mxu0 %v5614
        %6459 = vmatprep.subr.mxu0 0.0
        %6460 = vmatpush1.msra.mxu0 %v5615
        %6461 = vmatprep.subr.mxu0 0.0
        %6462 = vmatpush1.msra.mxu0 %v5616
        %6463 = vmatprep.subr.mxu0 0.0
        %6464 = vmatpush1.msra.mxu0 %v5617
        %6465 = vmatprep.subr.mxu0 0.0
        %6466 = vmatpush1.msra.mxu0 %v5618
        %6467 = vmatprep.subr.mxu0 0.0
        %6468 = vmatpush1.msra.mxu0 %v5619
        %6469 = vmatprep.subr.mxu0 0.0
        %6470 = vmatpush1.msra.mxu0 %v5620
        %6471 = vmatprep.subr.mxu0 0.0
        %6472 = vmatpush1.msra.mxu0 %v5621
        %6473 = vmatprep.subr.mxu0 0.0
        %6474 = vmatpush1.msra.mxu0 %v5622
        %6475 = vmatprep.subr.mxu0 0.0
        %6476 = vmatpush1.msra.mxu0 %v5623
        %6477 = vmatprep.subr.mxu0 0.0
        %6478 = vmatpush1.msra.mxu0 %v5624
        %6479 = vmatprep.subr.mxu0 0.0
        %6480 = vmatpush1.msra.mxu0 %v5625
        %6481 = vmatprep.subr.mxu0 0.0
        %6482 = vmatpush1.msra.mxu0 %v5626
        %6483 = vmatprep.subr.mxu0 0.0
        %6484 = vmatpush1.msra.mxu0 %v5627
        %6485 = vmatprep.subr.mxu0 0.0
        %6486 = vmatpush1.msra.mxu0 %v5628
        %6487 = vmatprep.subr.mxu0 0.0
        %6488 = vmatpush1.msra.mxu0 %v5629
        %6489 = vmatprep.subr.mxu0 0.0
        %6490 = vmatpush1.msra.mxu0 %v5630
        %6491 = vmatprep.subr.mxu0 0.0
        %6492 = vmatpush1.msra.mxu0 %v5631
        %6493 = vmatprep.subr.mxu0 0.0
        %6494 = vmatpush1.msra.mxu0 %v5632
        %6495 = vmatprep.subr.mxu0 0.0
        %6496 = vmatpush1.msra.mxu0 %v5633
        %6497 = vmatprep.subr.mxu0 0.0
        %6498 = vmatpush1.msra.mxu0 %v5634
        %6499 = vmatprep.subr.mxu0 0.0
        %6500 = vmatpush1.msra.mxu0 %v5635
        %6501 = vmatprep.subr.mxu0 0.0
        %6502 = vmatpush1.msra.mxu0 %v5636
        %6503 = vmatprep.mubr.f32.mxu0 %v5196
        %6504 = vmatmul.mubr.f32.gmra.mrb[0].mxu0 %v5195
        %v6505 = vpop.f32.mrb[0].mxu0
        %v6506 = vadd.f32 %v6281, %v6505
        %v6507 = vpop.f32.mrb[0].mxu0
        %6508 = vmatprep.mubr.f32.mxu0 %v5206
        %6509 = vmatmul.mubr.f32.gmra.mrb[0].mxu0 %v5205
        %v6510 = vpop.f32.mrb[0].mxu0
        %v6511 = vadd.f32 %v6286, %v6510
        %v6512 = vpop.f32.mrb[0].mxu0
        %6513 = vmatprep.mubr.f32.mxu0 %v5216
        %6514 = vmatmul.mubr.f32.gmra.mrb[0].mxu0 %v5215
        %v6515 = vpop.f32.mrb[0].mxu0
        %v6516 = vadd.f32 %v6291, %v6515
        %v6517 = vpop.f32.mrb[0].mxu0
        %6518 = vmatprep.mubr.f32.mxu0 %v5226
        %6519 = vmatmul.mubr.f32.gmra.mrb[0].mxu0 %v5225
        %v6520 = vpop.f32.mrb[0].mxu0
        %v6521 = vadd.f32 %v6296, %v6520
        %v6522 = vpop.f32.mrb[0].mxu0
        %6523 = vmatprep.mubr.f32.mxu0 %v5236
        %6524 = vmatmul.mubr.f32.gmra.mrb[0].mxu0 %v5235
        %v6525 = vpop.f32.mrb[0].mxu0
        %v6526 = vadd.f32 %v6301, %v6525
        %v6527 = vpop.f32.mrb[0].mxu0
        %6528 = vmatprep.mubr.f32.mxu0 %v5246
        %6529 = vmatmul.mubr.f32.gmra.mrb[0].mxu0 %v5245
        %v6530 = vpop.f32.mrb[0].mxu0
        %v6531 = vadd.f32 %v6306, %v6530
        %v6532 = vpop.f32.mrb[0].mxu0
        %6533 = vmatprep.mubr.f32.mxu0 %v5256
        %6534 = vmatmul.mubr.f32.gmra.mrb[0].mxu0 %v5255
        %v6535 = vpop.f32.mrb[0].mxu0
        %v6536 = vadd.f32 %v6311, %v6535
        %v6537 = vpop.f32.mrb[0].mxu0
        %6538 = vmatprep.mubr.f32.mxu0 %v5266
        %6539 = vmatmul.mubr.f32.gmra.mrb[0].mxu0 %v5265
        %v6540 = vpop.f32.mrb[0].mxu0
        %v6541 = vadd.f32 %v6316, %v6540
        %v6542 = vpop.f32.mrb[0].mxu0
        %6543 = vmatprep.mubr.f32.mxu0 %v5276
        %6544 = vmatmul.mubr.f32.gmra.mrb[0].mxu0 %v5275
        %v6545 = vpop.f32.mrb[0].mxu0
        %v6546 = vadd.f32 %v6321, %v6545
        %v6547 = vpop.f32.mrb[0].mxu0
        %6548 = vmatprep.mubr.f32.mxu0 %v5286
        %6549 = vmatmul.mubr.f32.gmra.mrb[0].mxu0 %v5285
        %v6550 = vpop.f32.mrb[0].mxu0
        %v6551 = vadd.f32 %v6326, %v6550
        %v6552 = vpop.f32.mrb[0].mxu0
        %6553 = vmatprep.mubr.f32.mxu0 %v5296
        %6554 = vmatmul.mubr.f32.gmra.mrb[0].mxu0 %v5295
        %v6555 = vpop.f32.mrb[0].mxu0
        %v6556 = vadd.f32 %v6331, %v6555
        %v6557 = vpop.f32.mrb[0].mxu0
        %6558 = vmatprep.mubr.f32.mxu0 %v5306
        %6559 = vmatmul.mubr.f32.gmra.mrb[0].mxu0 %v5305
        %v6560 = vpop.f32.mrb[0].mxu0
        %v6561 = vadd.f32 %v6336, %v6560
        %v6562 = vpop.f32.mrb[0].mxu0
        %6563 = vmatprep.mubr.f32.mxu0 %v5316
        %6564 = vmatmul.mubr.f32.gmra.mrb[0].mxu0 %v5315
        %v6565 = vpop.f32.mrb[0].mxu0
        %v6566 = vadd.f32 %v6341, %v6565
        %v6567 = vpop.f32.mrb[0].mxu0
        %6568 = vmatprep.mubr.f32.mxu0 %v5326
        %6569 = vmatmul.mubr.f32.gmra.mrb[0].mxu0 %v5325
        %v6570 = vpop.f32.mrb[0].mxu0
        %v6571 = vadd.f32 %v6346, %v6570
        %v6572 = vpop.f32.mrb[0].mxu0
        %6573 = vmatprep.mubr.f32.mxu0 %v5336
        %6574 = vmatmul.mubr.f32.gmra.mrb[0].mxu0 %v5335
        %v6575 = vpop.f32.mrb[0].mxu0
        %v6576 = vadd.f32 %v6351, %v6575
        %v6577 = vpop.f32.mrb[0].mxu0
        %6578 = vmatprep.mubr.f32.mxu0 %v5346
        %6579 = vmatmul.mubr.f32.gmra.mrb[0].mxu0 %v5345
        %v6580 = vpop.f32.mrb[0].mxu0
        %v6581 = vadd.f32 %v6356, %v6580
        %v6582 = vpop.f32.mrb[0].mxu0
        %6583 = vmatprep.mubr.f32.mxu0 %v5356
        %6584 = vmatmul.mubr.f32.gmra.mrb[0].mxu0 %v5355
        %v6585 = vpop.f32.mrb[0].mxu0
        %v6586 = vadd.f32 %v6361, %v6585
        %v6587 = vpop.f32.mrb[0].mxu0
        %6588 = vmatprep.mubr.f32.mxu0 %v5366
        %6589 = vmatmul.mubr.f32.gmra.mrb[0].mxu0 %v5365
        %v6590 = vpop.f32.mrb[0].mxu0
        %v6591 = vadd.f32 %v6366, %v6590
        %v6592 = vpop.f32.mrb[0].mxu0
        %6593 = vmatprep.mubr.f32.mxu0 %v5376
        %6594 = vmatmul.mubr.f32.gmra.mrb[0].mxu0 %v5375
        %v6595 = vpop.f32.mrb[0].mxu0
        %v6596 = vadd.f32 %v6371, %v6595
        %v6597 = vpop.f32.mrb[0].mxu0
        %6598 = vmatprep.mubr.f32.mxu0 %v5386
        %6599 = vmatmul.mubr.f32.gmra.mrb[0].mxu0 %v5385
        %v6600 = vpop.f32.mrb[0].mxu0
        %v6601 = vadd.f32 %v6376, %v6600
        %v6602 = vpop.f32.mrb[0].mxu0
        %6603 = vmatprep.mubr.f32.mxu0 %v5396
        %6604 = vmatmul.mubr.f32.gmra.mrb[0].mxu0 %v5395
        %v6605 = vpop.f32.mrb[0].mxu0
        %v6606 = vadd.f32 %v6381, %v6605
        %v6607 = vpop.f32.mrb[0].mxu0
        %6608 = vmatprep.mubr.f32.mxu0 %v5406
        %6609 = vmatmul.mubr.f32.gmra.mrb[0].mxu0 %v5405
        %v6610 = vpop.f32.mrb[0].mxu0
        %v6611 = vadd.f32 %v6386, %v6610
        %v6612 = vpop.f32.mrb[0].mxu0
        %6613 = vmatprep.mubr.f32.mxu0 %v5416
        %6614 = vmatmul.mubr.f32.gmra.mrb[0].mxu0 %v5415
        %v6615 = vpop.f32.mrb[0].mxu0
        %v6616 = vadd.f32 %v6391, %v6615
        %v6617 = vpop.f32.mrb[0].mxu0
        %6618 = vmatprep.mubr.f32.mxu0 %v5426
        %6619 = vmatmul.mubr.f32.gmra.mrb[0].mxu0 %v5425
        %v6620 = vpop.f32.mrb[0].mxu0
        %v6621 = vadd.f32 %v6396, %v6620
        %v6622 = vpop.f32.mrb[0].mxu0
        %6623 = vmatprep.mubr.f32.mxu0 %v5436
        %6624 = vmatmul.mubr.f32.gmra.mrb[0].mxu0 %v5435
        %v6625 = vpop.f32.mrb[0].mxu0
        %v6626 = vadd.f32 %v6401, %v6625
        %v6627 = vpop.f32.mrb[0].mxu0
        %6628 = vmatprep.mubr.f32.mxu0 %v5446
        %6629 = vmatmul.mubr.f32.gmra.mrb[0].mxu0 %v5445
        %v6630 = vpop.f32.mrb[0].mxu0
        %v6631 = vadd.f32 %v6406, %v6630
        %v6632 = vpop.f32.mrb[0].mxu0
        %6633 = vmatprep.mubr.f32.mxu0 %v5456
        %6634 = vmatmul.mubr.f32.gmra.mrb[0].mxu0 %v5455
        %v6635 = vpop.f32.mrb[0].mxu0
        %v6636 = vadd.f32 %v6411, %v6635
        %v6637 = vpop.f32.mrb[0].mxu0
        %6638 = vmatprep.mubr.f32.mxu0 %v5466
        %6639 = vmatmul.mubr.f32.gmra.mrb[0].mxu0 %v5465
        %v6640 = vpop.f32.mrb[0].mxu0
        %v6641 = vadd.f32 %v6416, %v6640
        %v6642 = vpop.f32.mrb[0].mxu0
        %6643 = vmatprep.mubr.f32.mxu0 %v5476
        %6644 = vmatmul.mubr.f32.gmra.mrb[0].mxu0 %v5475
        %v6645 = vpop.f32.mrb[0].mxu0
        %v6646 = vadd.f32 %v6421, %v6645
        %v6647 = vpop.f32.mrb[0].mxu0
        %6648 = vmatprep.mubr.f32.mxu0 %v5486
        %6649 = vmatmul.mubr.f32.gmra.mrb[0].mxu0 %v5485
        %v6650 = vpop.f32.mrb[0].mxu0
        %v6651 = vadd.f32 %v6426, %v6650
        %v6652 = vpop.f32.mrb[0].mxu0
        %6653 = vmatprep.mubr.f32.mxu0 %v5496
        %6654 = vmatmul.mubr.f32.gmra.mrb[0].mxu0 %v5495
        %v6655 = vpop.f32.mrb[0].mxu0
        %v6656 = vadd.f32 %v6431, %v6655
        %v6657 = vpop.f32.mrb[0].mxu0
        %6658 = vmatprep.mubr.f32.mxu0 %v5506
        %6659 = vmatmul.mubr.f32.gmra.mrb[0].mxu0 %v5505
        %v6660 = vpop.f32.mrb[0].mxu0
        %v6661 = vadd.f32 %v6436, %v6660
        %v6662 = vpop.f32.mrb[0].mxu0
        %6663 = vdwg.mxu0
        %6664 = vmatprep.subr.mxu0 0.0
        %6665 = vmatpush1.msra.mxu0 %v5637
        %6666 = vmatprep.subr.mxu0 0.0
        %6667 = vmatpush1.msra.mxu0 %v5638
        %6668 = vmatprep.subr.mxu0 0.0
        %6669 = vmatpush1.msra.mxu0 %v5639
        %6670 = vmatprep.subr.mxu0 0.0
        %6671 = vmatpush1.msra.mxu0 %v5640
        %6672 = vmatprep.subr.mxu0 0.0
        %6673 = vmatpush1.msra.mxu0 %v5641
        %6674 = vmatprep.subr.mxu0 0.0
        %6675 = vmatpush1.msra.mxu0 %v5642
        %6676 = vmatprep.subr.mxu0 0.0
        %6677 = vmatpush1.msra.mxu0 %v5643
        %6678 = vmatprep.subr.mxu0 0.0
        %6679 = vmatpush1.msra.mxu0 %v5644
        %6680 = vmatprep.subr.mxu0 0.0
        %6681 = vmatpush1.msra.mxu0 %v5645
        %6682 = vmatprep.subr.mxu0 0.0
        %6683 = vmatpush1.msra.mxu0 %v5646
        %6684 = vmatprep.subr.mxu0 0.0
        %6685 = vmatpush1.msra.mxu0 %v5647
        %6686 = vmatprep.subr.mxu0 0.0
        %6687 = vmatpush1.msra.mxu0 %v5648
        %6688 = vmatprep.subr.mxu0 0.0
        %6689 = vmatpush1.msra.mxu0 %v5649
        %6690 = vmatprep.subr.mxu0 0.0
        %6691 = vmatpush1.msra.mxu0 %v5650
        %6692 = vmatprep.subr.mxu0 0.0
        %6693 = vmatpush1.msra.mxu0 %v5651
        %6694 = vmatprep.subr.mxu0 0.0
        %6695 = vmatpush1.msra.mxu0 %v5652
        %6696 = vmatprep.subr.mxu0 0.0
        %6697 = vmatpush1.msra.mxu0 %v5653
        %6698 = vmatprep.subr.mxu0 0.0
        %6699 = vmatpush1.msra.mxu0 %v5654
        %6700 = vmatprep.subr.mxu0 0.0
        %6701 = vmatpush1.msra.mxu0 %v5655
        %6702 = vmatprep.subr.mxu0 0.0
        %6703 = vmatpush1.msra.mxu0 %v5656
        %6704 = vmatprep.subr.mxu0 0.0
        %6705 = vmatpush1.msra.mxu0 %v5657
        %6706 = vmatprep.subr.mxu0 0.0
        %6707 = vmatpush1.msra.mxu0 %v5658
        %6708 = vmatprep.subr.mxu0 0.0
        %6709 = vmatpush1.msra.mxu0 %v5659
        %6710 = vmatprep.subr.mxu0 0.0
        %6711 = vmatpush1.msra.mxu0 %v5660
        %6712 = vmatprep.subr.mxu0 0.0
        %6713 = vmatpush1.msra.mxu0 0.0
        %6714 = vmatprep.subr.mxu0 0.0
        %6715 = vmatpush1.msra.mxu0 0.0
        %6716 = vmatprep.subr.mxu0 0.0
        %6717 = vmatpush1.msra.mxu0 0.0
        %6718 = vmatprep.subr.mxu0 0.0
        %6719 = vmatpush1.msra.mxu0 0.0
        %6720 = vmatprep.subr.mxu0 0.0
        %6721 = vmatpush1.msra.mxu0 0.0
        %6722 = vmatprep.subr.mxu0 0.0
        %6723 = vmatpush1.msra.mxu0 0.0
        %6724 = vmatprep.subr.mxu0 0.0
        %6725 = vmatpush1.msra.mxu0 0.0
        %6726 = vmatprep.subr.mxu0 0.0
        %6727 = vmatpush1.msra.mxu0 0.0
        %6728 = vmatprep.mubr.f32.mxu0 %v5669
        %6729 = vmatmul.mubr.f32.gmra.mrb[0].mxu0 %v5197
        %v6730 = vpop.f32.mrb[0].mxu0
        %v6731 = vadd.f32 %v6506, %v6730
        %v6732 = vpop.f32.mrb[0].mxu0
        %6733 = vmatprep.mubr.f32.mxu0 %v5672
        %6734 = vmatmul.mubr.f32.gmra.mrb[0].mxu0 %v5207
        %v6735 = vpop.f32.mrb[0].mxu0
        %v6736 = vadd.f32 %v6511, %v6735
        %v6737 = vpop.f32.mrb[0].mxu0
        %6738 = vmatprep.mubr.f32.mxu0 %v5675
        %6739 = vmatmul.mubr.f32.gmra.mrb[0].mxu0 %v5217
        %v6740 = vpop.f32.mrb[0].mxu0
        %v6741 = vadd.f32 %v6516, %v6740
        %v6742 = vpop.f32.mrb[0].mxu0
        %6743 = vmatprep.mubr.f32.mxu0 %v5678
        %6744 = vmatmul.mubr.f32.gmra.mrb[0].mxu0 %v5227
        %v6745 = vpop.f32.mrb[0].mxu0
        %v6746 = vadd.f32 %v6521, %v6745
        %v6747 = vpop.f32.mrb[0].mxu0
        %6748 = vmatprep.mubr.f32.mxu0 %v5681
        %6749 = vmatmul.mubr.f32.gmra.mrb[0].mxu0 %v5237
        %v6750 = vpop.f32.mrb[0].mxu0
        %v6751 = vadd.f32 %v6526, %v6750
        %v6752 = vpop.f32.mrb[0].mxu0
        %6753 = vmatprep.mubr.f32.mxu0 %v5684
        %6754 = vmatmul.mubr.f32.gmra.mrb[0].mxu0 %v5247
        %v6755 = vpop.f32.mrb[0].mxu0
        %v6756 = vadd.f32 %v6531, %v6755
        %v6757 = vpop.f32.mrb[0].mxu0
        %6758 = vmatprep.mubr.f32.mxu0 %v5687
        %6759 = vmatmul.mubr.f32.gmra.mrb[0].mxu0 %v5257
        %v6760 = vpop.f32.mrb[0].mxu0
        %v6761 = vadd.f32 %v6536, %v6760
        %v6762 = vpop.f32.mrb[0].mxu0
        %6763 = vmatprep.mubr.f32.mxu0 %v5690
        %6764 = vmatmul.mubr.f32.gmra.mrb[0].mxu0 %v5267
        %v6765 = vpop.f32.mrb[0].mxu0
        %v6766 = vadd.f32 %v6541, %v6765
        %v6767 = vpop.f32.mrb[0].mxu0
        %6768 = vmatprep.mubr.f32.mxu0 %v5693
        %6769 = vmatmul.mubr.f32.gmra.mrb[0].mxu0 %v5277
        %v6770 = vpop.f32.mrb[0].mxu0
        %v6771 = vadd.f32 %v6546, %v6770
        %v6772 = vpop.f32.mrb[0].mxu0
        %6773 = vmatprep.mubr.f32.mxu0 %v5696
        %6774 = vmatmul.mubr.f32.gmra.mrb[0].mxu0 %v5287
        %v6775 = vpop.f32.mrb[0].mxu0
        %v6776 = vadd.f32 %v6551, %v6775
        %v6777 = vpop.f32.mrb[0].mxu0
        %6778 = vmatprep.mubr.f32.mxu0 %v5699
        %6779 = vmatmul.mubr.f32.gmra.mrb[0].mxu0 %v5297
        %v6780 = vpop.f32.mrb[0].mxu0
        %v6781 = vadd.f32 %v6556, %v6780
        %v6782 = vpop.f32.mrb[0].mxu0
        %6783 = vmatprep.mubr.f32.mxu0 %v5702
        %6784 = vmatmul.mubr.f32.gmra.mrb[0].mxu0 %v5307
        %v6785 = vpop.f32.mrb[0].mxu0
        %v6786 = vadd.f32 %v6561, %v6785
        %v6787 = vpop.f32.mrb[0].mxu0
        %6788 = vmatprep.mubr.f32.mxu0 %v5705
        %6789 = vmatmul.mubr.f32.gmra.mrb[0].mxu0 %v5317
        %v6790 = vpop.f32.mrb[0].mxu0
        %v6791 = vadd.f32 %v6566, %v6790
        %v6792 = vpop.f32.mrb[0].mxu0
        %6793 = vmatprep.mubr.f32.mxu0 %v5708
        %6794 = vmatmul.mubr.f32.gmra.mrb[0].mxu0 %v5327
        %v6795 = vpop.f32.mrb[0].mxu0
        %v6796 = vadd.f32 %v6571, %v6795
        %v6797 = vpop.f32.mrb[0].mxu0
        %6798 = vmatprep.mubr.f32.mxu0 %v5711
        %6799 = vmatmul.mubr.f32.gmra.mrb[0].mxu0 %v5337
        %v6800 = vpop.f32.mrb[0].mxu0
        %v6801 = vadd.f32 %v6576, %v6800
        %v6802 = vpop.f32.mrb[0].mxu0
        %6803 = vmatprep.mubr.f32.mxu0 %v5714
        %6804 = vmatmul.mubr.f32.gmra.mrb[0].mxu0 %v5347
        %v6805 = vpop.f32.mrb[0].mxu0
        %v6806 = vadd.f32 %v6581, %v6805
        %v6807 = vpop.f32.mrb[0].mxu0
        %6808 = vmatprep.mubr.f32.mxu0 %v5717
        %6809 = vmatmul.mubr.f32.gmra.mrb[0].mxu0 %v5357
        %v6810 = vpop.f32.mrb[0].mxu0
        %v6811 = vadd.f32 %v6586, %v6810
        %v6812 = vpop.f32.mrb[0].mxu0
        %6813 = vmatprep.mubr.f32.mxu0 %v5720
        %6814 = vmatmul.mubr.f32.gmra.mrb[0].mxu0 %v5367
        %v6815 = vpop.f32.mrb[0].mxu0
        %v6816 = vadd.f32 %v6591, %v6815
        %v6817 = vpop.f32.mrb[0].mxu0
        %6818 = vmatprep.mubr.f32.mxu0 %v5723
        %6819 = vmatmul.mubr.f32.gmra.mrb[0].mxu0 %v5377
        %v6820 = vpop.f32.mrb[0].mxu0
        %v6821 = vadd.f32 %v6596, %v6820
        %v6822 = vpop.f32.mrb[0].mxu0
        %6823 = vmatprep.mubr.f32.mxu0 %v5726
        %6824 = vmatmul.mubr.f32.gmra.mrb[0].mxu0 %v5387
        %v6825 = vpop.f32.mrb[0].mxu0
        %v6826 = vadd.f32 %v6601, %v6825
        %v6827 = vpop.f32.mrb[0].mxu0
        %6828 = vmatprep.mubr.f32.mxu0 %v5729
        %6829 = vmatmul.mubr.f32.gmra.mrb[0].mxu0 %v5397
        %v6830 = vpop.f32.mrb[0].mxu0
        %v6831 = vadd.f32 %v6606, %v6830
        %v6832 = vpop.f32.mrb[0].mxu0
        %6833 = vmatprep.mubr.f32.mxu0 %v5732
        %6834 = vmatmul.mubr.f32.gmra.mrb[0].mxu0 %v5407
        %v6835 = vpop.f32.mrb[0].mxu0
        %v6836 = vadd.f32 %v6611, %v6835
        %v6837 = vpop.f32.mrb[0].mxu0
        %6838 = vmatprep.mubr.f32.mxu0 %v5735
        %6839 = vmatmul.mubr.f32.gmra.mrb[0].mxu0 %v5417
        %v6840 = vpop.f32.mrb[0].mxu0
        %v6841 = vadd.f32 %v6616, %v6840
        %v6842 = vpop.f32.mrb[0].mxu0
        %6843 = vmatprep.mubr.f32.mxu0 %v5738
        %6844 = vmatmul.mubr.f32.gmra.mrb[0].mxu0 %v5427
        %v6845 = vpop.f32.mrb[0].mxu0
        %v6846 = vadd.f32 %v6621, %v6845
        %v6847 = vpop.f32.mrb[0].mxu0
        %6848 = vmatprep.mubr.f32.mxu0 %v5741
        %6849 = vmatmul.mubr.f32.gmra.mrb[0].mxu0 %v5437
        %v6850 = vpop.f32.mrb[0].mxu0
        %v6851 = vadd.f32 %v6626, %v6850
        %v6852 = vpop.f32.mrb[0].mxu0
        %6853 = vmatprep.mubr.f32.mxu0 %v5744
        %6854 = vmatmul.mubr.f32.gmra.mrb[0].mxu0 %v5447
        %v6855 = vpop.f32.mrb[0].mxu0
        %v6856 = vadd.f32 %v6631, %v6855
        %v6857 = vpop.f32.mrb[0].mxu0
        %6858 = vmatprep.mubr.f32.mxu0 %v5747
        %6859 = vmatmul.mubr.f32.gmra.mrb[0].mxu0 %v5457
        %v6860 = vpop.f32.mrb[0].mxu0
        %v6861 = vadd.f32 %v6636, %v6860
        %v6862 = vpop.f32.mrb[0].mxu0
        %6863 = vmatprep.mubr.f32.mxu0 %v5750
        %6864 = vmatmul.mubr.f32.gmra.mrb[0].mxu0 %v5467
        %v6865 = vpop.f32.mrb[0].mxu0
        %v6866 = vadd.f32 %v6641, %v6865
        %v6867 = vpop.f32.mrb[0].mxu0
        %6868 = vmatprep.mubr.f32.mxu0 %v5753
        %6869 = vmatmul.mubr.f32.gmra.mrb[0].mxu0 %v5477
        %v6870 = vpop.f32.mrb[0].mxu0
        %v6871 = vadd.f32 %v6646, %v6870
        %v6872 = vpop.f32.mrb[0].mxu0
        %6873 = vmatprep.mubr.f32.mxu0 %v5756
        %6874 = vmatmul.mubr.f32.gmra.mrb[0].mxu0 %v5487
        %v6875 = vpop.f32.mrb[0].mxu0
        %v6876 = vadd.f32 %v6651, %v6875
        %v6877 = vpop.f32.mrb[0].mxu0
        %6878 = vmatprep.mubr.f32.mxu0 %v5759
        %6879 = vmatmul.mubr.f32.gmra.mrb[0].mxu0 %v5497
        %v6880 = vpop.f32.mrb[0].mxu0
        %v6881 = vadd.f32 %v6656, %v6880
        %v6882 = vpop.f32.mrb[0].mxu0
        %6883 = vmatprep.mubr.f32.mxu0 %v5762
        %6884 = vmatmul.mubr.f32.gmra.mrb[0].mxu0 %v5507
        %v6885 = vpop.f32.mrb[0].mxu0
        %v6886 = vadd.f32 %v6661, %v6885
        %v6887 = vpop.f32.mrb[0].mxu0
        %6888 = vdwg.mxu0
        %6889 = vst [vmem:[%s530] sm:$0xff] %v6731
        %6890 = vst [vmem:[%s530 + $0x8] sm:$0xff] %v6736
        %6891 = vst [vmem:[%s530 + $0x10] sm:$0xff] %v6741
        %6892 = vst [vmem:[%s530 + $0x18] sm:$0xff] %v6746
        %6893 = vst [vmem:[%s530 + $0x20] sm:$0xff] %v6751
        %6894 = vst [vmem:[%s530 + $0x28] sm:$0xff] %v6756
        %6895 = vst [vmem:[%s530 + $0x30] sm:$0xff] %v6761
        %6896 = vst [vmem:[%s530 + $0x38] sm:$0xff] %v6766
        %6897 = vst [vmem:[%s530 + $0x40] sm:$0xff] %v6771
        %6898 = vst [vmem:[%s530 + $0x48] sm:$0xff] %v6776
        %6899 = vst [vmem:[%s530 + $0x50] sm:$0xff] %v6781
        %6900 = vst [vmem:[%s530 + $0x58] sm:$0xff] %v6786
        %6901 = vst [vmem:[%s530 + $0x60] sm:$0xff] %v6791
        %6902 = vst [vmem:[%s530 + $0x68] sm:$0xff] %v6796
        %6903 = vst [vmem:[%s530 + $0x70] sm:$0xff] %v6801
        %6904 = vst [vmem:[%s530 + $0x78] sm:$0xff] %v6806
        %6905 = vst [vmem:[%s530 + $0x80] sm:$0xff] %v6811
        %6906 = vst [vmem:[%s530 + $0x88] sm:$0xff] %v6816
        %6907 = vst [vmem:[%s530 + $0x90] sm:$0xff] %v6821
        %6908 = vst [vmem:[%s530 + $0x98] sm:$0xff] %v6826
        %6909 = vst [vmem:[%s530 + $0xa0] sm:$0xff] %v6831
        %6910 = vst [vmem:[%s530 + $0xa8] sm:$0xff] %v6836
        %6911 = vst [vmem:[%s530 + $0xb0] sm:$0xff] %v6841
        %6912 = vst [vmem:[%s530 + $0xb8] sm:$0xff] %v6846
        %6913 = vst [vmem:[%s530 + $0xc0] sm:$0xff] %v6851
        %6914 = vst [vmem:[%s530 + $0xc8] sm:$0xff] %v6856
        %6915 = vst [vmem:[%s530 + $0xd0] sm:$0xff] %v6861
        %6916 = vst [vmem:[%s530 + $0xd8] sm:$0xff] %v6866
        %6917 = vst [vmem:[%s530 + $0xe0] sm:$0xff] %v6871
        %6918 = vst [vmem:[%s530 + $0xe8] sm:$0xff] %v6876
        %6919 = vst [vmem:[%s530 + $0xf0] sm:$0xff] %v6881
        %6920 = vst [vmem:[%s530 + $0xf8] sm:$0xff] %v6886
        %s6921 = sand.u32 %s304, 1
        %s6922 = scalar_lea.sflag [#allocation8], %s6921
        %s6923 = sand.u32 %s304, 1
        %s6924 = smul.addr %s6923, 256
        %s6925 = scalar_lea.vmem [#allocation17], %s6924
        // Predicated region
        $region93: #{tpu_custom_call.1} parent=67 // pred_check
          %p6926 = pneg %p314
        $region94: #{tpu_custom_call.1} parent=67 // pred_check_branch
          %6928 = sbr.rel (%p6926) target = $region96
        $region95: #{tpu_custom_call.1} parent=67 // pred_region
          %s6929 = smul.u32 4, %s34
          %s6931 = ssub.s32 4096, 4096
          %6932 = vsyncadd %s6922, %s6931
          %s6933 = smul.addr %s6929, 8
          %s6934 = smul.addr %s6933, 128
          %s6935 = scalar_lea.hbm %s12, %s6934
          %s6936 = sshll.u32 %s6925, 4
          %s6937 = int_to_ptr.vmem [resolvable:$true] %s6936
          %6942 = dma.vmem_to_hbm [thread:$0]  %s6937, 4096, %s6935, %s6922, 128, 128, 8
        $region96: #{tpu_custom_call.1} parent=67 // pred_fallthru
          _
      $region68: #{tpu_custom_call.1} parent=5 // pred_fallthru
        _
      %p6943 = scmp.le.s32.totalorder 2, %s29
      // Predicated region
      $region97: #{tpu_custom_call.1} parent=5 // pred_check
        %p6944 = pneg %p6943
      $region98: #{tpu_custom_call.1} parent=5 // pred_check_branch
        %6946 = sbr.rel (%p6944) target = $region100
      $region99: #{tpu_custom_call.1} parent=5 // pred_region
        %s6947 = ssub.s32 %s29, 2
        // Predicated region
        $region101: #{tpu_custom_call.1} parent=99 // pred_check
          %p6948 = pneg %p320
        $region102: #{tpu_custom_call.1} parent=99 // pred_check_branch
          %6950 = sbr.rel (%p6948) target = $region104
        $region103: #{tpu_custom_call.1} parent=99 // pred_region
          %s6951 = sand.u32 %s305, 1
          %s6952 = scalar_lea.sflag [#allocation8], %s6951
          %s6953 = sand.u32 %s305, 1
          %s6954 = smul.addr %s6953, 256
          %s6955 = scalar_lea.vmem [#allocation17], %s6954
          %6956 = dma.done %s6952, 4096
        $region104: #{tpu_custom_call.1} parent=99 // pred_fallthru
          _
      $region100: #{tpu_custom_call.1} parent=5 // pred_fallthru
        _
    $region6: #{tpu_custom_call.1} parent=1 // loop_footer
      %s33 = sadd.s32 1, %s29
    $region7: #{tpu_custom_call.1} parent=1 // loop_footer_branch
      %28 = sbr.rel target = $region3
    $region8: #{tpu_custom_call.1} parent=1 // loop_exit
      _
    %6957 = vsyncpa [#allocation7], 1
    %s6958 = scalar_lea.sflag [#allocation7], 1
    %6959 = vsyncpa %s6958, 1
    %6960 = vsyncpa [#allocation10], 1
    %s6961 = scalar_lea.sflag [#allocation10], 1
    %6962 = vsyncpa %s6961, 1
    %6963 = vsyncpa [#allocation13], 1
    %6964 = vsyncpa [#allocation16], 1
    %6965 = vsyncpa [#allocation8], 1
    %s6966 = scalar_lea.sflag [#allocation8], 1
    %6967 = vsyncpa %s6966, 1

</llo_original>
